<compile_context>
chip_gen: v7x
topology: tpu7x:2x2x1
jax: 0.10.0
libtpu: 0.0.40
codegen_flags: <defaults>
</compile_context>

<pallas_src>
import functools

import jax
import jax.numpy as jnp
from jax.experimental import pallas as pl
from jax.experimental.pallas import tpu as pltpu


def _silu(x):
    return x * jax.nn.sigmoid(x)


def _round_up(n, m):
    return (n + m - 1) // m * m


def _choose_h_tile(h, w):
    """Pick the H tile so th*W rows fill the MXU: ~256 on v6e/v7x, ~128 on v5e."""
    try:
        kind = jax.devices()[0].device_kind.lower()
        is_v5e = ("v5 lite" in kind) or ("v5e" in kind) or ("v5lite" in kind)
    except Exception:
        is_v5e = False
    target_rows = 128 if is_v5e else 256
    goal = max(1, target_rows // max(w, 1))
    for cand in (goal, 16, 8, 32, 4, 2, 1):
        if 0 < cand <= h and h % cand == 0:
            return cand
    return h


# ---------------------------------------------------------------------------
# Fused PoseHead kernel: one grid step = (batch, H-tile).
#   - reads (th+2) halo rows of the zero-padded bf16 input
#   - 1x1 ConvBlocks of both branches (masked to zero on the 3x3 padding ring)
#   - 3x3 ConvBlocks (per-dh concatenated taps, K = 3C matmuls)
#   - det tail: final 1x1 conv (lane-padded to 128)
#   - kpt tail: 1x1 ConvBlock + spatial attention + gating + kpt_reg 1x1 (padded)
# ---------------------------------------------------------------------------
def pose_head_kernel(x_ref, m_ref,
                     wd1_ref, sd1_ref, bd1_ref,
                     wk1_ref, sk1_ref, bk1_ref,
                     wd2_ref, sd2_ref, bd2_ref,
                     wk2_ref, sk2_ref, bk2_ref,
                     wk3_ref, sk3_ref, bk3_ref,
                     wa_ref, ba_ref,
                     wf_ref, bf_ref,
                     wr_ref, br_ref,
                     det_ref, kpt_ref,
                     acc_ref,
                     *, th, sw, c, hh):
    i = pl.program_id(1)
    r0 = pl.multiple_of(i * th, th)

    wp = x_ref.shape[1]
    xh = x_ref[pl.ds(r0, hh), :, :]                       # (hh, wp, c) bf16 halo rows
    x2d = xh.reshape(hh * wp, c)
    mask = m_ref[pl.ds(r0, hh), :, :]                     # (hh, wp, 1) f32; 0 on 3x3 pad ring

    def cb1x1(z2d, w_ref, s_ref, b_ref):
        y = jnp.dot(z2d, w_ref[...], preferred_element_type=jnp.float32)
        return _silu(y * s_ref[...] + b_ref[...])         # f32

    # First 1x1 ConvBlock of each branch, computed on halo rows; positions that are
    # 3x3 zero-padding are masked back to zero (the pad is applied AFTER ConvBlock1).
    d1 = (cb1x1(x2d, wd1_ref, sd1_ref, bd1_ref).reshape(hh, wp, c)
          * mask).astype(jnp.bfloat16)
    k1 = (cb1x1(x2d, wk1_ref, sk1_ref, bk1_ref).reshape(hh, wp, c)
          * mask).astype(jnp.bfloat16)

    def cb3x3(z, w2_ref, s_ref, b_ref):
        acc_ref[...] = jnp.zeros_like(acc_ref)
        for dh in range(3):
            rows = z[dh:dh + th]                          # (th, wp, c) bf16
            patch = jnp.concatenate(
                [rows[:, 0:sw, :], rows[:, 1:1 + sw, :], rows[:, 2:2 + sw, :]],
                axis=-1).reshape(th * sw, 3 * c)          # (th*sw, 3c) bf16
            acc_ref[...] += jnp.dot(patch, w2_ref[dh],
                                    preferred_element_type=jnp.float32)
        return _silu(acc_ref[...] * s_ref[...] + b_ref[...])   # (th*sw, c) f32

    # ---- det branch: 3x3 ConvBlock + final 1x1 conv (lane-padded to 128) ----
    y2 = cb3x3(d1, wd2_ref, sd2_ref, bd2_ref)
    det = jnp.dot(y2.astype(jnp.bfloat16), wf_ref[...],
                  preferred_element_type=jnp.float32) + bf_ref[...]
    det_ref[...] = det.reshape(th, sw, det_ref.shape[-1]).astype(det_ref.dtype)

    # ---- kpt branch: 3x3 CB + 1x1 CB + spatial attention + kpt_reg 1x1 ----
    k2 = cb3x3(k1, wk2_ref, sk2_ref, bk2_ref)
    k3 = _silu(jnp.dot(k2.astype(jnp.bfloat16), wk3_ref[...],
                       preferred_element_type=jnp.float32)
               * sk3_ref[...] + bk3_ref[...])
    att = jax.nn.sigmoid(jnp.sum(k3 * wa_ref[...], axis=-1, keepdims=True)
                         + ba_ref[...])                   # (th*sw, 1) f32
    kpt = jnp.dot((k3 * att).astype(jnp.bfloat16), wr_ref[...],
                  preferred_element_type=jnp.float32) + br_ref[...]
    kpt_ref[...] = kpt.reshape(th, sw, kpt_ref.shape[-1]).astype(kpt_ref.dtype)


def _pose_head_pallas(x_pad, pad_mask, weights, *, b, h, w, c, th, cdp, ckp):
    hp, wp = x_pad.shape[1], x_pad.shape[2]
    sw = w
    hh = th + 2

    kern = functools.partial(pose_head_kernel, th=th, sw=sw, c=c, hh=hh)

    def rep(shape):                       # grid-invariant operand, full block
        nd = len(shape)
        return pl.BlockSpec(shape, lambda bi, i, _n=nd: (0,) * _n)

    in_specs = [
        pl.BlockSpec((None, hp, wp, c), lambda bi, i: (bi, 0, 0, 0)),  # padded x, per batch
        rep((hp, wp, 1)),                                              # 3x3 pad mask
        rep((c, c)), rep((1, c)), rep((1, c)),                         # det ConvBlock 1x1
        rep((c, c)), rep((1, c)), rep((1, c)),                         # kpt ConvBlock 1x1
        rep((3, 3 * c, c)), rep((1, c)), rep((1, c)),                  # det ConvBlock 3x3
        rep((3, 3 * c, c)), rep((1, c)), rep((1, c)),                  # kpt ConvBlock 3x3
        rep((c, c)), rep((1, c)), rep((1, c)),                         # kpt ConvBlock 1x1 (#3)
        rep((1, c)), rep((1, 1)),                                      # spatial attention
        rep((c, cdp)), rep((1, cdp)),                                  # det final 1x1 (padded)
        rep((c, ckp)), rep((1, ckp)),                                  # kpt_reg 1x1 (padded)
    ]
    out_specs = (
        pl.BlockSpec((None, th, sw, cdp), lambda bi, i: (bi, i, 0, 0)),
        pl.BlockSpec((None, th, sw, ckp), lambda bi, i: (bi, i, 0, 0)),
    )
    return pl.pallas_call(
        kern,
        out_shape=(jax.ShapeDtypeStruct((b, h, w, cdp), jnp.float32),
                   jax.ShapeDtypeStruct((b, h, w, ckp), jnp.float32)),
        grid=(b, h // th),
        in_specs=in_specs,
        out_specs=out_specs,
        scratch_shapes=[pltpu.VMEM((th * sw, c), jnp.float32)],
        compiler_params=pltpu.CompilerParams(
            dimension_semantics=("parallel", "parallel")),
    )(x_pad, pad_mask, *weights)


# ---------------------------------------------------------------------------
# Parameters (deterministic, synthetic).  Conv weights are stored (in, out)
# (transposed vs PyTorch); 3x3 weights are tap-major (9, in, out).  BatchNorm
# is folded to per-channel scale/bias (inference semantics).
# ---------------------------------------------------------------------------
def fold_bn(gamma, beta, mean, var, eps=1e-5):
    scale = gamma / jnp.sqrt(var + eps)
    bias = beta - mean * scale
    return scale.reshape(1, -1), bias.reshape(1, -1)


def _bn_params(key, c):
    k0, k1, k2, k3 = jax.random.split(key, 4)
    gamma = 1.0 + 0.1 * jax.random.normal(k0, (c,), jnp.float32)
    beta = 0.1 * jax.random.normal(k1, (c,), jnp.float32)
    mean = 0.1 * jax.random.normal(k2, (c,), jnp.float32)
    var = jnp.abs(1.0 + 0.1 * jax.random.normal(k3, (c,), jnp.float32))
    return fold_bn(gamma, beta, mean, var)


def init_params(in_c, n_classes, n_keypoints, key):
    ks = jax.random.split(key, 16)
    c_det = n_classes + 4
    c_kpt = n_keypoints * 3
    p = {}
    # det_head
    p["det_w1"] = 0.1 * jax.random.normal(ks[0], (in_c, in_c), jnp.float32)
    p["det_s1"], p["det_b1"] = _bn_params(ks[1], in_c)
    p["det_w2"] = 0.05 * jax.random.normal(ks[2], (9, in_c, in_c), jnp.float32)
    p["det_s2"], p["det_b2"] = _bn_params(ks[3], in_c)
    p["det_wf"] = 0.1 * jax.random.normal(ks[4], (in_c, c_det), jnp.float32)
    p["det_bf"] = 0.1 * jax.random.normal(ks[5], (1, c_det), jnp.float32)
    # kpt_feat
    p["kpt_w1"] = 0.1 * jax.random.normal(ks[6], (in_c, in_c), jnp.float32)
    p["kpt_s1"], p["kpt_b1"] = _bn_params(ks[7], in_c)
    p["kpt_w2"] = 0.05 * jax.random.normal(ks[8], (9, in_c, in_c), jnp.float32)
    p["kpt_s2"], p["kpt_b2"] = _bn_params(ks[9], in_c)
    p["kpt_w3"] = 0.1 * jax.random.normal(ks[10], (in_c, in_c), jnp.float32)
    p["kpt_s3"], p["kpt_b3"] = _bn_params(ks[11], in_c)
    # spatial attention + kpt_reg
    p["att_w"] = 0.1 * jax.random.normal(ks[12], (1, in_c), jnp.float32)
    p["att_b"] = 0.1 * jax.random.normal(ks[13], (1, 1), jnp.float32)
    p["reg_w"] = 0.1 * jax.random.normal(ks[14], (in_c, c_kpt), jnp.float32)
    p["reg_b"] = 0.1 * jax.random.normal(ks[15], (1, c_kpt), jnp.float32)
    return p


# ---------------------------------------------------------------------------
# Forward wrapper (NCHW in/out, matching PyTorch).
# ---------------------------------------------------------------------------
def pose_head_forward(x_nchw, params, n_classes=1, n_keypoints=9):
    b, c, h, w = x_nchw.shape
    c_det = n_classes + 4
    c_kpt = 3 * n_keypoints
    cdp = _round_up(c_det, 128)          # lane-dense output widths
    ckp = _round_up(c_kpt, 128)

    # NCHW -> NHWC (channels on lanes), bf16 MXU operands, zero pad: +1 halo row/col
    # on each side for the 3x3 conv, width rounded up to a multiple of 8 sublanes.
    hp = h + 2
    wp = _round_up(w + 2, 8)
    x = jnp.transpose(x_nchw, (0, 2, 3, 1)).astype(jnp.bfloat16)
    x_pad = jnp.pad(x, ((0, 0), (1, 1), (1, wp - (w + 1)), (0, 0)))
    # 1 inside the real image, 0 on the 3x3 zero-padding ring / alignment columns.
    pad_mask = jnp.zeros((hp, wp, 1), jnp.float32).at[1:h + 1, 1:w + 1, :].set(1.0)

    bf16 = jnp.bfloat16
    weights = (
        params["det_w1"].astype(bf16), params["det_s1"], params["det_b1"],
        params["kpt_w1"].astype(bf16), params["kpt_s1"], params["kpt_b1"],
        params["det_w2"].reshape(3, 3 * c, c).astype(bf16),
        params["det_s2"], params["det_b2"],
        params["kpt_w2"].reshape(3, 3 * c, c).astype(bf16),
        params["kpt_s2"], params["kpt_b2"],
        params["kpt_w3"].astype(bf16), params["kpt_s3"], params["kpt_b3"],
        params["att_w"], params["att_b"],
        jnp.pad(params["det_wf"], ((0, 0), (0, cdp - c_det))).astype(bf16),
        jnp.pad(params["det_bf"], ((0, 0), (0, cdp - c_det))),
        jnp.pad(params["reg_w"], ((0, 0), (0, ckp - c_kpt))).astype(bf16),
        jnp.pad(params["reg_b"], ((0, 0), (0, ckp - c_kpt))),
    )

    th = _choose_h_tile(h, w)
    det_p, kpt_p = _pose_head_pallas(x_pad, pad_mask, weights,
                                     b=b, h=h, w=w, c=c, th=th, cdp=cdp, ckp=ckp)

    det_out = jnp.transpose(det_p[..., :c_det], (0, 3, 1, 2))          # (B, n_cls+4, H, W)
    kpt_out = jnp.transpose(kpt_p[..., :c_kpt], (0, 3, 1, 2)).reshape(
        b, n_keypoints, 3, h, w)
    return det_out, kpt_out


# ---------------------------------------------------------------------------
# Pure-JAX reference (all f32, plain XLA ops) for correctness.
# ---------------------------------------------------------------------------
def _ref_cb1x1(x, w, s, b):
    y = jnp.einsum("bhwc,cd->bhwd", x, w)
    return _silu(y * s.reshape(1, 1, 1, -1) + b.reshape(1, 1, 1, -1))


def _ref_cb3x3(x, w9, s, b):
    bs, h, wd, _ = x.shape
    xp = jnp.pad(x, ((0, 0), (1, 1), (1, 1), (0, 0)))
    acc = 0.0
    for dh in range(3):
        for dw in range(3):
            acc = acc + jnp.einsum("bhwc,cd->bhwd",
                                   xp[:, dh:dh + h, dw:dw + wd, :], w9[dh * 3 + dw])
    return _silu(acc * s.reshape(1, 1, 1, -1) + b.reshape(1, 1, 1, -1))


def pose_head_reference(x_nchw, params, n_keypoints=9):
    b, c, h, w = x_nchw.shape
    x = jnp.transpose(x_nchw, (0, 2, 3, 1))
    d1 = _ref_cb1x1(x, params["det_w1"], params["det_s1"], params["det_b1"])
    d2 = _ref_cb3x3(d1, params["det_w2"], params["det_s2"], params["det_b2"])
    det = jnp.einsum("bhwc,cd->bhwd", d2, params["det_wf"]) + params["det_bf"].reshape(1, 1, 1, -1)
    k1 = _ref_cb1x1(x, params["kpt_w1"], params["kpt_s1"], params["kpt_b1"])
    k2 = _ref_cb3x3(k1, params["kpt_w2"], params["kpt_s2"], params["kpt_b2"])
    k3 = _ref_cb1x1(k2, params["kpt_w3"], params["kpt_s3"], params["kpt_b3"])
    att = jax.nn.sigmoid(jnp.einsum("bhwc,c->bhw", k3, params["att_w"].reshape(-1))[..., None]
                         + params["att_b"].reshape(()))
    kpt = jnp.einsum("bhwc,cd->bhwd", k3 * att, params["reg_w"]) + params["reg_b"].reshape(1, 1, 1, -1)
    det = jnp.transpose(det, (0, 3, 1, 2))
    kpt = jnp.transpose(kpt, (0, 3, 1, 2)).reshape(b, n_keypoints, 3, h, w)
    return det, kpt


if __name__ == "__main__":
    key = jax.random.PRNGKey(0)
    kx, kp = jax.random.split(key)
    B, C, H, W = 2, 128, 16, 16          # C=128 keeps the lane dimension dense
    N_CLASSES, N_KPT = 1, 9
    x = jax.random.normal(kx, (B, C, H, W), jnp.float32)
    params = init_params(C, N_CLASSES, N_KPT, kp)

    det_out, kpt_out = jax.jit(pose_head_forward)(x, params)
    det_out, kpt_out = jax.block_until_ready((det_out, kpt_out))

    assert det_out.shape == (B, N_CLASSES + 4, H, W)
    assert kpt_out.shape == (B, N_KPT, 3, H, W)
    assert bool(jnp.all(jnp.isfinite(det_out))) and bool(jnp.all(jnp.isfinite(kpt_out)))

    ref_det, ref_kpt = jax.jit(pose_head_reference)(x, params)
    # Tolerance sized for bf16 MXU operands with f32 accumulation (reference is all-f32).
    assert bool(jnp.allclose(det_out, ref_det, atol=6e-2, rtol=6e-2)), \
        float(jnp.max(jnp.abs(det_out - ref_det)))
    assert bool(jnp.allclose(kpt_out, ref_kpt, atol=6e-2, rtol=6e-2)), \
        float(jnp.max(jnp.abs(kpt_out - ref_kpt)))

    print("KERNEL_OK")
</pallas_src>

<mosaic_0001>
module attributes {stable_mosaic.version = 11 : i64} {
  func.func @pose_head_kernel(%arg0: i32, %arg1: i32, %arg2: memref<1x18x24x128xbf16, #tpu.memory_space<vmem>>, %arg3: memref<18x24x1xf32, #tpu.memory_space<vmem>>, %arg4: memref<128x128xbf16, #tpu.memory_space<vmem>>, %arg5: memref<1x128xf32, #tpu.memory_space<vmem>>, %arg6: memref<1x128xf32, #tpu.memory_space<vmem>>, %arg7: memref<128x128xbf16, #tpu.memory_space<vmem>>, %arg8: memref<1x128xf32, #tpu.memory_space<vmem>>, %arg9: memref<1x128xf32, #tpu.memory_space<vmem>>, %arg10: memref<3x384x128xbf16, #tpu.memory_space<vmem>>, %arg11: memref<1x128xf32, #tpu.memory_space<vmem>>, %arg12: memref<1x128xf32, #tpu.memory_space<vmem>>, %arg13: memref<3x384x128xbf16, #tpu.memory_space<vmem>>, %arg14: memref<1x128xf32, #tpu.memory_space<vmem>>, %arg15: memref<1x128xf32, #tpu.memory_space<vmem>>, %arg16: memref<128x128xbf16, #tpu.memory_space<vmem>>, %arg17: memref<1x128xf32, #tpu.memory_space<vmem>>, %arg18: memref<1x128xf32, #tpu.memory_space<vmem>>, %arg19: memref<1x128xf32, #tpu.memory_space<vmem>>, %arg20: memref<1x1xf32, #tpu.memory_space<vmem>>, %arg21: memref<128x128xbf16, #tpu.memory_space<vmem>>, %arg22: memref<1x128xf32, #tpu.memory_space<vmem>>, %arg23: memref<128x128xbf16, #tpu.memory_space<vmem>>, %arg24: memref<1x128xf32, #tpu.memory_space<vmem>>, %arg25: memref<1x16x16x128xf32, #tpu.memory_space<vmem>>, %arg26: memref<1x16x16x128xf32, #tpu.memory_space<vmem>>, %arg27: memref<256x128xf32, #tpu.memory_space<vmem>>) attributes {dimension_semantics = [#tpu.dimension_semantics<parallel>, #tpu.dimension_semantics<parallel>], iteration_bounds = array<i64: 2, 1>, scalar_prefetch = 0 : i64, scratch_operands = 1 : i64, tpu.core_type = #tpu.core_type<tc>, window_params = [{transform_indices = @transform_0, window_bounds = array<i64: 1, 18, 24, 128>}, {pipeline_mode = #tpu.pipeline_mode<synchronous>, transform_indices = @transform_1, window_bounds = array<i64: 18, 24, 1>}, {pipeline_mode = #tpu.pipeline_mode<synchronous>, transform_indices = @transform_2, window_bounds = array<i64: 128, 128>}, {pipeline_mode = #tpu.pipeline_mode<synchronous>, transform_indices = @transform_3, window_bounds = array<i64: 1, 128>}, {pipeline_mode = #tpu.pipeline_mode<synchronous>, transform_indices = @transform_4, window_bounds = array<i64: 1, 128>}, {pipeline_mode = #tpu.pipeline_mode<synchronous>, transform_indices = @transform_5, window_bounds = array<i64: 128, 128>}, {pipeline_mode = #tpu.pipeline_mode<synchronous>, transform_indices = @transform_6, window_bounds = array<i64: 1, 128>}, {pipeline_mode = #tpu.pipeline_mode<synchronous>, transform_indices = @transform_7, window_bounds = array<i64: 1, 128>}, {pipeline_mode = #tpu.pipeline_mode<synchronous>, transform_indices = @transform_8, window_bounds = array<i64: 3, 384, 128>}, {pipeline_mode = #tpu.pipeline_mode<synchronous>, transform_indices = @transform_9, window_bounds = array<i64: 1, 128>}, {pipeline_mode = #tpu.pipeline_mode<synchronous>, transform_indices = @transform_10, window_bounds = array<i64: 1, 128>}, {pipeline_mode = #tpu.pipeline_mode<synchronous>, transform_indices = @transform_11, window_bounds = array<i64: 3, 384, 128>}, {pipeline_mode = #tpu.pipeline_mode<synchronous>, transform_indices = @transform_12, window_bounds = array<i64: 1, 128>}, {pipeline_mode = #tpu.pipeline_mode<synchronous>, transform_indices = @transform_13, window_bounds = array<i64: 1, 128>}, {pipeline_mode = #tpu.pipeline_mode<synchronous>, transform_indices = @transform_14, window_bounds = array<i64: 128, 128>}, {pipeline_mode = #tpu.pipeline_mode<synchronous>, transform_indices = @transform_15, window_bounds = array<i64: 1, 128>}, {pipeline_mode = #tpu.pipeline_mode<synchronous>, transform_indices = @transform_16, window_bounds = array<i64: 1, 128>}, {pipeline_mode = #tpu.pipeline_mode<synchronous>, transform_indices = @transform_17, window_bounds = array<i64: 1, 128>}, {pipeline_mode = #tpu.pipeline_mode<synchronous>, transform_indices = @transform_18, window_bounds = array<i64: 1, 1>}, {pipeline_mode = #tpu.pipeline_mode<synchronous>, transform_indices = @transform_19, window_bounds = array<i64: 128, 128>}, {pipeline_mode = #tpu.pipeline_mode<synchronous>, transform_indices = @transform_20, window_bounds = array<i64: 1, 128>}, {pipeline_mode = #tpu.pipeline_mode<synchronous>, transform_indices = @transform_21, window_bounds = array<i64: 128, 128>}, {pipeline_mode = #tpu.pipeline_mode<synchronous>, transform_indices = @transform_22, window_bounds = array<i64: 1, 128>}, {transform_indices = @transform_23, window_bounds = array<i64: 1, 16, 16, 128>}, {transform_indices = @transform_24, window_bounds = array<i64: 1, 16, 16, 128>}]} {
    %c16_i32 = arith.constant 16 : i32
    %0 = arith.muli %arg1, %c16_i32 : i32
    %1 = tpu.assume_multiple %0, 16 : i32
    %c0 = arith.constant 0 : index
    %2 = arith.index_cast %1 : i32 to index
    %c0_0 = arith.constant 0 : index
    %c0_1 = arith.constant 0 : index
    %3 = vector.load %arg2[%c0, %2, %c0_0, %c0_1] : memref<1x18x24x128xbf16, #tpu.memory_space<vmem>>, vector<1x18x24x128xbf16>
    %4 = vector.shape_cast %3 : vector<1x18x24x128xbf16> to vector<18x24x128xbf16>
    %5 = vector.shape_cast %4 : vector<18x24x128xbf16> to vector<432x128xbf16>
    %6 = arith.index_cast %1 : i32 to index
    %c0_2 = arith.constant 0 : index
    %c0_3 = arith.constant 0 : index
    %7 = vector.load %arg3[%6, %c0_2, %c0_3] : memref<18x24x1xf32, #tpu.memory_space<vmem>>, vector<18x24x1xf32>
    %c0_4 = arith.constant 0 : index
    %c0_5 = arith.constant 0 : index
    %8 = vector.load %arg4[%c0_4, %c0_5] : memref<128x128xbf16, #tpu.memory_space<vmem>>, vector<128x128xbf16>
    %cst = arith.constant dense<0.000000e+00> : vector<432x128xf32>
    %9 = tpu.matmul %5, %8, %cst {dimension_numbers = #tpu.dot_dimension_numbers<[1], [0], [0], [1], [0, 0, 1, 1], [], []>} : vector<432x128xbf16>, vector<128x128xbf16>, vector<432x128xf32> -> vector<432x128xf32>
    %c0_6 = arith.constant 0 : index
    %c0_7 = arith.constant 0 : index
    %10 = vector.load %arg5[%c0_6, %c0_7] : memref<1x128xf32, #tpu.memory_space<vmem>>, vector<1x128xf32>
    %11 = vector.broadcast %10 : vector<1x128xf32> to vector<432x128xf32>
    %12 = arith.mulf %9, %11 : vector<432x128xf32>
    %c0_8 = arith.constant 0 : index
    %c0_9 = arith.constant 0 : index
    %13 = vector.load %arg6[%c0_8, %c0_9] : memref<1x128xf32, #tpu.memory_space<vmem>>, vector<1x128xf32>
    %14 = vector.broadcast %13 : vector<1x128xf32> to vector<432x128xf32>
    %15 = arith.addf %12, %14 : vector<432x128xf32>
    %16 = arith.negf %15 : vector<432x128xf32>
    %17 = math.exp %16 : vector<432x128xf32>
    %cst_10 = arith.constant 1.000000e+00 : f32
    %18 = vector.broadcast %cst_10 : f32 to vector<432x128xf32>
    %19 = arith.addf %18, %17 : vector<432x128xf32>
    %20 = arith.divf %18, %19 : vector<432x128xf32>
    %21 = arith.mulf %15, %20 : vector<432x128xf32>
    %22 = vector.shape_cast %21 : vector<432x128xf32> to vector<18x24x128xf32>
    %23 = vector.broadcast %7 : vector<18x24x1xf32> to vector<18x24x128xf32>
    %24 = arith.mulf %22, %23 : vector<18x24x128xf32>
    %25 = arith.truncf %24 : vector<18x24x128xf32> to vector<18x24x128xbf16>
    %c0_11 = arith.constant 0 : index
    %c0_12 = arith.constant 0 : index
    %26 = vector.load %arg7[%c0_11, %c0_12] : memref<128x128xbf16, #tpu.memory_space<vmem>>, vector<128x128xbf16>
    %cst_13 = arith.constant dense<0.000000e+00> : vector<432x128xf32>
    %27 = tpu.matmul %5, %26, %cst_13 {dimension_numbers = #tpu.dot_dimension_numbers<[1], [0], [0], [1], [0, 0, 1, 1], [], []>} : vector<432x128xbf16>, vector<128x128xbf16>, vector<432x128xf32> -> vector<432x128xf32>
    %c0_14 = arith.constant 0 : index
    %c0_15 = arith.constant 0 : index
    %28 = vector.load %arg8[%c0_14, %c0_15] : memref<1x128xf32, #tpu.memory_space<vmem>>, vector<1x128xf32>
    %29 = vector.broadcast %28 : vector<1x128xf32> to vector<432x128xf32>
    %30 = arith.mulf %27, %29 : vector<432x128xf32>
    %c0_16 = arith.constant 0 : index
    %c0_17 = arith.constant 0 : index
    %31 = vector.load %arg9[%c0_16, %c0_17] : memref<1x128xf32, #tpu.memory_space<vmem>>, vector<1x128xf32>
    %32 = vector.broadcast %31 : vector<1x128xf32> to vector<432x128xf32>
    %33 = arith.addf %30, %32 : vector<432x128xf32>
    %34 = arith.negf %33 : vector<432x128xf32>
    %35 = math.exp %34 : vector<432x128xf32>
    %cst_18 = arith.constant 1.000000e+00 : f32
    %36 = vector.broadcast %cst_18 : f32 to vector<432x128xf32>
    %37 = arith.addf %36, %35 : vector<432x128xf32>
    %38 = arith.divf %36, %37 : vector<432x128xf32>
    %39 = arith.mulf %33, %38 : vector<432x128xf32>
    %40 = vector.shape_cast %39 : vector<432x128xf32> to vector<18x24x128xf32>
    %41 = vector.broadcast %7 : vector<18x24x1xf32> to vector<18x24x128xf32>
    %42 = arith.mulf %40, %41 : vector<18x24x128xf32>
    %43 = arith.truncf %42 : vector<18x24x128xf32> to vector<18x24x128xbf16>
    %cst_19 = arith.constant 0.000000e+00 : f32
    %44 = vector.broadcast %cst_19 : f32 to vector<256x128xf32>
    %c0_20 = arith.constant 0 : index
    %c0_21 = arith.constant 0 : index
    %45 = vector.load %arg27[%c0_20, %c0_21] : memref<256x128xf32, #tpu.memory_space<vmem>>, vector<256x128xf32>
    tpu.vector_store %arg27[%c0_20, %c0_21], %44 {strides = array<i32>} : memref<256x128xf32, #tpu.memory_space<vmem>>, vector<256x128xf32>,
    %46 = vector.extract_strided_slice %25 {offsets = [0, 0, 0], sizes = [16, 24, 128], strides = [1, 1, 1]} : vector<18x24x128xbf16> to vector<16x24x128xbf16>
    %47 = vector.extract_strided_slice %46 {offsets = [0, 0, 0], sizes = [16, 16, 128], strides = [1, 1, 1]} : vector<16x24x128xbf16> to vector<16x16x128xbf16>
    %48 = vector.extract_strided_slice %46 {offsets = [0, 1, 0], sizes = [16, 16, 128], strides = [1, 1, 1]} : vector<16x24x128xbf16> to vector<16x16x128xbf16>
    %49 = vector.extract_strided_slice %46 {offsets = [0, 2, 0], sizes = [16, 16, 128], strides = [1, 1, 1]} : vector<16x24x128xbf16> to vector<16x16x128xbf16>
    %50 = tpu.concatenate %47, %48, %49 in 2 : vector<16x16x128xbf16>, vector<16x16x128xbf16>, vector<16x16x128xbf16> -> vector<16x16x384xbf16>
    %51 = vector.shape_cast %50 : vector<16x16x384xbf16> to vector<256x384xbf16>
    %c0_22 = arith.constant 0 : index
    %c0_23 = arith.constant 0 : index
    %52 = vector.load %arg27[%c0_22, %c0_23] : memref<256x128xf32, #tpu.memory_space<vmem>>, vector<256x128xf32>
    %c0_24 = arith.constant 0 : index
    %c0_25 = arith.constant 0 : index
    %c0_26 = arith.constant 0 : index
    %53 = vector.load %arg10[%c0_24, %c0_25, %c0_26] : memref<3x384x128xbf16, #tpu.memory_space<vmem>>, vector<1x384x128xbf16>
    %54 = vector.shape_cast %53 : vector<1x384x128xbf16> to vector<384x128xbf16>
    %cst_27 = arith.constant dense<0.000000e+00> : vector<256x128xf32>
    %55 = tpu.matmul %51, %54, %cst_27 {dimension_numbers = #tpu.dot_dimension_numbers<[1], [0], [0], [1], [0, 0, 1, 1], [], []>} : vector<256x384xbf16>, vector<384x128xbf16>, vector<256x128xf32> -> vector<256x128xf32>
    %56 = arith.addf %52, %55 : vector<256x128xf32>
    %c0_28 = arith.constant 0 : index
    %c0_29 = arith.constant 0 : index
    %57 = vector.load %arg27[%c0_28, %c0_29] : memref<256x128xf32, #tpu.memory_space<vmem>>, vector<256x128xf32>
    tpu.vector_store %arg27[%c0_28, %c0_29], %56 {strides = array<i32>} : memref<256x128xf32, #tpu.memory_space<vmem>>, vector<256x128xf32>,
    %58 = vector.extract_strided_slice %25 {offsets = [1, 0, 0], sizes = [16, 24, 128], strides = [1, 1, 1]} : vector<18x24x128xbf16> to vector<16x24x128xbf16>
    %59 = vector.extract_strided_slice %58 {offsets = [0, 0, 0], sizes = [16, 16, 128], strides = [1, 1, 1]} : vector<16x24x128xbf16> to vector<16x16x128xbf16>
    %60 = vector.extract_strided_slice %58 {offsets = [0, 1, 0], sizes = [16, 16, 128], strides = [1, 1, 1]} : vector<16x24x128xbf16> to vector<16x16x128xbf16>
    %61 = vector.extract_strided_slice %58 {offsets = [0, 2, 0], sizes = [16, 16, 128], strides = [1, 1, 1]} : vector<16x24x128xbf16> to vector<16x16x128xbf16>
    %62 = tpu.concatenate %59, %60, %61 in 2 : vector<16x16x128xbf16>, vector<16x16x128xbf16>, vector<16x16x128xbf16> -> vector<16x16x384xbf16>
    %63 = vector.shape_cast %62 : vector<16x16x384xbf16> to vector<256x384xbf16>
    %c0_30 = arith.constant 0 : index
    %c0_31 = arith.constant 0 : index
    %64 = vector.load %arg27[%c0_30, %c0_31] : memref<256x128xf32, #tpu.memory_space<vmem>>, vector<256x128xf32>
    %c1 = arith.constant 1 : index
    %c0_32 = arith.constant 0 : index
    %c0_33 = arith.constant 0 : index
    %65 = vector.load %arg10[%c1, %c0_32, %c0_33] : memref<3x384x128xbf16, #tpu.memory_space<vmem>>, vector<1x384x128xbf16>
    %66 = vector.shape_cast %65 : vector<1x384x128xbf16> to vector<384x128xbf16>
    %cst_34 = arith.constant dense<0.000000e+00> : vector<256x128xf32>
    %67 = tpu.matmul %63, %66, %cst_34 {dimension_numbers = #tpu.dot_dimension_numbers<[1], [0], [0], [1], [0, 0, 1, 1], [], []>} : vector<256x384xbf16>, vector<384x128xbf16>, vector<256x128xf32> -> vector<256x128xf32>
    %68 = arith.addf %64, %67 : vector<256x128xf32>
    %c0_35 = arith.constant 0 : index
    %c0_36 = arith.constant 0 : index
    %69 = vector.load %arg27[%c0_35, %c0_36] : memref<256x128xf32, #tpu.memory_space<vmem>>, vector<256x128xf32>
    tpu.vector_store %arg27[%c0_35, %c0_36], %68 {strides = array<i32>} : memref<256x128xf32, #tpu.memory_space<vmem>>, vector<256x128xf32>,
    %70 = vector.extract_strided_slice %25 {offsets = [2, 0, 0], sizes = [16, 24, 128], strides = [1, 1, 1]} : vector<18x24x128xbf16> to vector<16x24x128xbf16>
    %71 = vector.extract_strided_slice %70 {offsets = [0, 0, 0], sizes = [16, 16, 128], strides = [1, 1, 1]} : vector<16x24x128xbf16> to vector<16x16x128xbf16>
    %72 = vector.extract_strided_slice %70 {offsets = [0, 1, 0], sizes = [16, 16, 128], strides = [1, 1, 1]} : vector<16x24x128xbf16> to vector<16x16x128xbf16>
    %73 = vector.extract_strided_slice %70 {offsets = [0, 2, 0], sizes = [16, 16, 128], strides = [1, 1, 1]} : vector<16x24x128xbf16> to vector<16x16x128xbf16>
    %74 = tpu.concatenate %71, %72, %73 in 2 : vector<16x16x128xbf16>, vector<16x16x128xbf16>, vector<16x16x128xbf16> -> vector<16x16x384xbf16>
    %75 = vector.shape_cast %74 : vector<16x16x384xbf16> to vector<256x384xbf16>
    %c0_37 = arith.constant 0 : index
    %c0_38 = arith.constant 0 : index
    %76 = vector.load %arg27[%c0_37, %c0_38] : memref<256x128xf32, #tpu.memory_space<vmem>>, vector<256x128xf32>
    %c2 = arith.constant 2 : index
    %c0_39 = arith.constant 0 : index
    %c0_40 = arith.constant 0 : index
    %77 = vector.load %arg10[%c2, %c0_39, %c0_40] : memref<3x384x128xbf16, #tpu.memory_space<vmem>>, vector<1x384x128xbf16>
    %78 = vector.shape_cast %77 : vector<1x384x128xbf16> to vector<384x128xbf16>
    %cst_41 = arith.constant dense<0.000000e+00> : vector<256x128xf32>
    %79 = tpu.matmul %75, %78, %cst_41 {dimension_numbers = #tpu.dot_dimension_numbers<[1], [0], [0], [1], [0, 0, 1, 1], [], []>} : vector<256x384xbf16>, vector<384x128xbf16>, vector<256x128xf32> -> vector<256x128xf32>
    %80 = arith.addf %76, %79 : vector<256x128xf32>
    %c0_42 = arith.constant 0 : index
    %c0_43 = arith.constant 0 : index
    %81 = vector.load %arg27[%c0_42, %c0_43] : memref<256x128xf32, #tpu.memory_space<vmem>>, vector<256x128xf32>
    tpu.vector_store %arg27[%c0_42, %c0_43], %80 {strides = array<i32>} : memref<256x128xf32, #tpu.memory_space<vmem>>, vector<256x128xf32>,
    %c0_44 = arith.constant 0 : index
    %c0_45 = arith.constant 0 : index
    %82 = vector.load %arg27[%c0_44, %c0_45] : memref<256x128xf32, #tpu.memory_space<vmem>>, vector<256x128xf32>
    %c0_46 = arith.constant 0 : index
    %c0_47 = arith.constant 0 : index
    %83 = vector.load %arg11[%c0_46, %c0_47] : memref<1x128xf32, #tpu.memory_space<vmem>>, vector<1x128xf32>
    %84 = vector.broadcast %83 : vector<1x128xf32> to vector<256x128xf32>
    %85 = arith.mulf %82, %84 : vector<256x128xf32>
    %c0_48 = arith.constant 0 : index
    %c0_49 = arith.constant 0 : index
    %86 = vector.load %arg12[%c0_48, %c0_49] : memref<1x128xf32, #tpu.memory_space<vmem>>, vector<1x128xf32>
    %87 = vector.broadcast %86 : vector<1x128xf32> to vector<256x128xf32>
    %88 = arith.addf %85, %87 : vector<256x128xf32>
    %89 = arith.negf %88 : vector<256x128xf32>
    %90 = math.exp %89 : vector<256x128xf32>
    %cst_50 = arith.constant 1.000000e+00 : f32
    %91 = vector.broadcast %cst_50 : f32 to vector<256x128xf32>
    %92 = arith.addf %91, %90 : vector<256x128xf32>
    %93 = arith.divf %91, %92 : vector<256x128xf32>
    %94 = arith.mulf %88, %93 : vector<256x128xf32>
    %95 = arith.truncf %94 : vector<256x128xf32> to vector<256x128xbf16>
    %c0_51 = arith.constant 0 : index
    %c0_52 = arith.constant 0 : index
    %96 = vector.load %arg21[%c0_51, %c0_52] : memref<128x128xbf16, #tpu.memory_space<vmem>>, vector<128x128xbf16>
    %cst_53 = arith.constant dense<0.000000e+00> : vector<256x128xf32>
    %97 = tpu.matmul %95, %96, %cst_53 {dimension_numbers = #tpu.dot_dimension_numbers<[1], [0], [0], [1], [0, 0, 1, 1], [], []>} : vector<256x128xbf16>, vector<128x128xbf16>, vector<256x128xf32> -> vector<256x128xf32>
    %c0_54 = arith.constant 0 : index
    %c0_55 = arith.constant 0 : index
    %98 = vector.load %arg22[%c0_54, %c0_55] : memref<1x128xf32, #tpu.memory_space<vmem>>, vector<1x128xf32>
    %99 = vector.broadcast %98 : vector<1x128xf32> to vector<256x128xf32>
    %100 = arith.addf %97, %99 : vector<256x128xf32>
    %101 = vector.shape_cast %100 : vector<256x128xf32> to vector<16x16x128xf32>
    %c0_56 = arith.constant 0 : index
    %c0_57 = arith.constant 0 : index
    %c0_58 = arith.constant 0 : index
    %c0_59 = arith.constant 0 : index
    %102 = vector.load %arg25[%c0_56, %c0_57, %c0_58, %c0_59] : memref<1x16x16x128xf32, #tpu.memory_space<vmem>>, vector<1x16x16x128xf32>
    %103 = vector.shape_cast %102 : vector<1x16x16x128xf32> to vector<16x16x128xf32>
    %104 = vector.shape_cast %101 : vector<16x16x128xf32> to vector<1x16x16x128xf32>
    tpu.vector_store %arg25[%c0_56, %c0_57, %c0_58, %c0_59], %104 {strides = array<i32>} : memref<1x16x16x128xf32, #tpu.memory_space<vmem>>, vector<1x16x16x128xf32>,
    %cst_60 = arith.constant 0.000000e+00 : f32
    %105 = vector.broadcast %cst_60 : f32 to vector<256x128xf32>
    %c0_61 = arith.constant 0 : index
    %c0_62 = arith.constant 0 : index
    %106 = vector.load %arg27[%c0_61, %c0_62] : memref<256x128xf32, #tpu.memory_space<vmem>>, vector<256x128xf32>
    tpu.vector_store %arg27[%c0_61, %c0_62], %105 {strides = array<i32>} : memref<256x128xf32, #tpu.memory_space<vmem>>, vector<256x128xf32>,
    %107 = vector.extract_strided_slice %43 {offsets = [0, 0, 0], sizes = [16, 24, 128], strides = [1, 1, 1]} : vector<18x24x128xbf16> to vector<16x24x128xbf16>
    %108 = vector.extract_strided_slice %107 {offsets = [0, 0, 0], sizes = [16, 16, 128], strides = [1, 1, 1]} : vector<16x24x128xbf16> to vector<16x16x128xbf16>
    %109 = vector.extract_strided_slice %107 {offsets = [0, 1, 0], sizes = [16, 16, 128], strides = [1, 1, 1]} : vector<16x24x128xbf16> to vector<16x16x128xbf16>
    %110 = vector.extract_strided_slice %107 {offsets = [0, 2, 0], sizes = [16, 16, 128], strides = [1, 1, 1]} : vector<16x24x128xbf16> to vector<16x16x128xbf16>
    %111 = tpu.concatenate %108, %109, %110 in 2 : vector<16x16x128xbf16>, vector<16x16x128xbf16>, vector<16x16x128xbf16> -> vector<16x16x384xbf16>
    %112 = vector.shape_cast %111 : vector<16x16x384xbf16> to vector<256x384xbf16>
    %c0_63 = arith.constant 0 : index
    %c0_64 = arith.constant 0 : index
    %113 = vector.load %arg27[%c0_63, %c0_64] : memref<256x128xf32, #tpu.memory_space<vmem>>, vector<256x128xf32>
    %c0_65 = arith.constant 0 : index
    %c0_66 = arith.constant 0 : index
    %c0_67 = arith.constant 0 : index
    %114 = vector.load %arg13[%c0_65, %c0_66, %c0_67] : memref<3x384x128xbf16, #tpu.memory_space<vmem>>, vector<1x384x128xbf16>
    %115 = vector.shape_cast %114 : vector<1x384x128xbf16> to vector<384x128xbf16>
    %cst_68 = arith.constant dense<0.000000e+00> : vector<256x128xf32>
    %116 = tpu.matmul %112, %115, %cst_68 {dimension_numbers = #tpu.dot_dimension_numbers<[1], [0], [0], [1], [0, 0, 1, 1], [], []>} : vector<256x384xbf16>, vector<384x128xbf16>, vector<256x128xf32> -> vector<256x128xf32>
    %117 = arith.addf %113, %116 : vector<256x128xf32>
    %c0_69 = arith.constant 0 : index
    %c0_70 = arith.constant 0 : index
    %118 = vector.load %arg27[%c0_69, %c0_70] : memref<256x128xf32, #tpu.memory_space<vmem>>, vector<256x128xf32>
    tpu.vector_store %arg27[%c0_69, %c0_70], %117 {strides = array<i32>} : memref<256x128xf32, #tpu.memory_space<vmem>>, vector<256x128xf32>,
    %119 = vector.extract_strided_slice %43 {offsets = [1, 0, 0], sizes = [16, 24, 128], strides = [1, 1, 1]} : vector<18x24x128xbf16> to vector<16x24x128xbf16>
    %120 = vector.extract_strided_slice %119 {offsets = [0, 0, 0], sizes = [16, 16, 128], strides = [1, 1, 1]} : vector<16x24x128xbf16> to vector<16x16x128xbf16>
    %121 = vector.extract_strided_slice %119 {offsets = [0, 1, 0], sizes = [16, 16, 128], strides = [1, 1, 1]} : vector<16x24x128xbf16> to vector<16x16x128xbf16>
    %122 = vector.extract_strided_slice %119 {offsets = [0, 2, 0], sizes = [16, 16, 128], strides = [1, 1, 1]} : vector<16x24x128xbf16> to vector<16x16x128xbf16>
    %123 = tpu.concatenate %120, %121, %122 in 2 : vector<16x16x128xbf16>, vector<16x16x128xbf16>, vector<16x16x128xbf16> -> vector<16x16x384xbf16>
    %124 = vector.shape_cast %123 : vector<16x16x384xbf16> to vector<256x384xbf16>
    %c0_71 = arith.constant 0 : index
    %c0_72 = arith.constant 0 : index
    %125 = vector.load %arg27[%c0_71, %c0_72] : memref<256x128xf32, #tpu.memory_space<vmem>>, vector<256x128xf32>
    %c1_73 = arith.constant 1 : index
    %c0_74 = arith.constant 0 : index
    %c0_75 = arith.constant 0 : index
    %126 = vector.load %arg13[%c1_73, %c0_74, %c0_75] : memref<3x384x128xbf16, #tpu.memory_space<vmem>>, vector<1x384x128xbf16>
    %127 = vector.shape_cast %126 : vector<1x384x128xbf16> to vector<384x128xbf16>
    %cst_76 = arith.constant dense<0.000000e+00> : vector<256x128xf32>
    %128 = tpu.matmul %124, %127, %cst_76 {dimension_numbers = #tpu.dot_dimension_numbers<[1], [0], [0], [1], [0, 0, 1, 1], [], []>} : vector<256x384xbf16>, vector<384x128xbf16>, vector<256x128xf32> -> vector<256x128xf32>
    %129 = arith.addf %125, %128 : vector<256x128xf32>
    %c0_77 = arith.constant 0 : index
    %c0_78 = arith.constant 0 : index
    %130 = vector.load %arg27[%c0_77, %c0_78] : memref<256x128xf32, #tpu.memory_space<vmem>>, vector<256x128xf32>
    tpu.vector_store %arg27[%c0_77, %c0_78], %129 {strides = array<i32>} : memref<256x128xf32, #tpu.memory_space<vmem>>, vector<256x128xf32>,
    %131 = vector.extract_strided_slice %43 {offsets = [2, 0, 0], sizes = [16, 24, 128], strides = [1, 1, 1]} : vector<18x24x128xbf16> to vector<16x24x128xbf16>
    %132 = vector.extract_strided_slice %131 {offsets = [0, 0, 0], sizes = [16, 16, 128], strides = [1, 1, 1]} : vector<16x24x128xbf16> to vector<16x16x128xbf16>
    %133 = vector.extract_strided_slice %131 {offsets = [0, 1, 0], sizes = [16, 16, 128], strides = [1, 1, 1]} : vector<16x24x128xbf16> to vector<16x16x128xbf16>
    %134 = vector.extract_strided_slice %131 {offsets = [0, 2, 0], sizes = [16, 16, 128], strides = [1, 1, 1]} : vector<16x24x128xbf16> to vector<16x16x128xbf16>
    %135 = tpu.concatenate %132, %133, %134 in 2 : vector<16x16x128xbf16>, vector<16x16x128xbf16>, vector<16x16x128xbf16> -> vector<16x16x384xbf16>
    %136 = vector.shape_cast %135 : vector<16x16x384xbf16> to vector<256x384xbf16>
    %c0_79 = arith.constant 0 : index
    %c0_80 = arith.constant 0 : index
    %137 = vector.load %arg27[%c0_79, %c0_80] : memref<256x128xf32, #tpu.memory_space<vmem>>, vector<256x128xf32>
    %c2_81 = arith.constant 2 : index
    %c0_82 = arith.constant 0 : index
    %c0_83 = arith.constant 0 : index
    %138 = vector.load %arg13[%c2_81, %c0_82, %c0_83] : memref<3x384x128xbf16, #tpu.memory_space<vmem>>, vector<1x384x128xbf16>
    %139 = vector.shape_cast %138 : vector<1x384x128xbf16> to vector<384x128xbf16>
    %cst_84 = arith.constant dense<0.000000e+00> : vector<256x128xf32>
    %140 = tpu.matmul %136, %139, %cst_84 {dimension_numbers = #tpu.dot_dimension_numbers<[1], [0], [0], [1], [0, 0, 1, 1], [], []>} : vector<256x384xbf16>, vector<384x128xbf16>, vector<256x128xf32> -> vector<256x128xf32>
    %141 = arith.addf %137, %140 : vector<256x128xf32>
    %c0_85 = arith.constant 0 : index
    %c0_86 = arith.constant 0 : index
    %142 = vector.load %arg27[%c0_85, %c0_86] : memref<256x128xf32, #tpu.memory_space<vmem>>, vector<256x128xf32>
    tpu.vector_store %arg27[%c0_85, %c0_86], %141 {strides = array<i32>} : memref<256x128xf32, #tpu.memory_space<vmem>>, vector<256x128xf32>,
    %c0_87 = arith.constant 0 : index
    %c0_88 = arith.constant 0 : index
    %143 = vector.load %arg27[%c0_87, %c0_88] : memref<256x128xf32, #tpu.memory_space<vmem>>, vector<256x128xf32>
    %c0_89 = arith.constant 0 : index
    %c0_90 = arith.constant 0 : index
    %144 = vector.load %arg14[%c0_89, %c0_90] : memref<1x128xf32, #tpu.memory_space<vmem>>, vector<1x128xf32>
    %145 = vector.broadcast %144 : vector<1x128xf32> to vector<256x128xf32>
    %146 = arith.mulf %143, %145 : vector<256x128xf32>
    %c0_91 = arith.constant 0 : index
    %c0_92 = arith.constant 0 : index
    %147 = vector.load %arg15[%c0_91, %c0_92] : memref<1x128xf32, #tpu.memory_space<vmem>>, vector<1x128xf32>
    %148 = vector.broadcast %147 : vector<1x128xf32> to vector<256x128xf32>
    %149 = arith.addf %146, %148 : vector<256x128xf32>
    %150 = arith.negf %149 : vector<256x128xf32>
    %151 = math.exp %150 : vector<256x128xf32>
    %cst_93 = arith.constant 1.000000e+00 : f32
    %152 = vector.broadcast %cst_93 : f32 to vector<256x128xf32>
    %153 = arith.addf %152, %151 : vector<256x128xf32>
    %154 = arith.divf %152, %153 : vector<256x128xf32>
    %155 = arith.mulf %149, %154 : vector<256x128xf32>
    %156 = arith.truncf %155 : vector<256x128xf32> to vector<256x128xbf16>
    %c0_94 = arith.constant 0 : index
    %c0_95 = arith.constant 0 : index
    %157 = vector.load %arg16[%c0_94, %c0_95] : memref<128x128xbf16, #tpu.memory_space<vmem>>, vector<128x128xbf16>
    %cst_96 = arith.constant dense<0.000000e+00> : vector<256x128xf32>
    %158 = tpu.matmul %156, %157, %cst_96 {dimension_numbers = #tpu.dot_dimension_numbers<[1], [0], [0], [1], [0, 0, 1, 1], [], []>} : vector<256x128xbf16>, vector<128x128xbf16>, vector<256x128xf32> -> vector<256x128xf32>
    %c0_97 = arith.constant 0 : index
    %c0_98 = arith.constant 0 : index
    %159 = vector.load %arg17[%c0_97, %c0_98] : memref<1x128xf32, #tpu.memory_space<vmem>>, vector<1x128xf32>
    %160 = vector.broadcast %159 : vector<1x128xf32> to vector<256x128xf32>
    %161 = arith.mulf %158, %160 : vector<256x128xf32>
    %c0_99 = arith.constant 0 : index
    %c0_100 = arith.constant 0 : index
    %162 = vector.load %arg18[%c0_99, %c0_100] : memref<1x128xf32, #tpu.memory_space<vmem>>, vector<1x128xf32>
    %163 = vector.broadcast %162 : vector<1x128xf32> to vector<256x128xf32>
    %164 = arith.addf %161, %163 : vector<256x128xf32>
    %165 = arith.negf %164 : vector<256x128xf32>
    %166 = math.exp %165 : vector<256x128xf32>
    %cst_101 = arith.constant 1.000000e+00 : f32
    %167 = vector.broadcast %cst_101 : f32 to vector<256x128xf32>
    %168 = arith.addf %167, %166 : vector<256x128xf32>
    %169 = arith.divf %167, %168 : vector<256x128xf32>
    %170 = arith.mulf %164, %169 : vector<256x128xf32>
    %c0_102 = arith.constant 0 : index
    %c0_103 = arith.constant 0 : index
    %171 = vector.load %arg19[%c0_102, %c0_103] : memref<1x128xf32, #tpu.memory_space<vmem>>, vector<1x128xf32>
    %172 = vector.broadcast %171 : vector<1x128xf32> to vector<256x128xf32>
    %173 = arith.mulf %170, %172 : vector<256x128xf32>
    %cst_104 = arith.constant dense<0.000000e+00> : vector<256xf32>
    %174 = vector.multi_reduction <add>, %173, %cst_104 [1] : vector<256x128xf32> to vector<256xf32>
    %175 = vector.shape_cast %174 : vector<256xf32> to vector<256x1xf32>
    %c0_105 = arith.constant 0 : index
    %c0_106 = arith.constant 0 : index
    %176 = vector.load %arg20[%c0_105, %c0_106] : memref<1x1xf32, #tpu.memory_space<vmem>>, vector<1x1xf32>
    %177 = vector.broadcast %176 : vector<1x1xf32> to vector<256x1xf32>
    %178 = arith.addf %175, %177 : vector<256x1xf32>
    %179 = arith.negf %178 : vector<256x1xf32>
    %180 = math.exp %179 : vector<256x1xf32>
    %cst_107 = arith.constant 1.000000e+00 : f32
    %181 = vector.broadcast %cst_107 : f32 to vector<256x1xf32>
    %182 = arith.addf %181, %180 : vector<256x1xf32>
    %183 = arith.divf %181, %182 : vector<256x1xf32>
    %184 = vector.broadcast %183 : vector<256x1xf32> to vector<256x128xf32>
    %185 = arith.mulf %170, %184 : vector<256x128xf32>
    %186 = arith.truncf %185 : vector<256x128xf32> to vector<256x128xbf16>
    %c0_108 = arith.constant 0 : index
    %c0_109 = arith.constant 0 : index
    %187 = vector.load %arg23[%c0_108, %c0_109] : memref<128x128xbf16, #tpu.memory_space<vmem>>, vector<128x128xbf16>
    %cst_110 = arith.constant dense<0.000000e+00> : vector<256x128xf32>
    %188 = tpu.matmul %186, %187, %cst_110 {dimension_numbers = #tpu.dot_dimension_numbers<[1], [0], [0], [1], [0, 0, 1, 1], [], []>} : vector<256x128xbf16>, vector<128x128xbf16>, vector<256x128xf32> -> vector<256x128xf32>
    %c0_111 = arith.constant 0 : index
    %c0_112 = arith.constant 0 : index
    %189 = vector.load %arg24[%c0_111, %c0_112] : memref<1x128xf32, #tpu.memory_space<vmem>>, vector<1x128xf32>
    %190 = vector.broadcast %189 : vector<1x128xf32> to vector<256x128xf32>
    %191 = arith.addf %188, %190 : vector<256x128xf32>
    %192 = vector.shape_cast %191 : vector<256x128xf32> to vector<16x16x128xf32>
    %c0_113 = arith.constant 0 : index
    %c0_114 = arith.constant 0 : index
    %c0_115 = arith.constant 0 : index
    %c0_116 = arith.constant 0 : index
    %193 = vector.load %arg26[%c0_113, %c0_114, %c0_115, %c0_116] : memref<1x16x16x128xf32, #tpu.memory_space<vmem>>, vector<1x16x16x128xf32>
    %194 = vector.shape_cast %193 : vector<1x16x16x128xf32> to vector<16x16x128xf32>
    %195 = vector.shape_cast %192 : vector<16x16x128xf32> to vector<1x16x16x128xf32>
    tpu.vector_store %arg26[%c0_113, %c0_114, %c0_115, %c0_116], %195 {strides = array<i32>} : memref<1x16x16x128xf32, #tpu.memory_space<vmem>>, vector<1x16x16x128xf32>,
    return
  }
  func.func @transform_0(%arg0: i32, %arg1: i32) -> (i32, i32, i32, i32) {
    %c0_i32 = arith.constant 0 : i32
    %c0_i32_0 = arith.constant 0 : i32
    %c0_i32_1 = arith.constant 0 : i32
    %c0_i32_2 = arith.constant 0 : i32
    return %arg0, %c0_i32, %c0_i32_0, %c0_i32_1 : i32, i32, i32, i32
  }
  func.func @transform_1(%arg0: i32, %arg1: i32) -> (i32, i32, i32) {
    %c0_i32 = arith.constant 0 : i32
    %c0_i32_0 = arith.constant 0 : i32
    %c0_i32_1 = arith.constant 0 : i32
    %c0_i32_2 = arith.constant 0 : i32
    return %c0_i32, %c0_i32_0, %c0_i32_1 : i32, i32, i32
  }
  func.func @transform_2(%arg0: i32, %arg1: i32) -> (i32, i32) {
    %c0_i32 = arith.constant 0 : i32
    %c0_i32_0 = arith.constant 0 : i32
    %c0_i32_1 = arith.constant 0 : i32
    return %c0_i32, %c0_i32_0 : i32, i32
  }
  func.func @transform_3(%arg0: i32, %arg1: i32) -> (i32, i32) {
    %c0_i32 = arith.constant 0 : i32
    %c0_i32_0 = arith.constant 0 : i32
    %c0_i32_1 = arith.constant 0 : i32
    return %c0_i32, %c0_i32_0 : i32, i32
  }
  func.func @transform_4(%arg0: i32, %arg1: i32) -> (i32, i32) {
    %c0_i32 = arith.constant 0 : i32
    %c0_i32_0 = arith.constant 0 : i32
    %c0_i32_1 = arith.constant 0 : i32
    return %c0_i32, %c0_i32_0 : i32, i32
  }
  func.func @transform_5(%arg0: i32, %arg1: i32) -> (i32, i32) {
    %c0_i32 = arith.constant 0 : i32
    %c0_i32_0 = arith.constant 0 : i32
    %c0_i32_1 = arith.constant 0 : i32
    return %c0_i32, %c0_i32_0 : i32, i32
  }
  func.func @transform_6(%arg0: i32, %arg1: i32) -> (i32, i32) {
    %c0_i32 = arith.constant 0 : i32
    %c0_i32_0 = arith.constant 0 : i32
    %c0_i32_1 = arith.constant 0 : i32
    return %c0_i32, %c0_i32_0 : i32, i32
  }
  func.func @transform_7(%arg0: i32, %arg1: i32) -> (i32, i32) {
    %c0_i32 = arith.constant 0 : i32
    %c0_i32_0 = arith.constant 0 : i32
    %c0_i32_1 = arith.constant 0 : i32
    return %c0_i32, %c0_i32_0 : i32, i32
  }
  func.func @transform_8(%arg0: i32, %arg1: i32) -> (i32, i32, i32) {
    %c0_i32 = arith.constant 0 : i32
    %c0_i32_0 = arith.constant 0 : i32
    %c0_i32_1 = arith.constant 0 : i32
    %c0_i32_2 = arith.constant 0 : i32
    return %c0_i32, %c0_i32_0, %c0_i32_1 : i32, i32, i32
  }
  func.func @transform_9(%arg0: i32, %arg1: i32) -> (i32, i32) {
    %c0_i32 = arith.constant 0 : i32
    %c0_i32_0 = arith.constant 0 : i32
    %c0_i32_1 = arith.constant 0 : i32
    return %c0_i32, %c0_i32_0 : i32, i32
  }
  func.func @transform_10(%arg0: i32, %arg1: i32) -> (i32, i32) {
    %c0_i32 = arith.constant 0 : i32
    %c0_i32_0 = arith.constant 0 : i32
    %c0_i32_1 = arith.constant 0 : i32
    return %c0_i32, %c0_i32_0 : i32, i32
  }
  func.func @transform_11(%arg0: i32, %arg1: i32) -> (i32, i32, i32) {
    %c0_i32 = arith.constant 0 : i32
    %c0_i32_0 = arith.constant 0 : i32
    %c0_i32_1 = arith.constant 0 : i32
    %c0_i32_2 = arith.constant 0 : i32
    return %c0_i32, %c0_i32_0, %c0_i32_1 : i32, i32, i32
  }
  func.func @transform_12(%arg0: i32, %arg1: i32) -> (i32, i32) {
    %c0_i32 = arith.constant 0 : i32
    %c0_i32_0 = arith.constant 0 : i32
    %c0_i32_1 = arith.constant 0 : i32
    return %c0_i32, %c0_i32_0 : i32, i32
  }
  func.func @transform_13(%arg0: i32, %arg1: i32) -> (i32, i32) {
    %c0_i32 = arith.constant 0 : i32
    %c0_i32_0 = arith.constant 0 : i32
    %c0_i32_1 = arith.constant 0 : i32
    return %c0_i32, %c0_i32_0 : i32, i32
  }
  func.func @transform_14(%arg0: i32, %arg1: i32) -> (i32, i32) {
    %c0_i32 = arith.constant 0 : i32
    %c0_i32_0 = arith.constant 0 : i32
    %c0_i32_1 = arith.constant 0 : i32
    return %c0_i32, %c0_i32_0 : i32, i32
  }
  func.func @transform_15(%arg0: i32, %arg1: i32) -> (i32, i32) {
    %c0_i32 = arith.constant 0 : i32
    %c0_i32_0 = arith.constant 0 : i32
    %c0_i32_1 = arith.constant 0 : i32
    return %c0_i32, %c0_i32_0 : i32, i32
  }
  func.func @transform_16(%arg0: i32, %arg1: i32) -> (i32, i32) {
    %c0_i32 = arith.constant 0 : i32
    %c0_i32_0 = arith.constant 0 : i32
    %c0_i32_1 = arith.constant 0 : i32
    return %c0_i32, %c0_i32_0 : i32, i32
  }
  func.func @transform_17(%arg0: i32, %arg1: i32) -> (i32, i32) {
    %c0_i32 = arith.constant 0 : i32
    %c0_i32_0 = arith.constant 0 : i32
    %c0_i32_1 = arith.constant 0 : i32
    return %c0_i32, %c0_i32_0 : i32, i32
  }
  func.func @transform_18(%arg0: i32, %arg1: i32) -> (i32, i32) {
    %c0_i32 = arith.constant 0 : i32
    %c0_i32_0 = arith.constant 0 : i32
    %c0_i32_1 = arith.constant 0 : i32
    return %c0_i32, %c0_i32_0 : i32, i32
  }
  func.func @transform_19(%arg0: i32, %arg1: i32) -> (i32, i32) {
    %c0_i32 = arith.constant 0 : i32
    %c0_i32_0 = arith.constant 0 : i32
    %c0_i32_1 = arith.constant 0 : i32
    return %c0_i32, %c0_i32_0 : i32, i32
  }
  func.func @transform_20(%arg0: i32, %arg1: i32) -> (i32, i32) {
    %c0_i32 = arith.constant 0 : i32
    %c0_i32_0 = arith.constant 0 : i32
    %c0_i32_1 = arith.constant 0 : i32
    return %c0_i32, %c0_i32_0 : i32, i32
  }
  func.func @transform_21(%arg0: i32, %arg1: i32) -> (i32, i32) {
    %c0_i32 = arith.constant 0 : i32
    %c0_i32_0 = arith.constant 0 : i32
    %c0_i32_1 = arith.constant 0 : i32
    return %c0_i32, %c0_i32_0 : i32, i32
  }
  func.func @transform_22(%arg0: i32, %arg1: i32) -> (i32, i32) {
    %c0_i32 = arith.constant 0 : i32
    %c0_i32_0 = arith.constant 0 : i32
    %c0_i32_1 = arith.constant 0 : i32
    return %c0_i32, %c0_i32_0 : i32, i32
  }
  func.func @transform_23(%arg0: i32, %arg1: i32) -> (i32, i32, i32, i32) {
    %c0_i32 = arith.constant 0 : i32
    %c0_i32_0 = arith.constant 0 : i32
    %c0_i32_1 = arith.constant 0 : i32
    return %arg0, %arg1, %c0_i32, %c0_i32_0 : i32, i32, i32, i32
  }
  func.func @transform_24(%arg0: i32, %arg1: i32) -> (i32, i32, i32, i32) {
    %c0_i32 = arith.constant 0 : i32
    %c0_i32_0 = arith.constant 0 : i32
    %c0_i32_1 = arith.constant 0 : i32
    return %arg0, %arg1, %c0_i32, %c0_i32_0 : i32, i32, i32, i32
  }
}

</mosaic_0001>

<llo_original>
// kernel: pose_head_forward.1
$region0: #{pose_head_forward.1}
  #allocation0 [shape = 'u32[]', space=smem, size = 0x4, offset = 0x4, fixed_abs, tag = 'smem constant byte address 0x4 - core index']
  #allocation1 [shape = 'u32[144,128]{1,0:T(1,128)}', space=vmem, size = 0x12000, scoped, tag = 'internal scratch']
  #allocation2 [shape = 'f32[256,128]{1,0:T(8,128)}', space=vmem, size = 0x20000, scoped, tag = 'scratch operand']
  #allocation3 [shape = 'f32[1,1]{1,0:T(1,128)S(1)}', space=vmem, size = 0x200, scoped, tag = 'scoped memory for pose_head_forward.1']
  %s0 = inlined_call_operand.vmem [shape: bf16[2,18,24,128], index: 0, kind: input, shape index: {}]
  %s1 = inlined_call_operand.vmem [shape: f32[18,24,1], index: 1, kind: input, shape index: {}]
  %s2 = inlined_call_operand.vmem [shape: bf16[128,128], index: 2, kind: input, shape index: {}]
  %s3 = inlined_call_operand.vmem [shape: f32[1,128], index: 3, kind: input, shape index: {}]
  %s4 = inlined_call_operand.vmem [shape: f32[1,128], index: 4, kind: input, shape index: {}]
  %s5 = inlined_call_operand.vmem [shape: bf16[128,128], index: 5, kind: input, shape index: {}]
  %s6 = inlined_call_operand.vmem [shape: f32[1,128], index: 6, kind: input, shape index: {}]
  %s7 = inlined_call_operand.vmem [shape: f32[1,128], index: 7, kind: input, shape index: {}]
  %s8 = inlined_call_operand.vmem [shape: bf16[3,384,128], index: 8, kind: input, shape index: {}]
  %s9 = inlined_call_operand.vmem [shape: f32[1,128], index: 9, kind: input, shape index: {}]
  %s10 = inlined_call_operand.vmem [shape: f32[1,128], index: 10, kind: input, shape index: {}]
  %s11 = inlined_call_operand.vmem [shape: bf16[3,384,128], index: 11, kind: input, shape index: {}]
  %s12 = inlined_call_operand.vmem [shape: f32[1,128], index: 12, kind: input, shape index: {}]
  %s13 = inlined_call_operand.vmem [shape: f32[1,128], index: 13, kind: input, shape index: {}]
  %s14 = inlined_call_operand.vmem [shape: bf16[128,128], index: 14, kind: input, shape index: {}]
  %s15 = inlined_call_operand.vmem [shape: f32[1,128], index: 15, kind: input, shape index: {}]
  %s16 = inlined_call_operand.vmem [shape: f32[1,128], index: 16, kind: input, shape index: {}]
  %s17 = inlined_call_operand.vmem [shape: f32[1,128], index: 17, kind: input, shape index: {}]
  %s18 = inlined_call_operand.<no memory space> [shape: f32[1,1], index: 18, kind: input, shape index: {}]
  %s19 = inlined_call_operand.vmem [shape: bf16[128,128], index: 19, kind: input, shape index: {}]
  %s20 = inlined_call_operand.vmem [shape: f32[1,128], index: 20, kind: input, shape index: {}]
  %s21 = inlined_call_operand.vmem [shape: bf16[128,128], index: 21, kind: input, shape index: {}]
  %s22 = inlined_call_operand.vmem [shape: f32[1,128], index: 22, kind: input, shape index: {}]
  %s23 = inlined_call_operand.vmem [shape: f32[2,16,16,128], index: 23, kind: output, shape index: {0}]
  %s24 = inlined_call_operand.vmem [shape: f32[2,16,16,128], index: 24, kind: output, shape index: {1}]
  %25 = xla_tuple %s23, %s24
  %s26 = sld [smem:[#allocation0]]
  $region133: #{pose_head_forward.1} parent=0
    _
  %s28 = ssub.s32 1, %s26
  %s29 = scalar_select 0, %s28, %s26
  %v30 = vstv %s18
  %31 = vst [vmem:[#allocation3] sm:$0x1] %v30
  loop: start=0, step=1, limit=4
  $region2: #{pose_head_forward.1} parent=0 // loop_pre_header
    _
  $region3: #{pose_head_forward.1} parent=0 // loop_header
    %s33 = sphi 0, %s37
    %p34 = scmp.ge.s32.totalorder %s33, 4
    %s40 = sphi 0, %s52
    %s41 = sphi 0, %s48
    %s42 = sphi 0, %s40
    %s43 = sphi 0, %s41
    %s44 = sphi 0, %s42
    %s45 = sphi 0, %s43
    %s55 = sphi 0, %s57
    %s58 = sphi 0, %s55
    %s59 = sphi 0, %s58
    %s75 = sphi 0, %s59
    %s79 = sphi 0, %s79
    %s81 = sphi 0, %s79
    %s82 = sphi 0, %s81
    %s96 = sphi 0, %s82
    %s100 = sphi 0, %s100
    %s102 = sphi 0, %s100
    %s103 = sphi 0, %s102
    %s117 = sphi 0, %s103
    %s121 = sphi 0, %s121
    %s123 = sphi 0, %s121
    %s124 = sphi 0, %s123
    %s138 = sphi 0, %s124
    %s142 = sphi 0, %s142
    %s144 = sphi 0, %s142
    %s145 = sphi 0, %s144
    %s159 = sphi 0, %s145
    %s163 = sphi 0, %s163
    %s165 = sphi 0, %s163
    %s166 = sphi 0, %s165
    %s180 = sphi 0, %s166
    %s184 = sphi 0, %s184
    %s186 = sphi 0, %s184
    %s187 = sphi 0, %s186
    %s201 = sphi 0, %s187
    %s205 = sphi 0, %s205
    %s207 = sphi 0, %s205
    %s208 = sphi 0, %s207
    %s222 = sphi 0, %s208
    %s226 = sphi 0, %s226
    %s228 = sphi 0, %s226
    %s229 = sphi 0, %s228
    %s243 = sphi 0, %s229
    %s247 = sphi 0, %s247
    %s249 = sphi 0, %s247
    %s250 = sphi 0, %s249
    %s264 = sphi 0, %s250
    %s268 = sphi 0, %s268
    %s270 = sphi 0, %s268
    %s271 = sphi 0, %s270
    %s285 = sphi 0, %s271
    %s289 = sphi 0, %s289
    %s291 = sphi 0, %s289
    %s292 = sphi 0, %s291
    %s306 = sphi 0, %s292
    %s310 = sphi 0, %s310
    %s312 = sphi 0, %s310
    %s313 = sphi 0, %s312
    %s327 = sphi 0, %s313
    %s331 = sphi 0, %s331
    %s333 = sphi 0, %s331
    %s334 = sphi 0, %s333
    %s348 = sphi 0, %s334
    %s352 = sphi 0, %s352
    %s354 = sphi 0, %s352
    %s355 = sphi 0, %s354
    %s369 = sphi 0, %s355
    %s373 = sphi 0, %s373
    %s375 = sphi 0, %s373
    %s376 = sphi 0, %s375
    %s390 = sphi 0, %s376
    %s394 = sphi 0, %s394
    %s396 = sphi 0, %s394
    %s397 = sphi 0, %s396
    %s411 = sphi 0, %s397
    %s415 = sphi 0, %s415
    %s417 = sphi 0, %s415
    %s418 = sphi 0, %s417
    %s432 = sphi 0, %s418
    %s436 = sphi 0, %s436
    %s438 = sphi 0, %s436
    %s439 = sphi 0, %s438
    %s453 = sphi 0, %s439
    %s457 = sphi 0, %s457
    %s459 = sphi 0, %s457
    %s460 = sphi 0, %s459
    %s474 = sphi 0, %s460
    %s478 = sphi 0, %s478
    %s480 = sphi 0, %s478
    %s481 = sphi 0, %s480
    %s495 = sphi 0, %s481
    %s499 = sphi 0, %s499
    %s501 = sphi 0, %s499
    %s502 = sphi 0, %s501
    %s516 = sphi 0, %s502
    %s520 = sphi 0, %s520
    %s522 = sphi 0, %s520
    %s523 = sphi 0, %s522
    %s537 = sphi 0, %s523
    %s545 = sphi 0, %s547
    %s548 = sphi 0, %s545
    %s549 = sphi 0, %s548
    %s565 = sphi 0, %s549
    %s573 = sphi 0, %s575
    %s576 = sphi 0, %s573
    %s577 = sphi 0, %s576
    %s593 = sphi 0, %s577
  $region4: #{pose_head_forward.1} parent=0 // loop_header_branch
    %36 = sbr.rel (%p34) target = $region8
  $region5: #{pose_head_forward.1} parent=0 // loop_body
    %s38 = ssub.s32 %s33, 1
    %s39 = ssub.s32 %s33, 2
    %s46 = sadd.s32 1, %s41
    %p47 = scmp.ge.s32.totalorder %s46, 1
    %s48 = scalar_select %p47, 0, %s46
    %s49 = sadd.s32 1, %s40
    %s50 = scalar_select %p47, %s49, %s40
    %p51 = scmp.ge.s32.totalorder %s50, 2
    %s52 = scalar_select %p51, 0, %s50
    %s53 = ssub.s32 %s40, %s52
    %p54 = scmp.eq.s32.totalorder %s53, 0
    %s56 = sadd.s32 %s55, 1
    %s57 = scalar_select %p54, %s55, %s56
    %p60 = pneg %p54
    %p61 = scmp.eq.s32.totalorder %s33, 1
    %p62 = por %p60, %p61
    %p63 = scmp.ne.s32.totalorder %s55, %s58
    %p64 = scmp.eq.s32.totalorder %s33, 0
    %p65 = por %p63, %p64
    %p66 = scmp.ne.s32.totalorder %s55, %s58
    %p67 = scmp.eq.s32.totalorder %s38, 1
    %p68 = por %p66, %p67
    %p69 = scmp.ne.s32.totalorder %s58, %s59
    %p70 = scmp.eq.s32.totalorder %s38, 0
    %p71 = por %p69, %p70
    %p72 = scmp.ne.s32.totalorder %s58, %s59
    %p73 = scmp.eq.s32.totalorder %s39, 1
    %p74 = por %p72, %p73
    %p76 = scmp.ne.s32.totalorder %s59, %s75
    %p77 = scmp.eq.s32.totalorder %s39, 0
    %p78 = por %p76, %p77
    %s80 = sadd.s32 %s79, 1
    %p83 = scmp.eq.s32.totalorder %s33, 1
    %p84 = scmp.ne.s32.totalorder %s79, %s81
    %p85 = scmp.eq.s32.totalorder %s33, 0
    %p86 = por %p84, %p85
    %p87 = scmp.ne.s32.totalorder %s79, %s81
    %p88 = scmp.eq.s32.totalorder %s38, 1
    %p89 = por %p87, %p88
    %p90 = scmp.ne.s32.totalorder %s81, %s82
    %p91 = scmp.eq.s32.totalorder %s38, 0
    %p92 = por %p90, %p91
    %p93 = scmp.ne.s32.totalorder %s81, %s82
    %p94 = scmp.eq.s32.totalorder %s39, 1
    %p95 = por %p93, %p94
    %p97 = scmp.ne.s32.totalorder %s82, %s96
    %p98 = scmp.eq.s32.totalorder %s39, 0
    %p99 = por %p97, %p98
    %s101 = sadd.s32 %s100, 1
    %p104 = scmp.eq.s32.totalorder %s33, 1
    %p105 = scmp.ne.s32.totalorder %s100, %s102
    %p106 = scmp.eq.s32.totalorder %s33, 0
    %p107 = por %p105, %p106
    %p108 = scmp.ne.s32.totalorder %s100, %s102
    %p109 = scmp.eq.s32.totalorder %s38, 1
    %p110 = por %p108, %p109
    %p111 = scmp.ne.s32.totalorder %s102, %s103
    %p112 = scmp.eq.s32.totalorder %s38, 0
    %p113 = por %p111, %p112
    %p114 = scmp.ne.s32.totalorder %s102, %s103
    %p115 = scmp.eq.s32.totalorder %s39, 1
    %p116 = por %p114, %p115
    %p118 = scmp.ne.s32.totalorder %s103, %s117
    %p119 = scmp.eq.s32.totalorder %s39, 0
    %p120 = por %p118, %p119
    %s122 = sadd.s32 %s121, 1
    %p125 = scmp.eq.s32.totalorder %s33, 1
    %p126 = scmp.ne.s32.totalorder %s121, %s123
    %p127 = scmp.eq.s32.totalorder %s33, 0
    %p128 = por %p126, %p127
    %p129 = scmp.ne.s32.totalorder %s121, %s123
    %p130 = scmp.eq.s32.totalorder %s38, 1
    %p131 = por %p129, %p130
    %p132 = scmp.ne.s32.totalorder %s123, %s124
    %p133 = scmp.eq.s32.totalorder %s38, 0
    %p134 = por %p132, %p133
    %p135 = scmp.ne.s32.totalorder %s123, %s124
    %p136 = scmp.eq.s32.totalorder %s39, 1
    %p137 = por %p135, %p136
    %p139 = scmp.ne.s32.totalorder %s124, %s138
    %p140 = scmp.eq.s32.totalorder %s39, 0
    %p141 = por %p139, %p140
    %s143 = sadd.s32 %s142, 1
    %p146 = scmp.eq.s32.totalorder %s33, 1
    %p147 = scmp.ne.s32.totalorder %s142, %s144
    %p148 = scmp.eq.s32.totalorder %s33, 0
    %p149 = por %p147, %p148
    %p150 = scmp.ne.s32.totalorder %s142, %s144
    %p151 = scmp.eq.s32.totalorder %s38, 1
    %p152 = por %p150, %p151
    %p153 = scmp.ne.s32.totalorder %s144, %s145
    %p154 = scmp.eq.s32.totalorder %s38, 0
    %p155 = por %p153, %p154
    %p156 = scmp.ne.s32.totalorder %s144, %s145
    %p157 = scmp.eq.s32.totalorder %s39, 1
    %p158 = por %p156, %p157
    %p160 = scmp.ne.s32.totalorder %s145, %s159
    %p161 = scmp.eq.s32.totalorder %s39, 0
    %p162 = por %p160, %p161
    %s164 = sadd.s32 %s163, 1
    %p167 = scmp.eq.s32.totalorder %s33, 1
    %p168 = scmp.ne.s32.totalorder %s163, %s165
    %p169 = scmp.eq.s32.totalorder %s33, 0
    %p170 = por %p168, %p169
    %p171 = scmp.ne.s32.totalorder %s163, %s165
    %p172 = scmp.eq.s32.totalorder %s38, 1
    %p173 = por %p171, %p172
    %p174 = scmp.ne.s32.totalorder %s165, %s166
    %p175 = scmp.eq.s32.totalorder %s38, 0
    %p176 = por %p174, %p175
    %p177 = scmp.ne.s32.totalorder %s165, %s166
    %p178 = scmp.eq.s32.totalorder %s39, 1
    %p179 = por %p177, %p178
    %p181 = scmp.ne.s32.totalorder %s166, %s180
    %p182 = scmp.eq.s32.totalorder %s39, 0
    %p183 = por %p181, %p182
    %s185 = sadd.s32 %s184, 1
    %p188 = scmp.eq.s32.totalorder %s33, 1
    %p189 = scmp.ne.s32.totalorder %s184, %s186
    %p190 = scmp.eq.s32.totalorder %s33, 0
    %p191 = por %p189, %p190
    %p192 = scmp.ne.s32.totalorder %s184, %s186
    %p193 = scmp.eq.s32.totalorder %s38, 1
    %p194 = por %p192, %p193
    %p195 = scmp.ne.s32.totalorder %s186, %s187
    %p196 = scmp.eq.s32.totalorder %s38, 0
    %p197 = por %p195, %p196
    %p198 = scmp.ne.s32.totalorder %s186, %s187
    %p199 = scmp.eq.s32.totalorder %s39, 1
    %p200 = por %p198, %p199
    %p202 = scmp.ne.s32.totalorder %s187, %s201
    %p203 = scmp.eq.s32.totalorder %s39, 0
    %p204 = por %p202, %p203
    %s206 = sadd.s32 %s205, 1
    %p209 = scmp.eq.s32.totalorder %s33, 1
    %p210 = scmp.ne.s32.totalorder %s205, %s207
    %p211 = scmp.eq.s32.totalorder %s33, 0
    %p212 = por %p210, %p211
    %p213 = scmp.ne.s32.totalorder %s205, %s207
    %p214 = scmp.eq.s32.totalorder %s38, 1
    %p215 = por %p213, %p214
    %p216 = scmp.ne.s32.totalorder %s207, %s208
    %p217 = scmp.eq.s32.totalorder %s38, 0
    %p218 = por %p216, %p217
    %p219 = scmp.ne.s32.totalorder %s207, %s208
    %p220 = scmp.eq.s32.totalorder %s39, 1
    %p221 = por %p219, %p220
    %p223 = scmp.ne.s32.totalorder %s208, %s222
    %p224 = scmp.eq.s32.totalorder %s39, 0
    %p225 = por %p223, %p224
    %s227 = sadd.s32 %s226, 1
    %p230 = scmp.eq.s32.totalorder %s33, 1
    %p231 = scmp.ne.s32.totalorder %s226, %s228
    %p232 = scmp.eq.s32.totalorder %s33, 0
    %p233 = por %p231, %p232
    %p234 = scmp.ne.s32.totalorder %s226, %s228
    %p235 = scmp.eq.s32.totalorder %s38, 1
    %p236 = por %p234, %p235
    %p237 = scmp.ne.s32.totalorder %s228, %s229
    %p238 = scmp.eq.s32.totalorder %s38, 0
    %p239 = por %p237, %p238
    %p240 = scmp.ne.s32.totalorder %s228, %s229
    %p241 = scmp.eq.s32.totalorder %s39, 1
    %p242 = por %p240, %p241
    %p244 = scmp.ne.s32.totalorder %s229, %s243
    %p245 = scmp.eq.s32.totalorder %s39, 0
    %p246 = por %p244, %p245
    %s248 = sadd.s32 %s247, 1
    %p251 = scmp.eq.s32.totalorder %s33, 1
    %p252 = scmp.ne.s32.totalorder %s247, %s249
    %p253 = scmp.eq.s32.totalorder %s33, 0
    %p254 = por %p252, %p253
    %p255 = scmp.ne.s32.totalorder %s247, %s249
    %p256 = scmp.eq.s32.totalorder %s38, 1
    %p257 = por %p255, %p256
    %p258 = scmp.ne.s32.totalorder %s249, %s250
    %p259 = scmp.eq.s32.totalorder %s38, 0
    %p260 = por %p258, %p259
    %p261 = scmp.ne.s32.totalorder %s249, %s250
    %p262 = scmp.eq.s32.totalorder %s39, 1
    %p263 = por %p261, %p262
    %p265 = scmp.ne.s32.totalorder %s250, %s264
    %p266 = scmp.eq.s32.totalorder %s39, 0
    %p267 = por %p265, %p266
    %s269 = sadd.s32 %s268, 1
    %p272 = scmp.eq.s32.totalorder %s33, 1
    %p273 = scmp.ne.s32.totalorder %s268, %s270
    %p274 = scmp.eq.s32.totalorder %s33, 0
    %p275 = por %p273, %p274
    %p276 = scmp.ne.s32.totalorder %s268, %s270
    %p277 = scmp.eq.s32.totalorder %s38, 1
    %p278 = por %p276, %p277
    %p279 = scmp.ne.s32.totalorder %s270, %s271
    %p280 = scmp.eq.s32.totalorder %s38, 0
    %p281 = por %p279, %p280
    %p282 = scmp.ne.s32.totalorder %s270, %s271
    %p283 = scmp.eq.s32.totalorder %s39, 1
    %p284 = por %p282, %p283
    %p286 = scmp.ne.s32.totalorder %s271, %s285
    %p287 = scmp.eq.s32.totalorder %s39, 0
    %p288 = por %p286, %p287
    %s290 = sadd.s32 %s289, 1
    %p293 = scmp.eq.s32.totalorder %s33, 1
    %p294 = scmp.ne.s32.totalorder %s289, %s291
    %p295 = scmp.eq.s32.totalorder %s33, 0
    %p296 = por %p294, %p295
    %p297 = scmp.ne.s32.totalorder %s289, %s291
    %p298 = scmp.eq.s32.totalorder %s38, 1
    %p299 = por %p297, %p298
    %p300 = scmp.ne.s32.totalorder %s291, %s292
    %p301 = scmp.eq.s32.totalorder %s38, 0
    %p302 = por %p300, %p301
    %p303 = scmp.ne.s32.totalorder %s291, %s292
    %p304 = scmp.eq.s32.totalorder %s39, 1
    %p305 = por %p303, %p304
    %p307 = scmp.ne.s32.totalorder %s292, %s306
    %p308 = scmp.eq.s32.totalorder %s39, 0
    %p309 = por %p307, %p308
    %s311 = sadd.s32 %s310, 1
    %p314 = scmp.eq.s32.totalorder %s33, 1
    %p315 = scmp.ne.s32.totalorder %s310, %s312
    %p316 = scmp.eq.s32.totalorder %s33, 0
    %p317 = por %p315, %p316
    %p318 = scmp.ne.s32.totalorder %s310, %s312
    %p319 = scmp.eq.s32.totalorder %s38, 1
    %p320 = por %p318, %p319
    %p321 = scmp.ne.s32.totalorder %s312, %s313
    %p322 = scmp.eq.s32.totalorder %s38, 0
    %p323 = por %p321, %p322
    %p324 = scmp.ne.s32.totalorder %s312, %s313
    %p325 = scmp.eq.s32.totalorder %s39, 1
    %p326 = por %p324, %p325
    %p328 = scmp.ne.s32.totalorder %s313, %s327
    %p329 = scmp.eq.s32.totalorder %s39, 0
    %p330 = por %p328, %p329
    %s332 = sadd.s32 %s331, 1
    %p335 = scmp.eq.s32.totalorder %s33, 1
    %p336 = scmp.ne.s32.totalorder %s331, %s333
    %p337 = scmp.eq.s32.totalorder %s33, 0
    %p338 = por %p336, %p337
    %p339 = scmp.ne.s32.totalorder %s331, %s333
    %p340 = scmp.eq.s32.totalorder %s38, 1
    %p341 = por %p339, %p340
    %p342 = scmp.ne.s32.totalorder %s333, %s334
    %p343 = scmp.eq.s32.totalorder %s38, 0
    %p344 = por %p342, %p343
    %p345 = scmp.ne.s32.totalorder %s333, %s334
    %p346 = scmp.eq.s32.totalorder %s39, 1
    %p347 = por %p345, %p346
    %p349 = scmp.ne.s32.totalorder %s334, %s348
    %p350 = scmp.eq.s32.totalorder %s39, 0
    %p351 = por %p349, %p350
    %s353 = sadd.s32 %s352, 1
    %p356 = scmp.eq.s32.totalorder %s33, 1
    %p357 = scmp.ne.s32.totalorder %s352, %s354
    %p358 = scmp.eq.s32.totalorder %s33, 0
    %p359 = por %p357, %p358
    %p360 = scmp.ne.s32.totalorder %s352, %s354
    %p361 = scmp.eq.s32.totalorder %s38, 1
    %p362 = por %p360, %p361
    %p363 = scmp.ne.s32.totalorder %s354, %s355
    %p364 = scmp.eq.s32.totalorder %s38, 0
    %p365 = por %p363, %p364
    %p366 = scmp.ne.s32.totalorder %s354, %s355
    %p367 = scmp.eq.s32.totalorder %s39, 1
    %p368 = por %p366, %p367
    %p370 = scmp.ne.s32.totalorder %s355, %s369
    %p371 = scmp.eq.s32.totalorder %s39, 0
    %p372 = por %p370, %p371
    %s374 = sadd.s32 %s373, 1
    %p377 = scmp.eq.s32.totalorder %s33, 1
    %p378 = scmp.ne.s32.totalorder %s373, %s375
    %p379 = scmp.eq.s32.totalorder %s33, 0
    %p380 = por %p378, %p379
    %p381 = scmp.ne.s32.totalorder %s373, %s375
    %p382 = scmp.eq.s32.totalorder %s38, 1
    %p383 = por %p381, %p382
    %p384 = scmp.ne.s32.totalorder %s375, %s376
    %p385 = scmp.eq.s32.totalorder %s38, 0
    %p386 = por %p384, %p385
    %p387 = scmp.ne.s32.totalorder %s375, %s376
    %p388 = scmp.eq.s32.totalorder %s39, 1
    %p389 = por %p387, %p388
    %p391 = scmp.ne.s32.totalorder %s376, %s390
    %p392 = scmp.eq.s32.totalorder %s39, 0
    %p393 = por %p391, %p392
    %s395 = sadd.s32 %s394, 1
    %p398 = scmp.eq.s32.totalorder %s33, 1
    %p399 = scmp.ne.s32.totalorder %s394, %s396
    %p400 = scmp.eq.s32.totalorder %s33, 0
    %p401 = por %p399, %p400
    %p402 = scmp.ne.s32.totalorder %s394, %s396
    %p403 = scmp.eq.s32.totalorder %s38, 1
    %p404 = por %p402, %p403
    %p405 = scmp.ne.s32.totalorder %s396, %s397
    %p406 = scmp.eq.s32.totalorder %s38, 0
    %p407 = por %p405, %p406
    %p408 = scmp.ne.s32.totalorder %s396, %s397
    %p409 = scmp.eq.s32.totalorder %s39, 1
    %p410 = por %p408, %p409
    %p412 = scmp.ne.s32.totalorder %s397, %s411
    %p413 = scmp.eq.s32.totalorder %s39, 0
    %p414 = por %p412, %p413
    %s416 = sadd.s32 %s415, 1
    %p419 = scmp.eq.s32.totalorder %s33, 1
    %p420 = scmp.ne.s32.totalorder %s415, %s417
    %p421 = scmp.eq.s32.totalorder %s33, 0
    %p422 = por %p420, %p421
    %p423 = scmp.ne.s32.totalorder %s415, %s417
    %p424 = scmp.eq.s32.totalorder %s38, 1
    %p425 = por %p423, %p424
    %p426 = scmp.ne.s32.totalorder %s417, %s418
    %p427 = scmp.eq.s32.totalorder %s38, 0
    %p428 = por %p426, %p427
    %p429 = scmp.ne.s32.totalorder %s417, %s418
    %p430 = scmp.eq.s32.totalorder %s39, 1
    %p431 = por %p429, %p430
    %p433 = scmp.ne.s32.totalorder %s418, %s432
    %p434 = scmp.eq.s32.totalorder %s39, 0
    %p435 = por %p433, %p434
    %s437 = sadd.s32 %s436, 1
    %p440 = scmp.eq.s32.totalorder %s33, 1
    %p441 = scmp.ne.s32.totalorder %s436, %s438
    %p442 = scmp.eq.s32.totalorder %s33, 0
    %p443 = por %p441, %p442
    %p444 = scmp.ne.s32.totalorder %s436, %s438
    %p445 = scmp.eq.s32.totalorder %s38, 1
    %p446 = por %p444, %p445
    %p447 = scmp.ne.s32.totalorder %s438, %s439
    %p448 = scmp.eq.s32.totalorder %s38, 0
    %p449 = por %p447, %p448
    %p450 = scmp.ne.s32.totalorder %s438, %s439
    %p451 = scmp.eq.s32.totalorder %s39, 1
    %p452 = por %p450, %p451
    %p454 = scmp.ne.s32.totalorder %s439, %s453
    %p455 = scmp.eq.s32.totalorder %s39, 0
    %p456 = por %p454, %p455
    %s458 = sadd.s32 %s457, 1
    %p461 = scmp.eq.s32.totalorder %s33, 1
    %p462 = scmp.ne.s32.totalorder %s457, %s459
    %p463 = scmp.eq.s32.totalorder %s33, 0
    %p464 = por %p462, %p463
    %p465 = scmp.ne.s32.totalorder %s457, %s459
    %p466 = scmp.eq.s32.totalorder %s38, 1
    %p467 = por %p465, %p466
    %p468 = scmp.ne.s32.totalorder %s459, %s460
    %p469 = scmp.eq.s32.totalorder %s38, 0
    %p470 = por %p468, %p469
    %p471 = scmp.ne.s32.totalorder %s459, %s460
    %p472 = scmp.eq.s32.totalorder %s39, 1
    %p473 = por %p471, %p472
    %p475 = scmp.ne.s32.totalorder %s460, %s474
    %p476 = scmp.eq.s32.totalorder %s39, 0
    %p477 = por %p475, %p476
    %s479 = sadd.s32 %s478, 1
    %p482 = scmp.eq.s32.totalorder %s33, 1
    %p483 = scmp.ne.s32.totalorder %s478, %s480
    %p484 = scmp.eq.s32.totalorder %s33, 0
    %p485 = por %p483, %p484
    %p486 = scmp.ne.s32.totalorder %s478, %s480
    %p487 = scmp.eq.s32.totalorder %s38, 1
    %p488 = por %p486, %p487
    %p489 = scmp.ne.s32.totalorder %s480, %s481
    %p490 = scmp.eq.s32.totalorder %s38, 0
    %p491 = por %p489, %p490
    %p492 = scmp.ne.s32.totalorder %s480, %s481
    %p493 = scmp.eq.s32.totalorder %s39, 1
    %p494 = por %p492, %p493
    %p496 = scmp.ne.s32.totalorder %s481, %s495
    %p497 = scmp.eq.s32.totalorder %s39, 0
    %p498 = por %p496, %p497
    %s500 = sadd.s32 %s499, 1
    %p503 = scmp.eq.s32.totalorder %s33, 1
    %p504 = scmp.ne.s32.totalorder %s499, %s501
    %p505 = scmp.eq.s32.totalorder %s33, 0
    %p506 = por %p504, %p505
    %p507 = scmp.ne.s32.totalorder %s499, %s501
    %p508 = scmp.eq.s32.totalorder %s38, 1
    %p509 = por %p507, %p508
    %p510 = scmp.ne.s32.totalorder %s501, %s502
    %p511 = scmp.eq.s32.totalorder %s38, 0
    %p512 = por %p510, %p511
    %p513 = scmp.ne.s32.totalorder %s501, %s502
    %p514 = scmp.eq.s32.totalorder %s39, 1
    %p515 = por %p513, %p514
    %p517 = scmp.ne.s32.totalorder %s502, %s516
    %p518 = scmp.eq.s32.totalorder %s39, 0
    %p519 = por %p517, %p518
    %s521 = sadd.s32 %s520, 1
    %p524 = scmp.eq.s32.totalorder %s33, 1
    %p525 = scmp.ne.s32.totalorder %s520, %s522
    %p526 = scmp.eq.s32.totalorder %s33, 0
    %p527 = por %p525, %p526
    %p528 = scmp.ne.s32.totalorder %s520, %s522
    %p529 = scmp.eq.s32.totalorder %s38, 1
    %p530 = por %p528, %p529
    %p531 = scmp.ne.s32.totalorder %s522, %s523
    %p532 = scmp.eq.s32.totalorder %s38, 0
    %p533 = por %p531, %p532
    %p534 = scmp.ne.s32.totalorder %s522, %s523
    %p535 = scmp.eq.s32.totalorder %s39, 1
    %p536 = por %p534, %p535
    %p538 = scmp.ne.s32.totalorder %s523, %s537
    %p539 = scmp.eq.s32.totalorder %s39, 0
    %p540 = por %p538, %p539
    %s541 = ssub.s32 %s40, %s52
    %s542 = ssub.s32 %s41, %s48
    %s543 = sor.u32 %s541, %s542
    %p544 = scmp.eq.s32.totalorder %s543, 0
    %s546 = sadd.s32 %s545, 1
    %s547 = scalar_select %p544, %s545, %s546
    %p550 = pneg %p544
    %p551 = scmp.eq.s32.totalorder %s33, 1
    %p552 = por %p550, %p551
    %p553 = scmp.ne.s32.totalorder %s545, %s548
    %p554 = scmp.eq.s32.totalorder %s33, 0
    %p555 = por %p553, %p554
    %p556 = scmp.ne.s32.totalorder %s545, %s548
    %p557 = scmp.eq.s32.totalorder %s38, 1
    %p558 = por %p556, %p557
    %p559 = scmp.ne.s32.totalorder %s548, %s549
    %p560 = scmp.eq.s32.totalorder %s38, 0
    %p561 = por %p559, %p560
    %p562 = scmp.ne.s32.totalorder %s548, %s549
    %p563 = scmp.eq.s32.totalorder %s39, 1
    %p564 = por %p562, %p563
    %p566 = scmp.ne.s32.totalorder %s549, %s565
    %p567 = scmp.eq.s32.totalorder %s39, 0
    %p568 = por %p566, %p567
    %s569 = ssub.s32 %s40, %s52
    %s570 = ssub.s32 %s41, %s48
    %s571 = sor.u32 %s569, %s570
    %p572 = scmp.eq.s32.totalorder %s571, 0
    %s574 = sadd.s32 %s573, 1
    %s575 = scalar_select %p572, %s573, %s574
    %p578 = pneg %p572
    %p579 = scmp.eq.s32.totalorder %s33, 1
    %p580 = por %p578, %p579
    %p581 = scmp.ne.s32.totalorder %s573, %s576
    %p582 = scmp.eq.s32.totalorder %s33, 0
    %p583 = por %p581, %p582
    %p584 = scmp.ne.s32.totalorder %s573, %s576
    %p585 = scmp.eq.s32.totalorder %s38, 1
    %p586 = por %p584, %p585
    %p587 = scmp.ne.s32.totalorder %s576, %s577
    %p588 = scmp.eq.s32.totalorder %s38, 0
    %p589 = por %p587, %p588
    %p590 = scmp.ne.s32.totalorder %s576, %s577
    %p591 = scmp.eq.s32.totalorder %s39, 1
    %p592 = por %p590, %p591
    %p594 = scmp.ne.s32.totalorder %s577, %s593
    %p595 = scmp.eq.s32.totalorder %s39, 0
    %p596 = por %p594, %p595
    %p597 = scmp.le.s32.totalorder 1, %s33
    %p598 = scmp.lt.s32.totalorder %s33, 3
    %p599 = pnand %p597, %p598
    %p600 = pneg %p599
    // Predicated region
    $region9: #{pose_head_forward.1} parent=5 // pred_check
      _
    $region10: #{pose_head_forward.1} parent=5 // pred_check_branch
      %602 = sbr.rel (%p599) target = $region12
    $region11: #{pose_head_forward.1} parent=5 // pred_region
      %s603 = ssub.s32 %s33, 1
      // Predicated region
      $region13: #{pose_head_forward.1} parent=11 // pred_check
        %p604 = pneg %p92
      $region14: #{pose_head_forward.1} parent=11 // pred_check_branch
        %606 = sbr.rel (%p604) target = $region16
      $region15: #{pose_head_forward.1} parent=11 // pred_region
        _
      $region16: #{pose_head_forward.1} parent=11 // pred_fallthru
        _
      // Predicated region
      $region17: #{pose_head_forward.1} parent=11 // pred_check
        %p607 = pneg %p113
      $region18: #{pose_head_forward.1} parent=11 // pred_check_branch
        %609 = sbr.rel (%p607) target = $region20
      $region19: #{pose_head_forward.1} parent=11 // pred_region
        _
      $region20: #{pose_head_forward.1} parent=11 // pred_fallthru
        _
      // Predicated region
      $region21: #{pose_head_forward.1} parent=11 // pred_check
        %p610 = pneg %p134
      $region22: #{pose_head_forward.1} parent=11 // pred_check_branch
        %612 = sbr.rel (%p610) target = $region24
      $region23: #{pose_head_forward.1} parent=11 // pred_region
        _
      $region24: #{pose_head_forward.1} parent=11 // pred_fallthru
        _
      // Predicated region
      $region25: #{pose_head_forward.1} parent=11 // pred_check
        %p613 = pneg %p155
      $region26: #{pose_head_forward.1} parent=11 // pred_check_branch
        %615 = sbr.rel (%p613) target = $region28
      $region27: #{pose_head_forward.1} parent=11 // pred_region
        _
      $region28: #{pose_head_forward.1} parent=11 // pred_fallthru
        _
      // Predicated region
      $region29: #{pose_head_forward.1} parent=11 // pred_check
        %p616 = pneg %p176
      $region30: #{pose_head_forward.1} parent=11 // pred_check_branch
        %618 = sbr.rel (%p616) target = $region32
      $region31: #{pose_head_forward.1} parent=11 // pred_region
        _
      $region32: #{pose_head_forward.1} parent=11 // pred_fallthru
        _
      // Predicated region
      $region33: #{pose_head_forward.1} parent=11 // pred_check
        %p619 = pneg %p197
      $region34: #{pose_head_forward.1} parent=11 // pred_check_branch
        %621 = sbr.rel (%p619) target = $region36
      $region35: #{pose_head_forward.1} parent=11 // pred_region
        _
      $region36: #{pose_head_forward.1} parent=11 // pred_fallthru
        _
      // Predicated region
      $region37: #{pose_head_forward.1} parent=11 // pred_check
        %p622 = pneg %p218
      $region38: #{pose_head_forward.1} parent=11 // pred_check_branch
        %624 = sbr.rel (%p622) target = $region40
      $region39: #{pose_head_forward.1} parent=11 // pred_region
        _
      $region40: #{pose_head_forward.1} parent=11 // pred_fallthru
        _
      // Predicated region
      $region41: #{pose_head_forward.1} parent=11 // pred_check
        %p625 = pneg %p239
      $region42: #{pose_head_forward.1} parent=11 // pred_check_branch
        %627 = sbr.rel (%p625) target = $region44
      $region43: #{pose_head_forward.1} parent=11 // pred_region
        _
      $region44: #{pose_head_forward.1} parent=11 // pred_fallthru
        _
      // Predicated region
      $region45: #{pose_head_forward.1} parent=11 // pred_check
        %p628 = pneg %p260
      $region46: #{pose_head_forward.1} parent=11 // pred_check_branch
        %630 = sbr.rel (%p628) target = $region48
      $region47: #{pose_head_forward.1} parent=11 // pred_region
        _
      $region48: #{pose_head_forward.1} parent=11 // pred_fallthru
        _
      // Predicated region
      $region49: #{pose_head_forward.1} parent=11 // pred_check
        %p631 = pneg %p281
      $region50: #{pose_head_forward.1} parent=11 // pred_check_branch
        %633 = sbr.rel (%p631) target = $region52
      $region51: #{pose_head_forward.1} parent=11 // pred_region
        _
      $region52: #{pose_head_forward.1} parent=11 // pred_fallthru
        _
      // Predicated region
      $region53: #{pose_head_forward.1} parent=11 // pred_check
        %p634 = pneg %p302
      $region54: #{pose_head_forward.1} parent=11 // pred_check_branch
        %636 = sbr.rel (%p634) target = $region56
      $region55: #{pose_head_forward.1} parent=11 // pred_region
        _
      $region56: #{pose_head_forward.1} parent=11 // pred_fallthru
        _
      // Predicated region
      $region57: #{pose_head_forward.1} parent=11 // pred_check
        %p637 = pneg %p323
      $region58: #{pose_head_forward.1} parent=11 // pred_check_branch
        %639 = sbr.rel (%p637) target = $region60
      $region59: #{pose_head_forward.1} parent=11 // pred_region
        _
      $region60: #{pose_head_forward.1} parent=11 // pred_fallthru
        _
      // Predicated region
      $region61: #{pose_head_forward.1} parent=11 // pred_check
        %p640 = pneg %p344
      $region62: #{pose_head_forward.1} parent=11 // pred_check_branch
        %642 = sbr.rel (%p640) target = $region64
      $region63: #{pose_head_forward.1} parent=11 // pred_region
        _
      $region64: #{pose_head_forward.1} parent=11 // pred_fallthru
        _
      // Predicated region
      $region65: #{pose_head_forward.1} parent=11 // pred_check
        %p643 = pneg %p365
      $region66: #{pose_head_forward.1} parent=11 // pred_check_branch
        %645 = sbr.rel (%p643) target = $region68
      $region67: #{pose_head_forward.1} parent=11 // pred_region
        _
      $region68: #{pose_head_forward.1} parent=11 // pred_fallthru
        _
      // Predicated region
      $region69: #{pose_head_forward.1} parent=11 // pred_check
        %p646 = pneg %p386
      $region70: #{pose_head_forward.1} parent=11 // pred_check_branch
        %648 = sbr.rel (%p646) target = $region72
      $region71: #{pose_head_forward.1} parent=11 // pred_region
        _
      $region72: #{pose_head_forward.1} parent=11 // pred_fallthru
        _
      // Predicated region
      $region73: #{pose_head_forward.1} parent=11 // pred_check
        %p649 = pneg %p407
      $region74: #{pose_head_forward.1} parent=11 // pred_check_branch
        %651 = sbr.rel (%p649) target = $region76
      $region75: #{pose_head_forward.1} parent=11 // pred_region
        _
      $region76: #{pose_head_forward.1} parent=11 // pred_fallthru
        _
      // Predicated region
      $region77: #{pose_head_forward.1} parent=11 // pred_check
        %p652 = pneg %p428
      $region78: #{pose_head_forward.1} parent=11 // pred_check_branch
        %654 = sbr.rel (%p652) target = $region80
      $region79: #{pose_head_forward.1} parent=11 // pred_region
        _
      $region80: #{pose_head_forward.1} parent=11 // pred_fallthru
        _
      // Predicated region
      $region81: #{pose_head_forward.1} parent=11 // pred_check
        %p655 = pneg %p449
      $region82: #{pose_head_forward.1} parent=11 // pred_check_branch
        %657 = sbr.rel (%p655) target = $region84
      $region83: #{pose_head_forward.1} parent=11 // pred_region
        _
      $region84: #{pose_head_forward.1} parent=11 // pred_fallthru
        _
      // Predicated region
      $region85: #{pose_head_forward.1} parent=11 // pred_check
        %p658 = pneg %p470
      $region86: #{pose_head_forward.1} parent=11 // pred_check_branch
        %660 = sbr.rel (%p658) target = $region88
      $region87: #{pose_head_forward.1} parent=11 // pred_region
        _
      $region88: #{pose_head_forward.1} parent=11 // pred_fallthru
        _
      // Predicated region
      $region89: #{pose_head_forward.1} parent=11 // pred_check
        %p661 = pneg %p491
      $region90: #{pose_head_forward.1} parent=11 // pred_check_branch
        %663 = sbr.rel (%p661) target = $region92
      $region91: #{pose_head_forward.1} parent=11 // pred_region
        _
      $region92: #{pose_head_forward.1} parent=11 // pred_fallthru
        _
      // Predicated region
      $region93: #{pose_head_forward.1} parent=11 // pred_check
        %p664 = pneg %p512
      $region94: #{pose_head_forward.1} parent=11 // pred_check_branch
        %666 = sbr.rel (%p664) target = $region96
      $region95: #{pose_head_forward.1} parent=11 // pred_region
        _
      $region96: #{pose_head_forward.1} parent=11 // pred_fallthru
        _
      // Predicated region
      $region97: #{pose_head_forward.1} parent=11 // pred_check
        %p667 = pneg %p533
      $region98: #{pose_head_forward.1} parent=11 // pred_check_branch
        %669 = sbr.rel (%p667) target = $region100
      $region99: #{pose_head_forward.1} parent=11 // pred_region
        _
      $region100: #{pose_head_forward.1} parent=11 // pred_fallthru
        _
    $region12: #{pose_head_forward.1} parent=5 // pred_fallthru
      _
    %p670 = scmp.lt.s32.totalorder %s33, 2
    // Predicated region
    $region101: #{pose_head_forward.1} parent=5 // pred_check
      %p671 = pneg %p670
    $region102: #{pose_head_forward.1} parent=5 // pred_check_branch
      %673 = sbr.rel (%p671) target = $region104
    $region103: #{pose_head_forward.1} parent=5 // pred_region
      // Predicated region
      $region105: #{pose_head_forward.1} parent=103 // pred_check
        %p674 = pneg %p65
      $region106: #{pose_head_forward.1} parent=103 // pred_check_branch
        %676 = sbr.rel (%p674) target = $region108
      $region107: #{pose_head_forward.1} parent=103 // pred_region
        %p677 = scmp.lt.s32.totalorder %s40, 1
        %s678 = scalar_select %p677, %s40, 1
        %s679 = smul.addr %s678, 54
        %s680 = smul.addr %s679, 4
        %s681 = scalar_lea.vmem %s0, %s680
      $region108: #{pose_head_forward.1} parent=103 // pred_fallthru
        _
    $region104: #{pose_head_forward.1} parent=5 // pred_fallthru
      _
    %p682 = scmp.le.s32.totalorder 1, %s33
    %p683 = scmp.lt.s32.totalorder %s33, 3
    %p684 = pnand %p682, %p683
    %p685 = pneg %p684
    // Predicated region
    $region109: #{pose_head_forward.1} parent=5 // pred_check
      _
    $region110: #{pose_head_forward.1} parent=5 // pred_check_branch
      %687 = sbr.rel (%p684) target = $region112
    $region111: #{pose_head_forward.1} parent=5 // pred_region
      %s688 = ssub.s32 %s33, 1
      %p689 = scmp.lt.s32.totalorder %s42, 1
      %s690 = scalar_select %p689, %s42, 1
      %s691 = smul.addr %s690, 54
      %s692 = smul.addr %s691, 4
      %s693 = scalar_lea.vmem %s0, %s692
      %p694 = pneg %p71
      %p695 = pneg %p68
      %p696 = pneg %p92
      %p697 = pneg %p89
      %p698 = pneg %p113
      %p699 = pneg %p110
      %p700 = pneg %p134
      %p701 = pneg %p131
      %p702 = pneg %p155
      %p703 = pneg %p152
      %p704 = pneg %p176
      %p705 = pneg %p173
      %p706 = pneg %p197
      %p707 = pneg %p194
      %p708 = pneg %p218
      %p709 = pneg %p215
      %p710 = pneg %p239
      %p711 = pneg %p236
      %p712 = pneg %p260
      %p713 = pneg %p257
      %p714 = pneg %p281
      %p715 = pneg %p278
      %p716 = pneg %p302
      %p717 = pneg %p299
      %p718 = pneg %p323
      %p719 = pneg %p320
      %p720 = pneg %p344
      %p721 = pneg %p341
      %p722 = pneg %p365
      %p723 = pneg %p362
      %p724 = pneg %p386
      %p725 = pneg %p383
      %p726 = pneg %p407
      %p727 = pneg %p404
      %p728 = pneg %p428
      %p729 = pneg %p425
      %p730 = pneg %p449
      %p731 = pneg %p446
      %p732 = pneg %p470
      %p733 = pneg %p467
      %p734 = pneg %p491
      %p735 = pneg %p488
      %p736 = pneg %p512
      %p737 = pneg %p509
      %p738 = pneg %p533
      %p739 = pneg %p530
      %p740 = pneg %p561
      %p741 = pneg %p558
      %s742 = smul.u32 16, %s43
      %p743 = scmp.lt.s32.totalorder %s42, 1
      %s744 = scalar_select %p743, %s42, 1
      %p745 = scmp.lt.s32.totalorder %s742, 15
      %s746 = scalar_select %p745, %s742, 15
      %s747 = smul.addr %s746, 2
      %s748 = smul.addr %s744, 32
      %s749 = sadd.s32 %s747, %s748
      %s750 = smul.addr %s749, 8
      %s751 = scalar_lea.vmem %s23, %s750
      %p752 = pneg %p589
      %p753 = pneg %p586
      %s754 = smul.u32 16, %s43
      %p755 = scmp.lt.s32.totalorder %s42, 1
      %s756 = scalar_select %p755, %s42, 1
      %p757 = scmp.lt.s32.totalorder %s754, 15
      %s758 = scalar_select %p757, %s754, 15
      %s759 = smul.addr %s758, 2
      %s760 = smul.addr %s756, 32
      %s761 = sadd.s32 %s759, %s760
      %s762 = smul.addr %s761, 8
      %s763 = scalar_lea.vmem %s24, %s762
      %p764 = scmp.lt.s32.totalorder %s42, 1
      %s765 = scalar_select %p764, %s42, 1
      %s766 = smul.addr %s765, 54
      %s767 = smul.addr %s766, 4
      %s768 = scalar_lea.vmem %s0, %s767
      %s769 = smul.u32 16, %s43
      %p770 = scmp.lt.s32.totalorder %s42, 1
      %s771 = scalar_select %p770, %s42, 1
      %p772 = scmp.lt.s32.totalorder %s769, 15
      %s773 = scalar_select %p772, %s769, 15
      %s774 = smul.addr %s773, 2
      %s775 = smul.addr %s771, 32
      %s776 = sadd.s32 %s774, %s775
      %s777 = smul.addr %s776, 8
      %s778 = scalar_lea.vmem %s23, %s777
      %s779 = smul.u32 16, %s43
      %s780 = smul.u32 16, %s43
      %p781 = scmp.lt.s32.totalorder %s42, 1
      %s782 = scalar_select %p781, %s42, 1
      %p783 = scmp.lt.s32.totalorder %s780, 15
      %s784 = scalar_select %p783, %s780, 15
      %s785 = smul.addr %s784, 2
      %s786 = smul.addr %s782, 32
      %s787 = sadd.s32 %s785, %s786
      %s788 = smul.addr %s787, 8
      %s789 = scalar_lea.vmem %s24, %s788
      %s790 = smul.u32 16, %s43
      %s792 = smul.u32 %s43, 16
      %s793 = smul.u32 %s792, 3
      %s794 = smul.addr %s793, 4
      %s795 = scalar_lea.vmem %s768, %s794
      %v796 = vld [vmem:[%s795] sm:$0xf]
      %v797 = vld [vmem:[%s795 + $0x4] sm:$0xf]
      %v798 = vld [vmem:[%s795 + $0x8] sm:$0xf]
      %v799 = vld [vmem:[%s795 + $0xc] sm:$0xf]
      %v800 = vld [vmem:[%s795 + $0x10] sm:$0xf]
      %v801 = vld [vmem:[%s795 + $0x14] sm:$0xf]
      %v802 = vld [vmem:[%s795 + $0x18] sm:$0xf]
      %v803 = vld [vmem:[%s795 + $0x1c] sm:$0xf]
      %v804 = vld [vmem:[%s795 + $0x20] sm:$0xf]
      %v805 = vld [vmem:[%s795 + $0x24] sm:$0xf]
      %v806 = vld [vmem:[%s795 + $0x28] sm:$0xf]
      %v807 = vld [vmem:[%s795 + $0x2c] sm:$0xf]
      %v808 = vld [vmem:[%s795 + $0x30] sm:$0xf]
      %v809 = vld [vmem:[%s795 + $0x34] sm:$0xf]
      %v810 = vld [vmem:[%s795 + $0x38] sm:$0xf]
      %v811 = vld [vmem:[%s795 + $0x3c] sm:$0xf]
      %v812 = vld [vmem:[%s795 + $0x40] sm:$0xf]
      %v813 = vld [vmem:[%s795 + $0x44] sm:$0xf]
      %v814 = vld [vmem:[%s795 + $0x48] sm:$0xf]
      %v815 = vld [vmem:[%s795 + $0x4c] sm:$0xf]
      %v816 = vld [vmem:[%s795 + $0x50] sm:$0xf]
      %v817 = vld [vmem:[%s795 + $0x54] sm:$0xf]
      %v818 = vld [vmem:[%s795 + $0x58] sm:$0xf]
      %v819 = vld [vmem:[%s795 + $0x5c] sm:$0xf]
      %v820 = vld [vmem:[%s795 + $0x60] sm:$0xf]
      %v821 = vld [vmem:[%s795 + $0x64] sm:$0xf]
      %v822 = vld [vmem:[%s795 + $0x68] sm:$0xf]
      %v823 = vld [vmem:[%s795 + $0x6c] sm:$0xf]
      %v824 = vld [vmem:[%s795 + $0x70] sm:$0xf]
      %v825 = vld [vmem:[%s795 + $0x74] sm:$0xf]
      %v826 = vld [vmem:[%s795 + $0x78] sm:$0xf]
      %v827 = vld [vmem:[%s795 + $0x7c] sm:$0xf]
      %v828 = vld [vmem:[%s795 + $0x80] sm:$0xf]
      %v829 = vld [vmem:[%s795 + $0x84] sm:$0xf]
      %v830 = vld [vmem:[%s795 + $0x88] sm:$0xf]
      %v831 = vld [vmem:[%s795 + $0x8c] sm:$0xf]
      %v832 = vld [vmem:[%s795 + $0x90] sm:$0xf]
      %v833 = vld [vmem:[%s795 + $0x94] sm:$0xf]
      %v834 = vld [vmem:[%s795 + $0x98] sm:$0xf]
      %v835 = vld [vmem:[%s795 + $0x9c] sm:$0xf]
      %v836 = vld [vmem:[%s795 + $0xa0] sm:$0xf]
      %v837 = vld [vmem:[%s795 + $0xa4] sm:$0xf]
      %v838 = vld [vmem:[%s795 + $0xa8] sm:$0xf]
      %v839 = vld [vmem:[%s795 + $0xac] sm:$0xf]
      %v840 = vld [vmem:[%s795 + $0xb0] sm:$0xf]
      %v841 = vld [vmem:[%s795 + $0xb4] sm:$0xf]
      %v842 = vld [vmem:[%s795 + $0xb8] sm:$0xf]
      %v843 = vld [vmem:[%s795 + $0xbc] sm:$0xf]
      %v844 = vld [vmem:[%s795 + $0xc0] sm:$0xf]
      %v845 = vld [vmem:[%s795 + $0xc4] sm:$0xf]
      %v846 = vld [vmem:[%s795 + $0xc8] sm:$0xf]
      %v847 = vld [vmem:[%s795 + $0xcc] sm:$0xf]
      %v848 = vld [vmem:[%s795 + $0xd0] sm:$0xf]
      %v849 = vld [vmem:[%s795 + $0xd4] sm:$0xf]
      %s850 = smul.u32 %s792, 24
      %s851 = scalar_lea.vmem %s1, %s850
      %v852 = vld [vmem:[%s851] sm:$0xff]
      %v853 = vld [vmem:[%s851 + $0x8] sm:$0xff]
      %v854 = vld [vmem:[%s851 + $0x10] sm:$0xff]
      %v855 = vld [vmem:[%s851 + $0x18] sm:$0xff]
      %v856 = vld [vmem:[%s851 + $0x20] sm:$0xff]
      %v857 = vld [vmem:[%s851 + $0x28] sm:$0xff]
      %v858 = vld [vmem:[%s851 + $0x30] sm:$0xff]
      %v859 = vld [vmem:[%s851 + $0x38] sm:$0xff]
      %v860 = vld [vmem:[%s851 + $0x40] sm:$0xff]
      %v861 = vld [vmem:[%s851 + $0x48] sm:$0xff]
      %v862 = vld [vmem:[%s851 + $0x50] sm:$0xff]
      %v863 = vld [vmem:[%s851 + $0x58] sm:$0xff]
      %v864 = vld [vmem:[%s851 + $0x60] sm:$0xff]
      %v865 = vld [vmem:[%s851 + $0x68] sm:$0xff]
      %v866 = vld [vmem:[%s851 + $0x70] sm:$0xff]
      %v867 = vld [vmem:[%s851 + $0x78] sm:$0xff]
      %v868 = vld [vmem:[%s851 + $0x80] sm:$0xff]
      %v869 = vld [vmem:[%s851 + $0x88] sm:$0xff]
      %v870 = vld [vmem:[%s851 + $0x90] sm:$0xff]
      %v871 = vld [vmem:[%s851 + $0x98] sm:$0xff]
      %v872 = vld [vmem:[%s851 + $0xa0] sm:$0xff]
      %v873 = vld [vmem:[%s851 + $0xa8] sm:$0xff]
      %v874 = vld [vmem:[%s851 + $0xb0] sm:$0xff]
      %v875 = vld [vmem:[%s851 + $0xb8] sm:$0xff]
      %v876 = vld [vmem:[%s851 + $0xc0] sm:$0xff]
      %v877 = vld [vmem:[%s851 + $0xc8] sm:$0xff]
      %v878 = vld [vmem:[%s851 + $0xd0] sm:$0xff]
      %v879 = vld [vmem:[%s851 + $0xd8] sm:$0xff]
      %v880 = vld [vmem:[%s851 + $0xe0] sm:$0xff]
      %v881 = vld [vmem:[%s851 + $0xe8] sm:$0xff]
      %v882 = vld [vmem:[%s851 + $0xf0] sm:$0xff]
      %v883 = vld [vmem:[%s851 + $0xf8] sm:$0xff]
      %v884 = vld [vmem:[%s851 + $0x100] sm:$0xff]
      %v885 = vld [vmem:[%s851 + $0x108] sm:$0xff]
      %v886 = vld [vmem:[%s851 + $0x110] sm:$0xff]
      %v887 = vld [vmem:[%s851 + $0x118] sm:$0xff]
      %v888 = vld [vmem:[%s851 + $0x120] sm:$0xff]
      %v889 = vld [vmem:[%s851 + $0x128] sm:$0xff]
      %v890 = vld [vmem:[%s851 + $0x130] sm:$0xff]
      %v891 = vld [vmem:[%s851 + $0x138] sm:$0xff]
      %v892 = vld [vmem:[%s851 + $0x140] sm:$0xff]
      %v893 = vld [vmem:[%s851 + $0x148] sm:$0xff]
      %v894 = vld [vmem:[%s851 + $0x150] sm:$0xff]
      %v895 = vld [vmem:[%s851 + $0x158] sm:$0xff]
      %v896 = vld [vmem:[%s851 + $0x160] sm:$0xff]
      %v897 = vld [vmem:[%s851 + $0x168] sm:$0xff]
      %v898 = vld [vmem:[%s851 + $0x170] sm:$0xff]
      %v899 = vld [vmem:[%s851 + $0x178] sm:$0xff]
      %v900 = vld [vmem:[%s851 + $0x180] sm:$0xff]
      %v901 = vld [vmem:[%s851 + $0x188] sm:$0xff]
      %v902 = vld [vmem:[%s851 + $0x190] sm:$0xff]
      %v903 = vld [vmem:[%s851 + $0x198] sm:$0xff]
      %v904 = vld [vmem:[%s851 + $0x1a0] sm:$0xff]
      %v905 = vld [vmem:[%s851 + $0x1a8] sm:$0xff]
      %v906 = vld [vmem:[%s2] sm:$0xf]
      %v907 = vld [vmem:[%s2 + $0x4] sm:$0xf]
      %v908 = vld [vmem:[%s2 + $0x8] sm:$0xf]
      %v909 = vld [vmem:[%s2 + $0xc] sm:$0xf]
      %v910 = vld [vmem:[%s2 + $0x10] sm:$0xf]
      %v911 = vld [vmem:[%s2 + $0x14] sm:$0xf]
      %v912 = vld [vmem:[%s2 + $0x18] sm:$0xf]
      %v913 = vld [vmem:[%s2 + $0x1c] sm:$0xf]
      %v914 = vld [vmem:[%s2 + $0x20] sm:$0xf]
      %v915 = vld [vmem:[%s2 + $0x24] sm:$0xf]
      %v916 = vld [vmem:[%s2 + $0x28] sm:$0xf]
      %v917 = vld [vmem:[%s2 + $0x2c] sm:$0xf]
      %v918 = vld [vmem:[%s2 + $0x30] sm:$0xf]
      %v919 = vld [vmem:[%s2 + $0x34] sm:$0xf]
      %v920 = vld [vmem:[%s2 + $0x38] sm:$0xf]
      %v921 = vld [vmem:[%s2 + $0x3c] sm:$0xf]
      %v976 = vunpack.c.l.b16 %v796
      %v977 = vunpack.c.l.b16 %v797
      %v978 = vunpack.c.l.b16 %v798
      %v979 = vunpack.c.l.b16 %v799
      %v980 = vunpack.c.l.b16 %v800
      %v981 = vunpack.c.l.b16 %v801
      %v982 = vunpack.c.l.b16 %v802
      %v983 = vunpack.c.l.b16 %v803
      %v984 = vunpack.c.l.b16 %v804
      %v985 = vunpack.c.l.b16 %v805
      %v986 = vunpack.c.l.b16 %v806
      %v987 = vunpack.c.l.b16 %v807
      %v988 = vunpack.c.l.b16 %v808
      %v989 = vunpack.c.l.b16 %v809
      %v990 = vunpack.c.l.b16 %v810
      %v991 = vunpack.c.l.b16 %v811
      %v992 = vunpack.c.l.b16 %v812
      %v993 = vunpack.c.l.b16 %v813
      %v994 = vunpack.c.l.b16 %v814
      %v995 = vunpack.c.l.b16 %v815
      %v996 = vunpack.c.l.b16 %v816
      %v997 = vunpack.c.l.b16 %v817
      %v998 = vunpack.c.l.b16 %v818
      %v999 = vunpack.c.l.b16 %v819
      %v1000 = vunpack.c.l.b16 %v820
      %v1001 = vunpack.c.l.b16 %v821
      %v1002 = vunpack.c.l.b16 %v822
      %v1003 = vunpack.c.l.b16 %v823
      %v1004 = vunpack.c.l.b16 %v824
      %v1005 = vunpack.c.l.b16 %v825
      %v1006 = vunpack.c.l.b16 %v826
      %v1007 = vunpack.c.l.b16 %v827
      %v1008 = vunpack.c.l.b16 %v828
      %v1009 = vunpack.c.l.b16 %v829
      %v1010 = vunpack.c.l.b16 %v830
      %v1011 = vunpack.c.l.b16 %v831
      %v1012 = vunpack.c.l.b16 %v832
      %v1013 = vunpack.c.l.b16 %v833
      %v1014 = vunpack.c.l.b16 %v834
      %v1015 = vunpack.c.l.b16 %v835
      %v1016 = vunpack.c.l.b16 %v836
      %v1017 = vunpack.c.l.b16 %v837
      %v1018 = vunpack.c.l.b16 %v838
      %v1019 = vunpack.c.l.b16 %v839
      %v1020 = vunpack.c.l.b16 %v840
      %v1021 = vunpack.c.l.b16 %v841
      %v1022 = vunpack.c.l.b16 %v842
      %v1023 = vunpack.c.l.b16 %v843
      %v1024 = vunpack.c.l.b16 %v844
      %v1025 = vunpack.c.l.b16 %v845
      %v1026 = vunpack.c.l.b16 %v846
      %v1027 = vunpack.c.l.b16 %v847
      %v1028 = vunpack.c.l.b16 %v848
      %v1029 = vunpack.c.l.b16 %v849
      %v1030 = vpack.c.b16 %v977, %v976
      %v1031 = vpack.c.b16 %v979, %v978
      %v1032 = vpack.c.b16 %v981, %v980
      %v1033 = vpack.c.b16 %v983, %v982
      %v1034 = vpack.c.b16 %v985, %v984
      %v1035 = vpack.c.b16 %v987, %v986
      %v1036 = vpack.c.b16 %v989, %v988
      %v1037 = vpack.c.b16 %v991, %v990
      %v1038 = vpack.c.b16 %v993, %v992
      %v1039 = vpack.c.b16 %v995, %v994
      %v1040 = vpack.c.b16 %v997, %v996
      %v1041 = vpack.c.b16 %v999, %v998
      %v1042 = vpack.c.b16 %v1001, %v1000
      %v1043 = vpack.c.b16 %v1003, %v1002
      %v1044 = vpack.c.b16 %v1005, %v1004
      %v1045 = vpack.c.b16 %v1007, %v1006
      %v1046 = vpack.c.b16 %v1009, %v1008
      %v1047 = vpack.c.b16 %v1011, %v1010
      %v1048 = vpack.c.b16 %v1013, %v1012
      %v1049 = vpack.c.b16 %v1015, %v1014
      %v1050 = vpack.c.b16 %v1017, %v1016
      %v1051 = vpack.c.b16 %v1019, %v1018
      %v1052 = vpack.c.b16 %v1021, %v1020
      %v1053 = vpack.c.b16 %v1023, %v1022
      %v1054 = vpack.c.b16 %v1025, %v1024
      %v1055 = vpack.c.b16 %v1027, %v1026
      %v1056 = vpack.c.b16 %v1029, %v1028
      %v1100 = vunpack.c.l.b16 %v906
      %v1101 = vunpack.c.l.b16 %v907
      %v1102 = vunpack.c.l.b16 %v908
      %v1103 = vunpack.c.l.b16 %v909
      %v1104 = vunpack.c.l.b16 %v910
      %v1105 = vunpack.c.l.b16 %v911
      %v1106 = vunpack.c.l.b16 %v912
      %v1107 = vunpack.c.l.b16 %v913
      %v1108 = vunpack.c.l.b16 %v914
      %v1109 = vunpack.c.l.b16 %v915
      %v1110 = vunpack.c.l.b16 %v916
      %v1111 = vunpack.c.l.b16 %v917
      %v1112 = vunpack.c.l.b16 %v918
      %v1113 = vunpack.c.l.b16 %v919
      %v1114 = vunpack.c.l.b16 %v920
      %v1115 = vunpack.c.l.b16 %v921
      %v1116 = vpack.c.b16 %v1101, %v1100
      %v1117 = vpack.c.b16 %v1103, %v1102
      %v1118 = vpack.c.b16 %v1105, %v1104
      %v1119 = vpack.c.b16 %v1107, %v1106
      %v1120 = vpack.c.b16 %v1109, %v1108
      %v1121 = vpack.c.b16 %v1111, %v1110
      %v1122 = vpack.c.b16 %v1113, %v1112
      %v1123 = vpack.c.b16 %v1115, %v1114
      %1132 = vmatprep.subr.bf16.mxu0 0
      %1133 = vmatpush1.bf16.msra.mxu0 %v1116
      %1134 = vmatprep.subr.bf16.mxu0 0
      %1135 = vmatpush1.bf16.msra.mxu0 %v1117
      %1136 = vmatprep.subr.bf16.mxu0 0
      %1137 = vmatpush1.bf16.msra.mxu0 %v1118
      %1138 = vmatprep.subr.bf16.mxu0 0
      %1139 = vmatpush1.bf16.msra.mxu0 %v1119
      %1140 = vmatprep.subr.bf16.mxu0 0
      %1141 = vmatpush1.bf16.msra.mxu0 %v1120
      %1142 = vmatprep.subr.bf16.mxu0 0
      %1143 = vmatpush1.bf16.msra.mxu0 %v1121
      %1144 = vmatprep.subr.bf16.mxu0 0
      %1145 = vmatpush1.bf16.msra.mxu0 %v1122
      %1146 = vmatprep.subr.bf16.mxu0 0
      %1147 = vmatpush1.bf16.msra.mxu0 %v1123
      %1148 = vmatprep.subr.bf16.mxu0 0
      %1149 = vmatpush1.bf16.msra.mxu0 0
      %1150 = vmatprep.subr.bf16.mxu0 0
      %1151 = vmatpush1.bf16.msra.mxu0 0
      %1152 = vmatprep.subr.bf16.mxu0 0
      %1153 = vmatpush1.bf16.msra.mxu0 0
      %1154 = vmatprep.subr.bf16.mxu0 0
      %1155 = vmatpush1.bf16.msra.mxu0 0
      %1156 = vmatprep.subr.bf16.mxu0 0
      %1157 = vmatpush1.bf16.msra.mxu0 0
      %1158 = vmatprep.subr.bf16.mxu0 0
      %1159 = vmatpush1.bf16.msra.mxu0 0
      %1160 = vmatprep.subr.bf16.mxu0 0
      %1161 = vmatpush1.bf16.msra.mxu0 0
      %1162 = vmatprep.subr.bf16.mxu0 0
      %1163 = vmatpush1.bf16.msra.mxu0 0
      %1164 = vmatprep.mubr.bf16.mxu0 0
      %1165 = vmatmul.mubr.bf16.gmra.mrb[0].mxu0 %v1030
      %v1166 = vpop.f32.mrb[0].mxu0
      %v1167 = vadd.f32 0.0, %v1166
      %v1168 = vpop.f32.mrb[0].mxu0
      %v1169 = vpop.f32.mrb[0].mxu0
      %v1170 = vadd.f32 0.0, %v1169
      %v1171 = vpop.f32.mrb[0].mxu0
      %1172 = vmatprep.mubr.bf16.mxu0 0
      %1173 = vmatmul.mubr.bf16.gmra.mrb[0].mxu0 %v1031
      %v1174 = vpop.f32.mrb[0].mxu0
      %v1175 = vadd.f32 0.0, %v1174
      %v1176 = vpop.f32.mrb[0].mxu0
      %v1177 = vpop.f32.mrb[0].mxu0
      %v1178 = vadd.f32 0.0, %v1177
      %v1179 = vpop.f32.mrb[0].mxu0
      %1180 = vmatprep.mubr.bf16.mxu0 0
      %1181 = vmatmul.mubr.bf16.gmra.mrb[0].mxu0 %v1032
      %v1182 = vpop.f32.mrb[0].mxu0
      %v1183 = vadd.f32 0.0, %v1182
      %v1184 = vpop.f32.mrb[0].mxu0
      %v1185 = vpop.f32.mrb[0].mxu0
      %v1186 = vadd.f32 0.0, %v1185
      %v1187 = vpop.f32.mrb[0].mxu0
      %1188 = vmatprep.mubr.bf16.mxu0 0
      %1189 = vmatmul.mubr.bf16.gmra.mrb[0].mxu0 %v1033
      %v1190 = vpop.f32.mrb[0].mxu0
      %v1191 = vadd.f32 0.0, %v1190
      %v1192 = vpop.f32.mrb[0].mxu0
      %v1193 = vpop.f32.mrb[0].mxu0
      %v1194 = vadd.f32 0.0, %v1193
      %v1195 = vpop.f32.mrb[0].mxu0
      %1196 = vmatprep.mubr.bf16.mxu0 0
      %1197 = vmatmul.mubr.bf16.gmra.mrb[0].mxu0 %v1034
      %v1198 = vpop.f32.mrb[0].mxu0
      %v1199 = vadd.f32 0.0, %v1198
      %v1200 = vpop.f32.mrb[0].mxu0
      %v1201 = vpop.f32.mrb[0].mxu0
      %v1202 = vadd.f32 0.0, %v1201
      %v1203 = vpop.f32.mrb[0].mxu0
      %1204 = vmatprep.mubr.bf16.mxu0 0
      %1205 = vmatmul.mubr.bf16.gmra.mrb[0].mxu0 %v1035
      %v1206 = vpop.f32.mrb[0].mxu0
      %v1207 = vadd.f32 0.0, %v1206
      %v1208 = vpop.f32.mrb[0].mxu0
      %v1209 = vpop.f32.mrb[0].mxu0
      %v1210 = vadd.f32 0.0, %v1209
      %v1211 = vpop.f32.mrb[0].mxu0
      %1212 = vmatprep.mubr.bf16.mxu0 0
      %1213 = vmatmul.mubr.bf16.gmra.mrb[0].mxu0 %v1036
      %v1214 = vpop.f32.mrb[0].mxu0
      %v1215 = vadd.f32 0.0, %v1214
      %v1216 = vpop.f32.mrb[0].mxu0
      %v1217 = vpop.f32.mrb[0].mxu0
      %v1218 = vadd.f32 0.0, %v1217
      %v1219 = vpop.f32.mrb[0].mxu0
      %1220 = vmatprep.mubr.bf16.mxu0 0
      %1221 = vmatmul.mubr.bf16.gmra.mrb[0].mxu0 %v1037
      %v1222 = vpop.f32.mrb[0].mxu0
      %v1223 = vadd.f32 0.0, %v1222
      %v1224 = vpop.f32.mrb[0].mxu0
      %v1225 = vpop.f32.mrb[0].mxu0
      %v1226 = vadd.f32 0.0, %v1225
      %v1227 = vpop.f32.mrb[0].mxu0
      %1228 = vmatprep.mubr.bf16.mxu0 0
      %1229 = vmatmul.mubr.bf16.gmra.mrb[0].mxu0 %v1038
      %v1230 = vpop.f32.mrb[0].mxu0
      %v1231 = vadd.f32 0.0, %v1230
      %v1232 = vpop.f32.mrb[0].mxu0
      %v1233 = vpop.f32.mrb[0].mxu0
      %v1234 = vadd.f32 0.0, %v1233
      %v1235 = vpop.f32.mrb[0].mxu0
      %1236 = vmatprep.mubr.bf16.mxu0 0
      %1237 = vmatmul.mubr.bf16.gmra.mrb[0].mxu0 %v1039
      %v1238 = vpop.f32.mrb[0].mxu0
      %v1239 = vadd.f32 0.0, %v1238
      %v1240 = vpop.f32.mrb[0].mxu0
      %v1241 = vpop.f32.mrb[0].mxu0
      %v1242 = vadd.f32 0.0, %v1241
      %v1243 = vpop.f32.mrb[0].mxu0
      %1244 = vmatprep.mubr.bf16.mxu0 0
      %1245 = vmatmul.mubr.bf16.gmra.mrb[0].mxu0 %v1040
      %v1246 = vpop.f32.mrb[0].mxu0
      %v1247 = vadd.f32 0.0, %v1246
      %v1248 = vpop.f32.mrb[0].mxu0
      %v1249 = vpop.f32.mrb[0].mxu0
      %v1250 = vadd.f32 0.0, %v1249
      %v1251 = vpop.f32.mrb[0].mxu0
      %1252 = vmatprep.mubr.bf16.mxu0 0
      %1253 = vmatmul.mubr.bf16.gmra.mrb[0].mxu0 %v1041
      %v1254 = vpop.f32.mrb[0].mxu0
      %v1255 = vadd.f32 0.0, %v1254
      %v1256 = vpop.f32.mrb[0].mxu0
      %v1257 = vpop.f32.mrb[0].mxu0
      %v1258 = vadd.f32 0.0, %v1257
      %v1259 = vpop.f32.mrb[0].mxu0
      %1260 = vmatprep.mubr.bf16.mxu0 0
      %1261 = vmatmul.mubr.bf16.gmra.mrb[0].mxu0 %v1042
      %v1262 = vpop.f32.mrb[0].mxu0
      %v1263 = vadd.f32 0.0, %v1262
      %v1264 = vpop.f32.mrb[0].mxu0
      %v1265 = vpop.f32.mrb[0].mxu0
      %v1266 = vadd.f32 0.0, %v1265
      %v1267 = vpop.f32.mrb[0].mxu0
      %1268 = vmatprep.mubr.bf16.mxu0 0
      %1269 = vmatmul.mubr.bf16.gmra.mrb[0].mxu0 %v1043
      %v1270 = vpop.f32.mrb[0].mxu0
      %v1271 = vadd.f32 0.0, %v1270
      %v1272 = vpop.f32.mrb[0].mxu0
      %v1273 = vpop.f32.mrb[0].mxu0
      %v1274 = vadd.f32 0.0, %v1273
      %v1275 = vpop.f32.mrb[0].mxu0
      %1276 = vmatprep.mubr.bf16.mxu0 0
      %1277 = vmatmul.mubr.bf16.gmra.mrb[0].mxu0 %v1044
      %v1278 = vpop.f32.mrb[0].mxu0
      %v1279 = vadd.f32 0.0, %v1278
      %v1280 = vpop.f32.mrb[0].mxu0
      %v1281 = vpop.f32.mrb[0].mxu0
      %v1282 = vadd.f32 0.0, %v1281
      %v1283 = vpop.f32.mrb[0].mxu0
      %1284 = vmatprep.mubr.bf16.mxu0 0
      %1285 = vmatmul.mubr.bf16.gmra.mrb[0].mxu0 %v1045
      %v1286 = vpop.f32.mrb[0].mxu0
      %v1287 = vadd.f32 0.0, %v1286
      %v1288 = vpop.f32.mrb[0].mxu0
      %v1289 = vpop.f32.mrb[0].mxu0
      %v1290 = vadd.f32 0.0, %v1289
      %v1291 = vpop.f32.mrb[0].mxu0
      %1292 = vmatprep.mubr.bf16.mxu0 0
      %1293 = vmatmul.mubr.bf16.gmra.mrb[0].mxu0 %v1046
      %v1294 = vpop.f32.mrb[0].mxu0
      %v1295 = vadd.f32 0.0, %v1294
      %v1296 = vpop.f32.mrb[0].mxu0
      %v1297 = vpop.f32.mrb[0].mxu0
      %v1298 = vadd.f32 0.0, %v1297
      %v1299 = vpop.f32.mrb[0].mxu0
      %1300 = vmatprep.mubr.bf16.mxu0 0
      %1301 = vmatmul.mubr.bf16.gmra.mrb[0].mxu0 %v1047
      %v1302 = vpop.f32.mrb[0].mxu0
      %v1303 = vadd.f32 0.0, %v1302
      %v1304 = vpop.f32.mrb[0].mxu0
      %v1305 = vpop.f32.mrb[0].mxu0
      %v1306 = vadd.f32 0.0, %v1305
      %v1307 = vpop.f32.mrb[0].mxu0
      %1308 = vmatprep.mubr.bf16.mxu0 0
      %1309 = vmatmul.mubr.bf16.gmra.mrb[0].mxu0 %v1048
      %v1310 = vpop.f32.mrb[0].mxu0
      %v1311 = vadd.f32 0.0, %v1310
      %v1312 = vpop.f32.mrb[0].mxu0
      %v1313 = vpop.f32.mrb[0].mxu0
      %v1314 = vadd.f32 0.0, %v1313
      %v1315 = vpop.f32.mrb[0].mxu0
      %1316 = vmatprep.mubr.bf16.mxu0 0
      %1317 = vmatmul.mubr.bf16.gmra.mrb[0].mxu0 %v1049
      %v1318 = vpop.f32.mrb[0].mxu0
      %v1319 = vadd.f32 0.0, %v1318
      %v1320 = vpop.f32.mrb[0].mxu0
      %v1321 = vpop.f32.mrb[0].mxu0
      %v1322 = vadd.f32 0.0, %v1321
      %v1323 = vpop.f32.mrb[0].mxu0
      %1324 = vmatprep.mubr.bf16.mxu0 0
      %1325 = vmatmul.mubr.bf16.gmra.mrb[0].mxu0 %v1050
      %v1326 = vpop.f32.mrb[0].mxu0
      %v1327 = vadd.f32 0.0, %v1326
      %v1328 = vpop.f32.mrb[0].mxu0
      %v1329 = vpop.f32.mrb[0].mxu0
      %v1330 = vadd.f32 0.0, %v1329
      %v1331 = vpop.f32.mrb[0].mxu0
      %1332 = vmatprep.mubr.bf16.mxu0 0
      %1333 = vmatmul.mubr.bf16.gmra.mrb[0].mxu0 %v1051
      %v1334 = vpop.f32.mrb[0].mxu0
      %v1335 = vadd.f32 0.0, %v1334
      %v1336 = vpop.f32.mrb[0].mxu0
      %v1337 = vpop.f32.mrb[0].mxu0
      %v1338 = vadd.f32 0.0, %v1337
      %v1339 = vpop.f32.mrb[0].mxu0
      %1340 = vmatprep.mubr.bf16.mxu0 0
      %1341 = vmatmul.mubr.bf16.gmra.mrb[0].mxu0 %v1052
      %v1342 = vpop.f32.mrb[0].mxu0
      %v1343 = vadd.f32 0.0, %v1342
      %v1344 = vpop.f32.mrb[0].mxu0
      %v1345 = vpop.f32.mrb[0].mxu0
      %v1346 = vadd.f32 0.0, %v1345
      %v1347 = vpop.f32.mrb[0].mxu0
      %1348 = vmatprep.mubr.bf16.mxu0 0
      %1349 = vmatmul.mubr.bf16.gmra.mrb[0].mxu0 %v1053
      %v1350 = vpop.f32.mrb[0].mxu0
      %v1351 = vadd.f32 0.0, %v1350
      %v1352 = vpop.f32.mrb[0].mxu0
      %v1353 = vpop.f32.mrb[0].mxu0
      %v1354 = vadd.f32 0.0, %v1353
      %v1355 = vpop.f32.mrb[0].mxu0
      %1356 = vmatprep.mubr.bf16.mxu0 0
      %1357 = vmatmul.mubr.bf16.gmra.mrb[0].mxu0 %v1054
      %v1358 = vpop.f32.mrb[0].mxu0
      %v1359 = vadd.f32 0.0, %v1358
      %v1360 = vpop.f32.mrb[0].mxu0
      %v1361 = vpop.f32.mrb[0].mxu0
      %v1362 = vadd.f32 0.0, %v1361
      %v1363 = vpop.f32.mrb[0].mxu0
      %1364 = vmatprep.mubr.bf16.mxu0 0
      %1365 = vmatmul.mubr.bf16.gmra.mrb[0].mxu0 %v1055
      %v1366 = vpop.f32.mrb[0].mxu0
      %v1367 = vadd.f32 0.0, %v1366
      %v1368 = vpop.f32.mrb[0].mxu0
      %v1369 = vpop.f32.mrb[0].mxu0
      %v1370 = vadd.f32 0.0, %v1369
      %v1371 = vpop.f32.mrb[0].mxu0
      %1372 = vmatprep.mubr.bf16.mxu0 0
      %1373 = vmatmul.mubr.bf16.gmra.mrb[0].mxu0 %v1056
      %v1374 = vpop.f32.mrb[0].mxu0
      %v1375 = vadd.f32 0.0, %v1374
      %v1376 = vpop.f32.mrb[0].mxu0
      %v1377 = vpop.f32.mrb[0].mxu0
      %v1378 = vadd.f32 0.0, %v1377
      %v1379 = vpop.f32.mrb[0].mxu0
      %1380 = vdwg.mxu0
      %v1381 = vld [vmem:[%s3] sm:$0x1]
      %v1383 = vlaneseq
      %v1384 = vshrl.u32 %v1383, 7
      %v1385 = vsub.s32 0, %v1384
      %v1386 = vrot.slane %v1381, %v1385
      %v1388 = vmul.f32 %v1167, %v1386
      %v1389 = vmul.f32 %v1170, %v1386
      %v1390 = vmul.f32 %v1175, %v1386
      %v1391 = vmul.f32 %v1178, %v1386
      %v1392 = vmul.f32 %v1183, %v1386
      %v1393 = vmul.f32 %v1186, %v1386
      %v1394 = vmul.f32 %v1191, %v1386
      %v1395 = vmul.f32 %v1194, %v1386
      %v1396 = vmul.f32 %v1199, %v1386
      %v1397 = vmul.f32 %v1202, %v1386
      %v1398 = vmul.f32 %v1207, %v1386
      %v1399 = vmul.f32 %v1210, %v1386
      %v1400 = vmul.f32 %v1215, %v1386
      %v1401 = vmul.f32 %v1218, %v1386
      %v1402 = vmul.f32 %v1223, %v1386
      %v1403 = vmul.f32 %v1226, %v1386
      %v1404 = vmul.f32 %v1231, %v1386
      %v1405 = vmul.f32 %v1234, %v1386
      %v1406 = vmul.f32 %v1239, %v1386
      %v1407 = vmul.f32 %v1242, %v1386
      %v1408 = vmul.f32 %v1247, %v1386
      %v1409 = vmul.f32 %v1250, %v1386
      %v1410 = vmul.f32 %v1255, %v1386
      %v1411 = vmul.f32 %v1258, %v1386
      %v1412 = vmul.f32 %v1263, %v1386
      %v1413 = vmul.f32 %v1266, %v1386
      %v1414 = vmul.f32 %v1271, %v1386
      %v1415 = vmul.f32 %v1274, %v1386
      %v1416 = vmul.f32 %v1279, %v1386
      %v1417 = vmul.f32 %v1282, %v1386
      %v1418 = vmul.f32 %v1287, %v1386
      %v1419 = vmul.f32 %v1290, %v1386
      %v1420 = vmul.f32 %v1295, %v1386
      %v1421 = vmul.f32 %v1298, %v1386
      %v1422 = vmul.f32 %v1303, %v1386
      %v1423 = vmul.f32 %v1306, %v1386
      %v1424 = vmul.f32 %v1311, %v1386
      %v1425 = vmul.f32 %v1314, %v1386
      %v1426 = vmul.f32 %v1319, %v1386
      %v1427 = vmul.f32 %v1322, %v1386
      %v1428 = vmul.f32 %v1327, %v1386
      %v1429 = vmul.f32 %v1330, %v1386
      %v1430 = vmul.f32 %v1335, %v1386
      %v1431 = vmul.f32 %v1338, %v1386
      %v1432 = vmul.f32 %v1343, %v1386
      %v1433 = vmul.f32 %v1346, %v1386
      %v1434 = vmul.f32 %v1351, %v1386
      %v1435 = vmul.f32 %v1354, %v1386
      %v1436 = vmul.f32 %v1359, %v1386
      %v1437 = vmul.f32 %v1362, %v1386
      %v1438 = vmul.f32 %v1367, %v1386
      %v1439 = vmul.f32 %v1370, %v1386
      %v1440 = vmul.f32 %v1375, %v1386
      %v1441 = vmul.f32 %v1378, %v1386
      %v1442 = vld [vmem:[%s4] sm:$0x1]
      %v1444 = vlaneseq
      %v1445 = vshrl.u32 %v1444, 7
      %v1446 = vsub.s32 0, %v1445
      %v1447 = vrot.slane %v1442, %v1446
      %v1449 = vadd.f32 %v1388, %v1447
      %v1450 = vadd.f32 %v1389, %v1447
      %v1451 = vadd.f32 %v1390, %v1447
      %v1452 = vadd.f32 %v1391, %v1447
      %v1453 = vadd.f32 %v1392, %v1447
      %v1454 = vadd.f32 %v1393, %v1447
      %v1455 = vadd.f32 %v1394, %v1447
      %v1456 = vadd.f32 %v1395, %v1447
      %v1457 = vadd.f32 %v1396, %v1447
      %v1458 = vadd.f32 %v1397, %v1447
      %v1459 = vadd.f32 %v1398, %v1447
      %v1460 = vadd.f32 %v1399, %v1447
      %v1461 = vadd.f32 %v1400, %v1447
      %v1462 = vadd.f32 %v1401, %v1447
      %v1463 = vadd.f32 %v1402, %v1447
      %v1464 = vadd.f32 %v1403, %v1447
      %v1465 = vadd.f32 %v1404, %v1447
      %v1466 = vadd.f32 %v1405, %v1447
      %v1467 = vadd.f32 %v1406, %v1447
      %v1468 = vadd.f32 %v1407, %v1447
      %v1469 = vadd.f32 %v1408, %v1447
      %v1470 = vadd.f32 %v1409, %v1447
      %v1471 = vadd.f32 %v1410, %v1447
      %v1472 = vadd.f32 %v1411, %v1447
      %v1473 = vadd.f32 %v1412, %v1447
      %v1474 = vadd.f32 %v1413, %v1447
      %v1475 = vadd.f32 %v1414, %v1447
      %v1476 = vadd.f32 %v1415, %v1447
      %v1477 = vadd.f32 %v1416, %v1447
      %v1478 = vadd.f32 %v1417, %v1447
      %v1479 = vadd.f32 %v1418, %v1447
      %v1480 = vadd.f32 %v1419, %v1447
      %v1481 = vadd.f32 %v1420, %v1447
      %v1482 = vadd.f32 %v1421, %v1447
      %v1483 = vadd.f32 %v1422, %v1447
      %v1484 = vadd.f32 %v1423, %v1447
      %v1485 = vadd.f32 %v1424, %v1447
      %v1486 = vadd.f32 %v1425, %v1447
      %v1487 = vadd.f32 %v1426, %v1447
      %v1488 = vadd.f32 %v1427, %v1447
      %v1489 = vadd.f32 %v1428, %v1447
      %v1490 = vadd.f32 %v1429, %v1447
      %v1491 = vadd.f32 %v1430, %v1447
      %v1492 = vadd.f32 %v1431, %v1447
      %v1493 = vadd.f32 %v1432, %v1447
      %v1494 = vadd.f32 %v1433, %v1447
      %v1495 = vadd.f32 %v1434, %v1447
      %v1496 = vadd.f32 %v1435, %v1447
      %v1497 = vadd.f32 %v1436, %v1447
      %v1498 = vadd.f32 %v1437, %v1447
      %v1499 = vadd.f32 %v1438, %v1447
      %v1500 = vadd.f32 %v1439, %v1447
      %v1501 = vadd.f32 %v1440, %v1447
      %v1502 = vadd.f32 %v1441, %v1447
      %v1503 = vxor.u32 %v1449, 2147483648
      %v1504 = vxor.u32 %v1450, 2147483648
      %v1505 = vxor.u32 %v1451, 2147483648
      %v1506 = vxor.u32 %v1452, 2147483648
      %v1507 = vxor.u32 %v1453, 2147483648
      %v1508 = vxor.u32 %v1454, 2147483648
      %v1509 = vxor.u32 %v1455, 2147483648
      %v1510 = vxor.u32 %v1456, 2147483648
      %v1511 = vxor.u32 %v1457, 2147483648
      %v1512 = vxor.u32 %v1458, 2147483648
      %v1513 = vxor.u32 %v1459, 2147483648
      %v1514 = vxor.u32 %v1460, 2147483648
      %v1515 = vxor.u32 %v1461, 2147483648
      %v1516 = vxor.u32 %v1462, 2147483648
      %v1517 = vxor.u32 %v1463, 2147483648
      %v1518 = vxor.u32 %v1464, 2147483648
      %v1519 = vxor.u32 %v1465, 2147483648
      %v1520 = vxor.u32 %v1466, 2147483648
      %v1521 = vxor.u32 %v1467, 2147483648
      %v1522 = vxor.u32 %v1468, 2147483648
      %v1523 = vxor.u32 %v1469, 2147483648
      %v1524 = vxor.u32 %v1470, 2147483648
      %v1525 = vxor.u32 %v1471, 2147483648
      %v1526 = vxor.u32 %v1472, 2147483648
      %v1527 = vxor.u32 %v1473, 2147483648
      %v1528 = vxor.u32 %v1474, 2147483648
      %v1529 = vxor.u32 %v1475, 2147483648
      %v1530 = vxor.u32 %v1476, 2147483648
      %v1531 = vxor.u32 %v1477, 2147483648
      %v1532 = vxor.u32 %v1478, 2147483648
      %v1533 = vxor.u32 %v1479, 2147483648
      %v1534 = vxor.u32 %v1480, 2147483648
      %v1535 = vxor.u32 %v1481, 2147483648
      %v1536 = vxor.u32 %v1482, 2147483648
      %v1537 = vxor.u32 %v1483, 2147483648
      %v1538 = vxor.u32 %v1484, 2147483648
      %v1539 = vxor.u32 %v1485, 2147483648
      %v1540 = vxor.u32 %v1486, 2147483648
      %v1541 = vxor.u32 %v1487, 2147483648
      %v1542 = vxor.u32 %v1488, 2147483648
      %v1543 = vxor.u32 %v1489, 2147483648
      %v1544 = vxor.u32 %v1490, 2147483648
      %v1545 = vxor.u32 %v1491, 2147483648
      %v1546 = vxor.u32 %v1492, 2147483648
      %v1547 = vxor.u32 %v1493, 2147483648
      %v1548 = vxor.u32 %v1494, 2147483648
      %v1549 = vxor.u32 %v1495, 2147483648
      %v1550 = vxor.u32 %v1496, 2147483648
      %v1551 = vxor.u32 %v1497, 2147483648
      %v1552 = vxor.u32 %v1498, 2147483648
      %v1553 = vxor.u32 %v1499, 2147483648
      %v1554 = vxor.u32 %v1500, 2147483648
      %v1555 = vxor.u32 %v1501, 2147483648
      %v1556 = vxor.u32 %v1502, 2147483648
      %v1557 = vmul.f32 %v1503, 1.442695
      %v1558 = vpow.pop %v1557
      %v1559 = vmul.f32 %v1504, 1.442695
      %v1560 = vpow.pop %v1559
      %v1561 = vmul.f32 %v1505, 1.442695
      %v1562 = vpow.pop %v1561
      %v1563 = vmul.f32 %v1506, 1.442695
      %v1564 = vpow.pop %v1563
      %v1565 = vmul.f32 %v1507, 1.442695
      %v1566 = vpow.pop %v1565
      %v1567 = vmul.f32 %v1508, 1.442695
      %v1568 = vpow.pop %v1567
      %v1569 = vmul.f32 %v1509, 1.442695
      %v1570 = vpow.pop %v1569
      %v1571 = vmul.f32 %v1510, 1.442695
      %v1572 = vpow.pop %v1571
      %v1573 = vmul.f32 %v1511, 1.442695
      %v1574 = vpow.pop %v1573
      %v1575 = vmul.f32 %v1512, 1.442695
      %v1576 = vpow.pop %v1575
      %v1577 = vmul.f32 %v1513, 1.442695
      %v1578 = vpow.pop %v1577
      %v1579 = vmul.f32 %v1514, 1.442695
      %v1580 = vpow.pop %v1579
      %v1581 = vmul.f32 %v1515, 1.442695
      %v1582 = vpow.pop %v1581
      %v1583 = vmul.f32 %v1516, 1.442695
      %v1584 = vpow.pop %v1583
      %v1585 = vmul.f32 %v1517, 1.442695
      %v1586 = vpow.pop %v1585
      %v1587 = vmul.f32 %v1518, 1.442695
      %v1588 = vpow.pop %v1587
      %v1589 = vmul.f32 %v1519, 1.442695
      %v1590 = vpow.pop %v1589
      %v1591 = vmul.f32 %v1520, 1.442695
      %v1592 = vpow.pop %v1591
      %v1593 = vmul.f32 %v1521, 1.442695
      %v1594 = vpow.pop %v1593
      %v1595 = vmul.f32 %v1522, 1.442695
      %v1596 = vpow.pop %v1595
      %v1597 = vmul.f32 %v1523, 1.442695
      %v1598 = vpow.pop %v1597
      %v1599 = vmul.f32 %v1524, 1.442695
      %v1600 = vpow.pop %v1599
      %v1601 = vmul.f32 %v1525, 1.442695
      %v1602 = vpow.pop %v1601
      %v1603 = vmul.f32 %v1526, 1.442695
      %v1604 = vpow.pop %v1603
      %v1605 = vmul.f32 %v1527, 1.442695
      %v1606 = vpow.pop %v1605
      %v1607 = vmul.f32 %v1528, 1.442695
      %v1608 = vpow.pop %v1607
      %v1609 = vmul.f32 %v1529, 1.442695
      %v1610 = vpow.pop %v1609
      %v1611 = vmul.f32 %v1530, 1.442695
      %v1612 = vpow.pop %v1611
      %v1613 = vmul.f32 %v1531, 1.442695
      %v1614 = vpow.pop %v1613
      %v1615 = vmul.f32 %v1532, 1.442695
      %v1616 = vpow.pop %v1615
      %v1617 = vmul.f32 %v1533, 1.442695
      %v1618 = vpow.pop %v1617
      %v1619 = vmul.f32 %v1534, 1.442695
      %v1620 = vpow.pop %v1619
      %v1621 = vmul.f32 %v1535, 1.442695
      %v1622 = vpow.pop %v1621
      %v1623 = vmul.f32 %v1536, 1.442695
      %v1624 = vpow.pop %v1623
      %v1625 = vmul.f32 %v1537, 1.442695
      %v1626 = vpow.pop %v1625
      %v1627 = vmul.f32 %v1538, 1.442695
      %v1628 = vpow.pop %v1627
      %v1629 = vmul.f32 %v1539, 1.442695
      %v1630 = vpow.pop %v1629
      %v1631 = vmul.f32 %v1540, 1.442695
      %v1632 = vpow.pop %v1631
      %v1633 = vmul.f32 %v1541, 1.442695
      %v1634 = vpow.pop %v1633
      %v1635 = vmul.f32 %v1542, 1.442695
      %v1636 = vpow.pop %v1635
      %v1637 = vmul.f32 %v1543, 1.442695
      %v1638 = vpow.pop %v1637
      %v1639 = vmul.f32 %v1544, 1.442695
      %v1640 = vpow.pop %v1639
      %v1641 = vmul.f32 %v1545, 1.442695
      %v1642 = vpow.pop %v1641
      %v1643 = vmul.f32 %v1546, 1.442695
      %v1644 = vpow.pop %v1643
      %v1645 = vmul.f32 %v1547, 1.442695
      %v1646 = vpow.pop %v1645
      %v1647 = vmul.f32 %v1548, 1.442695
      %v1648 = vpow.pop %v1647
      %v1649 = vmul.f32 %v1549, 1.442695
      %v1650 = vpow.pop %v1649
      %v1651 = vmul.f32 %v1550, 1.442695
      %v1652 = vpow.pop %v1651
      %v1653 = vmul.f32 %v1551, 1.442695
      %v1654 = vpow.pop %v1653
      %v1655 = vmul.f32 %v1552, 1.442695
      %v1656 = vpow.pop %v1655
      %v1657 = vmul.f32 %v1553, 1.442695
      %v1658 = vpow.pop %v1657
      %v1659 = vmul.f32 %v1554, 1.442695
      %v1660 = vpow.pop %v1659
      %v1661 = vmul.f32 %v1555, 1.442695
      %v1662 = vpow.pop %v1661
      %v1663 = vmul.f32 %v1556, 1.442695
      %v1664 = vpow.pop %v1663
      %v1665 = vadd.f32 %v1558, 1.0
      %v1666 = vadd.f32 %v1560, 1.0
      %v1667 = vadd.f32 %v1562, 1.0
      %v1668 = vadd.f32 %v1564, 1.0
      %v1669 = vadd.f32 %v1566, 1.0
      %v1670 = vadd.f32 %v1568, 1.0
      %v1671 = vadd.f32 %v1570, 1.0
      %v1672 = vadd.f32 %v1572, 1.0
      %v1673 = vadd.f32 %v1574, 1.0
      %v1674 = vadd.f32 %v1576, 1.0
      %v1675 = vadd.f32 %v1578, 1.0
      %v1676 = vadd.f32 %v1580, 1.0
      %v1677 = vadd.f32 %v1582, 1.0
      %v1678 = vadd.f32 %v1584, 1.0
      %v1679 = vadd.f32 %v1586, 1.0
      %v1680 = vadd.f32 %v1588, 1.0
      %v1681 = vadd.f32 %v1590, 1.0
      %v1682 = vadd.f32 %v1592, 1.0
      %v1683 = vadd.f32 %v1594, 1.0
      %v1684 = vadd.f32 %v1596, 1.0
      %v1685 = vadd.f32 %v1598, 1.0
      %v1686 = vadd.f32 %v1600, 1.0
      %v1687 = vadd.f32 %v1602, 1.0
      %v1688 = vadd.f32 %v1604, 1.0
      %v1689 = vadd.f32 %v1606, 1.0
      %v1690 = vadd.f32 %v1608, 1.0
      %v1691 = vadd.f32 %v1610, 1.0
      %v1692 = vadd.f32 %v1612, 1.0
      %v1693 = vadd.f32 %v1614, 1.0
      %v1694 = vadd.f32 %v1616, 1.0
      %v1695 = vadd.f32 %v1618, 1.0
      %v1696 = vadd.f32 %v1620, 1.0
      %v1697 = vadd.f32 %v1622, 1.0
      %v1698 = vadd.f32 %v1624, 1.0
      %v1699 = vadd.f32 %v1626, 1.0
      %v1700 = vadd.f32 %v1628, 1.0
      %v1701 = vadd.f32 %v1630, 1.0
      %v1702 = vadd.f32 %v1632, 1.0
      %v1703 = vadd.f32 %v1634, 1.0
      %v1704 = vadd.f32 %v1636, 1.0
      %v1705 = vadd.f32 %v1638, 1.0
      %v1706 = vadd.f32 %v1640, 1.0
      %v1707 = vadd.f32 %v1642, 1.0
      %v1708 = vadd.f32 %v1644, 1.0
      %v1709 = vadd.f32 %v1646, 1.0
      %v1710 = vadd.f32 %v1648, 1.0
      %v1711 = vadd.f32 %v1650, 1.0
      %v1712 = vadd.f32 %v1652, 1.0
      %v1713 = vadd.f32 %v1654, 1.0
      %v1714 = vadd.f32 %v1656, 1.0
      %v1715 = vadd.f32 %v1658, 1.0
      %v1716 = vadd.f32 %v1660, 1.0
      %v1717 = vadd.f32 %v1662, 1.0
      %v1718 = vadd.f32 %v1664, 1.0
      %v1719 = vrcp.pop %v1665
      %v1720 = vmul.f32 1.0, %v1719
      %v1721 = vrcp.pop %v1666
      %v1722 = vmul.f32 1.0, %v1721
      %v1723 = vrcp.pop %v1667
      %v1724 = vmul.f32 1.0, %v1723
      %v1725 = vrcp.pop %v1668
      %v1726 = vmul.f32 1.0, %v1725
      %v1727 = vrcp.pop %v1669
      %v1728 = vmul.f32 1.0, %v1727
      %v1729 = vrcp.pop %v1670
      %v1730 = vmul.f32 1.0, %v1729
      %v1731 = vrcp.pop %v1671
      %v1732 = vmul.f32 1.0, %v1731
      %v1733 = vrcp.pop %v1672
      %v1734 = vmul.f32 1.0, %v1733
      %v1735 = vrcp.pop %v1673
      %v1736 = vmul.f32 1.0, %v1735
      %v1737 = vrcp.pop %v1674
      %v1738 = vmul.f32 1.0, %v1737
      %v1739 = vrcp.pop %v1675
      %v1740 = vmul.f32 1.0, %v1739
      %v1741 = vrcp.pop %v1676
      %v1742 = vmul.f32 1.0, %v1741
      %v1743 = vrcp.pop %v1677
      %v1744 = vmul.f32 1.0, %v1743
      %v1745 = vrcp.pop %v1678
      %v1746 = vmul.f32 1.0, %v1745
      %v1747 = vrcp.pop %v1679
      %v1748 = vmul.f32 1.0, %v1747
      %v1749 = vrcp.pop %v1680
      %v1750 = vmul.f32 1.0, %v1749
      %v1751 = vrcp.pop %v1681
      %v1752 = vmul.f32 1.0, %v1751
      %v1753 = vrcp.pop %v1682
      %v1754 = vmul.f32 1.0, %v1753
      %v1755 = vrcp.pop %v1683
      %v1756 = vmul.f32 1.0, %v1755
      %v1757 = vrcp.pop %v1684
      %v1758 = vmul.f32 1.0, %v1757
      %v1759 = vrcp.pop %v1685
      %v1760 = vmul.f32 1.0, %v1759
      %v1761 = vrcp.pop %v1686
      %v1762 = vmul.f32 1.0, %v1761
      %v1763 = vrcp.pop %v1687
      %v1764 = vmul.f32 1.0, %v1763
      %v1765 = vrcp.pop %v1688
      %v1766 = vmul.f32 1.0, %v1765
      %v1767 = vrcp.pop %v1689
      %v1768 = vmul.f32 1.0, %v1767
      %v1769 = vrcp.pop %v1690
      %v1770 = vmul.f32 1.0, %v1769
      %v1771 = vrcp.pop %v1691
      %v1772 = vmul.f32 1.0, %v1771
      %v1773 = vrcp.pop %v1692
      %v1774 = vmul.f32 1.0, %v1773
      %v1775 = vrcp.pop %v1693
      %v1776 = vmul.f32 1.0, %v1775
      %v1777 = vrcp.pop %v1694
      %v1778 = vmul.f32 1.0, %v1777
      %v1779 = vrcp.pop %v1695
      %v1780 = vmul.f32 1.0, %v1779
      %v1781 = vrcp.pop %v1696
      %v1782 = vmul.f32 1.0, %v1781
      %v1783 = vrcp.pop %v1697
      %v1784 = vmul.f32 1.0, %v1783
      %v1785 = vrcp.pop %v1698
      %v1786 = vmul.f32 1.0, %v1785
      %v1787 = vrcp.pop %v1699
      %v1788 = vmul.f32 1.0, %v1787
      %v1789 = vrcp.pop %v1700
      %v1790 = vmul.f32 1.0, %v1789
      %v1791 = vrcp.pop %v1701
      %v1792 = vmul.f32 1.0, %v1791
      %v1793 = vrcp.pop %v1702
      %v1794 = vmul.f32 1.0, %v1793
      %v1795 = vrcp.pop %v1703
      %v1796 = vmul.f32 1.0, %v1795
      %v1797 = vrcp.pop %v1704
      %v1798 = vmul.f32 1.0, %v1797
      %v1799 = vrcp.pop %v1705
      %v1800 = vmul.f32 1.0, %v1799
      %v1801 = vrcp.pop %v1706
      %v1802 = vmul.f32 1.0, %v1801
      %v1803 = vrcp.pop %v1707
      %v1804 = vmul.f32 1.0, %v1803
      %v1805 = vrcp.pop %v1708
      %v1806 = vmul.f32 1.0, %v1805
      %v1807 = vrcp.pop %v1709
      %v1808 = vmul.f32 1.0, %v1807
      %v1809 = vrcp.pop %v1710
      %v1810 = vmul.f32 1.0, %v1809
      %v1811 = vrcp.pop %v1711
      %v1812 = vmul.f32 1.0, %v1811
      %v1813 = vrcp.pop %v1712
      %v1814 = vmul.f32 1.0, %v1813
      %v1815 = vrcp.pop %v1713
      %v1816 = vmul.f32 1.0, %v1815
      %v1817 = vrcp.pop %v1714
      %v1818 = vmul.f32 1.0, %v1817
      %v1819 = vrcp.pop %v1715
      %v1820 = vmul.f32 1.0, %v1819
      %v1821 = vrcp.pop %v1716
      %v1822 = vmul.f32 1.0, %v1821
      %v1823 = vrcp.pop %v1717
      %v1824 = vmul.f32 1.0, %v1823
      %v1825 = vrcp.pop %v1718
      %v1826 = vmul.f32 1.0, %v1825
      %v1827 = vmul.f32 %v1449, %v1720
      %v1828 = vmul.f32 %v1450, %v1722
      %v1829 = vmul.f32 %v1451, %v1724
      %v1830 = vmul.f32 %v1452, %v1726
      %v1831 = vmul.f32 %v1453, %v1728
      %v1832 = vmul.f32 %v1454, %v1730
      %v1833 = vmul.f32 %v1455, %v1732
      %v1834 = vmul.f32 %v1456, %v1734
      %v1835 = vmul.f32 %v1457, %v1736
      %v1836 = vmul.f32 %v1458, %v1738
      %v1837 = vmul.f32 %v1459, %v1740
      %v1838 = vmul.f32 %v1460, %v1742
      %v1839 = vmul.f32 %v1461, %v1744
      %v1840 = vmul.f32 %v1462, %v1746
      %v1841 = vmul.f32 %v1463, %v1748
      %v1842 = vmul.f32 %v1464, %v1750
      %v1843 = vmul.f32 %v1465, %v1752
      %v1844 = vmul.f32 %v1466, %v1754
      %v1845 = vmul.f32 %v1467, %v1756
      %v1846 = vmul.f32 %v1468, %v1758
      %v1847 = vmul.f32 %v1469, %v1760
      %v1848 = vmul.f32 %v1470, %v1762
      %v1849 = vmul.f32 %v1471, %v1764
      %v1850 = vmul.f32 %v1472, %v1766
      %v1851 = vmul.f32 %v1473, %v1768
      %v1852 = vmul.f32 %v1474, %v1770
      %v1853 = vmul.f32 %v1475, %v1772
      %v1854 = vmul.f32 %v1476, %v1774
      %v1855 = vmul.f32 %v1477, %v1776
      %v1856 = vmul.f32 %v1478, %v1778
      %v1857 = vmul.f32 %v1479, %v1780
      %v1858 = vmul.f32 %v1480, %v1782
      %v1859 = vmul.f32 %v1481, %v1784
      %v1860 = vmul.f32 %v1482, %v1786
      %v1861 = vmul.f32 %v1483, %v1788
      %v1862 = vmul.f32 %v1484, %v1790
      %v1863 = vmul.f32 %v1485, %v1792
      %v1864 = vmul.f32 %v1486, %v1794
      %v1865 = vmul.f32 %v1487, %v1796
      %v1866 = vmul.f32 %v1488, %v1798
      %v1867 = vmul.f32 %v1489, %v1800
      %v1868 = vmul.f32 %v1490, %v1802
      %v1869 = vmul.f32 %v1491, %v1804
      %v1870 = vmul.f32 %v1492, %v1806
      %v1871 = vmul.f32 %v1493, %v1808
      %v1872 = vmul.f32 %v1494, %v1810
      %v1873 = vmul.f32 %v1495, %v1812
      %v1874 = vmul.f32 %v1496, %v1814
      %v1875 = vmul.f32 %v1497, %v1816
      %v1876 = vmul.f32 %v1498, %v1818
      %v1877 = vmul.f32 %v1499, %v1820
      %v1878 = vmul.f32 %v1500, %v1822
      %v1879 = vmul.f32 %v1501, %v1824
      %v1880 = vmul.f32 %v1502, %v1826
      %1882 = vset.pattern.permute.xlu0 0
      %1883 = vperm.xlu0 %1882, %v852
      %v1884 = vpop.permute.xlu0 %1883
      %1887 = vset.pattern.permute.xlu0 0
      %1888 = vperm.xlu0 %1887, %v853
      %v1889 = vpop.permute.xlu0 %1888
      %1892 = vset.pattern.permute.xlu0 0
      %1893 = vperm.xlu0 %1892, %v854
      %v1894 = vpop.permute.xlu0 %1893
      %1897 = vset.pattern.permute.xlu0 0
      %1898 = vperm.xlu0 %1897, %v855
      %v1899 = vpop.permute.xlu0 %1898
      %1902 = vset.pattern.permute.xlu0 0
      %1903 = vperm.xlu0 %1902, %v856
      %v1904 = vpop.permute.xlu0 %1903
      %1907 = vset.pattern.permute.xlu0 0
      %1908 = vperm.xlu0 %1907, %v857
      %v1909 = vpop.permute.xlu0 %1908
      %1912 = vset.pattern.permute.xlu0 0
      %1913 = vperm.xlu0 %1912, %v858
      %v1914 = vpop.permute.xlu0 %1913
      %1917 = vset.pattern.permute.xlu0 0
      %1918 = vperm.xlu0 %1917, %v859
      %v1919 = vpop.permute.xlu0 %1918
      %1922 = vset.pattern.permute.xlu0 0
      %1923 = vperm.xlu0 %1922, %v860
      %v1924 = vpop.permute.xlu0 %1923
      %1927 = vset.pattern.permute.xlu0 0
      %1928 = vperm.xlu0 %1927, %v861
      %v1929 = vpop.permute.xlu0 %1928
      %1932 = vset.pattern.permute.xlu0 0
      %1933 = vperm.xlu0 %1932, %v862
      %v1934 = vpop.permute.xlu0 %1933
      %1937 = vset.pattern.permute.xlu0 0
      %1938 = vperm.xlu0 %1937, %v863
      %v1939 = vpop.permute.xlu0 %1938
      %1942 = vset.pattern.permute.xlu0 0
      %1943 = vperm.xlu0 %1942, %v864
      %v1944 = vpop.permute.xlu0 %1943
      %1947 = vset.pattern.permute.xlu0 0
      %1948 = vperm.xlu0 %1947, %v865
      %v1949 = vpop.permute.xlu0 %1948
      %1952 = vset.pattern.permute.xlu0 0
      %1953 = vperm.xlu0 %1952, %v866
      %v1954 = vpop.permute.xlu0 %1953
      %1957 = vset.pattern.permute.xlu0 0
      %1958 = vperm.xlu0 %1957, %v867
      %v1959 = vpop.permute.xlu0 %1958
      %1962 = vset.pattern.permute.xlu0 0
      %1963 = vperm.xlu0 %1962, %v868
      %v1964 = vpop.permute.xlu0 %1963
      %1967 = vset.pattern.permute.xlu0 0
      %1968 = vperm.xlu0 %1967, %v869
      %v1969 = vpop.permute.xlu0 %1968
      %1972 = vset.pattern.permute.xlu0 0
      %1973 = vperm.xlu0 %1972, %v870
      %v1974 = vpop.permute.xlu0 %1973
      %1977 = vset.pattern.permute.xlu0 0
      %1978 = vperm.xlu0 %1977, %v871
      %v1979 = vpop.permute.xlu0 %1978
      %1982 = vset.pattern.permute.xlu0 0
      %1983 = vperm.xlu0 %1982, %v872
      %v1984 = vpop.permute.xlu0 %1983
      %1987 = vset.pattern.permute.xlu0 0
      %1988 = vperm.xlu0 %1987, %v873
      %v1989 = vpop.permute.xlu0 %1988
      %1992 = vset.pattern.permute.xlu0 0
      %1993 = vperm.xlu0 %1992, %v874
      %v1994 = vpop.permute.xlu0 %1993
      %1997 = vset.pattern.permute.xlu0 0
      %1998 = vperm.xlu0 %1997, %v875
      %v1999 = vpop.permute.xlu0 %1998
      %2002 = vset.pattern.permute.xlu0 0
      %2003 = vperm.xlu0 %2002, %v876
      %v2004 = vpop.permute.xlu0 %2003
      %2007 = vset.pattern.permute.xlu0 0
      %2008 = vperm.xlu0 %2007, %v877
      %v2009 = vpop.permute.xlu0 %2008
      %2012 = vset.pattern.permute.xlu0 0
      %2013 = vperm.xlu0 %2012, %v878
      %v2014 = vpop.permute.xlu0 %2013
      %2017 = vset.pattern.permute.xlu0 0
      %2018 = vperm.xlu0 %2017, %v879
      %v2019 = vpop.permute.xlu0 %2018
      %2022 = vset.pattern.permute.xlu0 0
      %2023 = vperm.xlu0 %2022, %v880
      %v2024 = vpop.permute.xlu0 %2023
      %2027 = vset.pattern.permute.xlu0 0
      %2028 = vperm.xlu0 %2027, %v881
      %v2029 = vpop.permute.xlu0 %2028
      %2032 = vset.pattern.permute.xlu0 0
      %2033 = vperm.xlu0 %2032, %v882
      %v2034 = vpop.permute.xlu0 %2033
      %2037 = vset.pattern.permute.xlu0 0
      %2038 = vperm.xlu0 %2037, %v883
      %v2039 = vpop.permute.xlu0 %2038
      %2042 = vset.pattern.permute.xlu0 0
      %2043 = vperm.xlu0 %2042, %v884
      %v2044 = vpop.permute.xlu0 %2043
      %2047 = vset.pattern.permute.xlu0 0
      %2048 = vperm.xlu0 %2047, %v885
      %v2049 = vpop.permute.xlu0 %2048
      %2052 = vset.pattern.permute.xlu0 0
      %2053 = vperm.xlu0 %2052, %v886
      %v2054 = vpop.permute.xlu0 %2053
      %2057 = vset.pattern.permute.xlu0 0
      %2058 = vperm.xlu0 %2057, %v887
      %v2059 = vpop.permute.xlu0 %2058
      %2062 = vset.pattern.permute.xlu0 0
      %2063 = vperm.xlu0 %2062, %v888
      %v2064 = vpop.permute.xlu0 %2063
      %2067 = vset.pattern.permute.xlu0 0
      %2068 = vperm.xlu0 %2067, %v889
      %v2069 = vpop.permute.xlu0 %2068
      %2072 = vset.pattern.permute.xlu0 0
      %2073 = vperm.xlu0 %2072, %v890
      %v2074 = vpop.permute.xlu0 %2073
      %2077 = vset.pattern.permute.xlu0 0
      %2078 = vperm.xlu0 %2077, %v891
      %v2079 = vpop.permute.xlu0 %2078
      %2082 = vset.pattern.permute.xlu0 0
      %2083 = vperm.xlu0 %2082, %v892
      %v2084 = vpop.permute.xlu0 %2083
      %2087 = vset.pattern.permute.xlu0 0
      %2088 = vperm.xlu0 %2087, %v893
      %v2089 = vpop.permute.xlu0 %2088
      %2092 = vset.pattern.permute.xlu0 0
      %2093 = vperm.xlu0 %2092, %v894
      %v2094 = vpop.permute.xlu0 %2093
      %2097 = vset.pattern.permute.xlu0 0
      %2098 = vperm.xlu0 %2097, %v895
      %v2099 = vpop.permute.xlu0 %2098
      %2102 = vset.pattern.permute.xlu0 0
      %2103 = vperm.xlu0 %2102, %v896
      %v2104 = vpop.permute.xlu0 %2103
      %2107 = vset.pattern.permute.xlu0 0
      %2108 = vperm.xlu0 %2107, %v897
      %v2109 = vpop.permute.xlu0 %2108
      %2112 = vset.pattern.permute.xlu0 0
      %2113 = vperm.xlu0 %2112, %v898
      %v2114 = vpop.permute.xlu0 %2113
      %2117 = vset.pattern.permute.xlu0 0
      %2118 = vperm.xlu0 %2117, %v899
      %v2119 = vpop.permute.xlu0 %2118
      %2122 = vset.pattern.permute.xlu0 0
      %2123 = vperm.xlu0 %2122, %v900
      %v2124 = vpop.permute.xlu0 %2123
      %2127 = vset.pattern.permute.xlu0 0
      %2128 = vperm.xlu0 %2127, %v901
      %v2129 = vpop.permute.xlu0 %2128
      %2132 = vset.pattern.permute.xlu0 0
      %2133 = vperm.xlu0 %2132, %v902
      %v2134 = vpop.permute.xlu0 %2133
      %2137 = vset.pattern.permute.xlu0 0
      %2138 = vperm.xlu0 %2137, %v903
      %v2139 = vpop.permute.xlu0 %2138
      %2142 = vset.pattern.permute.xlu0 0
      %2143 = vperm.xlu0 %2142, %v904
      %v2144 = vpop.permute.xlu0 %2143
      %2147 = vset.pattern.permute.xlu0 0
      %2148 = vperm.xlu0 %2147, %v905
      %v2149 = vpop.permute.xlu0 %2148
      %v2151 = vmul.f32 %v1827, %v1884
      %v2152 = vmul.f32 %v1828, %v1889
      %v2153 = vmul.f32 %v1829, %v1894
      %v2154 = vmul.f32 %v1830, %v1899
      %v2155 = vmul.f32 %v1831, %v1904
      %v2156 = vmul.f32 %v1832, %v1909
      %v2157 = vmul.f32 %v1833, %v1914
      %v2158 = vmul.f32 %v1834, %v1919
      %v2159 = vmul.f32 %v1835, %v1924
      %v2160 = vmul.f32 %v1836, %v1929
      %v2161 = vmul.f32 %v1837, %v1934
      %v2162 = vmul.f32 %v1838, %v1939
      %v2163 = vmul.f32 %v1839, %v1944
      %v2164 = vmul.f32 %v1840, %v1949
      %v2165 = vmul.f32 %v1841, %v1954
      %v2166 = vmul.f32 %v1842, %v1959
      %v2167 = vmul.f32 %v1843, %v1964
      %v2168 = vmul.f32 %v1844, %v1969
      %v2169 = vmul.f32 %v1845, %v1974
      %v2170 = vmul.f32 %v1846, %v1979
      %v2171 = vmul.f32 %v1847, %v1984
      %v2172 = vmul.f32 %v1848, %v1989
      %v2173 = vmul.f32 %v1849, %v1994
      %v2174 = vmul.f32 %v1850, %v1999
      %v2175 = vmul.f32 %v1851, %v2004
      %v2176 = vmul.f32 %v1852, %v2009
      %v2177 = vmul.f32 %v1853, %v2014
      %v2178 = vmul.f32 %v1854, %v2019
      %v2179 = vmul.f32 %v1855, %v2024
      %v2180 = vmul.f32 %v1856, %v2029
      %v2181 = vmul.f32 %v1857, %v2034
      %v2182 = vmul.f32 %v1858, %v2039
      %v2183 = vmul.f32 %v1859, %v2044
      %v2184 = vmul.f32 %v1860, %v2049
      %v2185 = vmul.f32 %v1861, %v2054
      %v2186 = vmul.f32 %v1862, %v2059
      %v2187 = vmul.f32 %v1863, %v2064
      %v2188 = vmul.f32 %v1864, %v2069
      %v2189 = vmul.f32 %v1865, %v2074
      %v2190 = vmul.f32 %v1866, %v2079
      %v2191 = vmul.f32 %v1867, %v2084
      %v2192 = vmul.f32 %v1868, %v2089
      %v2193 = vmul.f32 %v1869, %v2094
      %v2194 = vmul.f32 %v1870, %v2099
      %v2195 = vmul.f32 %v1871, %v2104
      %v2196 = vmul.f32 %v1872, %v2109
      %v2197 = vmul.f32 %v1873, %v2114
      %v2198 = vmul.f32 %v1874, %v2119
      %v2199 = vmul.f32 %v1875, %v2124
      %v2200 = vmul.f32 %v1876, %v2129
      %v2201 = vmul.f32 %v1877, %v2134
      %v2202 = vmul.f32 %v1878, %v2139
      %v2203 = vmul.f32 %v1879, %v2144
      %v2204 = vmul.f32 %v1880, %v2149
      %v2205 = vpack.c.bf16 %v2152, %v2151
      %v2206 = vpack.c.bf16 %v2153, %v2153
      %v2207 = vpack.c.bf16 %v2155, %v2154
      %v2208 = vpack.c.bf16 %v2156, %v2156
      %v2209 = vpack.c.bf16 %v2158, %v2157
      %v2210 = vpack.c.bf16 %v2159, %v2159
      %v2211 = vpack.c.bf16 %v2161, %v2160
      %v2212 = vpack.c.bf16 %v2162, %v2162
      %v2213 = vpack.c.bf16 %v2164, %v2163
      %v2214 = vpack.c.bf16 %v2165, %v2165
      %v2215 = vpack.c.bf16 %v2167, %v2166
      %v2216 = vpack.c.bf16 %v2168, %v2168
      %v2217 = vpack.c.bf16 %v2170, %v2169
      %v2218 = vpack.c.bf16 %v2171, %v2171
      %v2219 = vpack.c.bf16 %v2173, %v2172
      %v2220 = vpack.c.bf16 %v2174, %v2174
      %v2221 = vpack.c.bf16 %v2176, %v2175
      %v2222 = vpack.c.bf16 %v2177, %v2177
      %v2223 = vpack.c.bf16 %v2179, %v2178
      %v2224 = vpack.c.bf16 %v2180, %v2180
      %v2225 = vpack.c.bf16 %v2182, %v2181
      %v2226 = vpack.c.bf16 %v2183, %v2183
      %v2227 = vpack.c.bf16 %v2185, %v2184
      %v2228 = vpack.c.bf16 %v2186, %v2186
      %v2229 = vpack.c.bf16 %v2188, %v2187
      %v2230 = vpack.c.bf16 %v2189, %v2189
      %v2231 = vpack.c.bf16 %v2191, %v2190
      %v2232 = vpack.c.bf16 %v2192, %v2192
      %v2233 = vpack.c.bf16 %v2194, %v2193
      %v2234 = vpack.c.bf16 %v2195, %v2195
      %v2235 = vpack.c.bf16 %v2197, %v2196
      %v2236 = vpack.c.bf16 %v2198, %v2198
      %v2237 = vpack.c.bf16 %v2200, %v2199
      %v2238 = vpack.c.bf16 %v2201, %v2201
      %v2239 = vpack.c.bf16 %v2203, %v2202
      %v2240 = vpack.c.bf16 %v2204, %v2204
      %v2241 = vld [vmem:[%s5] sm:$0xf]
      %v2242 = vld [vmem:[%s5 + $0x4] sm:$0xf]
      %v2243 = vld [vmem:[%s5 + $0x8] sm:$0xf]
      %v2244 = vld [vmem:[%s5 + $0xc] sm:$0xf]
      %v2245 = vld [vmem:[%s5 + $0x10] sm:$0xf]
      %v2246 = vld [vmem:[%s5 + $0x14] sm:$0xf]
      %v2247 = vld [vmem:[%s5 + $0x18] sm:$0xf]
      %v2248 = vld [vmem:[%s5 + $0x1c] sm:$0xf]
      %v2249 = vld [vmem:[%s5 + $0x20] sm:$0xf]
      %v2250 = vld [vmem:[%s5 + $0x24] sm:$0xf]
      %v2251 = vld [vmem:[%s5 + $0x28] sm:$0xf]
      %v2252 = vld [vmem:[%s5 + $0x2c] sm:$0xf]
      %v2253 = vld [vmem:[%s5 + $0x30] sm:$0xf]
      %v2254 = vld [vmem:[%s5 + $0x34] sm:$0xf]
      %v2255 = vld [vmem:[%s5 + $0x38] sm:$0xf]
      %v2256 = vld [vmem:[%s5 + $0x3c] sm:$0xf]
      %v2273 = vunpack.c.l.b16 %v2241
      %v2274 = vunpack.c.l.b16 %v2242
      %v2275 = vunpack.c.l.b16 %v2243
      %v2276 = vunpack.c.l.b16 %v2244
      %v2277 = vunpack.c.l.b16 %v2245
      %v2278 = vunpack.c.l.b16 %v2246
      %v2279 = vunpack.c.l.b16 %v2247
      %v2280 = vunpack.c.l.b16 %v2248
      %v2281 = vunpack.c.l.b16 %v2249
      %v2282 = vunpack.c.l.b16 %v2250
      %v2283 = vunpack.c.l.b16 %v2251
      %v2284 = vunpack.c.l.b16 %v2252
      %v2285 = vunpack.c.l.b16 %v2253
      %v2286 = vunpack.c.l.b16 %v2254
      %v2287 = vunpack.c.l.b16 %v2255
      %v2288 = vunpack.c.l.b16 %v2256
      %v2289 = vpack.c.b16 %v2274, %v2273
      %v2290 = vpack.c.b16 %v2276, %v2275
      %v2291 = vpack.c.b16 %v2278, %v2277
      %v2292 = vpack.c.b16 %v2280, %v2279
      %v2293 = vpack.c.b16 %v2282, %v2281
      %v2294 = vpack.c.b16 %v2284, %v2283
      %v2295 = vpack.c.b16 %v2286, %v2285
      %v2296 = vpack.c.b16 %v2288, %v2287
      %2305 = vmatprep.subr.bf16.mxu0 0
      %2306 = vmatpush1.bf16.msra.mxu0 %v2289
      %2307 = vmatprep.subr.bf16.mxu0 0
      %2308 = vmatpush1.bf16.msra.mxu0 %v2290
      %2309 = vmatprep.subr.bf16.mxu0 0
      %2310 = vmatpush1.bf16.msra.mxu0 %v2291
      %2311 = vmatprep.subr.bf16.mxu0 0
      %2312 = vmatpush1.bf16.msra.mxu0 %v2292
      %2313 = vmatprep.subr.bf16.mxu0 0
      %2314 = vmatpush1.bf16.msra.mxu0 %v2293
      %2315 = vmatprep.subr.bf16.mxu0 0
      %2316 = vmatpush1.bf16.msra.mxu0 %v2294
      %2317 = vmatprep.subr.bf16.mxu0 0
      %2318 = vmatpush1.bf16.msra.mxu0 %v2295
      %2319 = vmatprep.subr.bf16.mxu0 0
      %2320 = vmatpush1.bf16.msra.mxu0 %v2296
      %2321 = vmatprep.subr.bf16.mxu0 0
      %2322 = vmatpush1.bf16.msra.mxu0 0
      %2323 = vmatprep.subr.bf16.mxu0 0
      %2324 = vmatpush1.bf16.msra.mxu0 0
      %2325 = vmatprep.subr.bf16.mxu0 0
      %2326 = vmatpush1.bf16.msra.mxu0 0
      %2327 = vmatprep.subr.bf16.mxu0 0
      %2328 = vmatpush1.bf16.msra.mxu0 0
      %2329 = vmatprep.subr.bf16.mxu0 0
      %2330 = vmatpush1.bf16.msra.mxu0 0
      %2331 = vmatprep.subr.bf16.mxu0 0
      %2332 = vmatpush1.bf16.msra.mxu0 0
      %2333 = vmatprep.subr.bf16.mxu0 0
      %2334 = vmatpush1.bf16.msra.mxu0 0
      %2335 = vmatprep.subr.bf16.mxu0 0
      %2336 = vmatpush1.bf16.msra.mxu0 0
      %2337 = vmatprep.mubr.bf16.mxu0 0
      %2338 = vmatmul.mubr.bf16.gmra.mrb[0].mxu0 %v1030
      %v2339 = vpop.f32.mrb[0].mxu0
      %v2340 = vadd.f32 0.0, %v2339
      %v2341 = vpop.f32.mrb[0].mxu0
      %v2342 = vpop.f32.mrb[0].mxu0
      %v2343 = vadd.f32 0.0, %v2342
      %v2344 = vpop.f32.mrb[0].mxu0
      %2345 = vmatprep.mubr.bf16.mxu0 0
      %2346 = vmatmul.mubr.bf16.gmra.mrb[0].mxu0 %v1031
      %v2347 = vpop.f32.mrb[0].mxu0
      %v2348 = vadd.f32 0.0, %v2347
      %v2349 = vpop.f32.mrb[0].mxu0
      %v2350 = vpop.f32.mrb[0].mxu0
      %v2351 = vadd.f32 0.0, %v2350
      %v2352 = vpop.f32.mrb[0].mxu0
      %2353 = vmatprep.mubr.bf16.mxu0 0
      %2354 = vmatmul.mubr.bf16.gmra.mrb[0].mxu0 %v1032
      %v2355 = vpop.f32.mrb[0].mxu0
      %v2356 = vadd.f32 0.0, %v2355
      %v2357 = vpop.f32.mrb[0].mxu0
      %v2358 = vpop.f32.mrb[0].mxu0
      %v2359 = vadd.f32 0.0, %v2358
      %v2360 = vpop.f32.mrb[0].mxu0
      %2361 = vmatprep.mubr.bf16.mxu0 0
      %2362 = vmatmul.mubr.bf16.gmra.mrb[0].mxu0 %v1033
      %v2363 = vpop.f32.mrb[0].mxu0
      %v2364 = vadd.f32 0.0, %v2363
      %v2365 = vpop.f32.mrb[0].mxu0
      %v2366 = vpop.f32.mrb[0].mxu0
      %v2367 = vadd.f32 0.0, %v2366
      %v2368 = vpop.f32.mrb[0].mxu0
      %2369 = vmatprep.mubr.bf16.mxu0 0
      %2370 = vmatmul.mubr.bf16.gmra.mrb[0].mxu0 %v1034
      %v2371 = vpop.f32.mrb[0].mxu0
      %v2372 = vadd.f32 0.0, %v2371
      %v2373 = vpop.f32.mrb[0].mxu0
      %v2374 = vpop.f32.mrb[0].mxu0
      %v2375 = vadd.f32 0.0, %v2374
      %v2376 = vpop.f32.mrb[0].mxu0
      %2377 = vmatprep.mubr.bf16.mxu0 0
      %2378 = vmatmul.mubr.bf16.gmra.mrb[0].mxu0 %v1035
      %v2379 = vpop.f32.mrb[0].mxu0
      %v2380 = vadd.f32 0.0, %v2379
      %v2381 = vpop.f32.mrb[0].mxu0
      %v2382 = vpop.f32.mrb[0].mxu0
      %v2383 = vadd.f32 0.0, %v2382
      %v2384 = vpop.f32.mrb[0].mxu0
      %2385 = vmatprep.mubr.bf16.mxu0 0
      %2386 = vmatmul.mubr.bf16.gmra.mrb[0].mxu0 %v1036
      %v2387 = vpop.f32.mrb[0].mxu0
      %v2388 = vadd.f32 0.0, %v2387
      %v2389 = vpop.f32.mrb[0].mxu0
      %v2390 = vpop.f32.mrb[0].mxu0
      %v2391 = vadd.f32 0.0, %v2390
      %v2392 = vpop.f32.mrb[0].mxu0
      %2393 = vmatprep.mubr.bf16.mxu0 0
      %2394 = vmatmul.mubr.bf16.gmra.mrb[0].mxu0 %v1037
      %v2395 = vpop.f32.mrb[0].mxu0
      %v2396 = vadd.f32 0.0, %v2395
      %v2397 = vpop.f32.mrb[0].mxu0
      %v2398 = vpop.f32.mrb[0].mxu0
      %v2399 = vadd.f32 0.0, %v2398
      %v2400 = vpop.f32.mrb[0].mxu0
      %2401 = vmatprep.mubr.bf16.mxu0 0
      %2402 = vmatmul.mubr.bf16.gmra.mrb[0].mxu0 %v1038
      %v2403 = vpop.f32.mrb[0].mxu0
      %v2404 = vadd.f32 0.0, %v2403
      %v2405 = vpop.f32.mrb[0].mxu0
      %v2406 = vpop.f32.mrb[0].mxu0
      %v2407 = vadd.f32 0.0, %v2406
      %v2408 = vpop.f32.mrb[0].mxu0
      %2409 = vmatprep.mubr.bf16.mxu0 0
      %2410 = vmatmul.mubr.bf16.gmra.mrb[0].mxu0 %v1039
      %v2411 = vpop.f32.mrb[0].mxu0
      %v2412 = vadd.f32 0.0, %v2411
      %v2413 = vpop.f32.mrb[0].mxu0
      %v2414 = vpop.f32.mrb[0].mxu0
      %v2415 = vadd.f32 0.0, %v2414
      %v2416 = vpop.f32.mrb[0].mxu0
      %2417 = vmatprep.mubr.bf16.mxu0 0
      %2418 = vmatmul.mubr.bf16.gmra.mrb[0].mxu0 %v1040
      %v2419 = vpop.f32.mrb[0].mxu0
      %v2420 = vadd.f32 0.0, %v2419
      %v2421 = vpop.f32.mrb[0].mxu0
      %v2422 = vpop.f32.mrb[0].mxu0
      %v2423 = vadd.f32 0.0, %v2422
      %v2424 = vpop.f32.mrb[0].mxu0
      %2425 = vmatprep.mubr.bf16.mxu0 0
      %2426 = vmatmul.mubr.bf16.gmra.mrb[0].mxu0 %v1041
      %v2427 = vpop.f32.mrb[0].mxu0
      %v2428 = vadd.f32 0.0, %v2427
      %v2429 = vpop.f32.mrb[0].mxu0
      %v2430 = vpop.f32.mrb[0].mxu0
      %v2431 = vadd.f32 0.0, %v2430
      %v2432 = vpop.f32.mrb[0].mxu0
      %2433 = vmatprep.mubr.bf16.mxu0 0
      %2434 = vmatmul.mubr.bf16.gmra.mrb[0].mxu0 %v1042
      %v2435 = vpop.f32.mrb[0].mxu0
      %v2436 = vadd.f32 0.0, %v2435
      %v2437 = vpop.f32.mrb[0].mxu0
      %v2438 = vpop.f32.mrb[0].mxu0
      %v2439 = vadd.f32 0.0, %v2438
      %v2440 = vpop.f32.mrb[0].mxu0
      %2441 = vmatprep.mubr.bf16.mxu0 0
      %2442 = vmatmul.mubr.bf16.gmra.mrb[0].mxu0 %v1043
      %v2443 = vpop.f32.mrb[0].mxu0
      %v2444 = vadd.f32 0.0, %v2443
      %v2445 = vpop.f32.mrb[0].mxu0
      %v2446 = vpop.f32.mrb[0].mxu0
      %v2447 = vadd.f32 0.0, %v2446
      %v2448 = vpop.f32.mrb[0].mxu0
      %2449 = vmatprep.mubr.bf16.mxu0 0
      %2450 = vmatmul.mubr.bf16.gmra.mrb[0].mxu0 %v1044
      %v2451 = vpop.f32.mrb[0].mxu0
      %v2452 = vadd.f32 0.0, %v2451
      %v2453 = vpop.f32.mrb[0].mxu0
      %v2454 = vpop.f32.mrb[0].mxu0
      %v2455 = vadd.f32 0.0, %v2454
      %v2456 = vpop.f32.mrb[0].mxu0
      %2457 = vmatprep.mubr.bf16.mxu0 0
      %2458 = vmatmul.mubr.bf16.gmra.mrb[0].mxu0 %v1045
      %v2459 = vpop.f32.mrb[0].mxu0
      %v2460 = vadd.f32 0.0, %v2459
      %v2461 = vpop.f32.mrb[0].mxu0
      %v2462 = vpop.f32.mrb[0].mxu0
      %v2463 = vadd.f32 0.0, %v2462
      %v2464 = vpop.f32.mrb[0].mxu0
      %2465 = vmatprep.mubr.bf16.mxu0 0
      %2466 = vmatmul.mubr.bf16.gmra.mrb[0].mxu0 %v1046
      %v2467 = vpop.f32.mrb[0].mxu0
      %v2468 = vadd.f32 0.0, %v2467
      %v2469 = vpop.f32.mrb[0].mxu0
      %v2470 = vpop.f32.mrb[0].mxu0
      %v2471 = vadd.f32 0.0, %v2470
      %v2472 = vpop.f32.mrb[0].mxu0
      %2473 = vmatprep.mubr.bf16.mxu0 0
      %2474 = vmatmul.mubr.bf16.gmra.mrb[0].mxu0 %v1047
      %v2475 = vpop.f32.mrb[0].mxu0
      %v2476 = vadd.f32 0.0, %v2475
      %v2477 = vpop.f32.mrb[0].mxu0
      %v2478 = vpop.f32.mrb[0].mxu0
      %v2479 = vadd.f32 0.0, %v2478
      %v2480 = vpop.f32.mrb[0].mxu0
      %2481 = vmatprep.mubr.bf16.mxu0 0
      %2482 = vmatmul.mubr.bf16.gmra.mrb[0].mxu0 %v1048
      %v2483 = vpop.f32.mrb[0].mxu0
      %v2484 = vadd.f32 0.0, %v2483
      %v2485 = vpop.f32.mrb[0].mxu0
      %v2486 = vpop.f32.mrb[0].mxu0
      %v2487 = vadd.f32 0.0, %v2486
      %v2488 = vpop.f32.mrb[0].mxu0
      %2489 = vmatprep.mubr.bf16.mxu0 0
      %2490 = vmatmul.mubr.bf16.gmra.mrb[0].mxu0 %v1049
      %v2491 = vpop.f32.mrb[0].mxu0
      %v2492 = vadd.f32 0.0, %v2491
      %v2493 = vpop.f32.mrb[0].mxu0
      %v2494 = vpop.f32.mrb[0].mxu0
      %v2495 = vadd.f32 0.0, %v2494
      %v2496 = vpop.f32.mrb[0].mxu0
      %2497 = vmatprep.mubr.bf16.mxu0 0
      %2498 = vmatmul.mubr.bf16.gmra.mrb[0].mxu0 %v1050
      %v2499 = vpop.f32.mrb[0].mxu0
      %v2500 = vadd.f32 0.0, %v2499
      %v2501 = vpop.f32.mrb[0].mxu0
      %v2502 = vpop.f32.mrb[0].mxu0
      %v2503 = vadd.f32 0.0, %v2502
      %v2504 = vpop.f32.mrb[0].mxu0
      %2505 = vmatprep.mubr.bf16.mxu0 0
      %2506 = vmatmul.mubr.bf16.gmra.mrb[0].mxu0 %v1051
      %v2507 = vpop.f32.mrb[0].mxu0
      %v2508 = vadd.f32 0.0, %v2507
      %v2509 = vpop.f32.mrb[0].mxu0
      %v2510 = vpop.f32.mrb[0].mxu0
      %v2511 = vadd.f32 0.0, %v2510
      %v2512 = vpop.f32.mrb[0].mxu0
      %2513 = vmatprep.mubr.bf16.mxu0 0
      %2514 = vmatmul.mubr.bf16.gmra.mrb[0].mxu0 %v1052
      %v2515 = vpop.f32.mrb[0].mxu0
      %v2516 = vadd.f32 0.0, %v2515
      %v2517 = vpop.f32.mrb[0].mxu0
      %v2518 = vpop.f32.mrb[0].mxu0
      %v2519 = vadd.f32 0.0, %v2518
      %v2520 = vpop.f32.mrb[0].mxu0
      %2521 = vmatprep.mubr.bf16.mxu0 0
      %2522 = vmatmul.mubr.bf16.gmra.mrb[0].mxu0 %v1053
      %v2523 = vpop.f32.mrb[0].mxu0
      %v2524 = vadd.f32 0.0, %v2523
      %v2525 = vpop.f32.mrb[0].mxu0
      %v2526 = vpop.f32.mrb[0].mxu0
      %v2527 = vadd.f32 0.0, %v2526
      %v2528 = vpop.f32.mrb[0].mxu0
      %2529 = vmatprep.mubr.bf16.mxu0 0
      %2530 = vmatmul.mubr.bf16.gmra.mrb[0].mxu0 %v1054
      %v2531 = vpop.f32.mrb[0].mxu0
      %v2532 = vadd.f32 0.0, %v2531
      %v2533 = vpop.f32.mrb[0].mxu0
      %v2534 = vpop.f32.mrb[0].mxu0
      %v2535 = vadd.f32 0.0, %v2534
      %v2536 = vpop.f32.mrb[0].mxu0
      %2537 = vmatprep.mubr.bf16.mxu0 0
      %2538 = vmatmul.mubr.bf16.gmra.mrb[0].mxu0 %v1055
      %v2539 = vpop.f32.mrb[0].mxu0
      %v2540 = vadd.f32 0.0, %v2539
      %v2541 = vpop.f32.mrb[0].mxu0
      %v2542 = vpop.f32.mrb[0].mxu0
      %v2543 = vadd.f32 0.0, %v2542
      %v2544 = vpop.f32.mrb[0].mxu0
      %2545 = vmatprep.mubr.bf16.mxu0 0
      %2546 = vmatmul.mubr.bf16.gmra.mrb[0].mxu0 %v1056
      %v2547 = vpop.f32.mrb[0].mxu0
      %v2548 = vadd.f32 0.0, %v2547
      %v2549 = vpop.f32.mrb[0].mxu0
      %v2550 = vpop.f32.mrb[0].mxu0
      %v2551 = vadd.f32 0.0, %v2550
      %v2552 = vpop.f32.mrb[0].mxu0
      %2553 = vdwg.mxu0
      %v2554 = vld [vmem:[%s6] sm:$0x1]
      %v2556 = vlaneseq
      %v2557 = vshrl.u32 %v2556, 7
      %v2558 = vsub.s32 0, %v2557
      %v2559 = vrot.slane %v2554, %v2558
      %v2561 = vmul.f32 %v2340, %v2559
      %v2562 = vmul.f32 %v2343, %v2559
      %v2563 = vmul.f32 %v2348, %v2559
      %v2564 = vmul.f32 %v2351, %v2559
      %v2565 = vmul.f32 %v2356, %v2559
      %v2566 = vmul.f32 %v2359, %v2559
      %v2567 = vmul.f32 %v2364, %v2559
      %v2568 = vmul.f32 %v2367, %v2559
      %v2569 = vmul.f32 %v2372, %v2559
      %v2570 = vmul.f32 %v2375, %v2559
      %v2571 = vmul.f32 %v2380, %v2559
      %v2572 = vmul.f32 %v2383, %v2559
      %v2573 = vmul.f32 %v2388, %v2559
      %v2574 = vmul.f32 %v2391, %v2559
      %v2575 = vmul.f32 %v2396, %v2559
      %v2576 = vmul.f32 %v2399, %v2559
      %v2577 = vmul.f32 %v2404, %v2559
      %v2578 = vmul.f32 %v2407, %v2559
      %v2579 = vmul.f32 %v2412, %v2559
      %v2580 = vmul.f32 %v2415, %v2559
      %v2581 = vmul.f32 %v2420, %v2559
      %v2582 = vmul.f32 %v2423, %v2559
      %v2583 = vmul.f32 %v2428, %v2559
      %v2584 = vmul.f32 %v2431, %v2559
      %v2585 = vmul.f32 %v2436, %v2559
      %v2586 = vmul.f32 %v2439, %v2559
      %v2587 = vmul.f32 %v2444, %v2559
      %v2588 = vmul.f32 %v2447, %v2559
      %v2589 = vmul.f32 %v2452, %v2559
      %v2590 = vmul.f32 %v2455, %v2559
      %v2591 = vmul.f32 %v2460, %v2559
      %v2592 = vmul.f32 %v2463, %v2559
      %v2593 = vmul.f32 %v2468, %v2559
      %v2594 = vmul.f32 %v2471, %v2559
      %v2595 = vmul.f32 %v2476, %v2559
      %v2596 = vmul.f32 %v2479, %v2559
      %v2597 = vmul.f32 %v2484, %v2559
      %v2598 = vmul.f32 %v2487, %v2559
      %v2599 = vmul.f32 %v2492, %v2559
      %v2600 = vmul.f32 %v2495, %v2559
      %v2601 = vmul.f32 %v2500, %v2559
      %v2602 = vmul.f32 %v2503, %v2559
      %v2603 = vmul.f32 %v2508, %v2559
      %v2604 = vmul.f32 %v2511, %v2559
      %v2605 = vmul.f32 %v2516, %v2559
      %v2606 = vmul.f32 %v2519, %v2559
      %v2607 = vmul.f32 %v2524, %v2559
      %v2608 = vmul.f32 %v2527, %v2559
      %v2609 = vmul.f32 %v2532, %v2559
      %v2610 = vmul.f32 %v2535, %v2559
      %v2611 = vmul.f32 %v2540, %v2559
      %v2612 = vmul.f32 %v2543, %v2559
      %v2613 = vmul.f32 %v2548, %v2559
      %v2614 = vmul.f32 %v2551, %v2559
      %v2615 = vld [vmem:[%s7] sm:$0x1]
      %v2617 = vlaneseq
      %v2618 = vshrl.u32 %v2617, 7
      %v2619 = vsub.s32 0, %v2618
      %v2620 = vrot.slane %v2615, %v2619
      %v2622 = vadd.f32 %v2561, %v2620
      %v2623 = vadd.f32 %v2562, %v2620
      %v2624 = vadd.f32 %v2563, %v2620
      %v2625 = vadd.f32 %v2564, %v2620
      %v2626 = vadd.f32 %v2565, %v2620
      %v2627 = vadd.f32 %v2566, %v2620
      %v2628 = vadd.f32 %v2567, %v2620
      %v2629 = vadd.f32 %v2568, %v2620
      %v2630 = vadd.f32 %v2569, %v2620
      %v2631 = vadd.f32 %v2570, %v2620
      %v2632 = vadd.f32 %v2571, %v2620
      %v2633 = vadd.f32 %v2572, %v2620
      %v2634 = vadd.f32 %v2573, %v2620
      %v2635 = vadd.f32 %v2574, %v2620
      %v2636 = vadd.f32 %v2575, %v2620
      %v2637 = vadd.f32 %v2576, %v2620
      %v2638 = vadd.f32 %v2577, %v2620
      %v2639 = vadd.f32 %v2578, %v2620
      %v2640 = vadd.f32 %v2579, %v2620
      %v2641 = vadd.f32 %v2580, %v2620
      %v2642 = vadd.f32 %v2581, %v2620
      %v2643 = vadd.f32 %v2582, %v2620
      %v2644 = vadd.f32 %v2583, %v2620
      %v2645 = vadd.f32 %v2584, %v2620
      %v2646 = vadd.f32 %v2585, %v2620
      %v2647 = vadd.f32 %v2586, %v2620
      %v2648 = vadd.f32 %v2587, %v2620
      %v2649 = vadd.f32 %v2588, %v2620
      %v2650 = vadd.f32 %v2589, %v2620
      %v2651 = vadd.f32 %v2590, %v2620
      %v2652 = vadd.f32 %v2591, %v2620
      %v2653 = vadd.f32 %v2592, %v2620
      %v2654 = vadd.f32 %v2593, %v2620
      %v2655 = vadd.f32 %v2594, %v2620
      %v2656 = vadd.f32 %v2595, %v2620
      %v2657 = vadd.f32 %v2596, %v2620
      %v2658 = vadd.f32 %v2597, %v2620
      %v2659 = vadd.f32 %v2598, %v2620
      %v2660 = vadd.f32 %v2599, %v2620
      %v2661 = vadd.f32 %v2600, %v2620
      %v2662 = vadd.f32 %v2601, %v2620
      %v2663 = vadd.f32 %v2602, %v2620
      %v2664 = vadd.f32 %v2603, %v2620
      %v2665 = vadd.f32 %v2604, %v2620
      %v2666 = vadd.f32 %v2605, %v2620
      %v2667 = vadd.f32 %v2606, %v2620
      %v2668 = vadd.f32 %v2607, %v2620
      %v2669 = vadd.f32 %v2608, %v2620
      %v2670 = vadd.f32 %v2609, %v2620
      %v2671 = vadd.f32 %v2610, %v2620
      %v2672 = vadd.f32 %v2611, %v2620
      %v2673 = vadd.f32 %v2612, %v2620
      %v2674 = vadd.f32 %v2613, %v2620
      %v2675 = vadd.f32 %v2614, %v2620
      %v2676 = vxor.u32 %v2622, 2147483648
      %v2677 = vxor.u32 %v2623, 2147483648
      %v2678 = vxor.u32 %v2624, 2147483648
      %v2679 = vxor.u32 %v2625, 2147483648
      %v2680 = vxor.u32 %v2626, 2147483648
      %v2681 = vxor.u32 %v2627, 2147483648
      %v2682 = vxor.u32 %v2628, 2147483648
      %v2683 = vxor.u32 %v2629, 2147483648
      %v2684 = vxor.u32 %v2630, 2147483648
      %v2685 = vxor.u32 %v2631, 2147483648
      %v2686 = vxor.u32 %v2632, 2147483648
      %v2687 = vxor.u32 %v2633, 2147483648
      %v2688 = vxor.u32 %v2634, 2147483648
      %v2689 = vxor.u32 %v2635, 2147483648
      %v2690 = vxor.u32 %v2636, 2147483648
      %v2691 = vxor.u32 %v2637, 2147483648
      %v2692 = vxor.u32 %v2638, 2147483648
      %v2693 = vxor.u32 %v2639, 2147483648
      %v2694 = vxor.u32 %v2640, 2147483648
      %v2695 = vxor.u32 %v2641, 2147483648
      %v2696 = vxor.u32 %v2642, 2147483648
      %v2697 = vxor.u32 %v2643, 2147483648
      %v2698 = vxor.u32 %v2644, 2147483648
      %v2699 = vxor.u32 %v2645, 2147483648
      %v2700 = vxor.u32 %v2646, 2147483648
      %v2701 = vxor.u32 %v2647, 2147483648
      %v2702 = vxor.u32 %v2648, 2147483648
      %v2703 = vxor.u32 %v2649, 2147483648
      %v2704 = vxor.u32 %v2650, 2147483648
      %v2705 = vxor.u32 %v2651, 2147483648
      %v2706 = vxor.u32 %v2652, 2147483648
      %v2707 = vxor.u32 %v2653, 2147483648
      %v2708 = vxor.u32 %v2654, 2147483648
      %v2709 = vxor.u32 %v2655, 2147483648
      %v2710 = vxor.u32 %v2656, 2147483648
      %v2711 = vxor.u32 %v2657, 2147483648
      %v2712 = vxor.u32 %v2658, 2147483648
      %v2713 = vxor.u32 %v2659, 2147483648
      %v2714 = vxor.u32 %v2660, 2147483648
      %v2715 = vxor.u32 %v2661, 2147483648
      %v2716 = vxor.u32 %v2662, 2147483648
      %v2717 = vxor.u32 %v2663, 2147483648
      %v2718 = vxor.u32 %v2664, 2147483648
      %v2719 = vxor.u32 %v2665, 2147483648
      %v2720 = vxor.u32 %v2666, 2147483648
      %v2721 = vxor.u32 %v2667, 2147483648
      %v2722 = vxor.u32 %v2668, 2147483648
      %v2723 = vxor.u32 %v2669, 2147483648
      %v2724 = vxor.u32 %v2670, 2147483648
      %v2725 = vxor.u32 %v2671, 2147483648
      %v2726 = vxor.u32 %v2672, 2147483648
      %v2727 = vxor.u32 %v2673, 2147483648
      %v2728 = vxor.u32 %v2674, 2147483648
      %v2729 = vxor.u32 %v2675, 2147483648
      %v2730 = vmul.f32 %v2676, 1.442695
      %v2731 = vpow.pop %v2730
      %v2732 = vmul.f32 %v2677, 1.442695
      %v2733 = vpow.pop %v2732
      %v2734 = vmul.f32 %v2678, 1.442695
      %v2735 = vpow.pop %v2734
      %v2736 = vmul.f32 %v2679, 1.442695
      %v2737 = vpow.pop %v2736
      %v2738 = vmul.f32 %v2680, 1.442695
      %v2739 = vpow.pop %v2738
      %v2740 = vmul.f32 %v2681, 1.442695
      %v2741 = vpow.pop %v2740
      %v2742 = vmul.f32 %v2682, 1.442695
      %v2743 = vpow.pop %v2742
      %v2744 = vmul.f32 %v2683, 1.442695
      %v2745 = vpow.pop %v2744
      %v2746 = vmul.f32 %v2684, 1.442695
      %v2747 = vpow.pop %v2746
      %v2748 = vmul.f32 %v2685, 1.442695
      %v2749 = vpow.pop %v2748
      %v2750 = vmul.f32 %v2686, 1.442695
      %v2751 = vpow.pop %v2750
      %v2752 = vmul.f32 %v2687, 1.442695
      %v2753 = vpow.pop %v2752
      %v2754 = vmul.f32 %v2688, 1.442695
      %v2755 = vpow.pop %v2754
      %v2756 = vmul.f32 %v2689, 1.442695
      %v2757 = vpow.pop %v2756
      %v2758 = vmul.f32 %v2690, 1.442695
      %v2759 = vpow.pop %v2758
      %v2760 = vmul.f32 %v2691, 1.442695
      %v2761 = vpow.pop %v2760
      %v2762 = vmul.f32 %v2692, 1.442695
      %v2763 = vpow.pop %v2762
      %v2764 = vmul.f32 %v2693, 1.442695
      %v2765 = vpow.pop %v2764
      %v2766 = vmul.f32 %v2694, 1.442695
      %v2767 = vpow.pop %v2766
      %v2768 = vmul.f32 %v2695, 1.442695
      %v2769 = vpow.pop %v2768
      %v2770 = vmul.f32 %v2696, 1.442695
      %v2771 = vpow.pop %v2770
      %v2772 = vmul.f32 %v2697, 1.442695
      %v2773 = vpow.pop %v2772
      %v2774 = vmul.f32 %v2698, 1.442695
      %v2775 = vpow.pop %v2774
      %v2776 = vmul.f32 %v2699, 1.442695
      %v2777 = vpow.pop %v2776
      %v2778 = vmul.f32 %v2700, 1.442695
      %v2779 = vpow.pop %v2778
      %v2780 = vmul.f32 %v2701, 1.442695
      %v2781 = vpow.pop %v2780
      %v2782 = vmul.f32 %v2702, 1.442695
      %v2783 = vpow.pop %v2782
      %v2784 = vmul.f32 %v2703, 1.442695
      %v2785 = vpow.pop %v2784
      %v2786 = vmul.f32 %v2704, 1.442695
      %v2787 = vpow.pop %v2786
      %v2788 = vmul.f32 %v2705, 1.442695
      %v2789 = vpow.pop %v2788
      %v2790 = vmul.f32 %v2706, 1.442695
      %v2791 = vpow.pop %v2790
      %v2792 = vmul.f32 %v2707, 1.442695
      %v2793 = vpow.pop %v2792
      %v2794 = vmul.f32 %v2708, 1.442695
      %v2795 = vpow.pop %v2794
      %v2796 = vmul.f32 %v2709, 1.442695
      %v2797 = vpow.pop %v2796
      %v2798 = vmul.f32 %v2710, 1.442695
      %v2799 = vpow.pop %v2798
      %v2800 = vmul.f32 %v2711, 1.442695
      %v2801 = vpow.pop %v2800
      %v2802 = vmul.f32 %v2712, 1.442695
      %v2803 = vpow.pop %v2802
      %v2804 = vmul.f32 %v2713, 1.442695
      %v2805 = vpow.pop %v2804
      %v2806 = vmul.f32 %v2714, 1.442695
      %v2807 = vpow.pop %v2806
      %v2808 = vmul.f32 %v2715, 1.442695
      %v2809 = vpow.pop %v2808
      %v2810 = vmul.f32 %v2716, 1.442695
      %v2811 = vpow.pop %v2810
      %v2812 = vmul.f32 %v2717, 1.442695
      %v2813 = vpow.pop %v2812
      %v2814 = vmul.f32 %v2718, 1.442695
      %v2815 = vpow.pop %v2814
      %v2816 = vmul.f32 %v2719, 1.442695
      %v2817 = vpow.pop %v2816
      %v2818 = vmul.f32 %v2720, 1.442695
      %v2819 = vpow.pop %v2818
      %v2820 = vmul.f32 %v2721, 1.442695
      %v2821 = vpow.pop %v2820
      %v2822 = vmul.f32 %v2722, 1.442695
      %v2823 = vpow.pop %v2822
      %v2824 = vmul.f32 %v2723, 1.442695
      %v2825 = vpow.pop %v2824
      %v2826 = vmul.f32 %v2724, 1.442695
      %v2827 = vpow.pop %v2826
      %v2828 = vmul.f32 %v2725, 1.442695
      %v2829 = vpow.pop %v2828
      %v2830 = vmul.f32 %v2726, 1.442695
      %v2831 = vpow.pop %v2830
      %v2832 = vmul.f32 %v2727, 1.442695
      %v2833 = vpow.pop %v2832
      %v2834 = vmul.f32 %v2728, 1.442695
      %v2835 = vpow.pop %v2834
      %v2836 = vmul.f32 %v2729, 1.442695
      %v2837 = vpow.pop %v2836
      %v2838 = vadd.f32 %v2731, 1.0
      %v2839 = vadd.f32 %v2733, 1.0
      %v2840 = vadd.f32 %v2735, 1.0
      %v2841 = vadd.f32 %v2737, 1.0
      %v2842 = vadd.f32 %v2739, 1.0
      %v2843 = vadd.f32 %v2741, 1.0
      %v2844 = vadd.f32 %v2743, 1.0
      %v2845 = vadd.f32 %v2745, 1.0
      %v2846 = vadd.f32 %v2747, 1.0
      %v2847 = vadd.f32 %v2749, 1.0
      %v2848 = vadd.f32 %v2751, 1.0
      %v2849 = vadd.f32 %v2753, 1.0
      %v2850 = vadd.f32 %v2755, 1.0
      %v2851 = vadd.f32 %v2757, 1.0
      %v2852 = vadd.f32 %v2759, 1.0
      %v2853 = vadd.f32 %v2761, 1.0
      %v2854 = vadd.f32 %v2763, 1.0
      %v2855 = vadd.f32 %v2765, 1.0
      %v2856 = vadd.f32 %v2767, 1.0
      %v2857 = vadd.f32 %v2769, 1.0
      %v2858 = vadd.f32 %v2771, 1.0
      %v2859 = vadd.f32 %v2773, 1.0
      %v2860 = vadd.f32 %v2775, 1.0
      %v2861 = vadd.f32 %v2777, 1.0
      %v2862 = vadd.f32 %v2779, 1.0
      %v2863 = vadd.f32 %v2781, 1.0
      %v2864 = vadd.f32 %v2783, 1.0
      %v2865 = vadd.f32 %v2785, 1.0
      %v2866 = vadd.f32 %v2787, 1.0
      %v2867 = vadd.f32 %v2789, 1.0
      %v2868 = vadd.f32 %v2791, 1.0
      %v2869 = vadd.f32 %v2793, 1.0
      %v2870 = vadd.f32 %v2795, 1.0
      %v2871 = vadd.f32 %v2797, 1.0
      %v2872 = vadd.f32 %v2799, 1.0
      %v2873 = vadd.f32 %v2801, 1.0
      %v2874 = vadd.f32 %v2803, 1.0
      %v2875 = vadd.f32 %v2805, 1.0
      %v2876 = vadd.f32 %v2807, 1.0
      %v2877 = vadd.f32 %v2809, 1.0
      %v2878 = vadd.f32 %v2811, 1.0
      %v2879 = vadd.f32 %v2813, 1.0
      %v2880 = vadd.f32 %v2815, 1.0
      %v2881 = vadd.f32 %v2817, 1.0
      %v2882 = vadd.f32 %v2819, 1.0
      %v2883 = vadd.f32 %v2821, 1.0
      %v2884 = vadd.f32 %v2823, 1.0
      %v2885 = vadd.f32 %v2825, 1.0
      %v2886 = vadd.f32 %v2827, 1.0
      %v2887 = vadd.f32 %v2829, 1.0
      %v2888 = vadd.f32 %v2831, 1.0
      %v2889 = vadd.f32 %v2833, 1.0
      %v2890 = vadd.f32 %v2835, 1.0
      %v2891 = vadd.f32 %v2837, 1.0
      %v2892 = vrcp.pop %v2838
      %v2893 = vmul.f32 1.0, %v2892
      %v2894 = vrcp.pop %v2839
      %v2895 = vmul.f32 1.0, %v2894
      %v2896 = vrcp.pop %v2840
      %v2897 = vmul.f32 1.0, %v2896
      %v2898 = vrcp.pop %v2841
      %v2899 = vmul.f32 1.0, %v2898
      %v2900 = vrcp.pop %v2842
      %v2901 = vmul.f32 1.0, %v2900
      %v2902 = vrcp.pop %v2843
      %v2903 = vmul.f32 1.0, %v2902
      %v2904 = vrcp.pop %v2844
      %v2905 = vmul.f32 1.0, %v2904
      %v2906 = vrcp.pop %v2845
      %v2907 = vmul.f32 1.0, %v2906
      %v2908 = vrcp.pop %v2846
      %v2909 = vmul.f32 1.0, %v2908
      %v2910 = vrcp.pop %v2847
      %v2911 = vmul.f32 1.0, %v2910
      %v2912 = vrcp.pop %v2848
      %v2913 = vmul.f32 1.0, %v2912
      %v2914 = vrcp.pop %v2849
      %v2915 = vmul.f32 1.0, %v2914
      %v2916 = vrcp.pop %v2850
      %v2917 = vmul.f32 1.0, %v2916
      %v2918 = vrcp.pop %v2851
      %v2919 = vmul.f32 1.0, %v2918
      %v2920 = vrcp.pop %v2852
      %v2921 = vmul.f32 1.0, %v2920
      %v2922 = vrcp.pop %v2853
      %v2923 = vmul.f32 1.0, %v2922
      %v2924 = vrcp.pop %v2854
      %v2925 = vmul.f32 1.0, %v2924
      %v2926 = vrcp.pop %v2855
      %v2927 = vmul.f32 1.0, %v2926
      %v2928 = vrcp.pop %v2856
      %v2929 = vmul.f32 1.0, %v2928
      %v2930 = vrcp.pop %v2857
      %v2931 = vmul.f32 1.0, %v2930
      %v2932 = vrcp.pop %v2858
      %v2933 = vmul.f32 1.0, %v2932
      %v2934 = vrcp.pop %v2859
      %v2935 = vmul.f32 1.0, %v2934
      %v2936 = vrcp.pop %v2860
      %v2937 = vmul.f32 1.0, %v2936
      %v2938 = vrcp.pop %v2861
      %v2939 = vmul.f32 1.0, %v2938
      %v2940 = vrcp.pop %v2862
      %v2941 = vmul.f32 1.0, %v2940
      %v2942 = vrcp.pop %v2863
      %v2943 = vmul.f32 1.0, %v2942
      %v2944 = vrcp.pop %v2864
      %v2945 = vmul.f32 1.0, %v2944
      %v2946 = vrcp.pop %v2865
      %v2947 = vmul.f32 1.0, %v2946
      %v2948 = vrcp.pop %v2866
      %v2949 = vmul.f32 1.0, %v2948
      %v2950 = vrcp.pop %v2867
      %v2951 = vmul.f32 1.0, %v2950
      %v2952 = vrcp.pop %v2868
      %v2953 = vmul.f32 1.0, %v2952
      %v2954 = vrcp.pop %v2869
      %v2955 = vmul.f32 1.0, %v2954
      %v2956 = vrcp.pop %v2870
      %v2957 = vmul.f32 1.0, %v2956
      %v2958 = vrcp.pop %v2871
      %v2959 = vmul.f32 1.0, %v2958
      %v2960 = vrcp.pop %v2872
      %v2961 = vmul.f32 1.0, %v2960
      %v2962 = vrcp.pop %v2873
      %v2963 = vmul.f32 1.0, %v2962
      %v2964 = vrcp.pop %v2874
      %v2965 = vmul.f32 1.0, %v2964
      %v2966 = vrcp.pop %v2875
      %v2967 = vmul.f32 1.0, %v2966
      %v2968 = vrcp.pop %v2876
      %v2969 = vmul.f32 1.0, %v2968
      %v2970 = vrcp.pop %v2877
      %v2971 = vmul.f32 1.0, %v2970
      %v2972 = vrcp.pop %v2878
      %v2973 = vmul.f32 1.0, %v2972
      %v2974 = vrcp.pop %v2879
      %v2975 = vmul.f32 1.0, %v2974
      %v2976 = vrcp.pop %v2880
      %v2977 = vmul.f32 1.0, %v2976
      %v2978 = vrcp.pop %v2881
      %v2979 = vmul.f32 1.0, %v2978
      %v2980 = vrcp.pop %v2882
      %v2981 = vmul.f32 1.0, %v2980
      %v2982 = vrcp.pop %v2883
      %v2983 = vmul.f32 1.0, %v2982
      %v2984 = vrcp.pop %v2884
      %v2985 = vmul.f32 1.0, %v2984
      %v2986 = vrcp.pop %v2885
      %v2987 = vmul.f32 1.0, %v2986
      %v2988 = vrcp.pop %v2886
      %v2989 = vmul.f32 1.0, %v2988
      %v2990 = vrcp.pop %v2887
      %v2991 = vmul.f32 1.0, %v2990
      %v2992 = vrcp.pop %v2888
      %v2993 = vmul.f32 1.0, %v2992
      %v2994 = vrcp.pop %v2889
      %v2995 = vmul.f32 1.0, %v2994
      %v2996 = vrcp.pop %v2890
      %v2997 = vmul.f32 1.0, %v2996
      %v2998 = vrcp.pop %v2891
      %v2999 = vmul.f32 1.0, %v2998
      %v3000 = vmul.f32 %v2622, %v2893
      %v3001 = vmul.f32 %v2623, %v2895
      %v3002 = vmul.f32 %v2624, %v2897
      %v3003 = vmul.f32 %v2625, %v2899
      %v3004 = vmul.f32 %v2626, %v2901
      %v3005 = vmul.f32 %v2627, %v2903
      %v3006 = vmul.f32 %v2628, %v2905
      %v3007 = vmul.f32 %v2629, %v2907
      %v3008 = vmul.f32 %v2630, %v2909
      %v3009 = vmul.f32 %v2631, %v2911
      %v3010 = vmul.f32 %v2632, %v2913
      %v3011 = vmul.f32 %v2633, %v2915
      %v3012 = vmul.f32 %v2634, %v2917
      %v3013 = vmul.f32 %v2635, %v2919
      %v3014 = vmul.f32 %v2636, %v2921
      %v3015 = vmul.f32 %v2637, %v2923
      %v3016 = vmul.f32 %v2638, %v2925
      %v3017 = vmul.f32 %v2639, %v2927
      %v3018 = vmul.f32 %v2640, %v2929
      %v3019 = vmul.f32 %v2641, %v2931
      %v3020 = vmul.f32 %v2642, %v2933
      %v3021 = vmul.f32 %v2643, %v2935
      %v3022 = vmul.f32 %v2644, %v2937
      %v3023 = vmul.f32 %v2645, %v2939
      %v3024 = vmul.f32 %v2646, %v2941
      %v3025 = vmul.f32 %v2647, %v2943
      %v3026 = vmul.f32 %v2648, %v2945
      %v3027 = vmul.f32 %v2649, %v2947
      %v3028 = vmul.f32 %v2650, %v2949
      %v3029 = vmul.f32 %v2651, %v2951
      %v3030 = vmul.f32 %v2652, %v2953
      %v3031 = vmul.f32 %v2653, %v2955
      %v3032 = vmul.f32 %v2654, %v2957
      %v3033 = vmul.f32 %v2655, %v2959
      %v3034 = vmul.f32 %v2656, %v2961
      %v3035 = vmul.f32 %v2657, %v2963
      %v3036 = vmul.f32 %v2658, %v2965
      %v3037 = vmul.f32 %v2659, %v2967
      %v3038 = vmul.f32 %v2660, %v2969
      %v3039 = vmul.f32 %v2661, %v2971
      %v3040 = vmul.f32 %v2662, %v2973
      %v3041 = vmul.f32 %v2663, %v2975
      %v3042 = vmul.f32 %v2664, %v2977
      %v3043 = vmul.f32 %v2665, %v2979
      %v3044 = vmul.f32 %v2666, %v2981
      %v3045 = vmul.f32 %v2667, %v2983
      %v3046 = vmul.f32 %v2668, %v2985
      %v3047 = vmul.f32 %v2669, %v2987
      %v3048 = vmul.f32 %v2670, %v2989
      %v3049 = vmul.f32 %v2671, %v2991
      %v3050 = vmul.f32 %v2672, %v2993
      %v3051 = vmul.f32 %v2673, %v2995
      %v3052 = vmul.f32 %v2674, %v2997
      %v3053 = vmul.f32 %v2675, %v2999
      %v3054 = vmul.f32 %v3000, %v1884
      %v3055 = vmul.f32 %v3001, %v1889
      %v3056 = vmul.f32 %v3002, %v1894
      %v3057 = vmul.f32 %v3003, %v1899
      %v3058 = vmul.f32 %v3004, %v1904
      %v3059 = vmul.f32 %v3005, %v1909
      %v3060 = vmul.f32 %v3006, %v1914
      %v3061 = vmul.f32 %v3007, %v1919
      %v3062 = vmul.f32 %v3008, %v1924
      %v3063 = vmul.f32 %v3009, %v1929
      %v3064 = vmul.f32 %v3010, %v1934
      %v3065 = vmul.f32 %v3011, %v1939
      %v3066 = vmul.f32 %v3012, %v1944
      %v3067 = vmul.f32 %v3013, %v1949
      %v3068 = vmul.f32 %v3014, %v1954
      %v3069 = vmul.f32 %v3015, %v1959
      %v3070 = vmul.f32 %v3016, %v1964
      %v3071 = vmul.f32 %v3017, %v1969
      %v3072 = vmul.f32 %v3018, %v1974
      %v3073 = vmul.f32 %v3019, %v1979
      %v3074 = vmul.f32 %v3020, %v1984
      %v3075 = vmul.f32 %v3021, %v1989
      %v3076 = vmul.f32 %v3022, %v1994
      %v3077 = vmul.f32 %v3023, %v1999
      %v3078 = vmul.f32 %v3024, %v2004
      %v3079 = vmul.f32 %v3025, %v2009
      %v3080 = vmul.f32 %v3026, %v2014
      %v3081 = vmul.f32 %v3027, %v2019
      %v3082 = vmul.f32 %v3028, %v2024
      %v3083 = vmul.f32 %v3029, %v2029
      %v3084 = vmul.f32 %v3030, %v2034
      %v3085 = vmul.f32 %v3031, %v2039
      %v3086 = vmul.f32 %v3032, %v2044
      %v3087 = vmul.f32 %v3033, %v2049
      %v3088 = vmul.f32 %v3034, %v2054
      %v3089 = vmul.f32 %v3035, %v2059
      %v3090 = vmul.f32 %v3036, %v2064
      %v3091 = vmul.f32 %v3037, %v2069
      %v3092 = vmul.f32 %v3038, %v2074
      %v3093 = vmul.f32 %v3039, %v2079
      %v3094 = vmul.f32 %v3040, %v2084
      %v3095 = vmul.f32 %v3041, %v2089
      %v3096 = vmul.f32 %v3042, %v2094
      %v3097 = vmul.f32 %v3043, %v2099
      %v3098 = vmul.f32 %v3044, %v2104
      %v3099 = vmul.f32 %v3045, %v2109
      %v3100 = vmul.f32 %v3046, %v2114
      %v3101 = vmul.f32 %v3047, %v2119
      %v3102 = vmul.f32 %v3048, %v2124
      %v3103 = vmul.f32 %v3049, %v2129
      %v3104 = vmul.f32 %v3050, %v2134
      %v3105 = vmul.f32 %v3051, %v2139
      %v3106 = vmul.f32 %v3052, %v2144
      %v3107 = vmul.f32 %v3053, %v2149
      %v3108 = vpack.c.bf16 %v3055, %v3054
      %v3109 = vpack.c.bf16 %v3056, %v3056
      %v3110 = vpack.c.bf16 %v3058, %v3057
      %v3111 = vpack.c.bf16 %v3059, %v3059
      %v3112 = vpack.c.bf16 %v3061, %v3060
      %v3113 = vpack.c.bf16 %v3062, %v3062
      %v3114 = vpack.c.bf16 %v3064, %v3063
      %v3115 = vpack.c.bf16 %v3065, %v3065
      %v3116 = vpack.c.bf16 %v3067, %v3066
      %v3117 = vpack.c.bf16 %v3068, %v3068
      %v3118 = vpack.c.bf16 %v3070, %v3069
      %v3119 = vpack.c.bf16 %v3071, %v3071
      %v3120 = vpack.c.bf16 %v3073, %v3072
      %v3121 = vpack.c.bf16 %v3074, %v3074
      %v3122 = vpack.c.bf16 %v3076, %v3075
      %v3123 = vpack.c.bf16 %v3077, %v3077
      %v3124 = vpack.c.bf16 %v3079, %v3078
      %v3125 = vpack.c.bf16 %v3080, %v3080
      %v3126 = vpack.c.bf16 %v3082, %v3081
      %v3127 = vpack.c.bf16 %v3083, %v3083
      %v3128 = vpack.c.bf16 %v3085, %v3084
      %v3129 = vpack.c.bf16 %v3086, %v3086
      %v3130 = vpack.c.bf16 %v3088, %v3087
      %v3131 = vpack.c.bf16 %v3089, %v3089
      %v3132 = vpack.c.bf16 %v3091, %v3090
      %v3133 = vpack.c.bf16 %v3092, %v3092
      %v3134 = vpack.c.bf16 %v3094, %v3093
      %v3135 = vpack.c.bf16 %v3095, %v3095
      %v3136 = vpack.c.bf16 %v3097, %v3096
      %v3137 = vpack.c.bf16 %v3098, %v3098
      %v3138 = vpack.c.bf16 %v3100, %v3099
      %v3139 = vpack.c.bf16 %v3101, %v3101
      %v3140 = vpack.c.bf16 %v3103, %v3102
      %v3141 = vpack.c.bf16 %v3104, %v3104
      %v3142 = vpack.c.bf16 %v3106, %v3105
      %v3143 = vpack.c.bf16 %v3107, %v3107
      %3144 = vst [vmem:[#allocation2] sm:$0xff] 0.0
      %3145 = vst [vmem:[#allocation2 + $0x8] sm:$0xff] 0.0
      %3146 = vst [vmem:[#allocation2 + $0x10] sm:$0xff] 0.0
      %3147 = vst [vmem:[#allocation2 + $0x18] sm:$0xff] 0.0
      %3148 = vst [vmem:[#allocation2 + $0x20] sm:$0xff] 0.0
      %3149 = vst [vmem:[#allocation2 + $0x28] sm:$0xff] 0.0
      %3150 = vst [vmem:[#allocation2 + $0x30] sm:$0xff] 0.0
      %3151 = vst [vmem:[#allocation2 + $0x38] sm:$0xff] 0.0
      %3152 = vst [vmem:[#allocation2 + $0x40] sm:$0xff] 0.0
      %3153 = vst [vmem:[#allocation2 + $0x48] sm:$0xff] 0.0
      %3154 = vst [vmem:[#allocation2 + $0x50] sm:$0xff] 0.0
      %3155 = vst [vmem:[#allocation2 + $0x58] sm:$0xff] 0.0
      %3156 = vst [vmem:[#allocation2 + $0x60] sm:$0xff] 0.0
      %3157 = vst [vmem:[#allocation2 + $0x68] sm:$0xff] 0.0
      %3158 = vst [vmem:[#allocation2 + $0x70] sm:$0xff] 0.0
      %3159 = vst [vmem:[#allocation2 + $0x78] sm:$0xff] 0.0
      %3160 = vst [vmem:[#allocation2 + $0x80] sm:$0xff] 0.0
      %3161 = vst [vmem:[#allocation2 + $0x88] sm:$0xff] 0.0
      %3162 = vst [vmem:[#allocation2 + $0x90] sm:$0xff] 0.0
      %3163 = vst [vmem:[#allocation2 + $0x98] sm:$0xff] 0.0
      %3164 = vst [vmem:[#allocation2 + $0xa0] sm:$0xff] 0.0
      %3165 = vst [vmem:[#allocation2 + $0xa8] sm:$0xff] 0.0
      %3166 = vst [vmem:[#allocation2 + $0xb0] sm:$0xff] 0.0
      %3167 = vst [vmem:[#allocation2 + $0xb8] sm:$0xff] 0.0
      %3168 = vst [vmem:[#allocation2 + $0xc0] sm:$0xff] 0.0
      %3169 = vst [vmem:[#allocation2 + $0xc8] sm:$0xff] 0.0
      %3170 = vst [vmem:[#allocation2 + $0xd0] sm:$0xff] 0.0
      %3171 = vst [vmem:[#allocation2 + $0xd8] sm:$0xff] 0.0
      %3172 = vst [vmem:[#allocation2 + $0xe0] sm:$0xff] 0.0
      %3173 = vst [vmem:[#allocation2 + $0xe8] sm:$0xff] 0.0
      %3174 = vst [vmem:[#allocation2 + $0xf0] sm:$0xff] 0.0
      %3175 = vst [vmem:[#allocation2 + $0xf8] sm:$0xff] 0.0
      %vm3176 = vsmask.f32 7424
      %v3178 = vshrl.u32 %v2205, 16
      %v3180 = vshll.u32 %v2205, 16
      %v3182 = vrot.slane %v3180, 1
      %v3183 = vor.u32 %v3178, %v3182
      %v3185 = vshll.u32 %v2206, 16
      %v3187 = vrot.slane %v3185, 1
      %v3188 = vsel %vm3176, %v3183, %v3187
      %v3190 = vshrl.u32 %v2207, 16
      %v3192 = vshll.u32 %v2207, 16
      %v3194 = vrot.slane %v3192, 1
      %v3195 = vor.u32 %v3190, %v3194
      %v3197 = vshll.u32 %v2208, 16
      %v3199 = vrot.slane %v3197, 1
      %v3200 = vsel %vm3176, %v3195, %v3199
      %v3202 = vshrl.u32 %v2209, 16
      %v3204 = vshll.u32 %v2209, 16
      %v3206 = vrot.slane %v3204, 1
      %v3207 = vor.u32 %v3202, %v3206
      %v3209 = vshll.u32 %v2210, 16
      %v3211 = vrot.slane %v3209, 1
      %v3212 = vsel %vm3176, %v3207, %v3211
      %v3214 = vshrl.u32 %v2211, 16
      %v3216 = vshll.u32 %v2211, 16
      %v3218 = vrot.slane %v3216, 1
      %v3219 = vor.u32 %v3214, %v3218
      %v3221 = vshll.u32 %v2212, 16
      %v3223 = vrot.slane %v3221, 1
      %v3224 = vsel %vm3176, %v3219, %v3223
      %v3226 = vshrl.u32 %v2213, 16
      %v3228 = vshll.u32 %v2213, 16
      %v3230 = vrot.slane %v3228, 1
      %v3231 = vor.u32 %v3226, %v3230
      %v3233 = vshll.u32 %v2214, 16
      %v3235 = vrot.slane %v3233, 1
      %v3236 = vsel %vm3176, %v3231, %v3235
      %v3238 = vshrl.u32 %v2215, 16
      %v3240 = vshll.u32 %v2215, 16
      %v3242 = vrot.slane %v3240, 1
      %v3243 = vor.u32 %v3238, %v3242
      %v3245 = vshll.u32 %v2216, 16
      %v3247 = vrot.slane %v3245, 1
      %v3248 = vsel %vm3176, %v3243, %v3247
      %v3250 = vshrl.u32 %v2217, 16
      %v3252 = vshll.u32 %v2217, 16
      %v3254 = vrot.slane %v3252, 1
      %v3255 = vor.u32 %v3250, %v3254
      %v3257 = vshll.u32 %v2218, 16
      %v3259 = vrot.slane %v3257, 1
      %v3260 = vsel %vm3176, %v3255, %v3259
      %v3262 = vshrl.u32 %v2219, 16
      %v3264 = vshll.u32 %v2219, 16
      %v3266 = vrot.slane %v3264, 1
      %v3267 = vor.u32 %v3262, %v3266
      %v3269 = vshll.u32 %v2220, 16
      %v3271 = vrot.slane %v3269, 1
      %v3272 = vsel %vm3176, %v3267, %v3271
      %v3274 = vshrl.u32 %v2221, 16
      %v3276 = vshll.u32 %v2221, 16
      %v3278 = vrot.slane %v3276, 1
      %v3279 = vor.u32 %v3274, %v3278
      %v3281 = vshll.u32 %v2222, 16
      %v3283 = vrot.slane %v3281, 1
      %v3284 = vsel %vm3176, %v3279, %v3283
      %v3286 = vshrl.u32 %v2223, 16
      %v3288 = vshll.u32 %v2223, 16
      %v3290 = vrot.slane %v3288, 1
      %v3291 = vor.u32 %v3286, %v3290
      %v3293 = vshll.u32 %v2224, 16
      %v3295 = vrot.slane %v3293, 1
      %v3296 = vsel %vm3176, %v3291, %v3295
      %v3298 = vshrl.u32 %v2225, 16
      %v3300 = vshll.u32 %v2225, 16
      %v3302 = vrot.slane %v3300, 1
      %v3303 = vor.u32 %v3298, %v3302
      %v3305 = vshll.u32 %v2226, 16
      %v3307 = vrot.slane %v3305, 1
      %v3308 = vsel %vm3176, %v3303, %v3307
      %v3310 = vshrl.u32 %v2227, 16
      %v3312 = vshll.u32 %v2227, 16
      %v3314 = vrot.slane %v3312, 1
      %v3315 = vor.u32 %v3310, %v3314
      %v3317 = vshll.u32 %v2228, 16
      %v3319 = vrot.slane %v3317, 1
      %v3320 = vsel %vm3176, %v3315, %v3319
      %v3322 = vshrl.u32 %v2229, 16
      %v3324 = vshll.u32 %v2229, 16
      %v3326 = vrot.slane %v3324, 1
      %v3327 = vor.u32 %v3322, %v3326
      %v3329 = vshll.u32 %v2230, 16
      %v3331 = vrot.slane %v3329, 1
      %v3332 = vsel %vm3176, %v3327, %v3331
      %v3334 = vshrl.u32 %v2231, 16
      %v3336 = vshll.u32 %v2231, 16
      %v3338 = vrot.slane %v3336, 1
      %v3339 = vor.u32 %v3334, %v3338
      %v3341 = vshll.u32 %v2232, 16
      %v3343 = vrot.slane %v3341, 1
      %v3344 = vsel %vm3176, %v3339, %v3343
      %v3346 = vshrl.u32 %v2233, 16
      %v3348 = vshll.u32 %v2233, 16
      %v3350 = vrot.slane %v3348, 1
      %v3351 = vor.u32 %v3346, %v3350
      %v3353 = vshll.u32 %v2234, 16
      %v3355 = vrot.slane %v3353, 1
      %v3356 = vsel %vm3176, %v3351, %v3355
      %v3358 = vshrl.u32 %v2235, 16
      %v3360 = vshll.u32 %v2235, 16
      %v3362 = vrot.slane %v3360, 1
      %v3363 = vor.u32 %v3358, %v3362
      %v3365 = vshll.u32 %v2236, 16
      %v3367 = vrot.slane %v3365, 1
      %v3368 = vsel %vm3176, %v3363, %v3367
      %vm3417 = vcmask 1046528
      %v3418 = vrot.slane %v2205, 1
      %v3419 = vrot.slane %v2206, 1
      %v3420 = vsel %vm3417, %v3418, %v3419
      %v3421 = vrot.slane %v2207, 1
      %v3422 = vrot.slane %v2208, 1
      %v3423 = vsel %vm3417, %v3421, %v3422
      %v3424 = vrot.slane %v2209, 1
      %v3425 = vrot.slane %v2210, 1
      %v3426 = vsel %vm3417, %v3424, %v3425
      %v3427 = vrot.slane %v2211, 1
      %v3428 = vrot.slane %v2212, 1
      %v3429 = vsel %vm3417, %v3427, %v3428
      %v3430 = vrot.slane %v2213, 1
      %v3431 = vrot.slane %v2214, 1
      %v3432 = vsel %vm3417, %v3430, %v3431
      %v3433 = vrot.slane %v2215, 1
      %v3434 = vrot.slane %v2216, 1
      %v3435 = vsel %vm3417, %v3433, %v3434
      %v3436 = vrot.slane %v2217, 1
      %v3437 = vrot.slane %v2218, 1
      %v3438 = vsel %vm3417, %v3436, %v3437
      %v3439 = vrot.slane %v2219, 1
      %v3440 = vrot.slane %v2220, 1
      %v3441 = vsel %vm3417, %v3439, %v3440
      %v3442 = vrot.slane %v2221, 1
      %v3443 = vrot.slane %v2222, 1
      %v3444 = vsel %vm3417, %v3442, %v3443
      %v3445 = vrot.slane %v2223, 1
      %v3446 = vrot.slane %v2224, 1
      %v3447 = vsel %vm3417, %v3445, %v3446
      %v3448 = vrot.slane %v2225, 1
      %v3449 = vrot.slane %v2226, 1
      %v3450 = vsel %vm3417, %v3448, %v3449
      %v3451 = vrot.slane %v2227, 1
      %v3452 = vrot.slane %v2228, 1
      %v3453 = vsel %vm3417, %v3451, %v3452
      %v3454 = vrot.slane %v2229, 1
      %v3455 = vrot.slane %v2230, 1
      %v3456 = vsel %vm3417, %v3454, %v3455
      %v3457 = vrot.slane %v2231, 1
      %v3458 = vrot.slane %v2232, 1
      %v3459 = vsel %vm3417, %v3457, %v3458
      %v3460 = vrot.slane %v2233, 1
      %v3461 = vrot.slane %v2234, 1
      %v3462 = vsel %vm3417, %v3460, %v3461
      %v3463 = vrot.slane %v2235, 1
      %v3464 = vrot.slane %v2236, 1
      %v3465 = vsel %vm3417, %v3463, %v3464
      %v3482 = vld [vmem:[#allocation2] sm:$0xff]
      %v3483 = vld [vmem:[#allocation2 + $0x8] sm:$0xff]
      %v3484 = vld [vmem:[#allocation2 + $0x10] sm:$0xff]
      %v3485 = vld [vmem:[#allocation2 + $0x18] sm:$0xff]
      %v3486 = vld [vmem:[#allocation2 + $0x20] sm:$0xff]
      %v3487 = vld [vmem:[#allocation2 + $0x28] sm:$0xff]
      %v3488 = vld [vmem:[#allocation2 + $0x30] sm:$0xff]
      %v3489 = vld [vmem:[#allocation2 + $0x38] sm:$0xff]
      %v3490 = vld [vmem:[#allocation2 + $0x40] sm:$0xff]
      %v3491 = vld [vmem:[#allocation2 + $0x48] sm:$0xff]
      %v3492 = vld [vmem:[#allocation2 + $0x50] sm:$0xff]
      %v3493 = vld [vmem:[#allocation2 + $0x58] sm:$0xff]
      %v3494 = vld [vmem:[#allocation2 + $0x60] sm:$0xff]
      %v3495 = vld [vmem:[#allocation2 + $0x68] sm:$0xff]
      %v3496 = vld [vmem:[#allocation2 + $0x70] sm:$0xff]
      %v3497 = vld [vmem:[#allocation2 + $0x78] sm:$0xff]
      %v3498 = vld [vmem:[#allocation2 + $0x80] sm:$0xff]
      %v3499 = vld [vmem:[#allocation2 + $0x88] sm:$0xff]
      %v3500 = vld [vmem:[#allocation2 + $0x90] sm:$0xff]
      %v3501 = vld [vmem:[#allocation2 + $0x98] sm:$0xff]
      %v3502 = vld [vmem:[#allocation2 + $0xa0] sm:$0xff]
      %v3503 = vld [vmem:[#allocation2 + $0xa8] sm:$0xff]
      %v3504 = vld [vmem:[#allocation2 + $0xb0] sm:$0xff]
      %v3505 = vld [vmem:[#allocation2 + $0xb8] sm:$0xff]
      %v3506 = vld [vmem:[#allocation2 + $0xc0] sm:$0xff]
      %v3507 = vld [vmem:[#allocation2 + $0xc8] sm:$0xff]
      %v3508 = vld [vmem:[#allocation2 + $0xd0] sm:$0xff]
      %v3509 = vld [vmem:[#allocation2 + $0xd8] sm:$0xff]
      %v3510 = vld [vmem:[#allocation2 + $0xe0] sm:$0xff]
      %v3511 = vld [vmem:[#allocation2 + $0xe8] sm:$0xff]
      %v3512 = vld [vmem:[#allocation2 + $0xf0] sm:$0xff]
      %v3513 = vld [vmem:[#allocation2 + $0xf8] sm:$0xff]
      %v3514 = vld [vmem:[%s8] sm:$0xf]
      %v3515 = vld [vmem:[%s8 + $0x4] sm:$0xf]
      %v3516 = vld [vmem:[%s8 + $0x8] sm:$0xf]
      %v3517 = vld [vmem:[%s8 + $0xc] sm:$0xf]
      %v3518 = vld [vmem:[%s8 + $0x10] sm:$0xf]
      %v3519 = vld [vmem:[%s8 + $0x14] sm:$0xf]
      %v3520 = vld [vmem:[%s8 + $0x18] sm:$0xf]
      %v3521 = vld [vmem:[%s8 + $0x1c] sm:$0xf]
      %v3522 = vld [vmem:[%s8 + $0x20] sm:$0xf]
      %v3523 = vld [vmem:[%s8 + $0x24] sm:$0xf]
      %v3524 = vld [vmem:[%s8 + $0x28] sm:$0xf]
      %v3525 = vld [vmem:[%s8 + $0x2c] sm:$0xf]
      %v3526 = vld [vmem:[%s8 + $0x30] sm:$0xf]
      %v3527 = vld [vmem:[%s8 + $0x34] sm:$0xf]
      %v3528 = vld [vmem:[%s8 + $0x38] sm:$0xf]
      %v3529 = vld [vmem:[%s8 + $0x3c] sm:$0xf]
      %v3530 = vld [vmem:[%s8 + $0x40] sm:$0xf]
      %v3531 = vld [vmem:[%s8 + $0x44] sm:$0xf]
      %v3532 = vld [vmem:[%s8 + $0x48] sm:$0xf]
      %v3533 = vld [vmem:[%s8 + $0x4c] sm:$0xf]
      %v3534 = vld [vmem:[%s8 + $0x50] sm:$0xf]
      %v3535 = vld [vmem:[%s8 + $0x54] sm:$0xf]
      %v3536 = vld [vmem:[%s8 + $0x58] sm:$0xf]
      %v3537 = vld [vmem:[%s8 + $0x5c] sm:$0xf]
      %v3538 = vld [vmem:[%s8 + $0x60] sm:$0xf]
      %v3539 = vld [vmem:[%s8 + $0x64] sm:$0xf]
      %v3540 = vld [vmem:[%s8 + $0x68] sm:$0xf]
      %v3541 = vld [vmem:[%s8 + $0x6c] sm:$0xf]
      %v3542 = vld [vmem:[%s8 + $0x70] sm:$0xf]
      %v3543 = vld [vmem:[%s8 + $0x74] sm:$0xf]
      %v3544 = vld [vmem:[%s8 + $0x78] sm:$0xf]
      %v3545 = vld [vmem:[%s8 + $0x7c] sm:$0xf]
      %v3546 = vld [vmem:[%s8 + $0x80] sm:$0xf]
      %v3547 = vld [vmem:[%s8 + $0x84] sm:$0xf]
      %v3548 = vld [vmem:[%s8 + $0x88] sm:$0xf]
      %v3549 = vld [vmem:[%s8 + $0x8c] sm:$0xf]
      %v3550 = vld [vmem:[%s8 + $0x90] sm:$0xf]
      %v3551 = vld [vmem:[%s8 + $0x94] sm:$0xf]
      %v3552 = vld [vmem:[%s8 + $0x98] sm:$0xf]
      %v3553 = vld [vmem:[%s8 + $0x9c] sm:$0xf]
      %v3554 = vld [vmem:[%s8 + $0xa0] sm:$0xf]
      %v3555 = vld [vmem:[%s8 + $0xa4] sm:$0xf]
      %v3556 = vld [vmem:[%s8 + $0xa8] sm:$0xf]
      %v3557 = vld [vmem:[%s8 + $0xac] sm:$0xf]
      %v3558 = vld [vmem:[%s8 + $0xb0] sm:$0xf]
      %v3559 = vld [vmem:[%s8 + $0xb4] sm:$0xf]
      %v3560 = vld [vmem:[%s8 + $0xb8] sm:$0xf]
      %v3561 = vld [vmem:[%s8 + $0xbc] sm:$0xf]
      %v3610 = vunpack.c.l.b16 %v3514
      %v3611 = vunpack.c.l.b16 %v3515
      %v3612 = vunpack.c.l.b16 %v3516
      %v3613 = vunpack.c.l.b16 %v3517
      %v3614 = vunpack.c.l.b16 %v3518
      %v3615 = vunpack.c.l.b16 %v3519
      %v3616 = vunpack.c.l.b16 %v3520
      %v3617 = vunpack.c.l.b16 %v3521
      %v3618 = vunpack.c.l.b16 %v3522
      %v3619 = vunpack.c.l.b16 %v3523
      %v3620 = vunpack.c.l.b16 %v3524
      %v3621 = vunpack.c.l.b16 %v3525
      %v3622 = vunpack.c.l.b16 %v3526
      %v3623 = vunpack.c.l.b16 %v3527
      %v3624 = vunpack.c.l.b16 %v3528
      %v3625 = vunpack.c.l.b16 %v3529
      %v3626 = vunpack.c.l.b16 %v3530
      %v3627 = vunpack.c.l.b16 %v3531
      %v3628 = vunpack.c.l.b16 %v3532
      %v3629 = vunpack.c.l.b16 %v3533
      %v3630 = vunpack.c.l.b16 %v3534
      %v3631 = vunpack.c.l.b16 %v3535
      %v3632 = vunpack.c.l.b16 %v3536
      %v3633 = vunpack.c.l.b16 %v3537
      %v3634 = vunpack.c.l.b16 %v3538
      %v3635 = vunpack.c.l.b16 %v3539
      %v3636 = vunpack.c.l.b16 %v3540
      %v3637 = vunpack.c.l.b16 %v3541
      %v3638 = vunpack.c.l.b16 %v3542
      %v3639 = vunpack.c.l.b16 %v3543
      %v3640 = vunpack.c.l.b16 %v3544
      %v3641 = vunpack.c.l.b16 %v3545
      %v3642 = vunpack.c.l.b16 %v3546
      %v3643 = vunpack.c.l.b16 %v3547
      %v3644 = vunpack.c.l.b16 %v3548
      %v3645 = vunpack.c.l.b16 %v3549
      %v3646 = vunpack.c.l.b16 %v3550
      %v3647 = vunpack.c.l.b16 %v3551
      %v3648 = vunpack.c.l.b16 %v3552
      %v3649 = vunpack.c.l.b16 %v3553
      %v3650 = vunpack.c.l.b16 %v3554
      %v3651 = vunpack.c.l.b16 %v3555
      %v3652 = vunpack.c.l.b16 %v3556
      %v3653 = vunpack.c.l.b16 %v3557
      %v3654 = vunpack.c.l.b16 %v3558
      %v3655 = vunpack.c.l.b16 %v3559
      %v3656 = vunpack.c.l.b16 %v3560
      %v3657 = vunpack.c.l.b16 %v3561
      %v3658 = vpack.c.b16 %v3611, %v3610
      %v3659 = vpack.c.b16 %v3613, %v3612
      %v3660 = vpack.c.b16 %v3615, %v3614
      %v3661 = vpack.c.b16 %v3617, %v3616
      %v3662 = vpack.c.b16 %v3619, %v3618
      %v3663 = vpack.c.b16 %v3621, %v3620
      %v3664 = vpack.c.b16 %v3623, %v3622
      %v3665 = vpack.c.b16 %v3625, %v3624
      %v3666 = vpack.c.b16 %v3627, %v3626
      %v3667 = vpack.c.b16 %v3629, %v3628
      %v3668 = vpack.c.b16 %v3631, %v3630
      %v3669 = vpack.c.b16 %v3633, %v3632
      %v3670 = vpack.c.b16 %v3635, %v3634
      %v3671 = vpack.c.b16 %v3637, %v3636
      %v3672 = vpack.c.b16 %v3639, %v3638
      %v3673 = vpack.c.b16 %v3641, %v3640
      %v3674 = vpack.c.b16 %v3643, %v3642
      %v3675 = vpack.c.b16 %v3645, %v3644
      %v3676 = vpack.c.b16 %v3647, %v3646
      %v3677 = vpack.c.b16 %v3649, %v3648
      %v3678 = vpack.c.b16 %v3651, %v3650
      %v3679 = vpack.c.b16 %v3653, %v3652
      %v3680 = vpack.c.b16 %v3655, %v3654
      %v3681 = vpack.c.b16 %v3657, %v3656
      %3706 = vmatprep.subr.bf16.mxu0 0
      %3707 = vmatpush1.bf16.msra.mxu0 %v3658
      %3708 = vmatprep.subr.bf16.mxu0 0
      %3709 = vmatpush1.bf16.msra.mxu0 %v3659
      %3710 = vmatprep.subr.bf16.mxu0 0
      %3711 = vmatpush1.bf16.msra.mxu0 %v3660
      %3712 = vmatprep.subr.bf16.mxu0 0
      %3713 = vmatpush1.bf16.msra.mxu0 %v3661
      %3714 = vmatprep.subr.bf16.mxu0 0
      %3715 = vmatpush1.bf16.msra.mxu0 %v3662
      %3716 = vmatprep.subr.bf16.mxu0 0
      %3717 = vmatpush1.bf16.msra.mxu0 %v3663
      %3718 = vmatprep.subr.bf16.mxu0 0
      %3719 = vmatpush1.bf16.msra.mxu0 %v3664
      %3720 = vmatprep.subr.bf16.mxu0 0
      %3721 = vmatpush1.bf16.msra.mxu0 %v3665
      %3722 = vmatprep.subr.bf16.mxu0 0
      %3723 = vmatpush1.bf16.msra.mxu0 %v3666
      %3724 = vmatprep.subr.bf16.mxu0 0
      %3725 = vmatpush1.bf16.msra.mxu0 %v3667
      %3726 = vmatprep.subr.bf16.mxu0 0
      %3727 = vmatpush1.bf16.msra.mxu0 %v3668
      %3728 = vmatprep.subr.bf16.mxu0 0
      %3729 = vmatpush1.bf16.msra.mxu0 %v3669
      %3730 = vmatprep.subr.bf16.mxu0 0
      %3731 = vmatpush1.bf16.msra.mxu0 %v3670
      %3732 = vmatprep.subr.bf16.mxu0 0
      %3733 = vmatpush1.bf16.msra.mxu0 %v3671
      %3734 = vmatprep.subr.bf16.mxu0 0
      %3735 = vmatpush1.bf16.msra.mxu0 %v3672
      %3736 = vmatprep.subr.bf16.mxu0 0
      %3737 = vmatpush1.bf16.msra.mxu0 %v3673
      %3738 = vmatprep.mubr.bf16.mxu0 %v3188
      %3739 = vmatmul.mubr.bf16.gmra.mrb[0].mxu0 %v2205
      %v3740 = vpop.f32.mrb[0].mxu0
      %v3741 = vadd.f32 0.0, %v3740
      %v3742 = vpop.f32.mrb[0].mxu0
      %v3743 = vpop.f32.mrb[0].mxu0
      %v3744 = vadd.f32 0.0, %v3743
      %v3745 = vpop.f32.mrb[0].mxu0
      %3746 = vmatprep.mubr.bf16.mxu0 %v3200
      %3747 = vmatmul.mubr.bf16.gmra.mrb[0].mxu0 %v2207
      %v3748 = vpop.f32.mrb[0].mxu0
      %v3749 = vadd.f32 0.0, %v3748
      %v3750 = vpop.f32.mrb[0].mxu0
      %v3751 = vpop.f32.mrb[0].mxu0
      %v3752 = vadd.f32 0.0, %v3751
      %v3753 = vpop.f32.mrb[0].mxu0
      %3754 = vmatprep.mubr.bf16.mxu0 %v3212
      %3755 = vmatmul.mubr.bf16.gmra.mrb[0].mxu0 %v2209
      %v3756 = vpop.f32.mrb[0].mxu0
      %v3757 = vadd.f32 0.0, %v3756
      %v3758 = vpop.f32.mrb[0].mxu0
      %v3759 = vpop.f32.mrb[0].mxu0
      %v3760 = vadd.f32 0.0, %v3759
      %v3761 = vpop.f32.mrb[0].mxu0
      %3762 = vmatprep.mubr.bf16.mxu0 %v3224
      %3763 = vmatmul.mubr.bf16.gmra.mrb[0].mxu0 %v2211
      %v3764 = vpop.f32.mrb[0].mxu0
      %v3765 = vadd.f32 0.0, %v3764
      %v3766 = vpop.f32.mrb[0].mxu0
      %v3767 = vpop.f32.mrb[0].mxu0
      %v3768 = vadd.f32 0.0, %v3767
      %v3769 = vpop.f32.mrb[0].mxu0
      %3770 = vmatprep.mubr.bf16.mxu0 %v3236
      %3771 = vmatmul.mubr.bf16.gmra.mrb[0].mxu0 %v2213
      %v3772 = vpop.f32.mrb[0].mxu0
      %v3773 = vadd.f32 0.0, %v3772
      %v3774 = vpop.f32.mrb[0].mxu0
      %v3775 = vpop.f32.mrb[0].mxu0
      %v3776 = vadd.f32 0.0, %v3775
      %v3777 = vpop.f32.mrb[0].mxu0
      %3778 = vmatprep.mubr.bf16.mxu0 %v3248
      %3779 = vmatmul.mubr.bf16.gmra.mrb[0].mxu0 %v2215
      %v3780 = vpop.f32.mrb[0].mxu0
      %v3781 = vadd.f32 0.0, %v3780
      %v3782 = vpop.f32.mrb[0].mxu0
      %v3783 = vpop.f32.mrb[0].mxu0
      %v3784 = vadd.f32 0.0, %v3783
      %v3785 = vpop.f32.mrb[0].mxu0
      %3786 = vmatprep.mubr.bf16.mxu0 %v3260
      %3787 = vmatmul.mubr.bf16.gmra.mrb[0].mxu0 %v2217
      %v3788 = vpop.f32.mrb[0].mxu0
      %v3789 = vadd.f32 0.0, %v3788
      %v3790 = vpop.f32.mrb[0].mxu0
      %v3791 = vpop.f32.mrb[0].mxu0
      %v3792 = vadd.f32 0.0, %v3791
      %v3793 = vpop.f32.mrb[0].mxu0
      %3794 = vmatprep.mubr.bf16.mxu0 %v3272
      %3795 = vmatmul.mubr.bf16.gmra.mrb[0].mxu0 %v2219
      %v3796 = vpop.f32.mrb[0].mxu0
      %v3797 = vadd.f32 0.0, %v3796
      %v3798 = vpop.f32.mrb[0].mxu0
      %v3799 = vpop.f32.mrb[0].mxu0
      %v3800 = vadd.f32 0.0, %v3799
      %v3801 = vpop.f32.mrb[0].mxu0
      %3802 = vmatprep.mubr.bf16.mxu0 %v3284
      %3803 = vmatmul.mubr.bf16.gmra.mrb[0].mxu0 %v2221
      %v3804 = vpop.f32.mrb[0].mxu0
      %v3805 = vadd.f32 0.0, %v3804
      %v3806 = vpop.f32.mrb[0].mxu0
      %v3807 = vpop.f32.mrb[0].mxu0
      %v3808 = vadd.f32 0.0, %v3807
      %v3809 = vpop.f32.mrb[0].mxu0
      %3810 = vmatprep.mubr.bf16.mxu0 %v3296
      %3811 = vmatmul.mubr.bf16.gmra.mrb[0].mxu0 %v2223
      %v3812 = vpop.f32.mrb[0].mxu0
      %v3813 = vadd.f32 0.0, %v3812
      %v3814 = vpop.f32.mrb[0].mxu0
      %v3815 = vpop.f32.mrb[0].mxu0
      %v3816 = vadd.f32 0.0, %v3815
      %v3817 = vpop.f32.mrb[0].mxu0
      %3818 = vmatprep.mubr.bf16.mxu0 %v3308
      %3819 = vmatmul.mubr.bf16.gmra.mrb[0].mxu0 %v2225
      %v3820 = vpop.f32.mrb[0].mxu0
      %v3821 = vadd.f32 0.0, %v3820
      %v3822 = vpop.f32.mrb[0].mxu0
      %v3823 = vpop.f32.mrb[0].mxu0
      %v3824 = vadd.f32 0.0, %v3823
      %v3825 = vpop.f32.mrb[0].mxu0
      %3826 = vmatprep.mubr.bf16.mxu0 %v3320
      %3827 = vmatmul.mubr.bf16.gmra.mrb[0].mxu0 %v2227
      %v3828 = vpop.f32.mrb[0].mxu0
      %v3829 = vadd.f32 0.0, %v3828
      %v3830 = vpop.f32.mrb[0].mxu0
      %v3831 = vpop.f32.mrb[0].mxu0
      %v3832 = vadd.f32 0.0, %v3831
      %v3833 = vpop.f32.mrb[0].mxu0
      %3834 = vmatprep.mubr.bf16.mxu0 %v3332
      %3835 = vmatmul.mubr.bf16.gmra.mrb[0].mxu0 %v2229
      %v3836 = vpop.f32.mrb[0].mxu0
      %v3837 = vadd.f32 0.0, %v3836
      %v3838 = vpop.f32.mrb[0].mxu0
      %v3839 = vpop.f32.mrb[0].mxu0
      %v3840 = vadd.f32 0.0, %v3839
      %v3841 = vpop.f32.mrb[0].mxu0
      %3842 = vmatprep.mubr.bf16.mxu0 %v3344
      %3843 = vmatmul.mubr.bf16.gmra.mrb[0].mxu0 %v2231
      %v3844 = vpop.f32.mrb[0].mxu0
      %v3845 = vadd.f32 0.0, %v3844
      %v3846 = vpop.f32.mrb[0].mxu0
      %v3847 = vpop.f32.mrb[0].mxu0
      %v3848 = vadd.f32 0.0, %v3847
      %v3849 = vpop.f32.mrb[0].mxu0
      %3850 = vmatprep.mubr.bf16.mxu0 %v3356
      %3851 = vmatmul.mubr.bf16.gmra.mrb[0].mxu0 %v2233
      %v3852 = vpop.f32.mrb[0].mxu0
      %v3853 = vadd.f32 0.0, %v3852
      %v3854 = vpop.f32.mrb[0].mxu0
      %v3855 = vpop.f32.mrb[0].mxu0
      %v3856 = vadd.f32 0.0, %v3855
      %v3857 = vpop.f32.mrb[0].mxu0
      %3858 = vmatprep.mubr.bf16.mxu0 %v3368
      %3859 = vmatmul.mubr.bf16.gmra.mrb[0].mxu0 %v2235
      %v3860 = vpop.f32.mrb[0].mxu0
      %v3861 = vadd.f32 0.0, %v3860
      %v3862 = vpop.f32.mrb[0].mxu0
      %v3863 = vpop.f32.mrb[0].mxu0
      %v3864 = vadd.f32 0.0, %v3863
      %v3865 = vpop.f32.mrb[0].mxu0
      %3866 = vdwg.mxu0
      %3867 = vmatprep.subr.bf16.mxu0 0
      %3868 = vmatpush1.bf16.msra.mxu0 %v3674
      %3869 = vmatprep.subr.bf16.mxu0 0
      %3870 = vmatpush1.bf16.msra.mxu0 %v3675
      %3871 = vmatprep.subr.bf16.mxu0 0
      %3872 = vmatpush1.bf16.msra.mxu0 %v3676
      %3873 = vmatprep.subr.bf16.mxu0 0
      %3874 = vmatpush1.bf16.msra.mxu0 %v3677
      %3875 = vmatprep.subr.bf16.mxu0 0
      %3876 = vmatpush1.bf16.msra.mxu0 %v3678
      %3877 = vmatprep.subr.bf16.mxu0 0
      %3878 = vmatpush1.bf16.msra.mxu0 %v3679
      %3879 = vmatprep.subr.bf16.mxu0 0
      %3880 = vmatpush1.bf16.msra.mxu0 %v3680
      %3881 = vmatprep.subr.bf16.mxu0 0
      %3882 = vmatpush1.bf16.msra.mxu0 %v3681
      %3883 = vmatprep.subr.bf16.mxu0 0
      %3884 = vmatpush1.bf16.msra.mxu0 0
      %3885 = vmatprep.subr.bf16.mxu0 0
      %3886 = vmatpush1.bf16.msra.mxu0 0
      %3887 = vmatprep.subr.bf16.mxu0 0
      %3888 = vmatpush1.bf16.msra.mxu0 0
      %3889 = vmatprep.subr.bf16.mxu0 0
      %3890 = vmatpush1.bf16.msra.mxu0 0
      %3891 = vmatprep.subr.bf16.mxu0 0
      %3892 = vmatpush1.bf16.msra.mxu0 0
      %3893 = vmatprep.subr.bf16.mxu0 0
      %3894 = vmatpush1.bf16.msra.mxu0 0
      %3895 = vmatprep.subr.bf16.mxu0 0
      %3896 = vmatpush1.bf16.msra.mxu0 0
      %3897 = vmatprep.subr.bf16.mxu0 0
      %3898 = vmatpush1.bf16.msra.mxu0 0
      %3899 = vmatprep.mubr.bf16.mxu0 0
      %3900 = vmatmul.mubr.bf16.gmra.mrb[0].mxu0 %v3420
      %v3901 = vpop.f32.mrb[0].mxu0
      %v3902 = vadd.f32 %v3741, %v3901
      %v3903 = vpop.f32.mrb[0].mxu0
      %v3904 = vpop.f32.mrb[0].mxu0
      %v3905 = vadd.f32 %v3744, %v3904
      %v3906 = vpop.f32.mrb[0].mxu0
      %3907 = vmatprep.mubr.bf16.mxu0 0
      %3908 = vmatmul.mubr.bf16.gmra.mrb[0].mxu0 %v3423
      %v3909 = vpop.f32.mrb[0].mxu0
      %v3910 = vadd.f32 %v3749, %v3909
      %v3911 = vpop.f32.mrb[0].mxu0
      %v3912 = vpop.f32.mrb[0].mxu0
      %v3913 = vadd.f32 %v3752, %v3912
      %v3914 = vpop.f32.mrb[0].mxu0
      %3915 = vmatprep.mubr.bf16.mxu0 0
      %3916 = vmatmul.mubr.bf16.gmra.mrb[0].mxu0 %v3426
      %v3917 = vpop.f32.mrb[0].mxu0
      %v3918 = vadd.f32 %v3757, %v3917
      %v3919 = vpop.f32.mrb[0].mxu0
      %v3920 = vpop.f32.mrb[0].mxu0
      %v3921 = vadd.f32 %v3760, %v3920
      %v3922 = vpop.f32.mrb[0].mxu0
      %3923 = vmatprep.mubr.bf16.mxu0 0
      %3924 = vmatmul.mubr.bf16.gmra.mrb[0].mxu0 %v3429
      %v3925 = vpop.f32.mrb[0].mxu0
      %v3926 = vadd.f32 %v3765, %v3925
      %v3927 = vpop.f32.mrb[0].mxu0
      %v3928 = vpop.f32.mrb[0].mxu0
      %v3929 = vadd.f32 %v3768, %v3928
      %v3930 = vpop.f32.mrb[0].mxu0
      %3931 = vmatprep.mubr.bf16.mxu0 0
      %3932 = vmatmul.mubr.bf16.gmra.mrb[0].mxu0 %v3432
      %v3933 = vpop.f32.mrb[0].mxu0
      %v3934 = vadd.f32 %v3773, %v3933
      %v3935 = vpop.f32.mrb[0].mxu0
      %v3936 = vpop.f32.mrb[0].mxu0
      %v3937 = vadd.f32 %v3776, %v3936
      %v3938 = vpop.f32.mrb[0].mxu0
      %3939 = vmatprep.mubr.bf16.mxu0 0
      %3940 = vmatmul.mubr.bf16.gmra.mrb[0].mxu0 %v3435
      %v3941 = vpop.f32.mrb[0].mxu0
      %v3942 = vadd.f32 %v3781, %v3941
      %v3943 = vpop.f32.mrb[0].mxu0
      %v3944 = vpop.f32.mrb[0].mxu0
      %v3945 = vadd.f32 %v3784, %v3944
      %v3946 = vpop.f32.mrb[0].mxu0
      %3947 = vmatprep.mubr.bf16.mxu0 0
      %3948 = vmatmul.mubr.bf16.gmra.mrb[0].mxu0 %v3438
      %v3949 = vpop.f32.mrb[0].mxu0
      %v3950 = vadd.f32 %v3789, %v3949
      %v3951 = vpop.f32.mrb[0].mxu0
      %v3952 = vpop.f32.mrb[0].mxu0
      %v3953 = vadd.f32 %v3792, %v3952
      %v3954 = vpop.f32.mrb[0].mxu0
      %3955 = vmatprep.mubr.bf16.mxu0 0
      %3956 = vmatmul.mubr.bf16.gmra.mrb[0].mxu0 %v3441
      %v3957 = vpop.f32.mrb[0].mxu0
      %v3958 = vadd.f32 %v3797, %v3957
      %v3959 = vpop.f32.mrb[0].mxu0
      %v3960 = vpop.f32.mrb[0].mxu0
      %v3961 = vadd.f32 %v3800, %v3960
      %v3962 = vpop.f32.mrb[0].mxu0
      %3963 = vmatprep.mubr.bf16.mxu0 0
      %3964 = vmatmul.mubr.bf16.gmra.mrb[0].mxu0 %v3444
      %v3965 = vpop.f32.mrb[0].mxu0
      %v3966 = vadd.f32 %v3805, %v3965
      %v3967 = vpop.f32.mrb[0].mxu0
      %v3968 = vpop.f32.mrb[0].mxu0
      %v3969 = vadd.f32 %v3808, %v3968
      %v3970 = vpop.f32.mrb[0].mxu0
      %3971 = vmatprep.mubr.bf16.mxu0 0
      %3972 = vmatmul.mubr.bf16.gmra.mrb[0].mxu0 %v3447
      %v3973 = vpop.f32.mrb[0].mxu0
      %v3974 = vadd.f32 %v3813, %v3973
      %v3975 = vpop.f32.mrb[0].mxu0
      %v3976 = vpop.f32.mrb[0].mxu0
      %v3977 = vadd.f32 %v3816, %v3976
      %v3978 = vpop.f32.mrb[0].mxu0
      %3979 = vmatprep.mubr.bf16.mxu0 0
      %3980 = vmatmul.mubr.bf16.gmra.mrb[0].mxu0 %v3450
      %v3981 = vpop.f32.mrb[0].mxu0
      %v3982 = vadd.f32 %v3821, %v3981
      %v3983 = vpop.f32.mrb[0].mxu0
      %v3984 = vpop.f32.mrb[0].mxu0
      %v3985 = vadd.f32 %v3824, %v3984
      %v3986 = vpop.f32.mrb[0].mxu0
      %3987 = vmatprep.mubr.bf16.mxu0 0
      %3988 = vmatmul.mubr.bf16.gmra.mrb[0].mxu0 %v3453
      %v3989 = vpop.f32.mrb[0].mxu0
      %v3990 = vadd.f32 %v3829, %v3989
      %v3991 = vpop.f32.mrb[0].mxu0
      %v3992 = vpop.f32.mrb[0].mxu0
      %v3993 = vadd.f32 %v3832, %v3992
      %v3994 = vpop.f32.mrb[0].mxu0
      %3995 = vmatprep.mubr.bf16.mxu0 0
      %3996 = vmatmul.mubr.bf16.gmra.mrb[0].mxu0 %v3456
      %v3997 = vpop.f32.mrb[0].mxu0
      %v3998 = vadd.f32 %v3837, %v3997
      %v3999 = vpop.f32.mrb[0].mxu0
      %v4000 = vpop.f32.mrb[0].mxu0
      %v4001 = vadd.f32 %v3840, %v4000
      %v4002 = vpop.f32.mrb[0].mxu0
      %4003 = vmatprep.mubr.bf16.mxu0 0
      %4004 = vmatmul.mubr.bf16.gmra.mrb[0].mxu0 %v3459
      %v4005 = vpop.f32.mrb[0].mxu0
      %v4006 = vadd.f32 %v3845, %v4005
      %v4007 = vpop.f32.mrb[0].mxu0
      %v4008 = vpop.f32.mrb[0].mxu0
      %v4009 = vadd.f32 %v3848, %v4008
      %v4010 = vpop.f32.mrb[0].mxu0
      %4011 = vmatprep.mubr.bf16.mxu0 0
      %4012 = vmatmul.mubr.bf16.gmra.mrb[0].mxu0 %v3462
      %v4013 = vpop.f32.mrb[0].mxu0
      %v4014 = vadd.f32 %v3853, %v4013
      %v4015 = vpop.f32.mrb[0].mxu0
      %v4016 = vpop.f32.mrb[0].mxu0
      %v4017 = vadd.f32 %v3856, %v4016
      %v4018 = vpop.f32.mrb[0].mxu0
      %4019 = vmatprep.mubr.bf16.mxu0 0
      %4020 = vmatmul.mubr.bf16.gmra.mrb[0].mxu0 %v3465
      %v4021 = vpop.f32.mrb[0].mxu0
      %v4022 = vadd.f32 %v3861, %v4021
      %v4023 = vpop.f32.mrb[0].mxu0
      %v4024 = vpop.f32.mrb[0].mxu0
      %v4025 = vadd.f32 %v3864, %v4024
      %v4026 = vpop.f32.mrb[0].mxu0
      %4027 = vdwg.mxu0
      %v4028 = vadd.f32 %v3482, %v3902
      %v4029 = vadd.f32 %v3483, %v3905
      %v4030 = vadd.f32 %v3484, %v3910
      %v4031 = vadd.f32 %v3485, %v3913
      %v4032 = vadd.f32 %v3486, %v3918
      %v4033 = vadd.f32 %v3487, %v3921
      %v4034 = vadd.f32 %v3488, %v3926
      %v4035 = vadd.f32 %v3489, %v3929
      %v4036 = vadd.f32 %v3490, %v3934
      %v4037 = vadd.f32 %v3491, %v3937
      %v4038 = vadd.f32 %v3492, %v3942
      %v4039 = vadd.f32 %v3493, %v3945
      %v4040 = vadd.f32 %v3494, %v3950
      %v4041 = vadd.f32 %v3495, %v3953
      %v4042 = vadd.f32 %v3496, %v3958
      %v4043 = vadd.f32 %v3497, %v3961
      %v4044 = vadd.f32 %v3498, %v3966
      %v4045 = vadd.f32 %v3499, %v3969
      %v4046 = vadd.f32 %v3500, %v3974
      %v4047 = vadd.f32 %v3501, %v3977
      %v4048 = vadd.f32 %v3502, %v3982
      %v4049 = vadd.f32 %v3503, %v3985
      %v4050 = vadd.f32 %v3504, %v3990
      %v4051 = vadd.f32 %v3505, %v3993
      %v4052 = vadd.f32 %v3506, %v3998
      %v4053 = vadd.f32 %v3507, %v4001
      %v4054 = vadd.f32 %v3508, %v4006
      %v4055 = vadd.f32 %v3509, %v4009
      %v4056 = vadd.f32 %v3510, %v4014
      %v4057 = vadd.f32 %v3511, %v4017
      %v4058 = vadd.f32 %v3512, %v4022
      %v4059 = vadd.f32 %v3513, %v4025
      %4060 = vst [vmem:[#allocation2] sm:$0xff] %v4028
      %4061 = vst [vmem:[#allocation2 + $0x8] sm:$0xff] %v4029
      %4062 = vst [vmem:[#allocation2 + $0x10] sm:$0xff] %v4030
      %4063 = vst [vmem:[#allocation2 + $0x18] sm:$0xff] %v4031
      %4064 = vst [vmem:[#allocation2 + $0x20] sm:$0xff] %v4032
      %4065 = vst [vmem:[#allocation2 + $0x28] sm:$0xff] %v4033
      %4066 = vst [vmem:[#allocation2 + $0x30] sm:$0xff] %v4034
      %4067 = vst [vmem:[#allocation2 + $0x38] sm:$0xff] %v4035
      %4068 = vst [vmem:[#allocation2 + $0x40] sm:$0xff] %v4036
      %4069 = vst [vmem:[#allocation2 + $0x48] sm:$0xff] %v4037
      %4070 = vst [vmem:[#allocation2 + $0x50] sm:$0xff] %v4038
      %4071 = vst [vmem:[#allocation2 + $0x58] sm:$0xff] %v4039
      %4072 = vst [vmem:[#allocation2 + $0x60] sm:$0xff] %v4040
      %4073 = vst [vmem:[#allocation2 + $0x68] sm:$0xff] %v4041
      %4074 = vst [vmem:[#allocation2 + $0x70] sm:$0xff] %v4042
      %4075 = vst [vmem:[#allocation2 + $0x78] sm:$0xff] %v4043
      %4076 = vst [vmem:[#allocation2 + $0x80] sm:$0xff] %v4044
      %4077 = vst [vmem:[#allocation2 + $0x88] sm:$0xff] %v4045
      %4078 = vst [vmem:[#allocation2 + $0x90] sm:$0xff] %v4046
      %4079 = vst [vmem:[#allocation2 + $0x98] sm:$0xff] %v4047
      %4080 = vst [vmem:[#allocation2 + $0xa0] sm:$0xff] %v4048
      %4081 = vst [vmem:[#allocation2 + $0xa8] sm:$0xff] %v4049
      %4082 = vst [vmem:[#allocation2 + $0xb0] sm:$0xff] %v4050
      %4083 = vst [vmem:[#allocation2 + $0xb8] sm:$0xff] %v4051
      %4084 = vst [vmem:[#allocation2 + $0xc0] sm:$0xff] %v4052
      %4085 = vst [vmem:[#allocation2 + $0xc8] sm:$0xff] %v4053
      %4086 = vst [vmem:[#allocation2 + $0xd0] sm:$0xff] %v4054
      %4087 = vst [vmem:[#allocation2 + $0xd8] sm:$0xff] %v4055
      %4088 = vst [vmem:[#allocation2 + $0xe0] sm:$0xff] %v4056
      %4089 = vst [vmem:[#allocation2 + $0xe8] sm:$0xff] %v4057
      %4090 = vst [vmem:[#allocation2 + $0xf0] sm:$0xff] %v4058
      %4091 = vst [vmem:[#allocation2 + $0xf8] sm:$0xff] %v4059
      %v4093 = vshrl.u32 %v2237, 16
      %v4095 = vshll.u32 %v2237, 16
      %v4097 = vrot.slane %v4095, 1
      %v4098 = vor.u32 %v4093, %v4097
      %v4100 = vshll.u32 %v2238, 16
      %v4102 = vrot.slane %v4100, 1
      %v4103 = vsel %vm3176, %v4098, %v4102
      %v4107 = vrot.slane %v2237, 1
      %v4108 = vrot.slane %v2238, 1
      %v4109 = vsel %vm3417, %v4107, %v4108
      %v4111 = vld [vmem:[#allocation2] sm:$0xff]
      %v4112 = vld [vmem:[#allocation2 + $0x8] sm:$0xff]
      %v4113 = vld [vmem:[#allocation2 + $0x10] sm:$0xff]
      %v4114 = vld [vmem:[#allocation2 + $0x18] sm:$0xff]
      %v4115 = vld [vmem:[#allocation2 + $0x20] sm:$0xff]
      %v4116 = vld [vmem:[#allocation2 + $0x28] sm:$0xff]
      %v4117 = vld [vmem:[#allocation2 + $0x30] sm:$0xff]
      %v4118 = vld [vmem:[#allocation2 + $0x38] sm:$0xff]
      %v4119 = vld [vmem:[#allocation2 + $0x40] sm:$0xff]
      %v4120 = vld [vmem:[#allocation2 + $0x48] sm:$0xff]
      %v4121 = vld [vmem:[#allocation2 + $0x50] sm:$0xff]
      %v4122 = vld [vmem:[#allocation2 + $0x58] sm:$0xff]
      %v4123 = vld [vmem:[#allocation2 + $0x60] sm:$0xff]
      %v4124 = vld [vmem:[#allocation2 + $0x68] sm:$0xff]
      %v4125 = vld [vmem:[#allocation2 + $0x70] sm:$0xff]
      %v4126 = vld [vmem:[#allocation2 + $0x78] sm:$0xff]
      %v4127 = vld [vmem:[#allocation2 + $0x80] sm:$0xff]
      %v4128 = vld [vmem:[#allocation2 + $0x88] sm:$0xff]
      %v4129 = vld [vmem:[#allocation2 + $0x90] sm:$0xff]
      %v4130 = vld [vmem:[#allocation2 + $0x98] sm:$0xff]
      %v4131 = vld [vmem:[#allocation2 + $0xa0] sm:$0xff]
      %v4132 = vld [vmem:[#allocation2 + $0xa8] sm:$0xff]
      %v4133 = vld [vmem:[#allocation2 + $0xb0] sm:$0xff]
      %v4134 = vld [vmem:[#allocation2 + $0xb8] sm:$0xff]
      %v4135 = vld [vmem:[#allocation2 + $0xc0] sm:$0xff]
      %v4136 = vld [vmem:[#allocation2 + $0xc8] sm:$0xff]
      %v4137 = vld [vmem:[#allocation2 + $0xd0] sm:$0xff]
      %v4138 = vld [vmem:[#allocation2 + $0xd8] sm:$0xff]
      %v4139 = vld [vmem:[#allocation2 + $0xe0] sm:$0xff]
      %v4140 = vld [vmem:[#allocation2 + $0xe8] sm:$0xff]
      %v4141 = vld [vmem:[#allocation2 + $0xf0] sm:$0xff]
      %v4142 = vld [vmem:[#allocation2 + $0xf8] sm:$0xff]
      %s4143 = scalar_lea.vmem %s8, 192
      %v4144 = vld [vmem:[%s4143] sm:$0xf]
      %v4145 = vld [vmem:[%s4143 + $0x4] sm:$0xf]
      %v4146 = vld [vmem:[%s4143 + $0x8] sm:$0xf]
      %v4147 = vld [vmem:[%s4143 + $0xc] sm:$0xf]
      %v4148 = vld [vmem:[%s4143 + $0x10] sm:$0xf]
      %v4149 = vld [vmem:[%s4143 + $0x14] sm:$0xf]
      %v4150 = vld [vmem:[%s4143 + $0x18] sm:$0xf]
      %v4151 = vld [vmem:[%s4143 + $0x1c] sm:$0xf]
      %v4152 = vld [vmem:[%s4143 + $0x20] sm:$0xf]
      %v4153 = vld [vmem:[%s4143 + $0x24] sm:$0xf]
      %v4154 = vld [vmem:[%s4143 + $0x28] sm:$0xf]
      %v4155 = vld [vmem:[%s4143 + $0x2c] sm:$0xf]
      %v4156 = vld [vmem:[%s4143 + $0x30] sm:$0xf]
      %v4157 = vld [vmem:[%s4143 + $0x34] sm:$0xf]
      %v4158 = vld [vmem:[%s4143 + $0x38] sm:$0xf]
      %v4159 = vld [vmem:[%s4143 + $0x3c] sm:$0xf]
      %v4160 = vld [vmem:[%s4143 + $0x40] sm:$0xf]
      %v4161 = vld [vmem:[%s4143 + $0x44] sm:$0xf]
      %v4162 = vld [vmem:[%s4143 + $0x48] sm:$0xf]
      %v4163 = vld [vmem:[%s4143 + $0x4c] sm:$0xf]
      %v4164 = vld [vmem:[%s4143 + $0x50] sm:$0xf]
      %v4165 = vld [vmem:[%s4143 + $0x54] sm:$0xf]
      %v4166 = vld [vmem:[%s4143 + $0x58] sm:$0xf]
      %v4167 = vld [vmem:[%s4143 + $0x5c] sm:$0xf]
      %v4168 = vld [vmem:[%s4143 + $0x60] sm:$0xf]
      %v4169 = vld [vmem:[%s4143 + $0x64] sm:$0xf]
      %v4170 = vld [vmem:[%s4143 + $0x68] sm:$0xf]
      %v4171 = vld [vmem:[%s4143 + $0x6c] sm:$0xf]
      %v4172 = vld [vmem:[%s4143 + $0x70] sm:$0xf]
      %v4173 = vld [vmem:[%s4143 + $0x74] sm:$0xf]
      %v4174 = vld [vmem:[%s4143 + $0x78] sm:$0xf]
      %v4175 = vld [vmem:[%s4143 + $0x7c] sm:$0xf]
      %v4176 = vld [vmem:[%s4143 + $0x80] sm:$0xf]
      %v4177 = vld [vmem:[%s4143 + $0x84] sm:$0xf]
      %v4178 = vld [vmem:[%s4143 + $0x88] sm:$0xf]
      %v4179 = vld [vmem:[%s4143 + $0x8c] sm:$0xf]
      %v4180 = vld [vmem:[%s4143 + $0x90] sm:$0xf]
      %v4181 = vld [vmem:[%s4143 + $0x94] sm:$0xf]
      %v4182 = vld [vmem:[%s4143 + $0x98] sm:$0xf]
      %v4183 = vld [vmem:[%s4143 + $0x9c] sm:$0xf]
      %v4184 = vld [vmem:[%s4143 + $0xa0] sm:$0xf]
      %v4185 = vld [vmem:[%s4143 + $0xa4] sm:$0xf]
      %v4186 = vld [vmem:[%s4143 + $0xa8] sm:$0xf]
      %v4187 = vld [vmem:[%s4143 + $0xac] sm:$0xf]
      %v4188 = vld [vmem:[%s4143 + $0xb0] sm:$0xf]
      %v4189 = vld [vmem:[%s4143 + $0xb4] sm:$0xf]
      %v4190 = vld [vmem:[%s4143 + $0xb8] sm:$0xf]
      %v4191 = vld [vmem:[%s4143 + $0xbc] sm:$0xf]
      %v4240 = vunpack.c.l.b16 %v4144
      %v4241 = vunpack.c.l.b16 %v4145
      %v4242 = vunpack.c.l.b16 %v4146
      %v4243 = vunpack.c.l.b16 %v4147
      %v4244 = vunpack.c.l.b16 %v4148
      %v4245 = vunpack.c.l.b16 %v4149
      %v4246 = vunpack.c.l.b16 %v4150
      %v4247 = vunpack.c.l.b16 %v4151
      %v4248 = vunpack.c.l.b16 %v4152
      %v4249 = vunpack.c.l.b16 %v4153
      %v4250 = vunpack.c.l.b16 %v4154
      %v4251 = vunpack.c.l.b16 %v4155
      %v4252 = vunpack.c.l.b16 %v4156
      %v4253 = vunpack.c.l.b16 %v4157
      %v4254 = vunpack.c.l.b16 %v4158
      %v4255 = vunpack.c.l.b16 %v4159
      %v4256 = vunpack.c.l.b16 %v4160
      %v4257 = vunpack.c.l.b16 %v4161
      %v4258 = vunpack.c.l.b16 %v4162
      %v4259 = vunpack.c.l.b16 %v4163
      %v4260 = vunpack.c.l.b16 %v4164
      %v4261 = vunpack.c.l.b16 %v4165
      %v4262 = vunpack.c.l.b16 %v4166
      %v4263 = vunpack.c.l.b16 %v4167
      %v4264 = vunpack.c.l.b16 %v4168
      %v4265 = vunpack.c.l.b16 %v4169
      %v4266 = vunpack.c.l.b16 %v4170
      %v4267 = vunpack.c.l.b16 %v4171
      %v4268 = vunpack.c.l.b16 %v4172
      %v4269 = vunpack.c.l.b16 %v4173
      %v4270 = vunpack.c.l.b16 %v4174
      %v4271 = vunpack.c.l.b16 %v4175
      %v4272 = vunpack.c.l.b16 %v4176
      %v4273 = vunpack.c.l.b16 %v4177
      %v4274 = vunpack.c.l.b16 %v4178
      %v4275 = vunpack.c.l.b16 %v4179
      %v4276 = vunpack.c.l.b16 %v4180
      %v4277 = vunpack.c.l.b16 %v4181
      %v4278 = vunpack.c.l.b16 %v4182
      %v4279 = vunpack.c.l.b16 %v4183
      %v4280 = vunpack.c.l.b16 %v4184
      %v4281 = vunpack.c.l.b16 %v4185
      %v4282 = vunpack.c.l.b16 %v4186
      %v4283 = vunpack.c.l.b16 %v4187
      %v4284 = vunpack.c.l.b16 %v4188
      %v4285 = vunpack.c.l.b16 %v4189
      %v4286 = vunpack.c.l.b16 %v4190
      %v4287 = vunpack.c.l.b16 %v4191
      %v4288 = vpack.c.b16 %v4241, %v4240
      %v4289 = vpack.c.b16 %v4243, %v4242
      %v4290 = vpack.c.b16 %v4245, %v4244
      %v4291 = vpack.c.b16 %v4247, %v4246
      %v4292 = vpack.c.b16 %v4249, %v4248
      %v4293 = vpack.c.b16 %v4251, %v4250
      %v4294 = vpack.c.b16 %v4253, %v4252
      %v4295 = vpack.c.b16 %v4255, %v4254
      %v4296 = vpack.c.b16 %v4257, %v4256
      %v4297 = vpack.c.b16 %v4259, %v4258
      %v4298 = vpack.c.b16 %v4261, %v4260
      %v4299 = vpack.c.b16 %v4263, %v4262
      %v4300 = vpack.c.b16 %v4265, %v4264
      %v4301 = vpack.c.b16 %v4267, %v4266
      %v4302 = vpack.c.b16 %v4269, %v4268
      %v4303 = vpack.c.b16 %v4271, %v4270
      %v4304 = vpack.c.b16 %v4273, %v4272
      %v4305 = vpack.c.b16 %v4275, %v4274
      %v4306 = vpack.c.b16 %v4277, %v4276
      %v4307 = vpack.c.b16 %v4279, %v4278
      %v4308 = vpack.c.b16 %v4281, %v4280
      %v4309 = vpack.c.b16 %v4283, %v4282
      %v4310 = vpack.c.b16 %v4285, %v4284
      %v4311 = vpack.c.b16 %v4287, %v4286
      %4336 = vmatprep.subr.bf16.mxu0 0
      %4337 = vmatpush1.bf16.msra.mxu0 %v4288
      %4338 = vmatprep.subr.bf16.mxu0 0
      %4339 = vmatpush1.bf16.msra.mxu0 %v4289
      %4340 = vmatprep.subr.bf16.mxu0 0
      %4341 = vmatpush1.bf16.msra.mxu0 %v4290
      %4342 = vmatprep.subr.bf16.mxu0 0
      %4343 = vmatpush1.bf16.msra.mxu0 %v4291
      %4344 = vmatprep.subr.bf16.mxu0 0
      %4345 = vmatpush1.bf16.msra.mxu0 %v4292
      %4346 = vmatprep.subr.bf16.mxu0 0
      %4347 = vmatpush1.bf16.msra.mxu0 %v4293
      %4348 = vmatprep.subr.bf16.mxu0 0
      %4349 = vmatpush1.bf16.msra.mxu0 %v4294
      %4350 = vmatprep.subr.bf16.mxu0 0
      %4351 = vmatpush1.bf16.msra.mxu0 %v4295
      %4352 = vmatprep.subr.bf16.mxu0 0
      %4353 = vmatpush1.bf16.msra.mxu0 %v4296
      %4354 = vmatprep.subr.bf16.mxu0 0
      %4355 = vmatpush1.bf16.msra.mxu0 %v4297
      %4356 = vmatprep.subr.bf16.mxu0 0
      %4357 = vmatpush1.bf16.msra.mxu0 %v4298
      %4358 = vmatprep.subr.bf16.mxu0 0
      %4359 = vmatpush1.bf16.msra.mxu0 %v4299
      %4360 = vmatprep.subr.bf16.mxu0 0
      %4361 = vmatpush1.bf16.msra.mxu0 %v4300
      %4362 = vmatprep.subr.bf16.mxu0 0
      %4363 = vmatpush1.bf16.msra.mxu0 %v4301
      %4364 = vmatprep.subr.bf16.mxu0 0
      %4365 = vmatpush1.bf16.msra.mxu0 %v4302
      %4366 = vmatprep.subr.bf16.mxu0 0
      %4367 = vmatpush1.bf16.msra.mxu0 %v4303
      %4368 = vmatprep.mubr.bf16.mxu0 %v3200
      %4369 = vmatmul.mubr.bf16.gmra.mrb[0].mxu0 %v2207
      %v4370 = vpop.f32.mrb[0].mxu0
      %v4371 = vadd.f32 0.0, %v4370
      %v4372 = vpop.f32.mrb[0].mxu0
      %v4373 = vpop.f32.mrb[0].mxu0
      %v4374 = vadd.f32 0.0, %v4373
      %v4375 = vpop.f32.mrb[0].mxu0
      %4376 = vmatprep.mubr.bf16.mxu0 %v3212
      %4377 = vmatmul.mubr.bf16.gmra.mrb[0].mxu0 %v2209
      %v4378 = vpop.f32.mrb[0].mxu0
      %v4379 = vadd.f32 0.0, %v4378
      %v4380 = vpop.f32.mrb[0].mxu0
      %v4381 = vpop.f32.mrb[0].mxu0
      %v4382 = vadd.f32 0.0, %v4381
      %v4383 = vpop.f32.mrb[0].mxu0
      %4384 = vmatprep.mubr.bf16.mxu0 %v3224
      %4385 = vmatmul.mubr.bf16.gmra.mrb[0].mxu0 %v2211
      %v4386 = vpop.f32.mrb[0].mxu0
      %v4387 = vadd.f32 0.0, %v4386
      %v4388 = vpop.f32.mrb[0].mxu0
      %v4389 = vpop.f32.mrb[0].mxu0
      %v4390 = vadd.f32 0.0, %v4389
      %v4391 = vpop.f32.mrb[0].mxu0
      %4392 = vmatprep.mubr.bf16.mxu0 %v3236
      %4393 = vmatmul.mubr.bf16.gmra.mrb[0].mxu0 %v2213
      %v4394 = vpop.f32.mrb[0].mxu0
      %v4395 = vadd.f32 0.0, %v4394
      %v4396 = vpop.f32.mrb[0].mxu0
      %v4397 = vpop.f32.mrb[0].mxu0
      %v4398 = vadd.f32 0.0, %v4397
      %v4399 = vpop.f32.mrb[0].mxu0
      %4400 = vmatprep.mubr.bf16.mxu0 %v3248
      %4401 = vmatmul.mubr.bf16.gmra.mrb[0].mxu0 %v2215
      %v4402 = vpop.f32.mrb[0].mxu0
      %v4403 = vadd.f32 0.0, %v4402
      %v4404 = vpop.f32.mrb[0].mxu0
      %v4405 = vpop.f32.mrb[0].mxu0
      %v4406 = vadd.f32 0.0, %v4405
      %v4407 = vpop.f32.mrb[0].mxu0
      %4408 = vmatprep.mubr.bf16.mxu0 %v3260
      %4409 = vmatmul.mubr.bf16.gmra.mrb[0].mxu0 %v2217
      %v4410 = vpop.f32.mrb[0].mxu0
      %v4411 = vadd.f32 0.0, %v4410
      %v4412 = vpop.f32.mrb[0].mxu0
      %v4413 = vpop.f32.mrb[0].mxu0
      %v4414 = vadd.f32 0.0, %v4413
      %v4415 = vpop.f32.mrb[0].mxu0
      %4416 = vmatprep.mubr.bf16.mxu0 %v3272
      %4417 = vmatmul.mubr.bf16.gmra.mrb[0].mxu0 %v2219
      %v4418 = vpop.f32.mrb[0].mxu0
      %v4419 = vadd.f32 0.0, %v4418
      %v4420 = vpop.f32.mrb[0].mxu0
      %v4421 = vpop.f32.mrb[0].mxu0
      %v4422 = vadd.f32 0.0, %v4421
      %v4423 = vpop.f32.mrb[0].mxu0
      %4424 = vmatprep.mubr.bf16.mxu0 %v3284
      %4425 = vmatmul.mubr.bf16.gmra.mrb[0].mxu0 %v2221
      %v4426 = vpop.f32.mrb[0].mxu0
      %v4427 = vadd.f32 0.0, %v4426
      %v4428 = vpop.f32.mrb[0].mxu0
      %v4429 = vpop.f32.mrb[0].mxu0
      %v4430 = vadd.f32 0.0, %v4429
      %v4431 = vpop.f32.mrb[0].mxu0
      %4432 = vmatprep.mubr.bf16.mxu0 %v3296
      %4433 = vmatmul.mubr.bf16.gmra.mrb[0].mxu0 %v2223
      %v4434 = vpop.f32.mrb[0].mxu0
      %v4435 = vadd.f32 0.0, %v4434
      %v4436 = vpop.f32.mrb[0].mxu0
      %v4437 = vpop.f32.mrb[0].mxu0
      %v4438 = vadd.f32 0.0, %v4437
      %v4439 = vpop.f32.mrb[0].mxu0
      %4440 = vmatprep.mubr.bf16.mxu0 %v3308
      %4441 = vmatmul.mubr.bf16.gmra.mrb[0].mxu0 %v2225
      %v4442 = vpop.f32.mrb[0].mxu0
      %v4443 = vadd.f32 0.0, %v4442
      %v4444 = vpop.f32.mrb[0].mxu0
      %v4445 = vpop.f32.mrb[0].mxu0
      %v4446 = vadd.f32 0.0, %v4445
      %v4447 = vpop.f32.mrb[0].mxu0
      %4448 = vmatprep.mubr.bf16.mxu0 %v3320
      %4449 = vmatmul.mubr.bf16.gmra.mrb[0].mxu0 %v2227
      %v4450 = vpop.f32.mrb[0].mxu0
      %v4451 = vadd.f32 0.0, %v4450
      %v4452 = vpop.f32.mrb[0].mxu0
      %v4453 = vpop.f32.mrb[0].mxu0
      %v4454 = vadd.f32 0.0, %v4453
      %v4455 = vpop.f32.mrb[0].mxu0
      %4456 = vmatprep.mubr.bf16.mxu0 %v3332
      %4457 = vmatmul.mubr.bf16.gmra.mrb[0].mxu0 %v2229
      %v4458 = vpop.f32.mrb[0].mxu0
      %v4459 = vadd.f32 0.0, %v4458
      %v4460 = vpop.f32.mrb[0].mxu0
      %v4461 = vpop.f32.mrb[0].mxu0
      %v4462 = vadd.f32 0.0, %v4461
      %v4463 = vpop.f32.mrb[0].mxu0
      %4464 = vmatprep.mubr.bf16.mxu0 %v3344
      %4465 = vmatmul.mubr.bf16.gmra.mrb[0].mxu0 %v2231
      %v4466 = vpop.f32.mrb[0].mxu0
      %v4467 = vadd.f32 0.0, %v4466
      %v4468 = vpop.f32.mrb[0].mxu0
      %v4469 = vpop.f32.mrb[0].mxu0
      %v4470 = vadd.f32 0.0, %v4469
      %v4471 = vpop.f32.mrb[0].mxu0
      %4472 = vmatprep.mubr.bf16.mxu0 %v3356
      %4473 = vmatmul.mubr.bf16.gmra.mrb[0].mxu0 %v2233
      %v4474 = vpop.f32.mrb[0].mxu0
      %v4475 = vadd.f32 0.0, %v4474
      %v4476 = vpop.f32.mrb[0].mxu0
      %v4477 = vpop.f32.mrb[0].mxu0
      %v4478 = vadd.f32 0.0, %v4477
      %v4479 = vpop.f32.mrb[0].mxu0
      %4480 = vmatprep.mubr.bf16.mxu0 %v3368
      %4481 = vmatmul.mubr.bf16.gmra.mrb[0].mxu0 %v2235
      %v4482 = vpop.f32.mrb[0].mxu0
      %v4483 = vadd.f32 0.0, %v4482
      %v4484 = vpop.f32.mrb[0].mxu0
      %v4485 = vpop.f32.mrb[0].mxu0
      %v4486 = vadd.f32 0.0, %v4485
      %v4487 = vpop.f32.mrb[0].mxu0
      %4488 = vmatprep.mubr.bf16.mxu0 %v4103
      %4489 = vmatmul.mubr.bf16.gmra.mrb[0].mxu0 %v2237
      %v4490 = vpop.f32.mrb[0].mxu0
      %v4491 = vadd.f32 0.0, %v4490
      %v4492 = vpop.f32.mrb[0].mxu0
      %v4493 = vpop.f32.mrb[0].mxu0
      %v4494 = vadd.f32 0.0, %v4493
      %v4495 = vpop.f32.mrb[0].mxu0
      %4496 = vdwg.mxu0
      %4497 = vmatprep.subr.bf16.mxu0 0
      %4498 = vmatpush1.bf16.msra.mxu0 %v4304
      %4499 = vmatprep.subr.bf16.mxu0 0
      %4500 = vmatpush1.bf16.msra.mxu0 %v4305
      %4501 = vmatprep.subr.bf16.mxu0 0
      %4502 = vmatpush1.bf16.msra.mxu0 %v4306
      %4503 = vmatprep.subr.bf16.mxu0 0
      %4504 = vmatpush1.bf16.msra.mxu0 %v4307
      %4505 = vmatprep.subr.bf16.mxu0 0
      %4506 = vmatpush1.bf16.msra.mxu0 %v4308
      %4507 = vmatprep.subr.bf16.mxu0 0
      %4508 = vmatpush1.bf16.msra.mxu0 %v4309
      %4509 = vmatprep.subr.bf16.mxu0 0
      %4510 = vmatpush1.bf16.msra.mxu0 %v4310
      %4511 = vmatprep.subr.bf16.mxu0 0
      %4512 = vmatpush1.bf16.msra.mxu0 %v4311
      %4513 = vmatprep.subr.bf16.mxu0 0
      %4514 = vmatpush1.bf16.msra.mxu0 0
      %4515 = vmatprep.subr.bf16.mxu0 0
      %4516 = vmatpush1.bf16.msra.mxu0 0
      %4517 = vmatprep.subr.bf16.mxu0 0
      %4518 = vmatpush1.bf16.msra.mxu0 0
      %4519 = vmatprep.subr.bf16.mxu0 0
      %4520 = vmatpush1.bf16.msra.mxu0 0
      %4521 = vmatprep.subr.bf16.mxu0 0
      %4522 = vmatpush1.bf16.msra.mxu0 0
      %4523 = vmatprep.subr.bf16.mxu0 0
      %4524 = vmatpush1.bf16.msra.mxu0 0
      %4525 = vmatprep.subr.bf16.mxu0 0
      %4526 = vmatpush1.bf16.msra.mxu0 0
      %4527 = vmatprep.subr.bf16.mxu0 0
      %4528 = vmatpush1.bf16.msra.mxu0 0
      %4529 = vmatprep.mubr.bf16.mxu0 0
      %4530 = vmatmul.mubr.bf16.gmra.mrb[0].mxu0 %v3423
      %v4531 = vpop.f32.mrb[0].mxu0
      %v4532 = vadd.f32 %v4371, %v4531
      %v4533 = vpop.f32.mrb[0].mxu0
      %v4534 = vpop.f32.mrb[0].mxu0
      %v4535 = vadd.f32 %v4374, %v4534
      %v4536 = vpop.f32.mrb[0].mxu0
      %4537 = vmatprep.mubr.bf16.mxu0 0
      %4538 = vmatmul.mubr.bf16.gmra.mrb[0].mxu0 %v3426
      %v4539 = vpop.f32.mrb[0].mxu0
      %v4540 = vadd.f32 %v4379, %v4539
      %v4541 = vpop.f32.mrb[0].mxu0
      %v4542 = vpop.f32.mrb[0].mxu0
      %v4543 = vadd.f32 %v4382, %v4542
      %v4544 = vpop.f32.mrb[0].mxu0
      %4545 = vmatprep.mubr.bf16.mxu0 0
      %4546 = vmatmul.mubr.bf16.gmra.mrb[0].mxu0 %v3429
      %v4547 = vpop.f32.mrb[0].mxu0
      %v4548 = vadd.f32 %v4387, %v4547
      %v4549 = vpop.f32.mrb[0].mxu0
      %v4550 = vpop.f32.mrb[0].mxu0
      %v4551 = vadd.f32 %v4390, %v4550
      %v4552 = vpop.f32.mrb[0].mxu0
      %4553 = vmatprep.mubr.bf16.mxu0 0
      %4554 = vmatmul.mubr.bf16.gmra.mrb[0].mxu0 %v3432
      %v4555 = vpop.f32.mrb[0].mxu0
      %v4556 = vadd.f32 %v4395, %v4555
      %v4557 = vpop.f32.mrb[0].mxu0
      %v4558 = vpop.f32.mrb[0].mxu0
      %v4559 = vadd.f32 %v4398, %v4558
      %v4560 = vpop.f32.mrb[0].mxu0
      %4561 = vmatprep.mubr.bf16.mxu0 0
      %4562 = vmatmul.mubr.bf16.gmra.mrb[0].mxu0 %v3435
      %v4563 = vpop.f32.mrb[0].mxu0
      %v4564 = vadd.f32 %v4403, %v4563
      %v4565 = vpop.f32.mrb[0].mxu0
      %v4566 = vpop.f32.mrb[0].mxu0
      %v4567 = vadd.f32 %v4406, %v4566
      %v4568 = vpop.f32.mrb[0].mxu0
      %4569 = vmatprep.mubr.bf16.mxu0 0
      %4570 = vmatmul.mubr.bf16.gmra.mrb[0].mxu0 %v3438
      %v4571 = vpop.f32.mrb[0].mxu0
      %v4572 = vadd.f32 %v4411, %v4571
      %v4573 = vpop.f32.mrb[0].mxu0
      %v4574 = vpop.f32.mrb[0].mxu0
      %v4575 = vadd.f32 %v4414, %v4574
      %v4576 = vpop.f32.mrb[0].mxu0
      %4577 = vmatprep.mubr.bf16.mxu0 0
      %4578 = vmatmul.mubr.bf16.gmra.mrb[0].mxu0 %v3441
      %v4579 = vpop.f32.mrb[0].mxu0
      %v4580 = vadd.f32 %v4419, %v4579
      %v4581 = vpop.f32.mrb[0].mxu0
      %v4582 = vpop.f32.mrb[0].mxu0
      %v4583 = vadd.f32 %v4422, %v4582
      %v4584 = vpop.f32.mrb[0].mxu0
      %4585 = vmatprep.mubr.bf16.mxu0 0
      %4586 = vmatmul.mubr.bf16.gmra.mrb[0].mxu0 %v3444
      %v4587 = vpop.f32.mrb[0].mxu0
      %v4588 = vadd.f32 %v4427, %v4587
      %v4589 = vpop.f32.mrb[0].mxu0
      %v4590 = vpop.f32.mrb[0].mxu0
      %v4591 = vadd.f32 %v4430, %v4590
      %v4592 = vpop.f32.mrb[0].mxu0
      %4593 = vmatprep.mubr.bf16.mxu0 0
      %4594 = vmatmul.mubr.bf16.gmra.mrb[0].mxu0 %v3447
      %v4595 = vpop.f32.mrb[0].mxu0
      %v4596 = vadd.f32 %v4435, %v4595
      %v4597 = vpop.f32.mrb[0].mxu0
      %v4598 = vpop.f32.mrb[0].mxu0
      %v4599 = vadd.f32 %v4438, %v4598
      %v4600 = vpop.f32.mrb[0].mxu0
      %4601 = vmatprep.mubr.bf16.mxu0 0
      %4602 = vmatmul.mubr.bf16.gmra.mrb[0].mxu0 %v3450
      %v4603 = vpop.f32.mrb[0].mxu0
      %v4604 = vadd.f32 %v4443, %v4603
      %v4605 = vpop.f32.mrb[0].mxu0
      %v4606 = vpop.f32.mrb[0].mxu0
      %v4607 = vadd.f32 %v4446, %v4606
      %v4608 = vpop.f32.mrb[0].mxu0
      %4609 = vmatprep.mubr.bf16.mxu0 0
      %4610 = vmatmul.mubr.bf16.gmra.mrb[0].mxu0 %v3453
      %v4611 = vpop.f32.mrb[0].mxu0
      %v4612 = vadd.f32 %v4451, %v4611
      %v4613 = vpop.f32.mrb[0].mxu0
      %v4614 = vpop.f32.mrb[0].mxu0
      %v4615 = vadd.f32 %v4454, %v4614
      %v4616 = vpop.f32.mrb[0].mxu0
      %4617 = vmatprep.mubr.bf16.mxu0 0
      %4618 = vmatmul.mubr.bf16.gmra.mrb[0].mxu0 %v3456
      %v4619 = vpop.f32.mrb[0].mxu0
      %v4620 = vadd.f32 %v4459, %v4619
      %v4621 = vpop.f32.mrb[0].mxu0
      %v4622 = vpop.f32.mrb[0].mxu0
      %v4623 = vadd.f32 %v4462, %v4622
      %v4624 = vpop.f32.mrb[0].mxu0
      %4625 = vmatprep.mubr.bf16.mxu0 0
      %4626 = vmatmul.mubr.bf16.gmra.mrb[0].mxu0 %v3459
      %v4627 = vpop.f32.mrb[0].mxu0
      %v4628 = vadd.f32 %v4467, %v4627
      %v4629 = vpop.f32.mrb[0].mxu0
      %v4630 = vpop.f32.mrb[0].mxu0
      %v4631 = vadd.f32 %v4470, %v4630
      %v4632 = vpop.f32.mrb[0].mxu0
      %4633 = vmatprep.mubr.bf16.mxu0 0
      %4634 = vmatmul.mubr.bf16.gmra.mrb[0].mxu0 %v3462
      %v4635 = vpop.f32.mrb[0].mxu0
      %v4636 = vadd.f32 %v4475, %v4635
      %v4637 = vpop.f32.mrb[0].mxu0
      %v4638 = vpop.f32.mrb[0].mxu0
      %v4639 = vadd.f32 %v4478, %v4638
      %v4640 = vpop.f32.mrb[0].mxu0
      %4641 = vmatprep.mubr.bf16.mxu0 0
      %4642 = vmatmul.mubr.bf16.gmra.mrb[0].mxu0 %v3465
      %v4643 = vpop.f32.mrb[0].mxu0
      %v4644 = vadd.f32 %v4483, %v4643
      %v4645 = vpop.f32.mrb[0].mxu0
      %v4646 = vpop.f32.mrb[0].mxu0
      %v4647 = vadd.f32 %v4486, %v4646
      %v4648 = vpop.f32.mrb[0].mxu0
      %4649 = vmatprep.mubr.bf16.mxu0 0
      %4650 = vmatmul.mubr.bf16.gmra.mrb[0].mxu0 %v4109
      %v4651 = vpop.f32.mrb[0].mxu0
      %v4652 = vadd.f32 %v4491, %v4651
      %v4653 = vpop.f32.mrb[0].mxu0
      %v4654 = vpop.f32.mrb[0].mxu0
      %v4655 = vadd.f32 %v4494, %v4654
      %v4656 = vpop.f32.mrb[0].mxu0
      %4657 = vdwg.mxu0
      %v4658 = vadd.f32 %v4111, %v4532
      %v4659 = vadd.f32 %v4112, %v4535
      %v4660 = vadd.f32 %v4113, %v4540
      %v4661 = vadd.f32 %v4114, %v4543
      %v4662 = vadd.f32 %v4115, %v4548
      %v4663 = vadd.f32 %v4116, %v4551
      %v4664 = vadd.f32 %v4117, %v4556
      %v4665 = vadd.f32 %v4118, %v4559
      %v4666 = vadd.f32 %v4119, %v4564
      %v4667 = vadd.f32 %v4120, %v4567
      %v4668 = vadd.f32 %v4121, %v4572
      %v4669 = vadd.f32 %v4122, %v4575
      %v4670 = vadd.f32 %v4123, %v4580
      %v4671 = vadd.f32 %v4124, %v4583
      %v4672 = vadd.f32 %v4125, %v4588
      %v4673 = vadd.f32 %v4126, %v4591
      %v4674 = vadd.f32 %v4127, %v4596
      %v4675 = vadd.f32 %v4128, %v4599
      %v4676 = vadd.f32 %v4129, %v4604
      %v4677 = vadd.f32 %v4130, %v4607
      %v4678 = vadd.f32 %v4131, %v4612
      %v4679 = vadd.f32 %v4132, %v4615
      %v4680 = vadd.f32 %v4133, %v4620
      %v4681 = vadd.f32 %v4134, %v4623
      %v4682 = vadd.f32 %v4135, %v4628
      %v4683 = vadd.f32 %v4136, %v4631
      %v4684 = vadd.f32 %v4137, %v4636
      %v4685 = vadd.f32 %v4138, %v4639
      %v4686 = vadd.f32 %v4139, %v4644
      %v4687 = vadd.f32 %v4140, %v4647
      %v4688 = vadd.f32 %v4141, %v4652
      %v4689 = vadd.f32 %v4142, %v4655
      %4690 = vst [vmem:[#allocation2] sm:$0xff] %v4658
      %4691 = vst [vmem:[#allocation2 + $0x8] sm:$0xff] %v4659
      %4692 = vst [vmem:[#allocation2 + $0x10] sm:$0xff] %v4660
      %4693 = vst [vmem:[#allocation2 + $0x18] sm:$0xff] %v4661
      %4694 = vst [vmem:[#allocation2 + $0x20] sm:$0xff] %v4662
      %4695 = vst [vmem:[#allocation2 + $0x28] sm:$0xff] %v4663
      %4696 = vst [vmem:[#allocation2 + $0x30] sm:$0xff] %v4664
      %4697 = vst [vmem:[#allocation2 + $0x38] sm:$0xff] %v4665
      %4698 = vst [vmem:[#allocation2 + $0x40] sm:$0xff] %v4666
      %4699 = vst [vmem:[#allocation2 + $0x48] sm:$0xff] %v4667
      %4700 = vst [vmem:[#allocation2 + $0x50] sm:$0xff] %v4668
      %4701 = vst [vmem:[#allocation2 + $0x58] sm:$0xff] %v4669
      %4702 = vst [vmem:[#allocation2 + $0x60] sm:$0xff] %v4670
      %4703 = vst [vmem:[#allocation2 + $0x68] sm:$0xff] %v4671
      %4704 = vst [vmem:[#allocation2 + $0x70] sm:$0xff] %v4672
      %4705 = vst [vmem:[#allocation2 + $0x78] sm:$0xff] %v4673
      %4706 = vst [vmem:[#allocation2 + $0x80] sm:$0xff] %v4674
      %4707 = vst [vmem:[#allocation2 + $0x88] sm:$0xff] %v4675
      %4708 = vst [vmem:[#allocation2 + $0x90] sm:$0xff] %v4676
      %4709 = vst [vmem:[#allocation2 + $0x98] sm:$0xff] %v4677
      %4710 = vst [vmem:[#allocation2 + $0xa0] sm:$0xff] %v4678
      %4711 = vst [vmem:[#allocation2 + $0xa8] sm:$0xff] %v4679
      %4712 = vst [vmem:[#allocation2 + $0xb0] sm:$0xff] %v4680
      %4713 = vst [vmem:[#allocation2 + $0xb8] sm:$0xff] %v4681
      %4714 = vst [vmem:[#allocation2 + $0xc0] sm:$0xff] %v4682
      %4715 = vst [vmem:[#allocation2 + $0xc8] sm:$0xff] %v4683
      %4716 = vst [vmem:[#allocation2 + $0xd0] sm:$0xff] %v4684
      %4717 = vst [vmem:[#allocation2 + $0xd8] sm:$0xff] %v4685
      %4718 = vst [vmem:[#allocation2 + $0xe0] sm:$0xff] %v4686
      %4719 = vst [vmem:[#allocation2 + $0xe8] sm:$0xff] %v4687
      %4720 = vst [vmem:[#allocation2 + $0xf0] sm:$0xff] %v4688
      %4721 = vst [vmem:[#allocation2 + $0xf8] sm:$0xff] %v4689
      %v4723 = vshrl.u32 %v2239, 16
      %v4725 = vshll.u32 %v2239, 16
      %v4727 = vrot.slane %v4725, 1
      %v4728 = vor.u32 %v4723, %v4727
      %v4730 = vshll.u32 %v2240, 16
      %v4732 = vrot.slane %v4730, 1
      %v4733 = vsel %vm3176, %v4728, %v4732
      %v4737 = vrot.slane %v2239, 1
      %v4738 = vrot.slane %v2240, 1
      %v4739 = vsel %vm3417, %v4737, %v4738
      %v4741 = vld [vmem:[#allocation2] sm:$0xff]
      %v4742 = vld [vmem:[#allocation2 + $0x8] sm:$0xff]
      %v4743 = vld [vmem:[#allocation2 + $0x10] sm:$0xff]
      %v4744 = vld [vmem:[#allocation2 + $0x18] sm:$0xff]
      %v4745 = vld [vmem:[#allocation2 + $0x20] sm:$0xff]
      %v4746 = vld [vmem:[#allocation2 + $0x28] sm:$0xff]
      %v4747 = vld [vmem:[#allocation2 + $0x30] sm:$0xff]
      %v4748 = vld [vmem:[#allocation2 + $0x38] sm:$0xff]
      %v4749 = vld [vmem:[#allocation2 + $0x40] sm:$0xff]
      %v4750 = vld [vmem:[#allocation2 + $0x48] sm:$0xff]
      %v4751 = vld [vmem:[#allocation2 + $0x50] sm:$0xff]
      %v4752 = vld [vmem:[#allocation2 + $0x58] sm:$0xff]
      %v4753 = vld [vmem:[#allocation2 + $0x60] sm:$0xff]
      %v4754 = vld [vmem:[#allocation2 + $0x68] sm:$0xff]
      %v4755 = vld [vmem:[#allocation2 + $0x70] sm:$0xff]
      %v4756 = vld [vmem:[#allocation2 + $0x78] sm:$0xff]
      %v4757 = vld [vmem:[#allocation2 + $0x80] sm:$0xff]
      %v4758 = vld [vmem:[#allocation2 + $0x88] sm:$0xff]
      %v4759 = vld [vmem:[#allocation2 + $0x90] sm:$0xff]
      %v4760 = vld [vmem:[#allocation2 + $0x98] sm:$0xff]
      %v4761 = vld [vmem:[#allocation2 + $0xa0] sm:$0xff]
      %v4762 = vld [vmem:[#allocation2 + $0xa8] sm:$0xff]
      %v4763 = vld [vmem:[#allocation2 + $0xb0] sm:$0xff]
      %v4764 = vld [vmem:[#allocation2 + $0xb8] sm:$0xff]
      %v4765 = vld [vmem:[#allocation2 + $0xc0] sm:$0xff]
      %v4766 = vld [vmem:[#allocation2 + $0xc8] sm:$0xff]
      %v4767 = vld [vmem:[#allocation2 + $0xd0] sm:$0xff]
      %v4768 = vld [vmem:[#allocation2 + $0xd8] sm:$0xff]
      %v4769 = vld [vmem:[#allocation2 + $0xe0] sm:$0xff]
      %v4770 = vld [vmem:[#allocation2 + $0xe8] sm:$0xff]
      %v4771 = vld [vmem:[#allocation2 + $0xf0] sm:$0xff]
      %v4772 = vld [vmem:[#allocation2 + $0xf8] sm:$0xff]
      %s4773 = scalar_lea.vmem %s8, 384
      %v4774 = vld [vmem:[%s4773] sm:$0xf]
      %v4775 = vld [vmem:[%s4773 + $0x4] sm:$0xf]
      %v4776 = vld [vmem:[%s4773 + $0x8] sm:$0xf]
      %v4777 = vld [vmem:[%s4773 + $0xc] sm:$0xf]
      %v4778 = vld [vmem:[%s4773 + $0x10] sm:$0xf]
      %v4779 = vld [vmem:[%s4773 + $0x14] sm:$0xf]
      %v4780 = vld [vmem:[%s4773 + $0x18] sm:$0xf]
      %v4781 = vld [vmem:[%s4773 + $0x1c] sm:$0xf]
      %v4782 = vld [vmem:[%s4773 + $0x20] sm:$0xf]
      %v4783 = vld [vmem:[%s4773 + $0x24] sm:$0xf]
      %v4784 = vld [vmem:[%s4773 + $0x28] sm:$0xf]
      %v4785 = vld [vmem:[%s4773 + $0x2c] sm:$0xf]
      %v4786 = vld [vmem:[%s4773 + $0x30] sm:$0xf]
      %v4787 = vld [vmem:[%s4773 + $0x34] sm:$0xf]
      %v4788 = vld [vmem:[%s4773 + $0x38] sm:$0xf]
      %v4789 = vld [vmem:[%s4773 + $0x3c] sm:$0xf]
      %v4790 = vld [vmem:[%s4773 + $0x40] sm:$0xf]
      %v4791 = vld [vmem:[%s4773 + $0x44] sm:$0xf]
      %v4792 = vld [vmem:[%s4773 + $0x48] sm:$0xf]
      %v4793 = vld [vmem:[%s4773 + $0x4c] sm:$0xf]
      %v4794 = vld [vmem:[%s4773 + $0x50] sm:$0xf]
      %v4795 = vld [vmem:[%s4773 + $0x54] sm:$0xf]
      %v4796 = vld [vmem:[%s4773 + $0x58] sm:$0xf]
      %v4797 = vld [vmem:[%s4773 + $0x5c] sm:$0xf]
      %v4798 = vld [vmem:[%s4773 + $0x60] sm:$0xf]
      %v4799 = vld [vmem:[%s4773 + $0x64] sm:$0xf]
      %v4800 = vld [vmem:[%s4773 + $0x68] sm:$0xf]
      %v4801 = vld [vmem:[%s4773 + $0x6c] sm:$0xf]
      %v4802 = vld [vmem:[%s4773 + $0x70] sm:$0xf]
      %v4803 = vld [vmem:[%s4773 + $0x74] sm:$0xf]
      %v4804 = vld [vmem:[%s4773 + $0x78] sm:$0xf]
      %v4805 = vld [vmem:[%s4773 + $0x7c] sm:$0xf]
      %v4806 = vld [vmem:[%s4773 + $0x80] sm:$0xf]
      %v4807 = vld [vmem:[%s4773 + $0x84] sm:$0xf]
      %v4808 = vld [vmem:[%s4773 + $0x88] sm:$0xf]
      %v4809 = vld [vmem:[%s4773 + $0x8c] sm:$0xf]
      %v4810 = vld [vmem:[%s4773 + $0x90] sm:$0xf]
      %v4811 = vld [vmem:[%s4773 + $0x94] sm:$0xf]
      %v4812 = vld [vmem:[%s4773 + $0x98] sm:$0xf]
      %v4813 = vld [vmem:[%s4773 + $0x9c] sm:$0xf]
      %v4814 = vld [vmem:[%s4773 + $0xa0] sm:$0xf]
      %v4815 = vld [vmem:[%s4773 + $0xa4] sm:$0xf]
      %v4816 = vld [vmem:[%s4773 + $0xa8] sm:$0xf]
      %v4817 = vld [vmem:[%s4773 + $0xac] sm:$0xf]
      %v4818 = vld [vmem:[%s4773 + $0xb0] sm:$0xf]
      %v4819 = vld [vmem:[%s4773 + $0xb4] sm:$0xf]
      %v4820 = vld [vmem:[%s4773 + $0xb8] sm:$0xf]
      %v4821 = vld [vmem:[%s4773 + $0xbc] sm:$0xf]
      %v4870 = vunpack.c.l.b16 %v4774
      %v4871 = vunpack.c.l.b16 %v4775
      %v4872 = vunpack.c.l.b16 %v4776
      %v4873 = vunpack.c.l.b16 %v4777
      %v4874 = vunpack.c.l.b16 %v4778
      %v4875 = vunpack.c.l.b16 %v4779
      %v4876 = vunpack.c.l.b16 %v4780
      %v4877 = vunpack.c.l.b16 %v4781
      %v4878 = vunpack.c.l.b16 %v4782
      %v4879 = vunpack.c.l.b16 %v4783
      %v4880 = vunpack.c.l.b16 %v4784
      %v4881 = vunpack.c.l.b16 %v4785
      %v4882 = vunpack.c.l.b16 %v4786
      %v4883 = vunpack.c.l.b16 %v4787
      %v4884 = vunpack.c.l.b16 %v4788
      %v4885 = vunpack.c.l.b16 %v4789
      %v4886 = vunpack.c.l.b16 %v4790
      %v4887 = vunpack.c.l.b16 %v4791
      %v4888 = vunpack.c.l.b16 %v4792
      %v4889 = vunpack.c.l.b16 %v4793
      %v4890 = vunpack.c.l.b16 %v4794
      %v4891 = vunpack.c.l.b16 %v4795
      %v4892 = vunpack.c.l.b16 %v4796
      %v4893 = vunpack.c.l.b16 %v4797
      %v4894 = vunpack.c.l.b16 %v4798
      %v4895 = vunpack.c.l.b16 %v4799
      %v4896 = vunpack.c.l.b16 %v4800
      %v4897 = vunpack.c.l.b16 %v4801
      %v4898 = vunpack.c.l.b16 %v4802
      %v4899 = vunpack.c.l.b16 %v4803
      %v4900 = vunpack.c.l.b16 %v4804
      %v4901 = vunpack.c.l.b16 %v4805
      %v4902 = vunpack.c.l.b16 %v4806
      %v4903 = vunpack.c.l.b16 %v4807
      %v4904 = vunpack.c.l.b16 %v4808
      %v4905 = vunpack.c.l.b16 %v4809
      %v4906 = vunpack.c.l.b16 %v4810
      %v4907 = vunpack.c.l.b16 %v4811
      %v4908 = vunpack.c.l.b16 %v4812
      %v4909 = vunpack.c.l.b16 %v4813
      %v4910 = vunpack.c.l.b16 %v4814
      %v4911 = vunpack.c.l.b16 %v4815
      %v4912 = vunpack.c.l.b16 %v4816
      %v4913 = vunpack.c.l.b16 %v4817
      %v4914 = vunpack.c.l.b16 %v4818
      %v4915 = vunpack.c.l.b16 %v4819
      %v4916 = vunpack.c.l.b16 %v4820
      %v4917 = vunpack.c.l.b16 %v4821
      %v4918 = vpack.c.b16 %v4871, %v4870
      %v4919 = vpack.c.b16 %v4873, %v4872
      %v4920 = vpack.c.b16 %v4875, %v4874
      %v4921 = vpack.c.b16 %v4877, %v4876
      %v4922 = vpack.c.b16 %v4879, %v4878
      %v4923 = vpack.c.b16 %v4881, %v4880
      %v4924 = vpack.c.b16 %v4883, %v4882
      %v4925 = vpack.c.b16 %v4885, %v4884
      %v4926 = vpack.c.b16 %v4887, %v4886
      %v4927 = vpack.c.b16 %v4889, %v4888
      %v4928 = vpack.c.b16 %v4891, %v4890
      %v4929 = vpack.c.b16 %v4893, %v4892
      %v4930 = vpack.c.b16 %v4895, %v4894
      %v4931 = vpack.c.b16 %v4897, %v4896
      %v4932 = vpack.c.b16 %v4899, %v4898
      %v4933 = vpack.c.b16 %v4901, %v4900
      %v4934 = vpack.c.b16 %v4903, %v4902
      %v4935 = vpack.c.b16 %v4905, %v4904
      %v4936 = vpack.c.b16 %v4907, %v4906
      %v4937 = vpack.c.b16 %v4909, %v4908
      %v4938 = vpack.c.b16 %v4911, %v4910
      %v4939 = vpack.c.b16 %v4913, %v4912
      %v4940 = vpack.c.b16 %v4915, %v4914
      %v4941 = vpack.c.b16 %v4917, %v4916
      %4966 = vmatprep.subr.bf16.mxu0 0
      %4967 = vmatpush1.bf16.msra.mxu0 %v4918
      %4968 = vmatprep.subr.bf16.mxu0 0
      %4969 = vmatpush1.bf16.msra.mxu0 %v4919
      %4970 = vmatprep.subr.bf16.mxu0 0
      %4971 = vmatpush1.bf16.msra.mxu0 %v4920
      %4972 = vmatprep.subr.bf16.mxu0 0
      %4973 = vmatpush1.bf16.msra.mxu0 %v4921
      %4974 = vmatprep.subr.bf16.mxu0 0
      %4975 = vmatpush1.bf16.msra.mxu0 %v4922
      %4976 = vmatprep.subr.bf16.mxu0 0
      %4977 = vmatpush1.bf16.msra.mxu0 %v4923
      %4978 = vmatprep.subr.bf16.mxu0 0
      %4979 = vmatpush1.bf16.msra.mxu0 %v4924
      %4980 = vmatprep.subr.bf16.mxu0 0
      %4981 = vmatpush1.bf16.msra.mxu0 %v4925
      %4982 = vmatprep.subr.bf16.mxu0 0
      %4983 = vmatpush1.bf16.msra.mxu0 %v4926
      %4984 = vmatprep.subr.bf16.mxu0 0
      %4985 = vmatpush1.bf16.msra.mxu0 %v4927
      %4986 = vmatprep.subr.bf16.mxu0 0
      %4987 = vmatpush1.bf16.msra.mxu0 %v4928
      %4988 = vmatprep.subr.bf16.mxu0 0
      %4989 = vmatpush1.bf16.msra.mxu0 %v4929
      %4990 = vmatprep.subr.bf16.mxu0 0
      %4991 = vmatpush1.bf16.msra.mxu0 %v4930
      %4992 = vmatprep.subr.bf16.mxu0 0
      %4993 = vmatpush1.bf16.msra.mxu0 %v4931
      %4994 = vmatprep.subr.bf16.mxu0 0
      %4995 = vmatpush1.bf16.msra.mxu0 %v4932
      %4996 = vmatprep.subr.bf16.mxu0 0
      %4997 = vmatpush1.bf16.msra.mxu0 %v4933
      %4998 = vmatprep.mubr.bf16.mxu0 %v3212
      %4999 = vmatmul.mubr.bf16.gmra.mrb[0].mxu0 %v2209
      %v5000 = vpop.f32.mrb[0].mxu0
      %v5001 = vadd.f32 0.0, %v5000
      %v5002 = vpop.f32.mrb[0].mxu0
      %v5003 = vpop.f32.mrb[0].mxu0
      %v5004 = vadd.f32 0.0, %v5003
      %v5005 = vpop.f32.mrb[0].mxu0
      %5006 = vmatprep.mubr.bf16.mxu0 %v3224
      %5007 = vmatmul.mubr.bf16.gmra.mrb[0].mxu0 %v2211
      %v5008 = vpop.f32.mrb[0].mxu0
      %v5009 = vadd.f32 0.0, %v5008
      %v5010 = vpop.f32.mrb[0].mxu0
      %v5011 = vpop.f32.mrb[0].mxu0
      %v5012 = vadd.f32 0.0, %v5011
      %v5013 = vpop.f32.mrb[0].mxu0
      %5014 = vmatprep.mubr.bf16.mxu0 %v3236
      %5015 = vmatmul.mubr.bf16.gmra.mrb[0].mxu0 %v2213
      %v5016 = vpop.f32.mrb[0].mxu0
      %v5017 = vadd.f32 0.0, %v5016
      %v5018 = vpop.f32.mrb[0].mxu0
      %v5019 = vpop.f32.mrb[0].mxu0
      %v5020 = vadd.f32 0.0, %v5019
      %v5021 = vpop.f32.mrb[0].mxu0
      %5022 = vmatprep.mubr.bf16.mxu0 %v3248
      %5023 = vmatmul.mubr.bf16.gmra.mrb[0].mxu0 %v2215
      %v5024 = vpop.f32.mrb[0].mxu0
      %v5025 = vadd.f32 0.0, %v5024
      %v5026 = vpop.f32.mrb[0].mxu0
      %v5027 = vpop.f32.mrb[0].mxu0
      %v5028 = vadd.f32 0.0, %v5027
      %v5029 = vpop.f32.mrb[0].mxu0
      %5030 = vmatprep.mubr.bf16.mxu0 %v3260
      %5031 = vmatmul.mubr.bf16.gmra.mrb[0].mxu0 %v2217
      %v5032 = vpop.f32.mrb[0].mxu0
      %v5033 = vadd.f32 0.0, %v5032
      %v5034 = vpop.f32.mrb[0].mxu0
      %v5035 = vpop.f32.mrb[0].mxu0
      %v5036 = vadd.f32 0.0, %v5035
      %v5037 = vpop.f32.mrb[0].mxu0
      %5038 = vmatprep.mubr.bf16.mxu0 %v3272
      %5039 = vmatmul.mubr.bf16.gmra.mrb[0].mxu0 %v2219
      %v5040 = vpop.f32.mrb[0].mxu0
      %v5041 = vadd.f32 0.0, %v5040
      %v5042 = vpop.f32.mrb[0].mxu0
      %v5043 = vpop.f32.mrb[0].mxu0
      %v5044 = vadd.f32 0.0, %v5043
      %v5045 = vpop.f32.mrb[0].mxu0
      %5046 = vmatprep.mubr.bf16.mxu0 %v3284
      %5047 = vmatmul.mubr.bf16.gmra.mrb[0].mxu0 %v2221
      %v5048 = vpop.f32.mrb[0].mxu0
      %v5049 = vadd.f32 0.0, %v5048
      %v5050 = vpop.f32.mrb[0].mxu0
      %v5051 = vpop.f32.mrb[0].mxu0
      %v5052 = vadd.f32 0.0, %v5051
      %v5053 = vpop.f32.mrb[0].mxu0
      %5054 = vmatprep.mubr.bf16.mxu0 %v3296
      %5055 = vmatmul.mubr.bf16.gmra.mrb[0].mxu0 %v2223
      %v5056 = vpop.f32.mrb[0].mxu0
      %v5057 = vadd.f32 0.0, %v5056
      %v5058 = vpop.f32.mrb[0].mxu0
      %v5059 = vpop.f32.mrb[0].mxu0
      %v5060 = vadd.f32 0.0, %v5059
      %v5061 = vpop.f32.mrb[0].mxu0
      %5062 = vmatprep.mubr.bf16.mxu0 %v3308
      %5063 = vmatmul.mubr.bf16.gmra.mrb[0].mxu0 %v2225
      %v5064 = vpop.f32.mrb[0].mxu0
      %v5065 = vadd.f32 0.0, %v5064
      %v5066 = vpop.f32.mrb[0].mxu0
      %v5067 = vpop.f32.mrb[0].mxu0
      %v5068 = vadd.f32 0.0, %v5067
      %v5069 = vpop.f32.mrb[0].mxu0
      %5070 = vmatprep.mubr.bf16.mxu0 %v3320
      %5071 = vmatmul.mubr.bf16.gmra.mrb[0].mxu0 %v2227
      %v5072 = vpop.f32.mrb[0].mxu0
      %v5073 = vadd.f32 0.0, %v5072
      %v5074 = vpop.f32.mrb[0].mxu0
      %v5075 = vpop.f32.mrb[0].mxu0
      %v5076 = vadd.f32 0.0, %v5075
      %v5077 = vpop.f32.mrb[0].mxu0
      %5078 = vmatprep.mubr.bf16.mxu0 %v3332
      %5079 = vmatmul.mubr.bf16.gmra.mrb[0].mxu0 %v2229
      %v5080 = vpop.f32.mrb[0].mxu0
      %v5081 = vadd.f32 0.0, %v5080
      %v5082 = vpop.f32.mrb[0].mxu0
      %v5083 = vpop.f32.mrb[0].mxu0
      %v5084 = vadd.f32 0.0, %v5083
      %v5085 = vpop.f32.mrb[0].mxu0
      %5086 = vmatprep.mubr.bf16.mxu0 %v3344
      %5087 = vmatmul.mubr.bf16.gmra.mrb[0].mxu0 %v2231
      %v5088 = vpop.f32.mrb[0].mxu0
      %v5089 = vadd.f32 0.0, %v5088
      %v5090 = vpop.f32.mrb[0].mxu0
      %v5091 = vpop.f32.mrb[0].mxu0
      %v5092 = vadd.f32 0.0, %v5091
      %v5093 = vpop.f32.mrb[0].mxu0
      %5094 = vmatprep.mubr.bf16.mxu0 %v3356
      %5095 = vmatmul.mubr.bf16.gmra.mrb[0].mxu0 %v2233
      %v5096 = vpop.f32.mrb[0].mxu0
      %v5097 = vadd.f32 0.0, %v5096
      %v5098 = vpop.f32.mrb[0].mxu0
      %v5099 = vpop.f32.mrb[0].mxu0
      %v5100 = vadd.f32 0.0, %v5099
      %v5101 = vpop.f32.mrb[0].mxu0
      %5102 = vmatprep.mubr.bf16.mxu0 %v3368
      %5103 = vmatmul.mubr.bf16.gmra.mrb[0].mxu0 %v2235
      %v5104 = vpop.f32.mrb[0].mxu0
      %v5105 = vadd.f32 0.0, %v5104
      %v5106 = vpop.f32.mrb[0].mxu0
      %v5107 = vpop.f32.mrb[0].mxu0
      %v5108 = vadd.f32 0.0, %v5107
      %v5109 = vpop.f32.mrb[0].mxu0
      %5110 = vmatprep.mubr.bf16.mxu0 %v4103
      %5111 = vmatmul.mubr.bf16.gmra.mrb[0].mxu0 %v2237
      %v5112 = vpop.f32.mrb[0].mxu0
      %v5113 = vadd.f32 0.0, %v5112
      %v5114 = vpop.f32.mrb[0].mxu0
      %v5115 = vpop.f32.mrb[0].mxu0
      %v5116 = vadd.f32 0.0, %v5115
      %v5117 = vpop.f32.mrb[0].mxu0
      %5118 = vmatprep.mubr.bf16.mxu0 %v4733
      %5119 = vmatmul.mubr.bf16.gmra.mrb[0].mxu0 %v2239
      %v5120 = vpop.f32.mrb[0].mxu0
      %v5121 = vadd.f32 0.0, %v5120
      %v5122 = vpop.f32.mrb[0].mxu0
      %v5123 = vpop.f32.mrb[0].mxu0
      %v5124 = vadd.f32 0.0, %v5123
      %v5125 = vpop.f32.mrb[0].mxu0
      %5126 = vdwg.mxu0
      %5127 = vmatprep.subr.bf16.mxu0 0
      %5128 = vmatpush1.bf16.msra.mxu0 %v4934
      %5129 = vmatprep.subr.bf16.mxu0 0
      %5130 = vmatpush1.bf16.msra.mxu0 %v4935
      %5131 = vmatprep.subr.bf16.mxu0 0
      %5132 = vmatpush1.bf16.msra.mxu0 %v4936
      %5133 = vmatprep.subr.bf16.mxu0 0
      %5134 = vmatpush1.bf16.msra.mxu0 %v4937
      %5135 = vmatprep.subr.bf16.mxu0 0
      %5136 = vmatpush1.bf16.msra.mxu0 %v4938
      %5137 = vmatprep.subr.bf16.mxu0 0
      %5138 = vmatpush1.bf16.msra.mxu0 %v4939
      %5139 = vmatprep.subr.bf16.mxu0 0
      %5140 = vmatpush1.bf16.msra.mxu0 %v4940
      %5141 = vmatprep.subr.bf16.mxu0 0
      %5142 = vmatpush1.bf16.msra.mxu0 %v4941
      %5143 = vmatprep.subr.bf16.mxu0 0
      %5144 = vmatpush1.bf16.msra.mxu0 0
      %5145 = vmatprep.subr.bf16.mxu0 0
      %5146 = vmatpush1.bf16.msra.mxu0 0
      %5147 = vmatprep.subr.bf16.mxu0 0
      %5148 = vmatpush1.bf16.msra.mxu0 0
      %5149 = vmatprep.subr.bf16.mxu0 0
      %5150 = vmatpush1.bf16.msra.mxu0 0
      %5151 = vmatprep.subr.bf16.mxu0 0
      %5152 = vmatpush1.bf16.msra.mxu0 0
      %5153 = vmatprep.subr.bf16.mxu0 0
      %5154 = vmatpush1.bf16.msra.mxu0 0
      %5155 = vmatprep.subr.bf16.mxu0 0
      %5156 = vmatpush1.bf16.msra.mxu0 0
      %5157 = vmatprep.subr.bf16.mxu0 0
      %5158 = vmatpush1.bf16.msra.mxu0 0
      %5159 = vmatprep.mubr.bf16.mxu0 0
      %5160 = vmatmul.mubr.bf16.gmra.mrb[0].mxu0 %v3426
      %v5161 = vpop.f32.mrb[0].mxu0
      %v5162 = vadd.f32 %v5001, %v5161
      %v5163 = vpop.f32.mrb[0].mxu0
      %v5164 = vpop.f32.mrb[0].mxu0
      %v5165 = vadd.f32 %v5004, %v5164
      %v5166 = vpop.f32.mrb[0].mxu0
      %5167 = vmatprep.mubr.bf16.mxu0 0
      %5168 = vmatmul.mubr.bf16.gmra.mrb[0].mxu0 %v3429
      %v5169 = vpop.f32.mrb[0].mxu0
      %v5170 = vadd.f32 %v5009, %v5169
      %v5171 = vpop.f32.mrb[0].mxu0
      %v5172 = vpop.f32.mrb[0].mxu0
      %v5173 = vadd.f32 %v5012, %v5172
      %v5174 = vpop.f32.mrb[0].mxu0
      %5175 = vmatprep.mubr.bf16.mxu0 0
      %5176 = vmatmul.mubr.bf16.gmra.mrb[0].mxu0 %v3432
      %v5177 = vpop.f32.mrb[0].mxu0
      %v5178 = vadd.f32 %v5017, %v5177
      %v5179 = vpop.f32.mrb[0].mxu0
      %v5180 = vpop.f32.mrb[0].mxu0
      %v5181 = vadd.f32 %v5020, %v5180
      %v5182 = vpop.f32.mrb[0].mxu0
      %5183 = vmatprep.mubr.bf16.mxu0 0
      %5184 = vmatmul.mubr.bf16.gmra.mrb[0].mxu0 %v3435
      %v5185 = vpop.f32.mrb[0].mxu0
      %v5186 = vadd.f32 %v5025, %v5185
      %v5187 = vpop.f32.mrb[0].mxu0
      %v5188 = vpop.f32.mrb[0].mxu0
      %v5189 = vadd.f32 %v5028, %v5188
      %v5190 = vpop.f32.mrb[0].mxu0
      %5191 = vmatprep.mubr.bf16.mxu0 0
      %5192 = vmatmul.mubr.bf16.gmra.mrb[0].mxu0 %v3438
      %v5193 = vpop.f32.mrb[0].mxu0
      %v5194 = vadd.f32 %v5033, %v5193
      %v5195 = vpop.f32.mrb[0].mxu0
      %v5196 = vpop.f32.mrb[0].mxu0
      %v5197 = vadd.f32 %v5036, %v5196
      %v5198 = vpop.f32.mrb[0].mxu0
      %5199 = vmatprep.mubr.bf16.mxu0 0
      %5200 = vmatmul.mubr.bf16.gmra.mrb[0].mxu0 %v3441
      %v5201 = vpop.f32.mrb[0].mxu0
      %v5202 = vadd.f32 %v5041, %v5201
      %v5203 = vpop.f32.mrb[0].mxu0
      %v5204 = vpop.f32.mrb[0].mxu0
      %v5205 = vadd.f32 %v5044, %v5204
      %v5206 = vpop.f32.mrb[0].mxu0
      %5207 = vmatprep.mubr.bf16.mxu0 0
      %5208 = vmatmul.mubr.bf16.gmra.mrb[0].mxu0 %v3444
      %v5209 = vpop.f32.mrb[0].mxu0
      %v5210 = vadd.f32 %v5049, %v5209
      %v5211 = vpop.f32.mrb[0].mxu0
      %v5212 = vpop.f32.mrb[0].mxu0
      %v5213 = vadd.f32 %v5052, %v5212
      %v5214 = vpop.f32.mrb[0].mxu0
      %5215 = vmatprep.mubr.bf16.mxu0 0
      %5216 = vmatmul.mubr.bf16.gmra.mrb[0].mxu0 %v3447
      %v5217 = vpop.f32.mrb[0].mxu0
      %v5218 = vadd.f32 %v5057, %v5217
      %v5219 = vpop.f32.mrb[0].mxu0
      %v5220 = vpop.f32.mrb[0].mxu0
      %v5221 = vadd.f32 %v5060, %v5220
      %v5222 = vpop.f32.mrb[0].mxu0
      %5223 = vmatprep.mubr.bf16.mxu0 0
      %5224 = vmatmul.mubr.bf16.gmra.mrb[0].mxu0 %v3450
      %v5225 = vpop.f32.mrb[0].mxu0
      %v5226 = vadd.f32 %v5065, %v5225
      %v5227 = vpop.f32.mrb[0].mxu0
      %v5228 = vpop.f32.mrb[0].mxu0
      %v5229 = vadd.f32 %v5068, %v5228
      %v5230 = vpop.f32.mrb[0].mxu0
      %5231 = vmatprep.mubr.bf16.mxu0 0
      %5232 = vmatmul.mubr.bf16.gmra.mrb[0].mxu0 %v3453
      %v5233 = vpop.f32.mrb[0].mxu0
      %v5234 = vadd.f32 %v5073, %v5233
      %v5235 = vpop.f32.mrb[0].mxu0
      %v5236 = vpop.f32.mrb[0].mxu0
      %v5237 = vadd.f32 %v5076, %v5236
      %v5238 = vpop.f32.mrb[0].mxu0
      %5239 = vmatprep.mubr.bf16.mxu0 0
      %5240 = vmatmul.mubr.bf16.gmra.mrb[0].mxu0 %v3456
      %v5241 = vpop.f32.mrb[0].mxu0
      %v5242 = vadd.f32 %v5081, %v5241
      %v5243 = vpop.f32.mrb[0].mxu0
      %v5244 = vpop.f32.mrb[0].mxu0
      %v5245 = vadd.f32 %v5084, %v5244
      %v5246 = vpop.f32.mrb[0].mxu0
      %5247 = vmatprep.mubr.bf16.mxu0 0
      %5248 = vmatmul.mubr.bf16.gmra.mrb[0].mxu0 %v3459
      %v5249 = vpop.f32.mrb[0].mxu0
      %v5250 = vadd.f32 %v5089, %v5249
      %v5251 = vpop.f32.mrb[0].mxu0
      %v5252 = vpop.f32.mrb[0].mxu0
      %v5253 = vadd.f32 %v5092, %v5252
      %v5254 = vpop.f32.mrb[0].mxu0
      %5255 = vmatprep.mubr.bf16.mxu0 0
      %5256 = vmatmul.mubr.bf16.gmra.mrb[0].mxu0 %v3462
      %v5257 = vpop.f32.mrb[0].mxu0
      %v5258 = vadd.f32 %v5097, %v5257
      %v5259 = vpop.f32.mrb[0].mxu0
      %v5260 = vpop.f32.mrb[0].mxu0
      %v5261 = vadd.f32 %v5100, %v5260
      %v5262 = vpop.f32.mrb[0].mxu0
      %5263 = vmatprep.mubr.bf16.mxu0 0
      %5264 = vmatmul.mubr.bf16.gmra.mrb[0].mxu0 %v3465
      %v5265 = vpop.f32.mrb[0].mxu0
      %v5266 = vadd.f32 %v5105, %v5265
      %v5267 = vpop.f32.mrb[0].mxu0
      %v5268 = vpop.f32.mrb[0].mxu0
      %v5269 = vadd.f32 %v5108, %v5268
      %v5270 = vpop.f32.mrb[0].mxu0
      %5271 = vmatprep.mubr.bf16.mxu0 0
      %5272 = vmatmul.mubr.bf16.gmra.mrb[0].mxu0 %v4109
      %v5273 = vpop.f32.mrb[0].mxu0
      %v5274 = vadd.f32 %v5113, %v5273
      %v5275 = vpop.f32.mrb[0].mxu0
      %v5276 = vpop.f32.mrb[0].mxu0
      %v5277 = vadd.f32 %v5116, %v5276
      %v5278 = vpop.f32.mrb[0].mxu0
      %5279 = vmatprep.mubr.bf16.mxu0 0
      %5280 = vmatmul.mubr.bf16.gmra.mrb[0].mxu0 %v4739
      %v5281 = vpop.f32.mrb[0].mxu0
      %v5282 = vadd.f32 %v5121, %v5281
      %v5283 = vpop.f32.mrb[0].mxu0
      %v5284 = vpop.f32.mrb[0].mxu0
      %v5285 = vadd.f32 %v5124, %v5284
      %v5286 = vpop.f32.mrb[0].mxu0
      %5287 = vdwg.mxu0
      %v5288 = vadd.f32 %v4741, %v5162
      %v5289 = vadd.f32 %v4742, %v5165
      %v5290 = vadd.f32 %v4743, %v5170
      %v5291 = vadd.f32 %v4744, %v5173
      %v5292 = vadd.f32 %v4745, %v5178
      %v5293 = vadd.f32 %v4746, %v5181
      %v5294 = vadd.f32 %v4747, %v5186
      %v5295 = vadd.f32 %v4748, %v5189
      %v5296 = vadd.f32 %v4749, %v5194
      %v5297 = vadd.f32 %v4750, %v5197
      %v5298 = vadd.f32 %v4751, %v5202
      %v5299 = vadd.f32 %v4752, %v5205
      %v5300 = vadd.f32 %v4753, %v5210
      %v5301 = vadd.f32 %v4754, %v5213
      %v5302 = vadd.f32 %v4755, %v5218
      %v5303 = vadd.f32 %v4756, %v5221
      %v5304 = vadd.f32 %v4757, %v5226
      %v5305 = vadd.f32 %v4758, %v5229
      %v5306 = vadd.f32 %v4759, %v5234
      %v5307 = vadd.f32 %v4760, %v5237
      %v5308 = vadd.f32 %v4761, %v5242
      %v5309 = vadd.f32 %v4762, %v5245
      %v5310 = vadd.f32 %v4763, %v5250
      %v5311 = vadd.f32 %v4764, %v5253
      %v5312 = vadd.f32 %v4765, %v5258
      %v5313 = vadd.f32 %v4766, %v5261
      %v5314 = vadd.f32 %v4767, %v5266
      %v5315 = vadd.f32 %v4768, %v5269
      %v5316 = vadd.f32 %v4769, %v5274
      %v5317 = vadd.f32 %v4770, %v5277
      %v5318 = vadd.f32 %v4771, %v5282
      %v5319 = vadd.f32 %v4772, %v5285
      %5320 = vst [vmem:[#allocation2] sm:$0xff] %v5288
      %5321 = vst [vmem:[#allocation2 + $0x8] sm:$0xff] %v5289
      %5322 = vst [vmem:[#allocation2 + $0x10] sm:$0xff] %v5290
      %5323 = vst [vmem:[#allocation2 + $0x18] sm:$0xff] %v5291
      %5324 = vst [vmem:[#allocation2 + $0x20] sm:$0xff] %v5292
      %5325 = vst [vmem:[#allocation2 + $0x28] sm:$0xff] %v5293
      %5326 = vst [vmem:[#allocation2 + $0x30] sm:$0xff] %v5294
      %5327 = vst [vmem:[#allocation2 + $0x38] sm:$0xff] %v5295
      %5328 = vst [vmem:[#allocation2 + $0x40] sm:$0xff] %v5296
      %5329 = vst [vmem:[#allocation2 + $0x48] sm:$0xff] %v5297
      %5330 = vst [vmem:[#allocation2 + $0x50] sm:$0xff] %v5298
      %5331 = vst [vmem:[#allocation2 + $0x58] sm:$0xff] %v5299
      %5332 = vst [vmem:[#allocation2 + $0x60] sm:$0xff] %v5300
      %5333 = vst [vmem:[#allocation2 + $0x68] sm:$0xff] %v5301
      %5334 = vst [vmem:[#allocation2 + $0x70] sm:$0xff] %v5302
      %5335 = vst [vmem:[#allocation2 + $0x78] sm:$0xff] %v5303
      %5336 = vst [vmem:[#allocation2 + $0x80] sm:$0xff] %v5304
      %5337 = vst [vmem:[#allocation2 + $0x88] sm:$0xff] %v5305
      %5338 = vst [vmem:[#allocation2 + $0x90] sm:$0xff] %v5306
      %5339 = vst [vmem:[#allocation2 + $0x98] sm:$0xff] %v5307
      %5340 = vst [vmem:[#allocation2 + $0xa0] sm:$0xff] %v5308
      %5341 = vst [vmem:[#allocation2 + $0xa8] sm:$0xff] %v5309
      %5342 = vst [vmem:[#allocation2 + $0xb0] sm:$0xff] %v5310
      %5343 = vst [vmem:[#allocation2 + $0xb8] sm:$0xff] %v5311
      %5344 = vst [vmem:[#allocation2 + $0xc0] sm:$0xff] %v5312
      %5345 = vst [vmem:[#allocation2 + $0xc8] sm:$0xff] %v5313
      %5346 = vst [vmem:[#allocation2 + $0xd0] sm:$0xff] %v5314
      %5347 = vst [vmem:[#allocation2 + $0xd8] sm:$0xff] %v5315
      %5348 = vst [vmem:[#allocation2 + $0xe0] sm:$0xff] %v5316
      %5349 = vst [vmem:[#allocation2 + $0xe8] sm:$0xff] %v5317
      %5350 = vst [vmem:[#allocation2 + $0xf0] sm:$0xff] %v5318
      %5351 = vst [vmem:[#allocation2 + $0xf8] sm:$0xff] %v5319
      %v5352 = vld [vmem:[#allocation2] sm:$0xff]
      %v5353 = vld [vmem:[#allocation2 + $0x8] sm:$0xff]
      %v5354 = vld [vmem:[#allocation2 + $0x10] sm:$0xff]
      %v5355 = vld [vmem:[#allocation2 + $0x18] sm:$0xff]
      %v5356 = vld [vmem:[#allocation2 + $0x20] sm:$0xff]
      %v5357 = vld [vmem:[#allocation2 + $0x28] sm:$0xff]
      %v5358 = vld [vmem:[#allocation2 + $0x30] sm:$0xff]
      %v5359 = vld [vmem:[#allocation2 + $0x38] sm:$0xff]
      %v5360 = vld [vmem:[#allocation2 + $0x40] sm:$0xff]
      %v5361 = vld [vmem:[#allocation2 + $0x48] sm:$0xff]
      %v5362 = vld [vmem:[#allocation2 + $0x50] sm:$0xff]
      %v5363 = vld [vmem:[#allocation2 + $0x58] sm:$0xff]
      %v5364 = vld [vmem:[#allocation2 + $0x60] sm:$0xff]
      %v5365 = vld [vmem:[#allocation2 + $0x68] sm:$0xff]
      %v5366 = vld [vmem:[#allocation2 + $0x70] sm:$0xff]
      %v5367 = vld [vmem:[#allocation2 + $0x78] sm:$0xff]
      %v5368 = vld [vmem:[#allocation2 + $0x80] sm:$0xff]
      %v5369 = vld [vmem:[#allocation2 + $0x88] sm:$0xff]
      %v5370 = vld [vmem:[#allocation2 + $0x90] sm:$0xff]
      %v5371 = vld [vmem:[#allocation2 + $0x98] sm:$0xff]
      %v5372 = vld [vmem:[#allocation2 + $0xa0] sm:$0xff]
      %v5373 = vld [vmem:[#allocation2 + $0xa8] sm:$0xff]
      %v5374 = vld [vmem:[#allocation2 + $0xb0] sm:$0xff]
      %v5375 = vld [vmem:[#allocation2 + $0xb8] sm:$0xff]
      %v5376 = vld [vmem:[#allocation2 + $0xc0] sm:$0xff]
      %v5377 = vld [vmem:[#allocation2 + $0xc8] sm:$0xff]
      %v5378 = vld [vmem:[#allocation2 + $0xd0] sm:$0xff]
      %v5379 = vld [vmem:[#allocation2 + $0xd8] sm:$0xff]
      %v5380 = vld [vmem:[#allocation2 + $0xe0] sm:$0xff]
      %v5381 = vld [vmem:[#allocation2 + $0xe8] sm:$0xff]
      %v5382 = vld [vmem:[#allocation2 + $0xf0] sm:$0xff]
      %v5383 = vld [vmem:[#allocation2 + $0xf8] sm:$0xff]
      %v5384 = vld [vmem:[%s9] sm:$0x1]
      %v5386 = vlaneseq
      %v5387 = vshrl.u32 %v5386, 7
      %v5388 = vsub.s32 0, %v5387
      %v5389 = vrot.slane %v5384, %v5388
      %v5391 = vmul.f32 %v5352, %v5389
      %v5392 = vmul.f32 %v5353, %v5389
      %v5393 = vmul.f32 %v5354, %v5389
      %v5394 = vmul.f32 %v5355, %v5389
      %v5395 = vmul.f32 %v5356, %v5389
      %v5396 = vmul.f32 %v5357, %v5389
      %v5397 = vmul.f32 %v5358, %v5389
      %v5398 = vmul.f32 %v5359, %v5389
      %v5399 = vmul.f32 %v5360, %v5389
      %v5400 = vmul.f32 %v5361, %v5389
      %v5401 = vmul.f32 %v5362, %v5389
      %v5402 = vmul.f32 %v5363, %v5389
      %v5403 = vmul.f32 %v5364, %v5389
      %v5404 = vmul.f32 %v5365, %v5389
      %v5405 = vmul.f32 %v5366, %v5389
      %v5406 = vmul.f32 %v5367, %v5389
      %v5407 = vmul.f32 %v5368, %v5389
      %v5408 = vmul.f32 %v5369, %v5389
      %v5409 = vmul.f32 %v5370, %v5389
      %v5410 = vmul.f32 %v5371, %v5389
      %v5411 = vmul.f32 %v5372, %v5389
      %v5412 = vmul.f32 %v5373, %v5389
      %v5413 = vmul.f32 %v5374, %v5389
      %v5414 = vmul.f32 %v5375, %v5389
      %v5415 = vmul.f32 %v5376, %v5389
      %v5416 = vmul.f32 %v5377, %v5389
      %v5417 = vmul.f32 %v5378, %v5389
      %v5418 = vmul.f32 %v5379, %v5389
      %v5419 = vmul.f32 %v5380, %v5389
      %v5420 = vmul.f32 %v5381, %v5389
      %v5421 = vmul.f32 %v5382, %v5389
      %v5422 = vmul.f32 %v5383, %v5389
      %v5423 = vld [vmem:[%s10] sm:$0x1]
      %v5425 = vlaneseq
      %v5426 = vshrl.u32 %v5425, 7
      %v5427 = vsub.s32 0, %v5426
      %v5428 = vrot.slane %v5423, %v5427
      %v5430 = vadd.f32 %v5391, %v5428
      %v5431 = vadd.f32 %v5392, %v5428
      %v5432 = vadd.f32 %v5393, %v5428
      %v5433 = vadd.f32 %v5394, %v5428
      %v5434 = vadd.f32 %v5395, %v5428
      %v5435 = vadd.f32 %v5396, %v5428
      %v5436 = vadd.f32 %v5397, %v5428
      %v5437 = vadd.f32 %v5398, %v5428
      %v5438 = vadd.f32 %v5399, %v5428
      %v5439 = vadd.f32 %v5400, %v5428
      %v5440 = vadd.f32 %v5401, %v5428
      %v5441 = vadd.f32 %v5402, %v5428
      %v5442 = vadd.f32 %v5403, %v5428
      %v5443 = vadd.f32 %v5404, %v5428
      %v5444 = vadd.f32 %v5405, %v5428
      %v5445 = vadd.f32 %v5406, %v5428
      %v5446 = vadd.f32 %v5407, %v5428
      %v5447 = vadd.f32 %v5408, %v5428
      %v5448 = vadd.f32 %v5409, %v5428
      %v5449 = vadd.f32 %v5410, %v5428
      %v5450 = vadd.f32 %v5411, %v5428
      %v5451 = vadd.f32 %v5412, %v5428
      %v5452 = vadd.f32 %v5413, %v5428
      %v5453 = vadd.f32 %v5414, %v5428
      %v5454 = vadd.f32 %v5415, %v5428
      %v5455 = vadd.f32 %v5416, %v5428
      %v5456 = vadd.f32 %v5417, %v5428
      %v5457 = vadd.f32 %v5418, %v5428
      %v5458 = vadd.f32 %v5419, %v5428
      %v5459 = vadd.f32 %v5420, %v5428
      %v5460 = vadd.f32 %v5421, %v5428
      %v5461 = vadd.f32 %v5422, %v5428
      %v5462 = vxor.u32 %v5430, 2147483648
      %v5463 = vxor.u32 %v5431, 2147483648
      %v5464 = vxor.u32 %v5432, 2147483648
      %v5465 = vxor.u32 %v5433, 2147483648
      %v5466 = vxor.u32 %v5434, 2147483648
      %v5467 = vxor.u32 %v5435, 2147483648
      %v5468 = vxor.u32 %v5436, 2147483648
      %v5469 = vxor.u32 %v5437, 2147483648
      %v5470 = vxor.u32 %v5438, 2147483648
      %v5471 = vxor.u32 %v5439, 2147483648
      %v5472 = vxor.u32 %v5440, 2147483648
      %v5473 = vxor.u32 %v5441, 2147483648
      %v5474 = vxor.u32 %v5442, 2147483648
      %v5475 = vxor.u32 %v5443, 2147483648
      %v5476 = vxor.u32 %v5444, 2147483648
      %v5477 = vxor.u32 %v5445, 2147483648
      %v5478 = vxor.u32 %v5446, 2147483648
      %v5479 = vxor.u32 %v5447, 2147483648
      %v5480 = vxor.u32 %v5448, 2147483648
      %v5481 = vxor.u32 %v5449, 2147483648
      %v5482 = vxor.u32 %v5450, 2147483648
      %v5483 = vxor.u32 %v5451, 2147483648
      %v5484 = vxor.u32 %v5452, 2147483648
      %v5485 = vxor.u32 %v5453, 2147483648
      %v5486 = vxor.u32 %v5454, 2147483648
      %v5487 = vxor.u32 %v5455, 2147483648
      %v5488 = vxor.u32 %v5456, 2147483648
      %v5489 = vxor.u32 %v5457, 2147483648
      %v5490 = vxor.u32 %v5458, 2147483648
      %v5491 = vxor.u32 %v5459, 2147483648
      %v5492 = vxor.u32 %v5460, 2147483648
      %v5493 = vxor.u32 %v5461, 2147483648
      %v5494 = vmul.f32 %v5462, 1.442695
      %v5495 = vpow.pop %v5494
      %v5496 = vmul.f32 %v5463, 1.442695
      %v5497 = vpow.pop %v5496
      %v5498 = vmul.f32 %v5464, 1.442695
      %v5499 = vpow.pop %v5498
      %v5500 = vmul.f32 %v5465, 1.442695
      %v5501 = vpow.pop %v5500
      %v5502 = vmul.f32 %v5466, 1.442695
      %v5503 = vpow.pop %v5502
      %v5504 = vmul.f32 %v5467, 1.442695
      %v5505 = vpow.pop %v5504
      %v5506 = vmul.f32 %v5468, 1.442695
      %v5507 = vpow.pop %v5506
      %v5508 = vmul.f32 %v5469, 1.442695
      %v5509 = vpow.pop %v5508
      %v5510 = vmul.f32 %v5470, 1.442695
      %v5511 = vpow.pop %v5510
      %v5512 = vmul.f32 %v5471, 1.442695
      %v5513 = vpow.pop %v5512
      %v5514 = vmul.f32 %v5472, 1.442695
      %v5515 = vpow.pop %v5514
      %v5516 = vmul.f32 %v5473, 1.442695
      %v5517 = vpow.pop %v5516
      %v5518 = vmul.f32 %v5474, 1.442695
      %v5519 = vpow.pop %v5518
      %v5520 = vmul.f32 %v5475, 1.442695
      %v5521 = vpow.pop %v5520
      %v5522 = vmul.f32 %v5476, 1.442695
      %v5523 = vpow.pop %v5522
      %v5524 = vmul.f32 %v5477, 1.442695
      %v5525 = vpow.pop %v5524
      %v5526 = vmul.f32 %v5478, 1.442695
      %v5527 = vpow.pop %v5526
      %v5528 = vmul.f32 %v5479, 1.442695
      %v5529 = vpow.pop %v5528
      %v5530 = vmul.f32 %v5480, 1.442695
      %v5531 = vpow.pop %v5530
      %v5532 = vmul.f32 %v5481, 1.442695
      %v5533 = vpow.pop %v5532
      %v5534 = vmul.f32 %v5482, 1.442695
      %v5535 = vpow.pop %v5534
      %v5536 = vmul.f32 %v5483, 1.442695
      %v5537 = vpow.pop %v5536
      %v5538 = vmul.f32 %v5484, 1.442695
      %v5539 = vpow.pop %v5538
      %v5540 = vmul.f32 %v5485, 1.442695
      %v5541 = vpow.pop %v5540
      %v5542 = vmul.f32 %v5486, 1.442695
      %v5543 = vpow.pop %v5542
      %v5544 = vmul.f32 %v5487, 1.442695
      %v5545 = vpow.pop %v5544
      %v5546 = vmul.f32 %v5488, 1.442695
      %v5547 = vpow.pop %v5546
      %v5548 = vmul.f32 %v5489, 1.442695
      %v5549 = vpow.pop %v5548
      %v5550 = vmul.f32 %v5490, 1.442695
      %v5551 = vpow.pop %v5550
      %v5552 = vmul.f32 %v5491, 1.442695
      %v5553 = vpow.pop %v5552
      %v5554 = vmul.f32 %v5492, 1.442695
      %v5555 = vpow.pop %v5554
      %v5556 = vmul.f32 %v5493, 1.442695
      %v5557 = vpow.pop %v5556
      %v5558 = vadd.f32 %v5495, 1.0
      %v5559 = vadd.f32 %v5497, 1.0
      %v5560 = vadd.f32 %v5499, 1.0
      %v5561 = vadd.f32 %v5501, 1.0
      %v5562 = vadd.f32 %v5503, 1.0
      %v5563 = vadd.f32 %v5505, 1.0
      %v5564 = vadd.f32 %v5507, 1.0
      %v5565 = vadd.f32 %v5509, 1.0
      %v5566 = vadd.f32 %v5511, 1.0
      %v5567 = vadd.f32 %v5513, 1.0
      %v5568 = vadd.f32 %v5515, 1.0
      %v5569 = vadd.f32 %v5517, 1.0
      %v5570 = vadd.f32 %v5519, 1.0
      %v5571 = vadd.f32 %v5521, 1.0
      %v5572 = vadd.f32 %v5523, 1.0
      %v5573 = vadd.f32 %v5525, 1.0
      %v5574 = vadd.f32 %v5527, 1.0
      %v5575 = vadd.f32 %v5529, 1.0
      %v5576 = vadd.f32 %v5531, 1.0
      %v5577 = vadd.f32 %v5533, 1.0
      %v5578 = vadd.f32 %v5535, 1.0
      %v5579 = vadd.f32 %v5537, 1.0
      %v5580 = vadd.f32 %v5539, 1.0
      %v5581 = vadd.f32 %v5541, 1.0
      %v5582 = vadd.f32 %v5543, 1.0
      %v5583 = vadd.f32 %v5545, 1.0
      %v5584 = vadd.f32 %v5547, 1.0
      %v5585 = vadd.f32 %v5549, 1.0
      %v5586 = vadd.f32 %v5551, 1.0
      %v5587 = vadd.f32 %v5553, 1.0
      %v5588 = vadd.f32 %v5555, 1.0
      %v5589 = vadd.f32 %v5557, 1.0
      %v5590 = vrcp.pop %v5558
      %v5591 = vmul.f32 1.0, %v5590
      %v5592 = vrcp.pop %v5559
      %v5593 = vmul.f32 1.0, %v5592
      %v5594 = vrcp.pop %v5560
      %v5595 = vmul.f32 1.0, %v5594
      %v5596 = vrcp.pop %v5561
      %v5597 = vmul.f32 1.0, %v5596
      %v5598 = vrcp.pop %v5562
      %v5599 = vmul.f32 1.0, %v5598
      %v5600 = vrcp.pop %v5563
      %v5601 = vmul.f32 1.0, %v5600
      %v5602 = vrcp.pop %v5564
      %v5603 = vmul.f32 1.0, %v5602
      %v5604 = vrcp.pop %v5565
      %v5605 = vmul.f32 1.0, %v5604
      %v5606 = vrcp.pop %v5566
      %v5607 = vmul.f32 1.0, %v5606
      %v5608 = vrcp.pop %v5567
      %v5609 = vmul.f32 1.0, %v5608
      %v5610 = vrcp.pop %v5568
      %v5611 = vmul.f32 1.0, %v5610
      %v5612 = vrcp.pop %v5569
      %v5613 = vmul.f32 1.0, %v5612
      %v5614 = vrcp.pop %v5570
      %v5615 = vmul.f32 1.0, %v5614
      %v5616 = vrcp.pop %v5571
      %v5617 = vmul.f32 1.0, %v5616
      %v5618 = vrcp.pop %v5572
      %v5619 = vmul.f32 1.0, %v5618
      %v5620 = vrcp.pop %v5573
      %v5621 = vmul.f32 1.0, %v5620
      %v5622 = vrcp.pop %v5574
      %v5623 = vmul.f32 1.0, %v5622
      %v5624 = vrcp.pop %v5575
      %v5625 = vmul.f32 1.0, %v5624
      %v5626 = vrcp.pop %v5576
      %v5627 = vmul.f32 1.0, %v5626
      %v5628 = vrcp.pop %v5577
      %v5629 = vmul.f32 1.0, %v5628
      %v5630 = vrcp.pop %v5578
      %v5631 = vmul.f32 1.0, %v5630
      %v5632 = vrcp.pop %v5579
      %v5633 = vmul.f32 1.0, %v5632
      %v5634 = vrcp.pop %v5580
      %v5635 = vmul.f32 1.0, %v5634
      %v5636 = vrcp.pop %v5581
      %v5637 = vmul.f32 1.0, %v5636
      %v5638 = vrcp.pop %v5582
      %v5639 = vmul.f32 1.0, %v5638
      %v5640 = vrcp.pop %v5583
      %v5641 = vmul.f32 1.0, %v5640
      %v5642 = vrcp.pop %v5584
      %v5643 = vmul.f32 1.0, %v5642
      %v5644 = vrcp.pop %v5585
      %v5645 = vmul.f32 1.0, %v5644
      %v5646 = vrcp.pop %v5586
      %v5647 = vmul.f32 1.0, %v5646
      %v5648 = vrcp.pop %v5587
      %v5649 = vmul.f32 1.0, %v5648
      %v5650 = vrcp.pop %v5588
      %v5651 = vmul.f32 1.0, %v5650
      %v5652 = vrcp.pop %v5589
      %v5653 = vmul.f32 1.0, %v5652
      %v5654 = vmul.f32 %v5430, %v5591
      %v5655 = vmul.f32 %v5431, %v5593
      %v5656 = vmul.f32 %v5432, %v5595
      %v5657 = vmul.f32 %v5433, %v5597
      %v5658 = vmul.f32 %v5434, %v5599
      %v5659 = vmul.f32 %v5435, %v5601
      %v5660 = vmul.f32 %v5436, %v5603
      %v5661 = vmul.f32 %v5437, %v5605
      %v5662 = vmul.f32 %v5438, %v5607
      %v5663 = vmul.f32 %v5439, %v5609
      %v5664 = vmul.f32 %v5440, %v5611
      %v5665 = vmul.f32 %v5441, %v5613
      %v5666 = vmul.f32 %v5442, %v5615
      %v5667 = vmul.f32 %v5443, %v5617
      %v5668 = vmul.f32 %v5444, %v5619
      %v5669 = vmul.f32 %v5445, %v5621
      %v5670 = vmul.f32 %v5446, %v5623
      %v5671 = vmul.f32 %v5447, %v5625
      %v5672 = vmul.f32 %v5448, %v5627
      %v5673 = vmul.f32 %v5449, %v5629
      %v5674 = vmul.f32 %v5450, %v5631
      %v5675 = vmul.f32 %v5451, %v5633
      %v5676 = vmul.f32 %v5452, %v5635
      %v5677 = vmul.f32 %v5453, %v5637
      %v5678 = vmul.f32 %v5454, %v5639
      %v5679 = vmul.f32 %v5455, %v5641
      %v5680 = vmul.f32 %v5456, %v5643
      %v5681 = vmul.f32 %v5457, %v5645
      %v5682 = vmul.f32 %v5458, %v5647
      %v5683 = vmul.f32 %v5459, %v5649
      %v5684 = vmul.f32 %v5460, %v5651
      %v5685 = vmul.f32 %v5461, %v5653
      %v5686 = vpack.c.bf16 %v5655, %v5654
      %v5687 = vpack.c.bf16 %v5657, %v5656
      %v5688 = vpack.c.bf16 %v5659, %v5658
      %v5689 = vpack.c.bf16 %v5661, %v5660
      %v5690 = vpack.c.bf16 %v5663, %v5662
      %v5691 = vpack.c.bf16 %v5665, %v5664
      %v5692 = vpack.c.bf16 %v5667, %v5666
      %v5693 = vpack.c.bf16 %v5669, %v5668
      %v5694 = vpack.c.bf16 %v5671, %v5670
      %v5695 = vpack.c.bf16 %v5673, %v5672
      %v5696 = vpack.c.bf16 %v5675, %v5674
      %v5697 = vpack.c.bf16 %v5677, %v5676
      %v5698 = vpack.c.bf16 %v5679, %v5678
      %v5699 = vpack.c.bf16 %v5681, %v5680
      %v5700 = vpack.c.bf16 %v5683, %v5682
      %v5701 = vpack.c.bf16 %v5685, %v5684
      %v5702 = vld [vmem:[%s19] sm:$0xf]
      %v5703 = vld [vmem:[%s19 + $0x4] sm:$0xf]
      %v5704 = vld [vmem:[%s19 + $0x8] sm:$0xf]
      %v5705 = vld [vmem:[%s19 + $0xc] sm:$0xf]
      %v5706 = vld [vmem:[%s19 + $0x10] sm:$0xf]
      %v5707 = vld [vmem:[%s19 + $0x14] sm:$0xf]
      %v5708 = vld [vmem:[%s19 + $0x18] sm:$0xf]
      %v5709 = vld [vmem:[%s19 + $0x1c] sm:$0xf]
      %v5710 = vld [vmem:[%s19 + $0x20] sm:$0xf]
      %v5711 = vld [vmem:[%s19 + $0x24] sm:$0xf]
      %v5712 = vld [vmem:[%s19 + $0x28] sm:$0xf]
      %v5713 = vld [vmem:[%s19 + $0x2c] sm:$0xf]
      %v5714 = vld [vmem:[%s19 + $0x30] sm:$0xf]
      %v5715 = vld [vmem:[%s19 + $0x34] sm:$0xf]
      %v5716 = vld [vmem:[%s19 + $0x38] sm:$0xf]
      %v5717 = vld [vmem:[%s19 + $0x3c] sm:$0xf]
      %v5718 = vld [vmem:[%s20] sm:$0x1]
      %v5720 = vlaneseq
      %v5721 = vshrl.u32 %v5720, 7
      %v5722 = vsub.s32 0, %v5721
      %v5723 = vrot.slane %v5718, %v5722
      %v5741 = vunpack.c.l.b16 %v5702
      %v5742 = vunpack.c.l.b16 %v5703
      %v5743 = vunpack.c.l.b16 %v5704
      %v5744 = vunpack.c.l.b16 %v5705
      %v5745 = vunpack.c.l.b16 %v5706
      %v5746 = vunpack.c.l.b16 %v5707
      %v5747 = vunpack.c.l.b16 %v5708
      %v5748 = vunpack.c.l.b16 %v5709
      %v5749 = vunpack.c.l.b16 %v5710
      %v5750 = vunpack.c.l.b16 %v5711
      %v5751 = vunpack.c.l.b16 %v5712
      %v5752 = vunpack.c.l.b16 %v5713
      %v5753 = vunpack.c.l.b16 %v5714
      %v5754 = vunpack.c.l.b16 %v5715
      %v5755 = vunpack.c.l.b16 %v5716
      %v5756 = vunpack.c.l.b16 %v5717
      %v5757 = vpack.c.b16 %v5742, %v5741
      %v5758 = vpack.c.b16 %v5744, %v5743
      %v5759 = vpack.c.b16 %v5746, %v5745
      %v5760 = vpack.c.b16 %v5748, %v5747
      %v5761 = vpack.c.b16 %v5750, %v5749
      %v5762 = vpack.c.b16 %v5752, %v5751
      %v5763 = vpack.c.b16 %v5754, %v5753
      %v5764 = vpack.c.b16 %v5756, %v5755
      %5773 = vmatprep.subr.bf16.mxu0 0
      %5774 = vmatpush1.bf16.msra.mxu0 %v5757
      %5775 = vmatprep.subr.bf16.mxu0 0
      %5776 = vmatpush1.bf16.msra.mxu0 %v5758
      %5777 = vmatprep.subr.bf16.mxu0 0
      %5778 = vmatpush1.bf16.msra.mxu0 %v5759
      %5779 = vmatprep.subr.bf16.mxu0 0
      %5780 = vmatpush1.bf16.msra.mxu0 %v5760
      %5781 = vmatprep.subr.bf16.mxu0 0
      %5782 = vmatpush1.bf16.msra.mxu0 %v5761
      %5783 = vmatprep.subr.bf16.mxu0 0
      %5784 = vmatpush1.bf16.msra.mxu0 %v5762
      %5785 = vmatprep.subr.bf16.mxu0 0
      %5786 = vmatpush1.bf16.msra.mxu0 %v5763
      %5787 = vmatprep.subr.bf16.mxu0 0
      %5788 = vmatpush1.bf16.msra.mxu0 %v5764
      %5789 = vmatprep.subr.bf16.mxu0 0
      %5790 = vmatpush1.bf16.msra.mxu0 0
      %5791 = vmatprep.subr.bf16.mxu0 0
      %5792 = vmatpush1.bf16.msra.mxu0 0
      %5793 = vmatprep.subr.bf16.mxu0 0
      %5794 = vmatpush1.bf16.msra.mxu0 0
      %5795 = vmatprep.subr.bf16.mxu0 0
      %5796 = vmatpush1.bf16.msra.mxu0 0
      %5797 = vmatprep.subr.bf16.mxu0 0
      %5798 = vmatpush1.bf16.msra.mxu0 0
      %5799 = vmatprep.subr.bf16.mxu0 0
      %5800 = vmatpush1.bf16.msra.mxu0 0
      %5801 = vmatprep.subr.bf16.mxu0 0
      %5802 = vmatpush1.bf16.msra.mxu0 0
      %5803 = vmatprep.subr.bf16.mxu0 0
      %5804 = vmatpush1.bf16.msra.mxu0 0
      %5805 = vmatprep.mubr.bf16.mxu0 0
      %5806 = vmatmul.mubr.bf16.gmra.mrb[0].mxu0 %v5686
      %v5807 = vpop.f32.mrb[0].mxu0
      %v5808 = vadd.f32 %v5723, %v5807
      %v5809 = vpop.f32.mrb[0].mxu0
      %v5810 = vpop.f32.mrb[0].mxu0
      %v5811 = vadd.f32 %v5723, %v5810
      %v5812 = vpop.f32.mrb[0].mxu0
      %5813 = vmatprep.mubr.bf16.mxu0 0
      %5814 = vmatmul.mubr.bf16.gmra.mrb[0].mxu0 %v5687
      %v5815 = vpop.f32.mrb[0].mxu0
      %v5816 = vadd.f32 %v5723, %v5815
      %v5817 = vpop.f32.mrb[0].mxu0
      %v5818 = vpop.f32.mrb[0].mxu0
      %v5819 = vadd.f32 %v5723, %v5818
      %v5820 = vpop.f32.mrb[0].mxu0
      %5821 = vmatprep.mubr.bf16.mxu0 0
      %5822 = vmatmul.mubr.bf16.gmra.mrb[0].mxu0 %v5688
      %v5823 = vpop.f32.mrb[0].mxu0
      %v5824 = vadd.f32 %v5723, %v5823
      %v5825 = vpop.f32.mrb[0].mxu0
      %v5826 = vpop.f32.mrb[0].mxu0
      %v5827 = vadd.f32 %v5723, %v5826
      %v5828 = vpop.f32.mrb[0].mxu0
      %5829 = vmatprep.mubr.bf16.mxu0 0
      %5830 = vmatmul.mubr.bf16.gmra.mrb[0].mxu0 %v5689
      %v5831 = vpop.f32.mrb[0].mxu0
      %v5832 = vadd.f32 %v5723, %v5831
      %v5833 = vpop.f32.mrb[0].mxu0
      %v5834 = vpop.f32.mrb[0].mxu0
      %v5835 = vadd.f32 %v5723, %v5834
      %v5836 = vpop.f32.mrb[0].mxu0
      %5837 = vmatprep.mubr.bf16.mxu0 0
      %5838 = vmatmul.mubr.bf16.gmra.mrb[0].mxu0 %v5690
      %v5839 = vpop.f32.mrb[0].mxu0
      %v5840 = vadd.f32 %v5723, %v5839
      %v5841 = vpop.f32.mrb[0].mxu0
      %v5842 = vpop.f32.mrb[0].mxu0
      %v5843 = vadd.f32 %v5723, %v5842
      %v5844 = vpop.f32.mrb[0].mxu0
      %5845 = vmatprep.mubr.bf16.mxu0 0
      %5846 = vmatmul.mubr.bf16.gmra.mrb[0].mxu0 %v5691
      %v5847 = vpop.f32.mrb[0].mxu0
      %v5848 = vadd.f32 %v5723, %v5847
      %v5849 = vpop.f32.mrb[0].mxu0
      %v5850 = vpop.f32.mrb[0].mxu0
      %v5851 = vadd.f32 %v5723, %v5850
      %v5852 = vpop.f32.mrb[0].mxu0
      %5853 = vmatprep.mubr.bf16.mxu0 0
      %5854 = vmatmul.mubr.bf16.gmra.mrb[0].mxu0 %v5692
      %v5855 = vpop.f32.mrb[0].mxu0
      %v5856 = vadd.f32 %v5723, %v5855
      %v5857 = vpop.f32.mrb[0].mxu0
      %v5858 = vpop.f32.mrb[0].mxu0
      %v5859 = vadd.f32 %v5723, %v5858
      %v5860 = vpop.f32.mrb[0].mxu0
      %5861 = vmatprep.mubr.bf16.mxu0 0
      %5862 = vmatmul.mubr.bf16.gmra.mrb[0].mxu0 %v5693
      %v5863 = vpop.f32.mrb[0].mxu0
      %v5864 = vadd.f32 %v5723, %v5863
      %v5865 = vpop.f32.mrb[0].mxu0
      %v5866 = vpop.f32.mrb[0].mxu0
      %v5867 = vadd.f32 %v5723, %v5866
      %v5868 = vpop.f32.mrb[0].mxu0
      %5869 = vmatprep.mubr.bf16.mxu0 0
      %5870 = vmatmul.mubr.bf16.gmra.mrb[0].mxu0 %v5694
      %v5871 = vpop.f32.mrb[0].mxu0
      %v5872 = vadd.f32 %v5723, %v5871
      %v5873 = vpop.f32.mrb[0].mxu0
      %v5874 = vpop.f32.mrb[0].mxu0
      %v5875 = vadd.f32 %v5723, %v5874
      %v5876 = vpop.f32.mrb[0].mxu0
      %5877 = vmatprep.mubr.bf16.mxu0 0
      %5878 = vmatmul.mubr.bf16.gmra.mrb[0].mxu0 %v5695
      %v5879 = vpop.f32.mrb[0].mxu0
      %v5880 = vadd.f32 %v5723, %v5879
      %v5881 = vpop.f32.mrb[0].mxu0
      %v5882 = vpop.f32.mrb[0].mxu0
      %v5883 = vadd.f32 %v5723, %v5882
      %v5884 = vpop.f32.mrb[0].mxu0
      %5885 = vmatprep.mubr.bf16.mxu0 0
      %5886 = vmatmul.mubr.bf16.gmra.mrb[0].mxu0 %v5696
      %v5887 = vpop.f32.mrb[0].mxu0
      %v5888 = vadd.f32 %v5723, %v5887
      %v5889 = vpop.f32.mrb[0].mxu0
      %v5890 = vpop.f32.mrb[0].mxu0
      %v5891 = vadd.f32 %v5723, %v5890
      %v5892 = vpop.f32.mrb[0].mxu0
      %5893 = vmatprep.mubr.bf16.mxu0 0
      %5894 = vmatmul.mubr.bf16.gmra.mrb[0].mxu0 %v5697
      %v5895 = vpop.f32.mrb[0].mxu0
      %v5896 = vadd.f32 %v5723, %v5895
      %v5897 = vpop.f32.mrb[0].mxu0
      %v5898 = vpop.f32.mrb[0].mxu0
      %v5899 = vadd.f32 %v5723, %v5898
      %v5900 = vpop.f32.mrb[0].mxu0
      %5901 = vmatprep.mubr.bf16.mxu0 0
      %5902 = vmatmul.mubr.bf16.gmra.mrb[0].mxu0 %v5698
      %v5903 = vpop.f32.mrb[0].mxu0
      %v5904 = vadd.f32 %v5723, %v5903
      %v5905 = vpop.f32.mrb[0].mxu0
      %v5906 = vpop.f32.mrb[0].mxu0
      %v5907 = vadd.f32 %v5723, %v5906
      %v5908 = vpop.f32.mrb[0].mxu0
      %5909 = vmatprep.mubr.bf16.mxu0 0
      %5910 = vmatmul.mubr.bf16.gmra.mrb[0].mxu0 %v5699
      %v5911 = vpop.f32.mrb[0].mxu0
      %v5912 = vadd.f32 %v5723, %v5911
      %v5913 = vpop.f32.mrb[0].mxu0
      %v5914 = vpop.f32.mrb[0].mxu0
      %v5915 = vadd.f32 %v5723, %v5914
      %v5916 = vpop.f32.mrb[0].mxu0
      %5917 = vmatprep.mubr.bf16.mxu0 0
      %5918 = vmatmul.mubr.bf16.gmra.mrb[0].mxu0 %v5700
      %v5919 = vpop.f32.mrb[0].mxu0
      %v5920 = vadd.f32 %v5723, %v5919
      %v5921 = vpop.f32.mrb[0].mxu0
      %v5922 = vpop.f32.mrb[0].mxu0
      %v5923 = vadd.f32 %v5723, %v5922
      %v5924 = vpop.f32.mrb[0].mxu0
      %5925 = vmatprep.mubr.bf16.mxu0 0
      %5926 = vmatmul.mubr.bf16.gmra.mrb[0].mxu0 %v5701
      %v5927 = vpop.f32.mrb[0].mxu0
      %v5928 = vadd.f32 %v5723, %v5927
      %v5929 = vpop.f32.mrb[0].mxu0
      %v5930 = vpop.f32.mrb[0].mxu0
      %v5931 = vadd.f32 %v5723, %v5930
      %v5932 = vpop.f32.mrb[0].mxu0
      %5933 = vdwg.mxu0
      %5934 = vst [vmem:[%s778] sm:$0xff] %v5808
      %5935 = vst [vmem:[%s778 + $0x8] sm:$0xff] %v5811
      %5936 = vst [vmem:[%s778 + $0x10] sm:$0xff] %v5816
      %5937 = vst [vmem:[%s778 + $0x18] sm:$0xff] %v5819
      %5938 = vst [vmem:[%s778 + $0x20] sm:$0xff] %v5824
      %5939 = vst [vmem:[%s778 + $0x28] sm:$0xff] %v5827
      %5940 = vst [vmem:[%s778 + $0x30] sm:$0xff] %v5832
      %5941 = vst [vmem:[%s778 + $0x38] sm:$0xff] %v5835
      %5942 = vst [vmem:[%s778 + $0x40] sm:$0xff] %v5840
      %5943 = vst [vmem:[%s778 + $0x48] sm:$0xff] %v5843
      %5944 = vst [vmem:[%s778 + $0x50] sm:$0xff] %v5848
      %5945 = vst [vmem:[%s778 + $0x58] sm:$0xff] %v5851
      %5946 = vst [vmem:[%s778 + $0x60] sm:$0xff] %v5856
      %5947 = vst [vmem:[%s778 + $0x68] sm:$0xff] %v5859
      %5948 = vst [vmem:[%s778 + $0x70] sm:$0xff] %v5864
      %5949 = vst [vmem:[%s778 + $0x78] sm:$0xff] %v5867
      %5950 = vst [vmem:[%s778 + $0x80] sm:$0xff] %v5872
      %5951 = vst [vmem:[%s778 + $0x88] sm:$0xff] %v5875
      %5952 = vst [vmem:[%s778 + $0x90] sm:$0xff] %v5880
      %5953 = vst [vmem:[%s778 + $0x98] sm:$0xff] %v5883
      %5954 = vst [vmem:[%s778 + $0xa0] sm:$0xff] %v5888
      %5955 = vst [vmem:[%s778 + $0xa8] sm:$0xff] %v5891
      %5956 = vst [vmem:[%s778 + $0xb0] sm:$0xff] %v5896
      %5957 = vst [vmem:[%s778 + $0xb8] sm:$0xff] %v5899
      %5958 = vst [vmem:[%s778 + $0xc0] sm:$0xff] %v5904
      %5959 = vst [vmem:[%s778 + $0xc8] sm:$0xff] %v5907
      %5960 = vst [vmem:[%s778 + $0xd0] sm:$0xff] %v5912
      %5961 = vst [vmem:[%s778 + $0xd8] sm:$0xff] %v5915
      %5962 = vst [vmem:[%s778 + $0xe0] sm:$0xff] %v5920
      %5963 = vst [vmem:[%s778 + $0xe8] sm:$0xff] %v5923
      %5964 = vst [vmem:[%s778 + $0xf0] sm:$0xff] %v5928
      %5965 = vst [vmem:[%s778 + $0xf8] sm:$0xff] %v5931
      %5966 = vst [vmem:[#allocation2] sm:$0xff] 0.0
      %5967 = vst [vmem:[#allocation2 + $0x8] sm:$0xff] 0.0
      %5968 = vst [vmem:[#allocation2 + $0x10] sm:$0xff] 0.0
      %5969 = vst [vmem:[#allocation2 + $0x18] sm:$0xff] 0.0
      %5970 = vst [vmem:[#allocation2 + $0x20] sm:$0xff] 0.0
      %5971 = vst [vmem:[#allocation2 + $0x28] sm:$0xff] 0.0
      %5972 = vst [vmem:[#allocation2 + $0x30] sm:$0xff] 0.0
      %5973 = vst [vmem:[#allocation2 + $0x38] sm:$0xff] 0.0
      %5974 = vst [vmem:[#allocation2 + $0x40] sm:$0xff] 0.0
      %5975 = vst [vmem:[#allocation2 + $0x48] sm:$0xff] 0.0
      %5976 = vst [vmem:[#allocation2 + $0x50] sm:$0xff] 0.0
      %5977 = vst [vmem:[#allocation2 + $0x58] sm:$0xff] 0.0
      %5978 = vst [vmem:[#allocation2 + $0x60] sm:$0xff] 0.0
      %5979 = vst [vmem:[#allocation2 + $0x68] sm:$0xff] 0.0
      %5980 = vst [vmem:[#allocation2 + $0x70] sm:$0xff] 0.0
      %5981 = vst [vmem:[#allocation2 + $0x78] sm:$0xff] 0.0
      %5982 = vst [vmem:[#allocation2 + $0x80] sm:$0xff] 0.0
      %5983 = vst [vmem:[#allocation2 + $0x88] sm:$0xff] 0.0
      %5984 = vst [vmem:[#allocation2 + $0x90] sm:$0xff] 0.0
      %5985 = vst [vmem:[#allocation2 + $0x98] sm:$0xff] 0.0
      %5986 = vst [vmem:[#allocation2 + $0xa0] sm:$0xff] 0.0
      %5987 = vst [vmem:[#allocation2 + $0xa8] sm:$0xff] 0.0
      %5988 = vst [vmem:[#allocation2 + $0xb0] sm:$0xff] 0.0
      %5989 = vst [vmem:[#allocation2 + $0xb8] sm:$0xff] 0.0
      %5990 = vst [vmem:[#allocation2 + $0xc0] sm:$0xff] 0.0
      %5991 = vst [vmem:[#allocation2 + $0xc8] sm:$0xff] 0.0
      %5992 = vst [vmem:[#allocation2 + $0xd0] sm:$0xff] 0.0
      %5993 = vst [vmem:[#allocation2 + $0xd8] sm:$0xff] 0.0
      %5994 = vst [vmem:[#allocation2 + $0xe0] sm:$0xff] 0.0
      %5995 = vst [vmem:[#allocation2 + $0xe8] sm:$0xff] 0.0
      %5996 = vst [vmem:[#allocation2 + $0xf0] sm:$0xff] 0.0
      %5997 = vst [vmem:[#allocation2 + $0xf8] sm:$0xff] 0.0
      %v5999 = vshrl.u32 %v3108, 16
      %v6001 = vshll.u32 %v3108, 16
      %v6003 = vrot.slane %v6001, 1
      %v6004 = vor.u32 %v5999, %v6003
      %v6006 = vshll.u32 %v3109, 16
      %v6008 = vrot.slane %v6006, 1
      %v6009 = vsel %vm3176, %v6004, %v6008
      %v6011 = vshrl.u32 %v3110, 16
      %v6013 = vshll.u32 %v3110, 16
      %v6015 = vrot.slane %v6013, 1
      %v6016 = vor.u32 %v6011, %v6015
      %v6018 = vshll.u32 %v3111, 16
      %v6020 = vrot.slane %v6018, 1
      %v6021 = vsel %vm3176, %v6016, %v6020
      %v6023 = vshrl.u32 %v3112, 16
      %v6025 = vshll.u32 %v3112, 16
      %v6027 = vrot.slane %v6025, 1
      %v6028 = vor.u32 %v6023, %v6027
      %v6030 = vshll.u32 %v3113, 16
      %v6032 = vrot.slane %v6030, 1
      %v6033 = vsel %vm3176, %v6028, %v6032
      %v6035 = vshrl.u32 %v3114, 16
      %v6037 = vshll.u32 %v3114, 16
      %v6039 = vrot.slane %v6037, 1
      %v6040 = vor.u32 %v6035, %v6039
      %v6042 = vshll.u32 %v3115, 16
      %v6044 = vrot.slane %v6042, 1
      %v6045 = vsel %vm3176, %v6040, %v6044
      %v6047 = vshrl.u32 %v3116, 16
      %v6049 = vshll.u32 %v3116, 16
      %v6051 = vrot.slane %v6049, 1
      %v6052 = vor.u32 %v6047, %v6051
      %v6054 = vshll.u32 %v3117, 16
      %v6056 = vrot.slane %v6054, 1
      %v6057 = vsel %vm3176, %v6052, %v6056
      %v6059 = vshrl.u32 %v3118, 16
      %v6061 = vshll.u32 %v3118, 16
      %v6063 = vrot.slane %v6061, 1
      %v6064 = vor.u32 %v6059, %v6063
      %v6066 = vshll.u32 %v3119, 16
      %v6068 = vrot.slane %v6066, 1
      %v6069 = vsel %vm3176, %v6064, %v6068
      %v6071 = vshrl.u32 %v3120, 16
      %v6073 = vshll.u32 %v3120, 16
      %v6075 = vrot.slane %v6073, 1
      %v6076 = vor.u32 %v6071, %v6075
      %v6078 = vshll.u32 %v3121, 16
      %v6080 = vrot.slane %v6078, 1
      %v6081 = vsel %vm3176, %v6076, %v6080
      %v6083 = vshrl.u32 %v3122, 16
      %v6085 = vshll.u32 %v3122, 16
      %v6087 = vrot.slane %v6085, 1
      %v6088 = vor.u32 %v6083, %v6087
      %v6090 = vshll.u32 %v3123, 16
      %v6092 = vrot.slane %v6090, 1
      %v6093 = vsel %vm3176, %v6088, %v6092
      %v6095 = vshrl.u32 %v3124, 16
      %v6097 = vshll.u32 %v3124, 16
      %v6099 = vrot.slane %v6097, 1
      %v6100 = vor.u32 %v6095, %v6099
      %v6102 = vshll.u32 %v3125, 16
      %v6104 = vrot.slane %v6102, 1
      %v6105 = vsel %vm3176, %v6100, %v6104
      %v6107 = vshrl.u32 %v3126, 16
      %v6109 = vshll.u32 %v3126, 16
      %v6111 = vrot.slane %v6109, 1
      %v6112 = vor.u32 %v6107, %v6111
      %v6114 = vshll.u32 %v3127, 16
      %v6116 = vrot.slane %v6114, 1
      %v6117 = vsel %vm3176, %v6112, %v6116
      %v6119 = vshrl.u32 %v3128, 16
      %v6121 = vshll.u32 %v3128, 16
      %v6123 = vrot.slane %v6121, 1
      %v6124 = vor.u32 %v6119, %v6123
      %v6126 = vshll.u32 %v3129, 16
      %v6128 = vrot.slane %v6126, 1
      %v6129 = vsel %vm3176, %v6124, %v6128
      %v6131 = vshrl.u32 %v3130, 16
      %v6133 = vshll.u32 %v3130, 16
      %v6135 = vrot.slane %v6133, 1
      %v6136 = vor.u32 %v6131, %v6135
      %v6138 = vshll.u32 %v3131, 16
      %v6140 = vrot.slane %v6138, 1
      %v6141 = vsel %vm3176, %v6136, %v6140
      %v6143 = vshrl.u32 %v3132, 16
      %v6145 = vshll.u32 %v3132, 16
      %v6147 = vrot.slane %v6145, 1
      %v6148 = vor.u32 %v6143, %v6147
      %v6150 = vshll.u32 %v3133, 16
      %v6152 = vrot.slane %v6150, 1
      %v6153 = vsel %vm3176, %v6148, %v6152
      %v6155 = vshrl.u32 %v3134, 16
      %v6157 = vshll.u32 %v3134, 16
      %v6159 = vrot.slane %v6157, 1
      %v6160 = vor.u32 %v6155, %v6159
      %v6162 = vshll.u32 %v3135, 16
      %v6164 = vrot.slane %v6162, 1
      %v6165 = vsel %vm3176, %v6160, %v6164
      %v6167 = vshrl.u32 %v3136, 16
      %v6169 = vshll.u32 %v3136, 16
      %v6171 = vrot.slane %v6169, 1
      %v6172 = vor.u32 %v6167, %v6171
      %v6174 = vshll.u32 %v3137, 16
      %v6176 = vrot.slane %v6174, 1
      %v6177 = vsel %vm3176, %v6172, %v6176
      %v6179 = vshrl.u32 %v3138, 16
      %v6181 = vshll.u32 %v3138, 16
      %v6183 = vrot.slane %v6181, 1
      %v6184 = vor.u32 %v6179, %v6183
      %v6186 = vshll.u32 %v3139, 16
      %v6188 = vrot.slane %v6186, 1
      %v6189 = vsel %vm3176, %v6184, %v6188
      %v6238 = vrot.slane %v3108, 1
      %v6239 = vrot.slane %v3109, 1
      %v6240 = vsel %vm3417, %v6238, %v6239
      %v6241 = vrot.slane %v3110, 1
      %v6242 = vrot.slane %v3111, 1
      %v6243 = vsel %vm3417, %v6241, %v6242
      %v6244 = vrot.slane %v3112, 1
      %v6245 = vrot.slane %v3113, 1
      %v6246 = vsel %vm3417, %v6244, %v6245
      %v6247 = vrot.slane %v3114, 1
      %v6248 = vrot.slane %v3115, 1
      %v6249 = vsel %vm3417, %v6247, %v6248
      %v6250 = vrot.slane %v3116, 1
      %v6251 = vrot.slane %v3117, 1
      %v6252 = vsel %vm3417, %v6250, %v6251
      %v6253 = vrot.slane %v3118, 1
      %v6254 = vrot.slane %v3119, 1
      %v6255 = vsel %vm3417, %v6253, %v6254
      %v6256 = vrot.slane %v3120, 1
      %v6257 = vrot.slane %v3121, 1
      %v6258 = vsel %vm3417, %v6256, %v6257
      %v6259 = vrot.slane %v3122, 1
      %v6260 = vrot.slane %v3123, 1
      %v6261 = vsel %vm3417, %v6259, %v6260
      %v6262 = vrot.slane %v3124, 1
      %v6263 = vrot.slane %v3125, 1
      %v6264 = vsel %vm3417, %v6262, %v6263
      %v6265 = vrot.slane %v3126, 1
      %v6266 = vrot.slane %v3127, 1
      %v6267 = vsel %vm3417, %v6265, %v6266
      %v6268 = vrot.slane %v3128, 1
      %v6269 = vrot.slane %v3129, 1
      %v6270 = vsel %vm3417, %v6268, %v6269
      %v6271 = vrot.slane %v3130, 1
      %v6272 = vrot.slane %v3131, 1
      %v6273 = vsel %vm3417, %v6271, %v6272
      %v6274 = vrot.slane %v3132, 1
      %v6275 = vrot.slane %v3133, 1
      %v6276 = vsel %vm3417, %v6274, %v6275
      %v6277 = vrot.slane %v3134, 1
      %v6278 = vrot.slane %v3135, 1
      %v6279 = vsel %vm3417, %v6277, %v6278
      %v6280 = vrot.slane %v3136, 1
      %v6281 = vrot.slane %v3137, 1
      %v6282 = vsel %vm3417, %v6280, %v6281
      %v6283 = vrot.slane %v3138, 1
      %v6284 = vrot.slane %v3139, 1
      %v6285 = vsel %vm3417, %v6283, %v6284
      %v6302 = vld [vmem:[#allocation2] sm:$0xff]
      %v6303 = vld [vmem:[#allocation2 + $0x8] sm:$0xff]
      %v6304 = vld [vmem:[#allocation2 + $0x10] sm:$0xff]
      %v6305 = vld [vmem:[#allocation2 + $0x18] sm:$0xff]
      %v6306 = vld [vmem:[#allocation2 + $0x20] sm:$0xff]
      %v6307 = vld [vmem:[#allocation2 + $0x28] sm:$0xff]
      %v6308 = vld [vmem:[#allocation2 + $0x30] sm:$0xff]
      %v6309 = vld [vmem:[#allocation2 + $0x38] sm:$0xff]
      %v6310 = vld [vmem:[#allocation2 + $0x40] sm:$0xff]
      %v6311 = vld [vmem:[#allocation2 + $0x48] sm:$0xff]
      %v6312 = vld [vmem:[#allocation2 + $0x50] sm:$0xff]
      %v6313 = vld [vmem:[#allocation2 + $0x58] sm:$0xff]
      %v6314 = vld [vmem:[#allocation2 + $0x60] sm:$0xff]
      %v6315 = vld [vmem:[#allocation2 + $0x68] sm:$0xff]
      %v6316 = vld [vmem:[#allocation2 + $0x70] sm:$0xff]
      %v6317 = vld [vmem:[#allocation2 + $0x78] sm:$0xff]
      %v6318 = vld [vmem:[#allocation2 + $0x80] sm:$0xff]
      %v6319 = vld [vmem:[#allocation2 + $0x88] sm:$0xff]
      %v6320 = vld [vmem:[#allocation2 + $0x90] sm:$0xff]
      %v6321 = vld [vmem:[#allocation2 + $0x98] sm:$0xff]
      %v6322 = vld [vmem:[#allocation2 + $0xa0] sm:$0xff]
      %v6323 = vld [vmem:[#allocation2 + $0xa8] sm:$0xff]
      %v6324 = vld [vmem:[#allocation2 + $0xb0] sm:$0xff]
      %v6325 = vld [vmem:[#allocation2 + $0xb8] sm:$0xff]
      %v6326 = vld [vmem:[#allocation2 + $0xc0] sm:$0xff]
      %v6327 = vld [vmem:[#allocation2 + $0xc8] sm:$0xff]
      %v6328 = vld [vmem:[#allocation2 + $0xd0] sm:$0xff]
      %v6329 = vld [vmem:[#allocation2 + $0xd8] sm:$0xff]
      %v6330 = vld [vmem:[#allocation2 + $0xe0] sm:$0xff]
      %v6331 = vld [vmem:[#allocation2 + $0xe8] sm:$0xff]
      %v6332 = vld [vmem:[#allocation2 + $0xf0] sm:$0xff]
      %v6333 = vld [vmem:[#allocation2 + $0xf8] sm:$0xff]
      %v6334 = vld [vmem:[%s11] sm:$0xf]
      %v6335 = vld [vmem:[%s11 + $0x4] sm:$0xf]
      %v6336 = vld [vmem:[%s11 + $0x8] sm:$0xf]
      %v6337 = vld [vmem:[%s11 + $0xc] sm:$0xf]
      %v6338 = vld [vmem:[%s11 + $0x10] sm:$0xf]
      %v6339 = vld [vmem:[%s11 + $0x14] sm:$0xf]
      %v6340 = vld [vmem:[%s11 + $0x18] sm:$0xf]
      %v6341 = vld [vmem:[%s11 + $0x1c] sm:$0xf]
      %v6342 = vld [vmem:[%s11 + $0x20] sm:$0xf]
      %v6343 = vld [vmem:[%s11 + $0x24] sm:$0xf]
      %v6344 = vld [vmem:[%s11 + $0x28] sm:$0xf]
      %v6345 = vld [vmem:[%s11 + $0x2c] sm:$0xf]
      %v6346 = vld [vmem:[%s11 + $0x30] sm:$0xf]
      %v6347 = vld [vmem:[%s11 + $0x34] sm:$0xf]
      %v6348 = vld [vmem:[%s11 + $0x38] sm:$0xf]
      %v6349 = vld [vmem:[%s11 + $0x3c] sm:$0xf]
      %v6350 = vld [vmem:[%s11 + $0x40] sm:$0xf]
      %v6351 = vld [vmem:[%s11 + $0x44] sm:$0xf]
      %v6352 = vld [vmem:[%s11 + $0x48] sm:$0xf]
      %v6353 = vld [vmem:[%s11 + $0x4c] sm:$0xf]
      %v6354 = vld [vmem:[%s11 + $0x50] sm:$0xf]
      %v6355 = vld [vmem:[%s11 + $0x54] sm:$0xf]
      %v6356 = vld [vmem:[%s11 + $0x58] sm:$0xf]
      %v6357 = vld [vmem:[%s11 + $0x5c] sm:$0xf]
      %v6358 = vld [vmem:[%s11 + $0x60] sm:$0xf]
      %v6359 = vld [vmem:[%s11 + $0x64] sm:$0xf]
      %v6360 = vld [vmem:[%s11 + $0x68] sm:$0xf]
      %v6361 = vld [vmem:[%s11 + $0x6c] sm:$0xf]
      %v6362 = vld [vmem:[%s11 + $0x70] sm:$0xf]
      %v6363 = vld [vmem:[%s11 + $0x74] sm:$0xf]
      %v6364 = vld [vmem:[%s11 + $0x78] sm:$0xf]
      %v6365 = vld [vmem:[%s11 + $0x7c] sm:$0xf]
      %v6366 = vld [vmem:[%s11 + $0x80] sm:$0xf]
      %v6367 = vld [vmem:[%s11 + $0x84] sm:$0xf]
      %v6368 = vld [vmem:[%s11 + $0x88] sm:$0xf]
      %v6369 = vld [vmem:[%s11 + $0x8c] sm:$0xf]
      %v6370 = vld [vmem:[%s11 + $0x90] sm:$0xf]
      %v6371 = vld [vmem:[%s11 + $0x94] sm:$0xf]
      %v6372 = vld [vmem:[%s11 + $0x98] sm:$0xf]
      %v6373 = vld [vmem:[%s11 + $0x9c] sm:$0xf]
      %v6374 = vld [vmem:[%s11 + $0xa0] sm:$0xf]
      %v6375 = vld [vmem:[%s11 + $0xa4] sm:$0xf]
      %v6376 = vld [vmem:[%s11 + $0xa8] sm:$0xf]
      %v6377 = vld [vmem:[%s11 + $0xac] sm:$0xf]
      %v6378 = vld [vmem:[%s11 + $0xb0] sm:$0xf]
      %v6379 = vld [vmem:[%s11 + $0xb4] sm:$0xf]
      %v6380 = vld [vmem:[%s11 + $0xb8] sm:$0xf]
      %v6381 = vld [vmem:[%s11 + $0xbc] sm:$0xf]
      %v6430 = vunpack.c.l.b16 %v6334
      %v6431 = vunpack.c.l.b16 %v6335
      %v6432 = vunpack.c.l.b16 %v6336
      %v6433 = vunpack.c.l.b16 %v6337
      %v6434 = vunpack.c.l.b16 %v6338
      %v6435 = vunpack.c.l.b16 %v6339
      %v6436 = vunpack.c.l.b16 %v6340
      %v6437 = vunpack.c.l.b16 %v6341
      %v6438 = vunpack.c.l.b16 %v6342
      %v6439 = vunpack.c.l.b16 %v6343
      %v6440 = vunpack.c.l.b16 %v6344
      %v6441 = vunpack.c.l.b16 %v6345
      %v6442 = vunpack.c.l.b16 %v6346
      %v6443 = vunpack.c.l.b16 %v6347
      %v6444 = vunpack.c.l.b16 %v6348
      %v6445 = vunpack.c.l.b16 %v6349
      %v6446 = vunpack.c.l.b16 %v6350
      %v6447 = vunpack.c.l.b16 %v6351
      %v6448 = vunpack.c.l.b16 %v6352
      %v6449 = vunpack.c.l.b16 %v6353
      %v6450 = vunpack.c.l.b16 %v6354
      %v6451 = vunpack.c.l.b16 %v6355
      %v6452 = vunpack.c.l.b16 %v6356
      %v6453 = vunpack.c.l.b16 %v6357
      %v6454 = vunpack.c.l.b16 %v6358
      %v6455 = vunpack.c.l.b16 %v6359
      %v6456 = vunpack.c.l.b16 %v6360
      %v6457 = vunpack.c.l.b16 %v6361
      %v6458 = vunpack.c.l.b16 %v6362
      %v6459 = vunpack.c.l.b16 %v6363
      %v6460 = vunpack.c.l.b16 %v6364
      %v6461 = vunpack.c.l.b16 %v6365
      %v6462 = vunpack.c.l.b16 %v6366
      %v6463 = vunpack.c.l.b16 %v6367
      %v6464 = vunpack.c.l.b16 %v6368
      %v6465 = vunpack.c.l.b16 %v6369
      %v6466 = vunpack.c.l.b16 %v6370
      %v6467 = vunpack.c.l.b16 %v6371
      %v6468 = vunpack.c.l.b16 %v6372
      %v6469 = vunpack.c.l.b16 %v6373
      %v6470 = vunpack.c.l.b16 %v6374
      %v6471 = vunpack.c.l.b16 %v6375
      %v6472 = vunpack.c.l.b16 %v6376
      %v6473 = vunpack.c.l.b16 %v6377
      %v6474 = vunpack.c.l.b16 %v6378
      %v6475 = vunpack.c.l.b16 %v6379
      %v6476 = vunpack.c.l.b16 %v6380
      %v6477 = vunpack.c.l.b16 %v6381
      %v6478 = vpack.c.b16 %v6431, %v6430
      %v6479 = vpack.c.b16 %v6433, %v6432
      %v6480 = vpack.c.b16 %v6435, %v6434
      %v6481 = vpack.c.b16 %v6437, %v6436
      %v6482 = vpack.c.b16 %v6439, %v6438
      %v6483 = vpack.c.b16 %v6441, %v6440
      %v6484 = vpack.c.b16 %v6443, %v6442
      %v6485 = vpack.c.b16 %v6445, %v6444
      %v6486 = vpack.c.b16 %v6447, %v6446
      %v6487 = vpack.c.b16 %v6449, %v6448
      %v6488 = vpack.c.b16 %v6451, %v6450
      %v6489 = vpack.c.b16 %v6453, %v6452
      %v6490 = vpack.c.b16 %v6455, %v6454
      %v6491 = vpack.c.b16 %v6457, %v6456
      %v6492 = vpack.c.b16 %v6459, %v6458
      %v6493 = vpack.c.b16 %v6461, %v6460
      %v6494 = vpack.c.b16 %v6463, %v6462
      %v6495 = vpack.c.b16 %v6465, %v6464
      %v6496 = vpack.c.b16 %v6467, %v6466
      %v6497 = vpack.c.b16 %v6469, %v6468
      %v6498 = vpack.c.b16 %v6471, %v6470
      %v6499 = vpack.c.b16 %v6473, %v6472
      %v6500 = vpack.c.b16 %v6475, %v6474
      %v6501 = vpack.c.b16 %v6477, %v6476
      %6526 = vmatprep.subr.bf16.mxu0 0
      %6527 = vmatpush1.bf16.msra.mxu0 %v6478
      %6528 = vmatprep.subr.bf16.mxu0 0
      %6529 = vmatpush1.bf16.msra.mxu0 %v6479
      %6530 = vmatprep.subr.bf16.mxu0 0
      %6531 = vmatpush1.bf16.msra.mxu0 %v6480
      %6532 = vmatprep.subr.bf16.mxu0 0
      %6533 = vmatpush1.bf16.msra.mxu0 %v6481
      %6534 = vmatprep.subr.bf16.mxu0 0
      %6535 = vmatpush1.bf16.msra.mxu0 %v6482
      %6536 = vmatprep.subr.bf16.mxu0 0
      %6537 = vmatpush1.bf16.msra.mxu0 %v6483
      %6538 = vmatprep.subr.bf16.mxu0 0
      %6539 = vmatpush1.bf16.msra.mxu0 %v6484
      %6540 = vmatprep.subr.bf16.mxu0 0
      %6541 = vmatpush1.bf16.msra.mxu0 %v6485
      %6542 = vmatprep.subr.bf16.mxu0 0
      %6543 = vmatpush1.bf16.msra.mxu0 %v6486
      %6544 = vmatprep.subr.bf16.mxu0 0
      %6545 = vmatpush1.bf16.msra.mxu0 %v6487
      %6546 = vmatprep.subr.bf16.mxu0 0
      %6547 = vmatpush1.bf16.msra.mxu0 %v6488
      %6548 = vmatprep.subr.bf16.mxu0 0
      %6549 = vmatpush1.bf16.msra.mxu0 %v6489
      %6550 = vmatprep.subr.bf16.mxu0 0
      %6551 = vmatpush1.bf16.msra.mxu0 %v6490
      %6552 = vmatprep.subr.bf16.mxu0 0
      %6553 = vmatpush1.bf16.msra.mxu0 %v6491
      %6554 = vmatprep.subr.bf16.mxu0 0
      %6555 = vmatpush1.bf16.msra.mxu0 %v6492
      %6556 = vmatprep.subr.bf16.mxu0 0
      %6557 = vmatpush1.bf16.msra.mxu0 %v6493
      %6558 = vmatprep.mubr.bf16.mxu0 %v6009
      %6559 = vmatmul.mubr.bf16.gmra.mrb[0].mxu0 %v3108
      %v6560 = vpop.f32.mrb[0].mxu0
      %v6561 = vadd.f32 0.0, %v6560
      %v6562 = vpop.f32.mrb[0].mxu0
      %v6563 = vpop.f32.mrb[0].mxu0
      %v6564 = vadd.f32 0.0, %v6563
      %v6565 = vpop.f32.mrb[0].mxu0
      %6566 = vmatprep.mubr.bf16.mxu0 %v6021
      %6567 = vmatmul.mubr.bf16.gmra.mrb[0].mxu0 %v3110
      %v6568 = vpop.f32.mrb[0].mxu0
      %v6569 = vadd.f32 0.0, %v6568
      %v6570 = vpop.f32.mrb[0].mxu0
      %v6571 = vpop.f32.mrb[0].mxu0
      %v6572 = vadd.f32 0.0, %v6571
      %v6573 = vpop.f32.mrb[0].mxu0
      %6574 = vmatprep.mubr.bf16.mxu0 %v6033
      %6575 = vmatmul.mubr.bf16.gmra.mrb[0].mxu0 %v3112
      %v6576 = vpop.f32.mrb[0].mxu0
      %v6577 = vadd.f32 0.0, %v6576
      %v6578 = vpop.f32.mrb[0].mxu0
      %v6579 = vpop.f32.mrb[0].mxu0
      %v6580 = vadd.f32 0.0, %v6579
      %v6581 = vpop.f32.mrb[0].mxu0
      %6582 = vmatprep.mubr.bf16.mxu0 %v6045
      %6583 = vmatmul.mubr.bf16.gmra.mrb[0].mxu0 %v3114
      %v6584 = vpop.f32.mrb[0].mxu0
      %v6585 = vadd.f32 0.0, %v6584
      %v6586 = vpop.f32.mrb[0].mxu0
      %v6587 = vpop.f32.mrb[0].mxu0
      %v6588 = vadd.f32 0.0, %v6587
      %v6589 = vpop.f32.mrb[0].mxu0
      %6590 = vmatprep.mubr.bf16.mxu0 %v6057
      %6591 = vmatmul.mubr.bf16.gmra.mrb[0].mxu0 %v3116
      %v6592 = vpop.f32.mrb[0].mxu0
      %v6593 = vadd.f32 0.0, %v6592
      %v6594 = vpop.f32.mrb[0].mxu0
      %v6595 = vpop.f32.mrb[0].mxu0
      %v6596 = vadd.f32 0.0, %v6595
      %v6597 = vpop.f32.mrb[0].mxu0
      %6598 = vmatprep.mubr.bf16.mxu0 %v6069
      %6599 = vmatmul.mubr.bf16.gmra.mrb[0].mxu0 %v3118
      %v6600 = vpop.f32.mrb[0].mxu0
      %v6601 = vadd.f32 0.0, %v6600
      %v6602 = vpop.f32.mrb[0].mxu0
      %v6603 = vpop.f32.mrb[0].mxu0
      %v6604 = vadd.f32 0.0, %v6603
      %v6605 = vpop.f32.mrb[0].mxu0
      %6606 = vmatprep.mubr.bf16.mxu0 %v6081
      %6607 = vmatmul.mubr.bf16.gmra.mrb[0].mxu0 %v3120
      %v6608 = vpop.f32.mrb[0].mxu0
      %v6609 = vadd.f32 0.0, %v6608
      %v6610 = vpop.f32.mrb[0].mxu0
      %v6611 = vpop.f32.mrb[0].mxu0
      %v6612 = vadd.f32 0.0, %v6611
      %v6613 = vpop.f32.mrb[0].mxu0
      %6614 = vmatprep.mubr.bf16.mxu0 %v6093
      %6615 = vmatmul.mubr.bf16.gmra.mrb[0].mxu0 %v3122
      %v6616 = vpop.f32.mrb[0].mxu0
      %v6617 = vadd.f32 0.0, %v6616
      %v6618 = vpop.f32.mrb[0].mxu0
      %v6619 = vpop.f32.mrb[0].mxu0
      %v6620 = vadd.f32 0.0, %v6619
      %v6621 = vpop.f32.mrb[0].mxu0
      %6622 = vmatprep.mubr.bf16.mxu0 %v6105
      %6623 = vmatmul.mubr.bf16.gmra.mrb[0].mxu0 %v3124
      %v6624 = vpop.f32.mrb[0].mxu0
      %v6625 = vadd.f32 0.0, %v6624
      %v6626 = vpop.f32.mrb[0].mxu0
      %v6627 = vpop.f32.mrb[0].mxu0
      %v6628 = vadd.f32 0.0, %v6627
      %v6629 = vpop.f32.mrb[0].mxu0
      %6630 = vmatprep.mubr.bf16.mxu0 %v6117
      %6631 = vmatmul.mubr.bf16.gmra.mrb[0].mxu0 %v3126
      %v6632 = vpop.f32.mrb[0].mxu0
      %v6633 = vadd.f32 0.0, %v6632
      %v6634 = vpop.f32.mrb[0].mxu0
      %v6635 = vpop.f32.mrb[0].mxu0
      %v6636 = vadd.f32 0.0, %v6635
      %v6637 = vpop.f32.mrb[0].mxu0
      %6638 = vmatprep.mubr.bf16.mxu0 %v6129
      %6639 = vmatmul.mubr.bf16.gmra.mrb[0].mxu0 %v3128
      %v6640 = vpop.f32.mrb[0].mxu0
      %v6641 = vadd.f32 0.0, %v6640
      %v6642 = vpop.f32.mrb[0].mxu0
      %v6643 = vpop.f32.mrb[0].mxu0
      %v6644 = vadd.f32 0.0, %v6643
      %v6645 = vpop.f32.mrb[0].mxu0
      %6646 = vmatprep.mubr.bf16.mxu0 %v6141
      %6647 = vmatmul.mubr.bf16.gmra.mrb[0].mxu0 %v3130
      %v6648 = vpop.f32.mrb[0].mxu0
      %v6649 = vadd.f32 0.0, %v6648
      %v6650 = vpop.f32.mrb[0].mxu0
      %v6651 = vpop.f32.mrb[0].mxu0
      %v6652 = vadd.f32 0.0, %v6651
      %v6653 = vpop.f32.mrb[0].mxu0
      %6654 = vmatprep.mubr.bf16.mxu0 %v6153
      %6655 = vmatmul.mubr.bf16.gmra.mrb[0].mxu0 %v3132
      %v6656 = vpop.f32.mrb[0].mxu0
      %v6657 = vadd.f32 0.0, %v6656
      %v6658 = vpop.f32.mrb[0].mxu0
      %v6659 = vpop.f32.mrb[0].mxu0
      %v6660 = vadd.f32 0.0, %v6659
      %v6661 = vpop.f32.mrb[0].mxu0
      %6662 = vmatprep.mubr.bf16.mxu0 %v6165
      %6663 = vmatmul.mubr.bf16.gmra.mrb[0].mxu0 %v3134
      %v6664 = vpop.f32.mrb[0].mxu0
      %v6665 = vadd.f32 0.0, %v6664
      %v6666 = vpop.f32.mrb[0].mxu0
      %v6667 = vpop.f32.mrb[0].mxu0
      %v6668 = vadd.f32 0.0, %v6667
      %v6669 = vpop.f32.mrb[0].mxu0
      %6670 = vmatprep.mubr.bf16.mxu0 %v6177
      %6671 = vmatmul.mubr.bf16.gmra.mrb[0].mxu0 %v3136
      %v6672 = vpop.f32.mrb[0].mxu0
      %v6673 = vadd.f32 0.0, %v6672
      %v6674 = vpop.f32.mrb[0].mxu0
      %v6675 = vpop.f32.mrb[0].mxu0
      %v6676 = vadd.f32 0.0, %v6675
      %v6677 = vpop.f32.mrb[0].mxu0
      %6678 = vmatprep.mubr.bf16.mxu0 %v6189
      %6679 = vmatmul.mubr.bf16.gmra.mrb[0].mxu0 %v3138
      %v6680 = vpop.f32.mrb[0].mxu0
      %v6681 = vadd.f32 0.0, %v6680
      %v6682 = vpop.f32.mrb[0].mxu0
      %v6683 = vpop.f32.mrb[0].mxu0
      %v6684 = vadd.f32 0.0, %v6683
      %v6685 = vpop.f32.mrb[0].mxu0
      %6686 = vdwg.mxu0
      %6687 = vmatprep.subr.bf16.mxu0 0
      %6688 = vmatpush1.bf16.msra.mxu0 %v6494
      %6689 = vmatprep.subr.bf16.mxu0 0
      %6690 = vmatpush1.bf16.msra.mxu0 %v6495
      %6691 = vmatprep.subr.bf16.mxu0 0
      %6692 = vmatpush1.bf16.msra.mxu0 %v6496
      %6693 = vmatprep.subr.bf16.mxu0 0
      %6694 = vmatpush1.bf16.msra.mxu0 %v6497
      %6695 = vmatprep.subr.bf16.mxu0 0
      %6696 = vmatpush1.bf16.msra.mxu0 %v6498
      %6697 = vmatprep.subr.bf16.mxu0 0
      %6698 = vmatpush1.bf16.msra.mxu0 %v6499
      %6699 = vmatprep.subr.bf16.mxu0 0
      %6700 = vmatpush1.bf16.msra.mxu0 %v6500
      %6701 = vmatprep.subr.bf16.mxu0 0
      %6702 = vmatpush1.bf16.msra.mxu0 %v6501
      %6703 = vmatprep.subr.bf16.mxu0 0
      %6704 = vmatpush1.bf16.msra.mxu0 0
      %6705 = vmatprep.subr.bf16.mxu0 0
      %6706 = vmatpush1.bf16.msra.mxu0 0
      %6707 = vmatprep.subr.bf16.mxu0 0
      %6708 = vmatpush1.bf16.msra.mxu0 0
      %6709 = vmatprep.subr.bf16.mxu0 0
      %6710 = vmatpush1.bf16.msra.mxu0 0
      %6711 = vmatprep.subr.bf16.mxu0 0
      %6712 = vmatpush1.bf16.msra.mxu0 0
      %6713 = vmatprep.subr.bf16.mxu0 0
      %6714 = vmatpush1.bf16.msra.mxu0 0
      %6715 = vmatprep.subr.bf16.mxu0 0
      %6716 = vmatpush1.bf16.msra.mxu0 0
      %6717 = vmatprep.subr.bf16.mxu0 0
      %6718 = vmatpush1.bf16.msra.mxu0 0
      %6719 = vmatprep.mubr.bf16.mxu0 0
      %6720 = vmatmul.mubr.bf16.gmra.mrb[0].mxu0 %v6240
      %v6721 = vpop.f32.mrb[0].mxu0
      %v6722 = vadd.f32 %v6561, %v6721
      %v6723 = vpop.f32.mrb[0].mxu0
      %v6724 = vpop.f32.mrb[0].mxu0
      %v6725 = vadd.f32 %v6564, %v6724
      %v6726 = vpop.f32.mrb[0].mxu0
      %6727 = vmatprep.mubr.bf16.mxu0 0
      %6728 = vmatmul.mubr.bf16.gmra.mrb[0].mxu0 %v6243
      %v6729 = vpop.f32.mrb[0].mxu0
      %v6730 = vadd.f32 %v6569, %v6729
      %v6731 = vpop.f32.mrb[0].mxu0
      %v6732 = vpop.f32.mrb[0].mxu0
      %v6733 = vadd.f32 %v6572, %v6732
      %v6734 = vpop.f32.mrb[0].mxu0
      %6735 = vmatprep.mubr.bf16.mxu0 0
      %6736 = vmatmul.mubr.bf16.gmra.mrb[0].mxu0 %v6246
      %v6737 = vpop.f32.mrb[0].mxu0
      %v6738 = vadd.f32 %v6577, %v6737
      %v6739 = vpop.f32.mrb[0].mxu0
      %v6740 = vpop.f32.mrb[0].mxu0
      %v6741 = vadd.f32 %v6580, %v6740
      %v6742 = vpop.f32.mrb[0].mxu0
      %6743 = vmatprep.mubr.bf16.mxu0 0
      %6744 = vmatmul.mubr.bf16.gmra.mrb[0].mxu0 %v6249
      %v6745 = vpop.f32.mrb[0].mxu0
      %v6746 = vadd.f32 %v6585, %v6745
      %v6747 = vpop.f32.mrb[0].mxu0
      %v6748 = vpop.f32.mrb[0].mxu0
      %v6749 = vadd.f32 %v6588, %v6748
      %v6750 = vpop.f32.mrb[0].mxu0
      %6751 = vmatprep.mubr.bf16.mxu0 0
      %6752 = vmatmul.mubr.bf16.gmra.mrb[0].mxu0 %v6252
      %v6753 = vpop.f32.mrb[0].mxu0
      %v6754 = vadd.f32 %v6593, %v6753
      %v6755 = vpop.f32.mrb[0].mxu0
      %v6756 = vpop.f32.mrb[0].mxu0
      %v6757 = vadd.f32 %v6596, %v6756
      %v6758 = vpop.f32.mrb[0].mxu0
      %6759 = vmatprep.mubr.bf16.mxu0 0
      %6760 = vmatmul.mubr.bf16.gmra.mrb[0].mxu0 %v6255
      %v6761 = vpop.f32.mrb[0].mxu0
      %v6762 = vadd.f32 %v6601, %v6761
      %v6763 = vpop.f32.mrb[0].mxu0
      %v6764 = vpop.f32.mrb[0].mxu0
      %v6765 = vadd.f32 %v6604, %v6764
      %v6766 = vpop.f32.mrb[0].mxu0
      %6767 = vmatprep.mubr.bf16.mxu0 0
      %6768 = vmatmul.mubr.bf16.gmra.mrb[0].mxu0 %v6258
      %v6769 = vpop.f32.mrb[0].mxu0
      %v6770 = vadd.f32 %v6609, %v6769
      %v6771 = vpop.f32.mrb[0].mxu0
      %v6772 = vpop.f32.mrb[0].mxu0
      %v6773 = vadd.f32 %v6612, %v6772
      %v6774 = vpop.f32.mrb[0].mxu0
      %6775 = vmatprep.mubr.bf16.mxu0 0
      %6776 = vmatmul.mubr.bf16.gmra.mrb[0].mxu0 %v6261
      %v6777 = vpop.f32.mrb[0].mxu0
      %v6778 = vadd.f32 %v6617, %v6777
      %v6779 = vpop.f32.mrb[0].mxu0
      %v6780 = vpop.f32.mrb[0].mxu0
      %v6781 = vadd.f32 %v6620, %v6780
      %v6782 = vpop.f32.mrb[0].mxu0
      %6783 = vmatprep.mubr.bf16.mxu0 0
      %6784 = vmatmul.mubr.bf16.gmra.mrb[0].mxu0 %v6264
      %v6785 = vpop.f32.mrb[0].mxu0
      %v6786 = vadd.f32 %v6625, %v6785
      %v6787 = vpop.f32.mrb[0].mxu0
      %v6788 = vpop.f32.mrb[0].mxu0
      %v6789 = vadd.f32 %v6628, %v6788
      %v6790 = vpop.f32.mrb[0].mxu0
      %6791 = vmatprep.mubr.bf16.mxu0 0
      %6792 = vmatmul.mubr.bf16.gmra.mrb[0].mxu0 %v6267
      %v6793 = vpop.f32.mrb[0].mxu0
      %v6794 = vadd.f32 %v6633, %v6793
      %v6795 = vpop.f32.mrb[0].mxu0
      %v6796 = vpop.f32.mrb[0].mxu0
      %v6797 = vadd.f32 %v6636, %v6796
      %v6798 = vpop.f32.mrb[0].mxu0
      %6799 = vmatprep.mubr.bf16.mxu0 0
      %6800 = vmatmul.mubr.bf16.gmra.mrb[0].mxu0 %v6270
      %v6801 = vpop.f32.mrb[0].mxu0
      %v6802 = vadd.f32 %v6641, %v6801
      %v6803 = vpop.f32.mrb[0].mxu0
      %v6804 = vpop.f32.mrb[0].mxu0
      %v6805 = vadd.f32 %v6644, %v6804
      %v6806 = vpop.f32.mrb[0].mxu0
      %6807 = vmatprep.mubr.bf16.mxu0 0
      %6808 = vmatmul.mubr.bf16.gmra.mrb[0].mxu0 %v6273
      %v6809 = vpop.f32.mrb[0].mxu0
      %v6810 = vadd.f32 %v6649, %v6809
      %v6811 = vpop.f32.mrb[0].mxu0
      %v6812 = vpop.f32.mrb[0].mxu0
      %v6813 = vadd.f32 %v6652, %v6812
      %v6814 = vpop.f32.mrb[0].mxu0
      %6815 = vmatprep.mubr.bf16.mxu0 0
      %6816 = vmatmul.mubr.bf16.gmra.mrb[0].mxu0 %v6276
      %v6817 = vpop.f32.mrb[0].mxu0
      %v6818 = vadd.f32 %v6657, %v6817
      %v6819 = vpop.f32.mrb[0].mxu0
      %v6820 = vpop.f32.mrb[0].mxu0
      %v6821 = vadd.f32 %v6660, %v6820
      %v6822 = vpop.f32.mrb[0].mxu0
      %6823 = vmatprep.mubr.bf16.mxu0 0
      %6824 = vmatmul.mubr.bf16.gmra.mrb[0].mxu0 %v6279
      %v6825 = vpop.f32.mrb[0].mxu0
      %v6826 = vadd.f32 %v6665, %v6825
      %v6827 = vpop.f32.mrb[0].mxu0
      %v6828 = vpop.f32.mrb[0].mxu0
      %v6829 = vadd.f32 %v6668, %v6828
      %v6830 = vpop.f32.mrb[0].mxu0
      %6831 = vmatprep.mubr.bf16.mxu0 0
      %6832 = vmatmul.mubr.bf16.gmra.mrb[0].mxu0 %v6282
      %v6833 = vpop.f32.mrb[0].mxu0
      %v6834 = vadd.f32 %v6673, %v6833
      %v6835 = vpop.f32.mrb[0].mxu0
      %v6836 = vpop.f32.mrb[0].mxu0
      %v6837 = vadd.f32 %v6676, %v6836
      %v6838 = vpop.f32.mrb[0].mxu0
      %6839 = vmatprep.mubr.bf16.mxu0 0
      %6840 = vmatmul.mubr.bf16.gmra.mrb[0].mxu0 %v6285
      %v6841 = vpop.f32.mrb[0].mxu0
      %v6842 = vadd.f32 %v6681, %v6841
      %v6843 = vpop.f32.mrb[0].mxu0
      %v6844 = vpop.f32.mrb[0].mxu0
      %v6845 = vadd.f32 %v6684, %v6844
      %v6846 = vpop.f32.mrb[0].mxu0
      %6847 = vdwg.mxu0
      %v6848 = vadd.f32 %v6302, %v6722
      %v6849 = vadd.f32 %v6303, %v6725
      %v6850 = vadd.f32 %v6304, %v6730
      %v6851 = vadd.f32 %v6305, %v6733
      %v6852 = vadd.f32 %v6306, %v6738
      %v6853 = vadd.f32 %v6307, %v6741
      %v6854 = vadd.f32 %v6308, %v6746
      %v6855 = vadd.f32 %v6309, %v6749
      %v6856 = vadd.f32 %v6310, %v6754
      %v6857 = vadd.f32 %v6311, %v6757
      %v6858 = vadd.f32 %v6312, %v6762
      %v6859 = vadd.f32 %v6313, %v6765
      %v6860 = vadd.f32 %v6314, %v6770
      %v6861 = vadd.f32 %v6315, %v6773
      %v6862 = vadd.f32 %v6316, %v6778
      %v6863 = vadd.f32 %v6317, %v6781
      %v6864 = vadd.f32 %v6318, %v6786
      %v6865 = vadd.f32 %v6319, %v6789
      %v6866 = vadd.f32 %v6320, %v6794
      %v6867 = vadd.f32 %v6321, %v6797
      %v6868 = vadd.f32 %v6322, %v6802
      %v6869 = vadd.f32 %v6323, %v6805
      %v6870 = vadd.f32 %v6324, %v6810
      %v6871 = vadd.f32 %v6325, %v6813
      %v6872 = vadd.f32 %v6326, %v6818
      %v6873 = vadd.f32 %v6327, %v6821
      %v6874 = vadd.f32 %v6328, %v6826
      %v6875 = vadd.f32 %v6329, %v6829
      %v6876 = vadd.f32 %v6330, %v6834
      %v6877 = vadd.f32 %v6331, %v6837
      %v6878 = vadd.f32 %v6332, %v6842
      %v6879 = vadd.f32 %v6333, %v6845
      %6880 = vst [vmem:[#allocation2] sm:$0xff] %v6848
      %6881 = vst [vmem:[#allocation2 + $0x8] sm:$0xff] %v6849
      %6882 = vst [vmem:[#allocation2 + $0x10] sm:$0xff] %v6850
      %6883 = vst [vmem:[#allocation2 + $0x18] sm:$0xff] %v6851
      %6884 = vst [vmem:[#allocation2 + $0x20] sm:$0xff] %v6852
      %6885 = vst [vmem:[#allocation2 + $0x28] sm:$0xff] %v6853
      %6886 = vst [vmem:[#allocation2 + $0x30] sm:$0xff] %v6854
      %6887 = vst [vmem:[#allocation2 + $0x38] sm:$0xff] %v6855
      %6888 = vst [vmem:[#allocation2 + $0x40] sm:$0xff] %v6856
      %6889 = vst [vmem:[#allocation2 + $0x48] sm:$0xff] %v6857
      %6890 = vst [vmem:[#allocation2 + $0x50] sm:$0xff] %v6858
      %6891 = vst [vmem:[#allocation2 + $0x58] sm:$0xff] %v6859
      %6892 = vst [vmem:[#allocation2 + $0x60] sm:$0xff] %v6860
      %6893 = vst [vmem:[#allocation2 + $0x68] sm:$0xff] %v6861
      %6894 = vst [vmem:[#allocation2 + $0x70] sm:$0xff] %v6862
      %6895 = vst [vmem:[#allocation2 + $0x78] sm:$0xff] %v6863
      %6896 = vst [vmem:[#allocation2 + $0x80] sm:$0xff] %v6864
      %6897 = vst [vmem:[#allocation2 + $0x88] sm:$0xff] %v6865
      %6898 = vst [vmem:[#allocation2 + $0x90] sm:$0xff] %v6866
      %6899 = vst [vmem:[#allocation2 + $0x98] sm:$0xff] %v6867
      %6900 = vst [vmem:[#allocation2 + $0xa0] sm:$0xff] %v6868
      %6901 = vst [vmem:[#allocation2 + $0xa8] sm:$0xff] %v6869
      %6902 = vst [vmem:[#allocation2 + $0xb0] sm:$0xff] %v6870
      %6903 = vst [vmem:[#allocation2 + $0xb8] sm:$0xff] %v6871
      %6904 = vst [vmem:[#allocation2 + $0xc0] sm:$0xff] %v6872
      %6905 = vst [vmem:[#allocation2 + $0xc8] sm:$0xff] %v6873
      %6906 = vst [vmem:[#allocation2 + $0xd0] sm:$0xff] %v6874
      %6907 = vst [vmem:[#allocation2 + $0xd8] sm:$0xff] %v6875
      %6908 = vst [vmem:[#allocation2 + $0xe0] sm:$0xff] %v6876
      %6909 = vst [vmem:[#allocation2 + $0xe8] sm:$0xff] %v6877
      %6910 = vst [vmem:[#allocation2 + $0xf0] sm:$0xff] %v6878
      %6911 = vst [vmem:[#allocation2 + $0xf8] sm:$0xff] %v6879
      %v6913 = vshrl.u32 %v3140, 16
      %v6915 = vshll.u32 %v3140, 16
      %v6917 = vrot.slane %v6915, 1
      %v6918 = vor.u32 %v6913, %v6917
      %v6920 = vshll.u32 %v3141, 16
      %v6922 = vrot.slane %v6920, 1
      %v6923 = vsel %vm3176, %v6918, %v6922
      %v6927 = vrot.slane %v3140, 1
      %v6928 = vrot.slane %v3141, 1
      %v6929 = vsel %vm3417, %v6927, %v6928
      %v6931 = vld [vmem:[#allocation2] sm:$0xff]
      %v6932 = vld [vmem:[#allocation2 + $0x8] sm:$0xff]
      %v6933 = vld [vmem:[#allocation2 + $0x10] sm:$0xff]
      %v6934 = vld [vmem:[#allocation2 + $0x18] sm:$0xff]
      %v6935 = vld [vmem:[#allocation2 + $0x20] sm:$0xff]
      %v6936 = vld [vmem:[#allocation2 + $0x28] sm:$0xff]
      %v6937 = vld [vmem:[#allocation2 + $0x30] sm:$0xff]
      %v6938 = vld [vmem:[#allocation2 + $0x38] sm:$0xff]
      %v6939 = vld [vmem:[#allocation2 + $0x40] sm:$0xff]
      %v6940 = vld [vmem:[#allocation2 + $0x48] sm:$0xff]
      %v6941 = vld [vmem:[#allocation2 + $0x50] sm:$0xff]
      %v6942 = vld [vmem:[#allocation2 + $0x58] sm:$0xff]
      %v6943 = vld [vmem:[#allocation2 + $0x60] sm:$0xff]
      %v6944 = vld [vmem:[#allocation2 + $0x68] sm:$0xff]
      %v6945 = vld [vmem:[#allocation2 + $0x70] sm:$0xff]
      %v6946 = vld [vmem:[#allocation2 + $0x78] sm:$0xff]
      %v6947 = vld [vmem:[#allocation2 + $0x80] sm:$0xff]
      %v6948 = vld [vmem:[#allocation2 + $0x88] sm:$0xff]
      %v6949 = vld [vmem:[#allocation2 + $0x90] sm:$0xff]
      %v6950 = vld [vmem:[#allocation2 + $0x98] sm:$0xff]
      %v6951 = vld [vmem:[#allocation2 + $0xa0] sm:$0xff]
      %v6952 = vld [vmem:[#allocation2 + $0xa8] sm:$0xff]
      %v6953 = vld [vmem:[#allocation2 + $0xb0] sm:$0xff]
      %v6954 = vld [vmem:[#allocation2 + $0xb8] sm:$0xff]
      %v6955 = vld [vmem:[#allocation2 + $0xc0] sm:$0xff]
      %v6956 = vld [vmem:[#allocation2 + $0xc8] sm:$0xff]
      %v6957 = vld [vmem:[#allocation2 + $0xd0] sm:$0xff]
      %v6958 = vld [vmem:[#allocation2 + $0xd8] sm:$0xff]
      %v6959 = vld [vmem:[#allocation2 + $0xe0] sm:$0xff]
      %v6960 = vld [vmem:[#allocation2 + $0xe8] sm:$0xff]
      %v6961 = vld [vmem:[#allocation2 + $0xf0] sm:$0xff]
      %v6962 = vld [vmem:[#allocation2 + $0xf8] sm:$0xff]
      %s6963 = scalar_lea.vmem %s11, 192
      %v6964 = vld [vmem:[%s6963] sm:$0xf]
      %v6965 = vld [vmem:[%s6963 + $0x4] sm:$0xf]
      %v6966 = vld [vmem:[%s6963 + $0x8] sm:$0xf]
      %v6967 = vld [vmem:[%s6963 + $0xc] sm:$0xf]
      %v6968 = vld [vmem:[%s6963 + $0x10] sm:$0xf]
      %v6969 = vld [vmem:[%s6963 + $0x14] sm:$0xf]
      %v6970 = vld [vmem:[%s6963 + $0x18] sm:$0xf]
      %v6971 = vld [vmem:[%s6963 + $0x1c] sm:$0xf]
      %v6972 = vld [vmem:[%s6963 + $0x20] sm:$0xf]
      %v6973 = vld [vmem:[%s6963 + $0x24] sm:$0xf]
      %v6974 = vld [vmem:[%s6963 + $0x28] sm:$0xf]
      %v6975 = vld [vmem:[%s6963 + $0x2c] sm:$0xf]
      %v6976 = vld [vmem:[%s6963 + $0x30] sm:$0xf]
      %v6977 = vld [vmem:[%s6963 + $0x34] sm:$0xf]
      %v6978 = vld [vmem:[%s6963 + $0x38] sm:$0xf]
      %v6979 = vld [vmem:[%s6963 + $0x3c] sm:$0xf]
      %v6980 = vld [vmem:[%s6963 + $0x40] sm:$0xf]
      %v6981 = vld [vmem:[%s6963 + $0x44] sm:$0xf]
      %v6982 = vld [vmem:[%s6963 + $0x48] sm:$0xf]
      %v6983 = vld [vmem:[%s6963 + $0x4c] sm:$0xf]
      %v6984 = vld [vmem:[%s6963 + $0x50] sm:$0xf]
      %v6985 = vld [vmem:[%s6963 + $0x54] sm:$0xf]
      %v6986 = vld [vmem:[%s6963 + $0x58] sm:$0xf]
      %v6987 = vld [vmem:[%s6963 + $0x5c] sm:$0xf]
      %v6988 = vld [vmem:[%s6963 + $0x60] sm:$0xf]
      %v6989 = vld [vmem:[%s6963 + $0x64] sm:$0xf]
      %v6990 = vld [vmem:[%s6963 + $0x68] sm:$0xf]
      %v6991 = vld [vmem:[%s6963 + $0x6c] sm:$0xf]
      %v6992 = vld [vmem:[%s6963 + $0x70] sm:$0xf]
      %v6993 = vld [vmem:[%s6963 + $0x74] sm:$0xf]
      %v6994 = vld [vmem:[%s6963 + $0x78] sm:$0xf]
      %v6995 = vld [vmem:[%s6963 + $0x7c] sm:$0xf]
      %v6996 = vld [vmem:[%s6963 + $0x80] sm:$0xf]
      %v6997 = vld [vmem:[%s6963 + $0x84] sm:$0xf]
      %v6998 = vld [vmem:[%s6963 + $0x88] sm:$0xf]
      %v6999 = vld [vmem:[%s6963 + $0x8c] sm:$0xf]
      %v7000 = vld [vmem:[%s6963 + $0x90] sm:$0xf]
      %v7001 = vld [vmem:[%s6963 + $0x94] sm:$0xf]
      %v7002 = vld [vmem:[%s6963 + $0x98] sm:$0xf]
      %v7003 = vld [vmem:[%s6963 + $0x9c] sm:$0xf]
      %v7004 = vld [vmem:[%s6963 + $0xa0] sm:$0xf]
      %v7005 = vld [vmem:[%s6963 + $0xa4] sm:$0xf]
      %v7006 = vld [vmem:[%s6963 + $0xa8] sm:$0xf]
      %v7007 = vld [vmem:[%s6963 + $0xac] sm:$0xf]
      %v7008 = vld [vmem:[%s6963 + $0xb0] sm:$0xf]
      %v7009 = vld [vmem:[%s6963 + $0xb4] sm:$0xf]
      %v7010 = vld [vmem:[%s6963 + $0xb8] sm:$0xf]
      %v7011 = vld [vmem:[%s6963 + $0xbc] sm:$0xf]
      %v7060 = vunpack.c.l.b16 %v6964
      %v7061 = vunpack.c.l.b16 %v6965
      %v7062 = vunpack.c.l.b16 %v6966
      %v7063 = vunpack.c.l.b16 %v6967
      %v7064 = vunpack.c.l.b16 %v6968
      %v7065 = vunpack.c.l.b16 %v6969
      %v7066 = vunpack.c.l.b16 %v6970
      %v7067 = vunpack.c.l.b16 %v6971
      %v7068 = vunpack.c.l.b16 %v6972
      %v7069 = vunpack.c.l.b16 %v6973
      %v7070 = vunpack.c.l.b16 %v6974
      %v7071 = vunpack.c.l.b16 %v6975
      %v7072 = vunpack.c.l.b16 %v6976
      %v7073 = vunpack.c.l.b16 %v6977
      %v7074 = vunpack.c.l.b16 %v6978
      %v7075 = vunpack.c.l.b16 %v6979
      %v7076 = vunpack.c.l.b16 %v6980
      %v7077 = vunpack.c.l.b16 %v6981
      %v7078 = vunpack.c.l.b16 %v6982
      %v7079 = vunpack.c.l.b16 %v6983
      %v7080 = vunpack.c.l.b16 %v6984
      %v7081 = vunpack.c.l.b16 %v6985
      %v7082 = vunpack.c.l.b16 %v6986
      %v7083 = vunpack.c.l.b16 %v6987
      %v7084 = vunpack.c.l.b16 %v6988
      %v7085 = vunpack.c.l.b16 %v6989
      %v7086 = vunpack.c.l.b16 %v6990
      %v7087 = vunpack.c.l.b16 %v6991
      %v7088 = vunpack.c.l.b16 %v6992
      %v7089 = vunpack.c.l.b16 %v6993
      %v7090 = vunpack.c.l.b16 %v6994
      %v7091 = vunpack.c.l.b16 %v6995
      %v7092 = vunpack.c.l.b16 %v6996
      %v7093 = vunpack.c.l.b16 %v6997
      %v7094 = vunpack.c.l.b16 %v6998
      %v7095 = vunpack.c.l.b16 %v6999
      %v7096 = vunpack.c.l.b16 %v7000
      %v7097 = vunpack.c.l.b16 %v7001
      %v7098 = vunpack.c.l.b16 %v7002
      %v7099 = vunpack.c.l.b16 %v7003
      %v7100 = vunpack.c.l.b16 %v7004
      %v7101 = vunpack.c.l.b16 %v7005
      %v7102 = vunpack.c.l.b16 %v7006
      %v7103 = vunpack.c.l.b16 %v7007
      %v7104 = vunpack.c.l.b16 %v7008
      %v7105 = vunpack.c.l.b16 %v7009
      %v7106 = vunpack.c.l.b16 %v7010
      %v7107 = vunpack.c.l.b16 %v7011
      %v7108 = vpack.c.b16 %v7061, %v7060
      %v7109 = vpack.c.b16 %v7063, %v7062
      %v7110 = vpack.c.b16 %v7065, %v7064
      %v7111 = vpack.c.b16 %v7067, %v7066
      %v7112 = vpack.c.b16 %v7069, %v7068
      %v7113 = vpack.c.b16 %v7071, %v7070
      %v7114 = vpack.c.b16 %v7073, %v7072
      %v7115 = vpack.c.b16 %v7075, %v7074
      %v7116 = vpack.c.b16 %v7077, %v7076
      %v7117 = vpack.c.b16 %v7079, %v7078
      %v7118 = vpack.c.b16 %v7081, %v7080
      %v7119 = vpack.c.b16 %v7083, %v7082
      %v7120 = vpack.c.b16 %v7085, %v7084
      %v7121 = vpack.c.b16 %v7087, %v7086
      %v7122 = vpack.c.b16 %v7089, %v7088
      %v7123 = vpack.c.b16 %v7091, %v7090
      %v7124 = vpack.c.b16 %v7093, %v7092
      %v7125 = vpack.c.b16 %v7095, %v7094
      %v7126 = vpack.c.b16 %v7097, %v7096
      %v7127 = vpack.c.b16 %v7099, %v7098
      %v7128 = vpack.c.b16 %v7101, %v7100
      %v7129 = vpack.c.b16 %v7103, %v7102
      %v7130 = vpack.c.b16 %v7105, %v7104
      %v7131 = vpack.c.b16 %v7107, %v7106
      %7156 = vmatprep.subr.bf16.mxu0 0
      %7157 = vmatpush1.bf16.msra.mxu0 %v7108
      %7158 = vmatprep.subr.bf16.mxu0 0
      %7159 = vmatpush1.bf16.msra.mxu0 %v7109
      %7160 = vmatprep.subr.bf16.mxu0 0
      %7161 = vmatpush1.bf16.msra.mxu0 %v7110
      %7162 = vmatprep.subr.bf16.mxu0 0
      %7163 = vmatpush1.bf16.msra.mxu0 %v7111
      %7164 = vmatprep.subr.bf16.mxu0 0
      %7165 = vmatpush1.bf16.msra.mxu0 %v7112
      %7166 = vmatprep.subr.bf16.mxu0 0
      %7167 = vmatpush1.bf16.msra.mxu0 %v7113
      %7168 = vmatprep.subr.bf16.mxu0 0
      %7169 = vmatpush1.bf16.msra.mxu0 %v7114
      %7170 = vmatprep.subr.bf16.mxu0 0
      %7171 = vmatpush1.bf16.msra.mxu0 %v7115
      %7172 = vmatprep.subr.bf16.mxu0 0
      %7173 = vmatpush1.bf16.msra.mxu0 %v7116
      %7174 = vmatprep.subr.bf16.mxu0 0
      %7175 = vmatpush1.bf16.msra.mxu0 %v7117
      %7176 = vmatprep.subr.bf16.mxu0 0
      %7177 = vmatpush1.bf16.msra.mxu0 %v7118
      %7178 = vmatprep.subr.bf16.mxu0 0
      %7179 = vmatpush1.bf16.msra.mxu0 %v7119
      %7180 = vmatprep.subr.bf16.mxu0 0
      %7181 = vmatpush1.bf16.msra.mxu0 %v7120
      %7182 = vmatprep.subr.bf16.mxu0 0
      %7183 = vmatpush1.bf16.msra.mxu0 %v7121
      %7184 = vmatprep.subr.bf16.mxu0 0
      %7185 = vmatpush1.bf16.msra.mxu0 %v7122
      %7186 = vmatprep.subr.bf16.mxu0 0
      %7187 = vmatpush1.bf16.msra.mxu0 %v7123
      %7188 = vmatprep.mubr.bf16.mxu0 %v6021
      %7189 = vmatmul.mubr.bf16.gmra.mrb[0].mxu0 %v3110
      %v7190 = vpop.f32.mrb[0].mxu0
      %v7191 = vadd.f32 0.0, %v7190
      %v7192 = vpop.f32.mrb[0].mxu0
      %v7193 = vpop.f32.mrb[0].mxu0
      %v7194 = vadd.f32 0.0, %v7193
      %v7195 = vpop.f32.mrb[0].mxu0
      %7196 = vmatprep.mubr.bf16.mxu0 %v6033
      %7197 = vmatmul.mubr.bf16.gmra.mrb[0].mxu0 %v3112
      %v7198 = vpop.f32.mrb[0].mxu0
      %v7199 = vadd.f32 0.0, %v7198
      %v7200 = vpop.f32.mrb[0].mxu0
      %v7201 = vpop.f32.mrb[0].mxu0
      %v7202 = vadd.f32 0.0, %v7201
      %v7203 = vpop.f32.mrb[0].mxu0
      %7204 = vmatprep.mubr.bf16.mxu0 %v6045
      %7205 = vmatmul.mubr.bf16.gmra.mrb[0].mxu0 %v3114
      %v7206 = vpop.f32.mrb[0].mxu0
      %v7207 = vadd.f32 0.0, %v7206
      %v7208 = vpop.f32.mrb[0].mxu0
      %v7209 = vpop.f32.mrb[0].mxu0
      %v7210 = vadd.f32 0.0, %v7209
      %v7211 = vpop.f32.mrb[0].mxu0
      %7212 = vmatprep.mubr.bf16.mxu0 %v6057
      %7213 = vmatmul.mubr.bf16.gmra.mrb[0].mxu0 %v3116
      %v7214 = vpop.f32.mrb[0].mxu0
      %v7215 = vadd.f32 0.0, %v7214
      %v7216 = vpop.f32.mrb[0].mxu0
      %v7217 = vpop.f32.mrb[0].mxu0
      %v7218 = vadd.f32 0.0, %v7217
      %v7219 = vpop.f32.mrb[0].mxu0
      %7220 = vmatprep.mubr.bf16.mxu0 %v6069
      %7221 = vmatmul.mubr.bf16.gmra.mrb[0].mxu0 %v3118
      %v7222 = vpop.f32.mrb[0].mxu0
      %v7223 = vadd.f32 0.0, %v7222
      %v7224 = vpop.f32.mrb[0].mxu0
      %v7225 = vpop.f32.mrb[0].mxu0
      %v7226 = vadd.f32 0.0, %v7225
      %v7227 = vpop.f32.mrb[0].mxu0
      %7228 = vmatprep.mubr.bf16.mxu0 %v6081
      %7229 = vmatmul.mubr.bf16.gmra.mrb[0].mxu0 %v3120
      %v7230 = vpop.f32.mrb[0].mxu0
      %v7231 = vadd.f32 0.0, %v7230
      %v7232 = vpop.f32.mrb[0].mxu0
      %v7233 = vpop.f32.mrb[0].mxu0
      %v7234 = vadd.f32 0.0, %v7233
      %v7235 = vpop.f32.mrb[0].mxu0
      %7236 = vmatprep.mubr.bf16.mxu0 %v6093
      %7237 = vmatmul.mubr.bf16.gmra.mrb[0].mxu0 %v3122
      %v7238 = vpop.f32.mrb[0].mxu0
      %v7239 = vadd.f32 0.0, %v7238
      %v7240 = vpop.f32.mrb[0].mxu0
      %v7241 = vpop.f32.mrb[0].mxu0
      %v7242 = vadd.f32 0.0, %v7241
      %v7243 = vpop.f32.mrb[0].mxu0
      %7244 = vmatprep.mubr.bf16.mxu0 %v6105
      %7245 = vmatmul.mubr.bf16.gmra.mrb[0].mxu0 %v3124
      %v7246 = vpop.f32.mrb[0].mxu0
      %v7247 = vadd.f32 0.0, %v7246
      %v7248 = vpop.f32.mrb[0].mxu0
      %v7249 = vpop.f32.mrb[0].mxu0
      %v7250 = vadd.f32 0.0, %v7249
      %v7251 = vpop.f32.mrb[0].mxu0
      %7252 = vmatprep.mubr.bf16.mxu0 %v6117
      %7253 = vmatmul.mubr.bf16.gmra.mrb[0].mxu0 %v3126
      %v7254 = vpop.f32.mrb[0].mxu0
      %v7255 = vadd.f32 0.0, %v7254
      %v7256 = vpop.f32.mrb[0].mxu0
      %v7257 = vpop.f32.mrb[0].mxu0
      %v7258 = vadd.f32 0.0, %v7257
      %v7259 = vpop.f32.mrb[0].mxu0
      %7260 = vmatprep.mubr.bf16.mxu0 %v6129
      %7261 = vmatmul.mubr.bf16.gmra.mrb[0].mxu0 %v3128
      %v7262 = vpop.f32.mrb[0].mxu0
      %v7263 = vadd.f32 0.0, %v7262
      %v7264 = vpop.f32.mrb[0].mxu0
      %v7265 = vpop.f32.mrb[0].mxu0
      %v7266 = vadd.f32 0.0, %v7265
      %v7267 = vpop.f32.mrb[0].mxu0
      %7268 = vmatprep.mubr.bf16.mxu0 %v6141
      %7269 = vmatmul.mubr.bf16.gmra.mrb[0].mxu0 %v3130
      %v7270 = vpop.f32.mrb[0].mxu0
      %v7271 = vadd.f32 0.0, %v7270
      %v7272 = vpop.f32.mrb[0].mxu0
      %v7273 = vpop.f32.mrb[0].mxu0
      %v7274 = vadd.f32 0.0, %v7273
      %v7275 = vpop.f32.mrb[0].mxu0
      %7276 = vmatprep.mubr.bf16.mxu0 %v6153
      %7277 = vmatmul.mubr.bf16.gmra.mrb[0].mxu0 %v3132
      %v7278 = vpop.f32.mrb[0].mxu0
      %v7279 = vadd.f32 0.0, %v7278
      %v7280 = vpop.f32.mrb[0].mxu0
      %v7281 = vpop.f32.mrb[0].mxu0
      %v7282 = vadd.f32 0.0, %v7281
      %v7283 = vpop.f32.mrb[0].mxu0
      %7284 = vmatprep.mubr.bf16.mxu0 %v6165
      %7285 = vmatmul.mubr.bf16.gmra.mrb[0].mxu0 %v3134
      %v7286 = vpop.f32.mrb[0].mxu0
      %v7287 = vadd.f32 0.0, %v7286
      %v7288 = vpop.f32.mrb[0].mxu0
      %v7289 = vpop.f32.mrb[0].mxu0
      %v7290 = vadd.f32 0.0, %v7289
      %v7291 = vpop.f32.mrb[0].mxu0
      %7292 = vmatprep.mubr.bf16.mxu0 %v6177
      %7293 = vmatmul.mubr.bf16.gmra.mrb[0].mxu0 %v3136
      %v7294 = vpop.f32.mrb[0].mxu0
      %v7295 = vadd.f32 0.0, %v7294
      %v7296 = vpop.f32.mrb[0].mxu0
      %v7297 = vpop.f32.mrb[0].mxu0
      %v7298 = vadd.f32 0.0, %v7297
      %v7299 = vpop.f32.mrb[0].mxu0
      %7300 = vmatprep.mubr.bf16.mxu0 %v6189
      %7301 = vmatmul.mubr.bf16.gmra.mrb[0].mxu0 %v3138
      %v7302 = vpop.f32.mrb[0].mxu0
      %v7303 = vadd.f32 0.0, %v7302
      %v7304 = vpop.f32.mrb[0].mxu0
      %v7305 = vpop.f32.mrb[0].mxu0
      %v7306 = vadd.f32 0.0, %v7305
      %v7307 = vpop.f32.mrb[0].mxu0
      %7308 = vmatprep.mubr.bf16.mxu0 %v6923
      %7309 = vmatmul.mubr.bf16.gmra.mrb[0].mxu0 %v3140
      %v7310 = vpop.f32.mrb[0].mxu0
      %v7311 = vadd.f32 0.0, %v7310
      %v7312 = vpop.f32.mrb[0].mxu0
      %v7313 = vpop.f32.mrb[0].mxu0
      %v7314 = vadd.f32 0.0, %v7313
      %v7315 = vpop.f32.mrb[0].mxu0
      %7316 = vdwg.mxu0
      %7317 = vmatprep.subr.bf16.mxu0 0
      %7318 = vmatpush1.bf16.msra.mxu0 %v7124
      %7319 = vmatprep.subr.bf16.mxu0 0
      %7320 = vmatpush1.bf16.msra.mxu0 %v7125
      %7321 = vmatprep.subr.bf16.mxu0 0
      %7322 = vmatpush1.bf16.msra.mxu0 %v7126
      %7323 = vmatprep.subr.bf16.mxu0 0
      %7324 = vmatpush1.bf16.msra.mxu0 %v7127
      %7325 = vmatprep.subr.bf16.mxu0 0
      %7326 = vmatpush1.bf16.msra.mxu0 %v7128
      %7327 = vmatprep.subr.bf16.mxu0 0
      %7328 = vmatpush1.bf16.msra.mxu0 %v7129
      %7329 = vmatprep.subr.bf16.mxu0 0
      %7330 = vmatpush1.bf16.msra.mxu0 %v7130
      %7331 = vmatprep.subr.bf16.mxu0 0
      %7332 = vmatpush1.bf16.msra.mxu0 %v7131
      %7333 = vmatprep.subr.bf16.mxu0 0
      %7334 = vmatpush1.bf16.msra.mxu0 0
      %7335 = vmatprep.subr.bf16.mxu0 0
      %7336 = vmatpush1.bf16.msra.mxu0 0
      %7337 = vmatprep.subr.bf16.mxu0 0
      %7338 = vmatpush1.bf16.msra.mxu0 0
      %7339 = vmatprep.subr.bf16.mxu0 0
      %7340 = vmatpush1.bf16.msra.mxu0 0
      %7341 = vmatprep.subr.bf16.mxu0 0
      %7342 = vmatpush1.bf16.msra.mxu0 0
      %7343 = vmatprep.subr.bf16.mxu0 0
      %7344 = vmatpush1.bf16.msra.mxu0 0
      %7345 = vmatprep.subr.bf16.mxu0 0
      %7346 = vmatpush1.bf16.msra.mxu0 0
      %7347 = vmatprep.subr.bf16.mxu0 0
      %7348 = vmatpush1.bf16.msra.mxu0 0
      %7349 = vmatprep.mubr.bf16.mxu0 0
      %7350 = vmatmul.mubr.bf16.gmra.mrb[0].mxu0 %v6243
      %v7351 = vpop.f32.mrb[0].mxu0
      %v7352 = vadd.f32 %v7191, %v7351
      %v7353 = vpop.f32.mrb[0].mxu0
      %v7354 = vpop.f32.mrb[0].mxu0
      %v7355 = vadd.f32 %v7194, %v7354
      %v7356 = vpop.f32.mrb[0].mxu0
      %7357 = vmatprep.mubr.bf16.mxu0 0
      %7358 = vmatmul.mubr.bf16.gmra.mrb[0].mxu0 %v6246
      %v7359 = vpop.f32.mrb[0].mxu0
      %v7360 = vadd.f32 %v7199, %v7359
      %v7361 = vpop.f32.mrb[0].mxu0
      %v7362 = vpop.f32.mrb[0].mxu0
      %v7363 = vadd.f32 %v7202, %v7362
      %v7364 = vpop.f32.mrb[0].mxu0
      %7365 = vmatprep.mubr.bf16.mxu0 0
      %7366 = vmatmul.mubr.bf16.gmra.mrb[0].mxu0 %v6249
      %v7367 = vpop.f32.mrb[0].mxu0
      %v7368 = vadd.f32 %v7207, %v7367
      %v7369 = vpop.f32.mrb[0].mxu0
      %v7370 = vpop.f32.mrb[0].mxu0
      %v7371 = vadd.f32 %v7210, %v7370
      %v7372 = vpop.f32.mrb[0].mxu0
      %7373 = vmatprep.mubr.bf16.mxu0 0
      %7374 = vmatmul.mubr.bf16.gmra.mrb[0].mxu0 %v6252
      %v7375 = vpop.f32.mrb[0].mxu0
      %v7376 = vadd.f32 %v7215, %v7375
      %v7377 = vpop.f32.mrb[0].mxu0
      %v7378 = vpop.f32.mrb[0].mxu0
      %v7379 = vadd.f32 %v7218, %v7378
      %v7380 = vpop.f32.mrb[0].mxu0
      %7381 = vmatprep.mubr.bf16.mxu0 0
      %7382 = vmatmul.mubr.bf16.gmra.mrb[0].mxu0 %v6255
      %v7383 = vpop.f32.mrb[0].mxu0
      %v7384 = vadd.f32 %v7223, %v7383
      %v7385 = vpop.f32.mrb[0].mxu0
      %v7386 = vpop.f32.mrb[0].mxu0
      %v7387 = vadd.f32 %v7226, %v7386
      %v7388 = vpop.f32.mrb[0].mxu0
      %7389 = vmatprep.mubr.bf16.mxu0 0
      %7390 = vmatmul.mubr.bf16.gmra.mrb[0].mxu0 %v6258
      %v7391 = vpop.f32.mrb[0].mxu0
      %v7392 = vadd.f32 %v7231, %v7391
      %v7393 = vpop.f32.mrb[0].mxu0
      %v7394 = vpop.f32.mrb[0].mxu0
      %v7395 = vadd.f32 %v7234, %v7394
      %v7396 = vpop.f32.mrb[0].mxu0
      %7397 = vmatprep.mubr.bf16.mxu0 0
      %7398 = vmatmul.mubr.bf16.gmra.mrb[0].mxu0 %v6261
      %v7399 = vpop.f32.mrb[0].mxu0
      %v7400 = vadd.f32 %v7239, %v7399
      %v7401 = vpop.f32.mrb[0].mxu0
      %v7402 = vpop.f32.mrb[0].mxu0
      %v7403 = vadd.f32 %v7242, %v7402
      %v7404 = vpop.f32.mrb[0].mxu0
      %7405 = vmatprep.mubr.bf16.mxu0 0
      %7406 = vmatmul.mubr.bf16.gmra.mrb[0].mxu0 %v6264
      %v7407 = vpop.f32.mrb[0].mxu0
      %v7408 = vadd.f32 %v7247, %v7407
      %v7409 = vpop.f32.mrb[0].mxu0
      %v7410 = vpop.f32.mrb[0].mxu0
      %v7411 = vadd.f32 %v7250, %v7410
      %v7412 = vpop.f32.mrb[0].mxu0
      %7413 = vmatprep.mubr.bf16.mxu0 0
      %7414 = vmatmul.mubr.bf16.gmra.mrb[0].mxu0 %v6267
      %v7415 = vpop.f32.mrb[0].mxu0
      %v7416 = vadd.f32 %v7255, %v7415
      %v7417 = vpop.f32.mrb[0].mxu0
      %v7418 = vpop.f32.mrb[0].mxu0
      %v7419 = vadd.f32 %v7258, %v7418
      %v7420 = vpop.f32.mrb[0].mxu0
      %7421 = vmatprep.mubr.bf16.mxu0 0
      %7422 = vmatmul.mubr.bf16.gmra.mrb[0].mxu0 %v6270
      %v7423 = vpop.f32.mrb[0].mxu0
      %v7424 = vadd.f32 %v7263, %v7423
      %v7425 = vpop.f32.mrb[0].mxu0
      %v7426 = vpop.f32.mrb[0].mxu0
      %v7427 = vadd.f32 %v7266, %v7426
      %v7428 = vpop.f32.mrb[0].mxu0
      %7429 = vmatprep.mubr.bf16.mxu0 0
      %7430 = vmatmul.mubr.bf16.gmra.mrb[0].mxu0 %v6273
      %v7431 = vpop.f32.mrb[0].mxu0
      %v7432 = vadd.f32 %v7271, %v7431
      %v7433 = vpop.f32.mrb[0].mxu0
      %v7434 = vpop.f32.mrb[0].mxu0
      %v7435 = vadd.f32 %v7274, %v7434
      %v7436 = vpop.f32.mrb[0].mxu0
      %7437 = vmatprep.mubr.bf16.mxu0 0
      %7438 = vmatmul.mubr.bf16.gmra.mrb[0].mxu0 %v6276
      %v7439 = vpop.f32.mrb[0].mxu0
      %v7440 = vadd.f32 %v7279, %v7439
      %v7441 = vpop.f32.mrb[0].mxu0
      %v7442 = vpop.f32.mrb[0].mxu0
      %v7443 = vadd.f32 %v7282, %v7442
      %v7444 = vpop.f32.mrb[0].mxu0
      %7445 = vmatprep.mubr.bf16.mxu0 0
      %7446 = vmatmul.mubr.bf16.gmra.mrb[0].mxu0 %v6279
      %v7447 = vpop.f32.mrb[0].mxu0
      %v7448 = vadd.f32 %v7287, %v7447
      %v7449 = vpop.f32.mrb[0].mxu0
      %v7450 = vpop.f32.mrb[0].mxu0
      %v7451 = vadd.f32 %v7290, %v7450
      %v7452 = vpop.f32.mrb[0].mxu0
      %7453 = vmatprep.mubr.bf16.mxu0 0
      %7454 = vmatmul.mubr.bf16.gmra.mrb[0].mxu0 %v6282
      %v7455 = vpop.f32.mrb[0].mxu0
      %v7456 = vadd.f32 %v7295, %v7455
      %v7457 = vpop.f32.mrb[0].mxu0
      %v7458 = vpop.f32.mrb[0].mxu0
      %v7459 = vadd.f32 %v7298, %v7458
      %v7460 = vpop.f32.mrb[0].mxu0
      %7461 = vmatprep.mubr.bf16.mxu0 0
      %7462 = vmatmul.mubr.bf16.gmra.mrb[0].mxu0 %v6285
      %v7463 = vpop.f32.mrb[0].mxu0
      %v7464 = vadd.f32 %v7303, %v7463
      %v7465 = vpop.f32.mrb[0].mxu0
      %v7466 = vpop.f32.mrb[0].mxu0
      %v7467 = vadd.f32 %v7306, %v7466
      %v7468 = vpop.f32.mrb[0].mxu0
      %7469 = vmatprep.mubr.bf16.mxu0 0
      %7470 = vmatmul.mubr.bf16.gmra.mrb[0].mxu0 %v6929
      %v7471 = vpop.f32.mrb[0].mxu0
      %v7472 = vadd.f32 %v7311, %v7471
      %v7473 = vpop.f32.mrb[0].mxu0
      %v7474 = vpop.f32.mrb[0].mxu0
      %v7475 = vadd.f32 %v7314, %v7474
      %v7476 = vpop.f32.mrb[0].mxu0
      %7477 = vdwg.mxu0
      %v7478 = vadd.f32 %v6931, %v7352
      %v7479 = vadd.f32 %v6932, %v7355
      %v7480 = vadd.f32 %v6933, %v7360
      %v7481 = vadd.f32 %v6934, %v7363
      %v7482 = vadd.f32 %v6935, %v7368
      %v7483 = vadd.f32 %v6936, %v7371
      %v7484 = vadd.f32 %v6937, %v7376
      %v7485 = vadd.f32 %v6938, %v7379
      %v7486 = vadd.f32 %v6939, %v7384
      %v7487 = vadd.f32 %v6940, %v7387
      %v7488 = vadd.f32 %v6941, %v7392
      %v7489 = vadd.f32 %v6942, %v7395
      %v7490 = vadd.f32 %v6943, %v7400
      %v7491 = vadd.f32 %v6944, %v7403
      %v7492 = vadd.f32 %v6945, %v7408
      %v7493 = vadd.f32 %v6946, %v7411
      %v7494 = vadd.f32 %v6947, %v7416
      %v7495 = vadd.f32 %v6948, %v7419
      %v7496 = vadd.f32 %v6949, %v7424
      %v7497 = vadd.f32 %v6950, %v7427
      %v7498 = vadd.f32 %v6951, %v7432
      %v7499 = vadd.f32 %v6952, %v7435
      %v7500 = vadd.f32 %v6953, %v7440
      %v7501 = vadd.f32 %v6954, %v7443
      %v7502 = vadd.f32 %v6955, %v7448
      %v7503 = vadd.f32 %v6956, %v7451
      %v7504 = vadd.f32 %v6957, %v7456
      %v7505 = vadd.f32 %v6958, %v7459
      %v7506 = vadd.f32 %v6959, %v7464
      %v7507 = vadd.f32 %v6960, %v7467
      %v7508 = vadd.f32 %v6961, %v7472
      %v7509 = vadd.f32 %v6962, %v7475
      %7510 = vst [vmem:[#allocation2] sm:$0xff] %v7478
      %7511 = vst [vmem:[#allocation2 + $0x8] sm:$0xff] %v7479
      %7512 = vst [vmem:[#allocation2 + $0x10] sm:$0xff] %v7480
      %7513 = vst [vmem:[#allocation2 + $0x18] sm:$0xff] %v7481
      %7514 = vst [vmem:[#allocation2 + $0x20] sm:$0xff] %v7482
      %7515 = vst [vmem:[#allocation2 + $0x28] sm:$0xff] %v7483
      %7516 = vst [vmem:[#allocation2 + $0x30] sm:$0xff] %v7484
      %7517 = vst [vmem:[#allocation2 + $0x38] sm:$0xff] %v7485
      %7518 = vst [vmem:[#allocation2 + $0x40] sm:$0xff] %v7486
      %7519 = vst [vmem:[#allocation2 + $0x48] sm:$0xff] %v7487
      %7520 = vst [vmem:[#allocation2 + $0x50] sm:$0xff] %v7488
      %7521 = vst [vmem:[#allocation2 + $0x58] sm:$0xff] %v7489
      %7522 = vst [vmem:[#allocation2 + $0x60] sm:$0xff] %v7490
      %7523 = vst [vmem:[#allocation2 + $0x68] sm:$0xff] %v7491
      %7524 = vst [vmem:[#allocation2 + $0x70] sm:$0xff] %v7492
      %7525 = vst [vmem:[#allocation2 + $0x78] sm:$0xff] %v7493
      %7526 = vst [vmem:[#allocation2 + $0x80] sm:$0xff] %v7494
      %7527 = vst [vmem:[#allocation2 + $0x88] sm:$0xff] %v7495
      %7528 = vst [vmem:[#allocation2 + $0x90] sm:$0xff] %v7496
      %7529 = vst [vmem:[#allocation2 + $0x98] sm:$0xff] %v7497
      %7530 = vst [vmem:[#allocation2 + $0xa0] sm:$0xff] %v7498
      %7531 = vst [vmem:[#allocation2 + $0xa8] sm:$0xff] %v7499
      %7532 = vst [vmem:[#allocation2 + $0xb0] sm:$0xff] %v7500
      %7533 = vst [vmem:[#allocation2 + $0xb8] sm:$0xff] %v7501
      %7534 = vst [vmem:[#allocation2 + $0xc0] sm:$0xff] %v7502
      %7535 = vst [vmem:[#allocation2 + $0xc8] sm:$0xff] %v7503
      %7536 = vst [vmem:[#allocation2 + $0xd0] sm:$0xff] %v7504
      %7537 = vst [vmem:[#allocation2 + $0xd8] sm:$0xff] %v7505
      %7538 = vst [vmem:[#allocation2 + $0xe0] sm:$0xff] %v7506
      %7539 = vst [vmem:[#allocation2 + $0xe8] sm:$0xff] %v7507
      %7540 = vst [vmem:[#allocation2 + $0xf0] sm:$0xff] %v7508
      %7541 = vst [vmem:[#allocation2 + $0xf8] sm:$0xff] %v7509
      %v7543 = vshrl.u32 %v3142, 16
      %v7545 = vshll.u32 %v3142, 16
      %v7547 = vrot.slane %v7545, 1
      %v7548 = vor.u32 %v7543, %v7547
      %v7550 = vshll.u32 %v3143, 16
      %v7552 = vrot.slane %v7550, 1
      %v7553 = vsel %vm3176, %v7548, %v7552
      %v7557 = vrot.slane %v3142, 1
      %v7558 = vrot.slane %v3143, 1
      %v7559 = vsel %vm3417, %v7557, %v7558
      %v7561 = vld [vmem:[#allocation2] sm:$0xff]
      %v7562 = vld [vmem:[#allocation2 + $0x8] sm:$0xff]
      %v7563 = vld [vmem:[#allocation2 + $0x10] sm:$0xff]
      %v7564 = vld [vmem:[#allocation2 + $0x18] sm:$0xff]
      %v7565 = vld [vmem:[#allocation2 + $0x20] sm:$0xff]
      %v7566 = vld [vmem:[#allocation2 + $0x28] sm:$0xff]
      %v7567 = vld [vmem:[#allocation2 + $0x30] sm:$0xff]
      %v7568 = vld [vmem:[#allocation2 + $0x38] sm:$0xff]
      %v7569 = vld [vmem:[#allocation2 + $0x40] sm:$0xff]
      %v7570 = vld [vmem:[#allocation2 + $0x48] sm:$0xff]
      %v7571 = vld [vmem:[#allocation2 + $0x50] sm:$0xff]
      %v7572 = vld [vmem:[#allocation2 + $0x58] sm:$0xff]
      %v7573 = vld [vmem:[#allocation2 + $0x60] sm:$0xff]
      %v7574 = vld [vmem:[#allocation2 + $0x68] sm:$0xff]
      %v7575 = vld [vmem:[#allocation2 + $0x70] sm:$0xff]
      %v7576 = vld [vmem:[#allocation2 + $0x78] sm:$0xff]
      %v7577 = vld [vmem:[#allocation2 + $0x80] sm:$0xff]
      %v7578 = vld [vmem:[#allocation2 + $0x88] sm:$0xff]
      %v7579 = vld [vmem:[#allocation2 + $0x90] sm:$0xff]
      %v7580 = vld [vmem:[#allocation2 + $0x98] sm:$0xff]
      %v7581 = vld [vmem:[#allocation2 + $0xa0] sm:$0xff]
      %v7582 = vld [vmem:[#allocation2 + $0xa8] sm:$0xff]
      %v7583 = vld [vmem:[#allocation2 + $0xb0] sm:$0xff]
      %v7584 = vld [vmem:[#allocation2 + $0xb8] sm:$0xff]
      %v7585 = vld [vmem:[#allocation2 + $0xc0] sm:$0xff]
      %v7586 = vld [vmem:[#allocation2 + $0xc8] sm:$0xff]
      %v7587 = vld [vmem:[#allocation2 + $0xd0] sm:$0xff]
      %v7588 = vld [vmem:[#allocation2 + $0xd8] sm:$0xff]
      %v7589 = vld [vmem:[#allocation2 + $0xe0] sm:$0xff]
      %v7590 = vld [vmem:[#allocation2 + $0xe8] sm:$0xff]
      %v7591 = vld [vmem:[#allocation2 + $0xf0] sm:$0xff]
      %v7592 = vld [vmem:[#allocation2 + $0xf8] sm:$0xff]
      %s7593 = scalar_lea.vmem %s11, 384
      %v7594 = vld [vmem:[%s7593] sm:$0xf]
      %v7595 = vld [vmem:[%s7593 + $0x4] sm:$0xf]
      %v7596 = vld [vmem:[%s7593 + $0x8] sm:$0xf]
      %v7597 = vld [vmem:[%s7593 + $0xc] sm:$0xf]
      %v7598 = vld [vmem:[%s7593 + $0x10] sm:$0xf]
      %v7599 = vld [vmem:[%s7593 + $0x14] sm:$0xf]
      %v7600 = vld [vmem:[%s7593 + $0x18] sm:$0xf]
      %v7601 = vld [vmem:[%s7593 + $0x1c] sm:$0xf]
      %v7602 = vld [vmem:[%s7593 + $0x20] sm:$0xf]
      %v7603 = vld [vmem:[%s7593 + $0x24] sm:$0xf]
      %v7604 = vld [vmem:[%s7593 + $0x28] sm:$0xf]
      %v7605 = vld [vmem:[%s7593 + $0x2c] sm:$0xf]
      %v7606 = vld [vmem:[%s7593 + $0x30] sm:$0xf]
      %v7607 = vld [vmem:[%s7593 + $0x34] sm:$0xf]
      %v7608 = vld [vmem:[%s7593 + $0x38] sm:$0xf]
      %v7609 = vld [vmem:[%s7593 + $0x3c] sm:$0xf]
      %v7610 = vld [vmem:[%s7593 + $0x40] sm:$0xf]
      %v7611 = vld [vmem:[%s7593 + $0x44] sm:$0xf]
      %v7612 = vld [vmem:[%s7593 + $0x48] sm:$0xf]
      %v7613 = vld [vmem:[%s7593 + $0x4c] sm:$0xf]
      %v7614 = vld [vmem:[%s7593 + $0x50] sm:$0xf]
      %v7615 = vld [vmem:[%s7593 + $0x54] sm:$0xf]
      %v7616 = vld [vmem:[%s7593 + $0x58] sm:$0xf]
      %v7617 = vld [vmem:[%s7593 + $0x5c] sm:$0xf]
      %v7618 = vld [vmem:[%s7593 + $0x60] sm:$0xf]
      %v7619 = vld [vmem:[%s7593 + $0x64] sm:$0xf]
      %v7620 = vld [vmem:[%s7593 + $0x68] sm:$0xf]
      %v7621 = vld [vmem:[%s7593 + $0x6c] sm:$0xf]
      %v7622 = vld [vmem:[%s7593 + $0x70] sm:$0xf]
      %v7623 = vld [vmem:[%s7593 + $0x74] sm:$0xf]
      %v7624 = vld [vmem:[%s7593 + $0x78] sm:$0xf]
      %v7625 = vld [vmem:[%s7593 + $0x7c] sm:$0xf]
      %v7626 = vld [vmem:[%s7593 + $0x80] sm:$0xf]
      %v7627 = vld [vmem:[%s7593 + $0x84] sm:$0xf]
      %v7628 = vld [vmem:[%s7593 + $0x88] sm:$0xf]
      %v7629 = vld [vmem:[%s7593 + $0x8c] sm:$0xf]
      %v7630 = vld [vmem:[%s7593 + $0x90] sm:$0xf]
      %v7631 = vld [vmem:[%s7593 + $0x94] sm:$0xf]
      %v7632 = vld [vmem:[%s7593 + $0x98] sm:$0xf]
      %v7633 = vld [vmem:[%s7593 + $0x9c] sm:$0xf]
      %v7634 = vld [vmem:[%s7593 + $0xa0] sm:$0xf]
      %v7635 = vld [vmem:[%s7593 + $0xa4] sm:$0xf]
      %v7636 = vld [vmem:[%s7593 + $0xa8] sm:$0xf]
      %v7637 = vld [vmem:[%s7593 + $0xac] sm:$0xf]
      %v7638 = vld [vmem:[%s7593 + $0xb0] sm:$0xf]
      %v7639 = vld [vmem:[%s7593 + $0xb4] sm:$0xf]
      %v7640 = vld [vmem:[%s7593 + $0xb8] sm:$0xf]
      %v7641 = vld [vmem:[%s7593 + $0xbc] sm:$0xf]
      %v7690 = vunpack.c.l.b16 %v7594
      %v7691 = vunpack.c.l.b16 %v7595
      %v7692 = vunpack.c.l.b16 %v7596
      %v7693 = vunpack.c.l.b16 %v7597
      %v7694 = vunpack.c.l.b16 %v7598
      %v7695 = vunpack.c.l.b16 %v7599
      %v7696 = vunpack.c.l.b16 %v7600
      %v7697 = vunpack.c.l.b16 %v7601
      %v7698 = vunpack.c.l.b16 %v7602
      %v7699 = vunpack.c.l.b16 %v7603
      %v7700 = vunpack.c.l.b16 %v7604
      %v7701 = vunpack.c.l.b16 %v7605
      %v7702 = vunpack.c.l.b16 %v7606
      %v7703 = vunpack.c.l.b16 %v7607
      %v7704 = vunpack.c.l.b16 %v7608
      %v7705 = vunpack.c.l.b16 %v7609
      %v7706 = vunpack.c.l.b16 %v7610
      %v7707 = vunpack.c.l.b16 %v7611
      %v7708 = vunpack.c.l.b16 %v7612
      %v7709 = vunpack.c.l.b16 %v7613
      %v7710 = vunpack.c.l.b16 %v7614
      %v7711 = vunpack.c.l.b16 %v7615
      %v7712 = vunpack.c.l.b16 %v7616
      %v7713 = vunpack.c.l.b16 %v7617
      %v7714 = vunpack.c.l.b16 %v7618
      %v7715 = vunpack.c.l.b16 %v7619
      %v7716 = vunpack.c.l.b16 %v7620
      %v7717 = vunpack.c.l.b16 %v7621
      %v7718 = vunpack.c.l.b16 %v7622
      %v7719 = vunpack.c.l.b16 %v7623
      %v7720 = vunpack.c.l.b16 %v7624
      %v7721 = vunpack.c.l.b16 %v7625
      %v7722 = vunpack.c.l.b16 %v7626
      %v7723 = vunpack.c.l.b16 %v7627
      %v7724 = vunpack.c.l.b16 %v7628
      %v7725 = vunpack.c.l.b16 %v7629
      %v7726 = vunpack.c.l.b16 %v7630
      %v7727 = vunpack.c.l.b16 %v7631
      %v7728 = vunpack.c.l.b16 %v7632
      %v7729 = vunpack.c.l.b16 %v7633
      %v7730 = vunpack.c.l.b16 %v7634
      %v7731 = vunpack.c.l.b16 %v7635
      %v7732 = vunpack.c.l.b16 %v7636
      %v7733 = vunpack.c.l.b16 %v7637
      %v7734 = vunpack.c.l.b16 %v7638
      %v7735 = vunpack.c.l.b16 %v7639
      %v7736 = vunpack.c.l.b16 %v7640
      %v7737 = vunpack.c.l.b16 %v7641
      %v7738 = vpack.c.b16 %v7691, %v7690
      %v7739 = vpack.c.b16 %v7693, %v7692
      %v7740 = vpack.c.b16 %v7695, %v7694
      %v7741 = vpack.c.b16 %v7697, %v7696
      %v7742 = vpack.c.b16 %v7699, %v7698
      %v7743 = vpack.c.b16 %v7701, %v7700
      %v7744 = vpack.c.b16 %v7703, %v7702
      %v7745 = vpack.c.b16 %v7705, %v7704
      %v7746 = vpack.c.b16 %v7707, %v7706
      %v7747 = vpack.c.b16 %v7709, %v7708
      %v7748 = vpack.c.b16 %v7711, %v7710
      %v7749 = vpack.c.b16 %v7713, %v7712
      %v7750 = vpack.c.b16 %v7715, %v7714
      %v7751 = vpack.c.b16 %v7717, %v7716
      %v7752 = vpack.c.b16 %v7719, %v7718
      %v7753 = vpack.c.b16 %v7721, %v7720
      %v7754 = vpack.c.b16 %v7723, %v7722
      %v7755 = vpack.c.b16 %v7725, %v7724
      %v7756 = vpack.c.b16 %v7727, %v7726
      %v7757 = vpack.c.b16 %v7729, %v7728
      %v7758 = vpack.c.b16 %v7731, %v7730
      %v7759 = vpack.c.b16 %v7733, %v7732
      %v7760 = vpack.c.b16 %v7735, %v7734
      %v7761 = vpack.c.b16 %v7737, %v7736
      %7786 = vmatprep.subr.bf16.mxu0 0
      %7787 = vmatpush1.bf16.msra.mxu0 %v7738
      %7788 = vmatprep.subr.bf16.mxu0 0
      %7789 = vmatpush1.bf16.msra.mxu0 %v7739
      %7790 = vmatprep.subr.bf16.mxu0 0
      %7791 = vmatpush1.bf16.msra.mxu0 %v7740
      %7792 = vmatprep.subr.bf16.mxu0 0
      %7793 = vmatpush1.bf16.msra.mxu0 %v7741
      %7794 = vmatprep.subr.bf16.mxu0 0
      %7795 = vmatpush1.bf16.msra.mxu0 %v7742
      %7796 = vmatprep.subr.bf16.mxu0 0
      %7797 = vmatpush1.bf16.msra.mxu0 %v7743
      %7798 = vmatprep.subr.bf16.mxu0 0
      %7799 = vmatpush1.bf16.msra.mxu0 %v7744
      %7800 = vmatprep.subr.bf16.mxu0 0
      %7801 = vmatpush1.bf16.msra.mxu0 %v7745
      %7802 = vmatprep.subr.bf16.mxu0 0
      %7803 = vmatpush1.bf16.msra.mxu0 %v7746
      %7804 = vmatprep.subr.bf16.mxu0 0
      %7805 = vmatpush1.bf16.msra.mxu0 %v7747
      %7806 = vmatprep.subr.bf16.mxu0 0
      %7807 = vmatpush1.bf16.msra.mxu0 %v7748
      %7808 = vmatprep.subr.bf16.mxu0 0
      %7809 = vmatpush1.bf16.msra.mxu0 %v7749
      %7810 = vmatprep.subr.bf16.mxu0 0
      %7811 = vmatpush1.bf16.msra.mxu0 %v7750
      %7812 = vmatprep.subr.bf16.mxu0 0
      %7813 = vmatpush1.bf16.msra.mxu0 %v7751
      %7814 = vmatprep.subr.bf16.mxu0 0
      %7815 = vmatpush1.bf16.msra.mxu0 %v7752
      %7816 = vmatprep.subr.bf16.mxu0 0
      %7817 = vmatpush1.bf16.msra.mxu0 %v7753
      %7818 = vmatprep.mubr.bf16.mxu0 %v6033
      %7819 = vmatmul.mubr.bf16.gmra.mrb[0].mxu0 %v3112
      %v7820 = vpop.f32.mrb[0].mxu0
      %v7821 = vadd.f32 0.0, %v7820
      %v7822 = vpop.f32.mrb[0].mxu0
      %v7823 = vpop.f32.mrb[0].mxu0
      %v7824 = vadd.f32 0.0, %v7823
      %v7825 = vpop.f32.mrb[0].mxu0
      %7826 = vmatprep.mubr.bf16.mxu0 %v6045
      %7827 = vmatmul.mubr.bf16.gmra.mrb[0].mxu0 %v3114
      %v7828 = vpop.f32.mrb[0].mxu0
      %v7829 = vadd.f32 0.0, %v7828
      %v7830 = vpop.f32.mrb[0].mxu0
      %v7831 = vpop.f32.mrb[0].mxu0
      %v7832 = vadd.f32 0.0, %v7831
      %v7833 = vpop.f32.mrb[0].mxu0
      %7834 = vmatprep.mubr.bf16.mxu0 %v6057
      %7835 = vmatmul.mubr.bf16.gmra.mrb[0].mxu0 %v3116
      %v7836 = vpop.f32.mrb[0].mxu0
      %v7837 = vadd.f32 0.0, %v7836
      %v7838 = vpop.f32.mrb[0].mxu0
      %v7839 = vpop.f32.mrb[0].mxu0
      %v7840 = vadd.f32 0.0, %v7839
      %v7841 = vpop.f32.mrb[0].mxu0
      %7842 = vmatprep.mubr.bf16.mxu0 %v6069
      %7843 = vmatmul.mubr.bf16.gmra.mrb[0].mxu0 %v3118
      %v7844 = vpop.f32.mrb[0].mxu0
      %v7845 = vadd.f32 0.0, %v7844
      %v7846 = vpop.f32.mrb[0].mxu0
      %v7847 = vpop.f32.mrb[0].mxu0
      %v7848 = vadd.f32 0.0, %v7847
      %v7849 = vpop.f32.mrb[0].mxu0
      %7850 = vmatprep.mubr.bf16.mxu0 %v6081
      %7851 = vmatmul.mubr.bf16.gmra.mrb[0].mxu0 %v3120
      %v7852 = vpop.f32.mrb[0].mxu0
      %v7853 = vadd.f32 0.0, %v7852
      %v7854 = vpop.f32.mrb[0].mxu0
      %v7855 = vpop.f32.mrb[0].mxu0
      %v7856 = vadd.f32 0.0, %v7855
      %v7857 = vpop.f32.mrb[0].mxu0
      %7858 = vmatprep.mubr.bf16.mxu0 %v6093
      %7859 = vmatmul.mubr.bf16.gmra.mrb[0].mxu0 %v3122
      %v7860 = vpop.f32.mrb[0].mxu0
      %v7861 = vadd.f32 0.0, %v7860
      %v7862 = vpop.f32.mrb[0].mxu0
      %v7863 = vpop.f32.mrb[0].mxu0
      %v7864 = vadd.f32 0.0, %v7863
      %v7865 = vpop.f32.mrb[0].mxu0
      %7866 = vmatprep.mubr.bf16.mxu0 %v6105
      %7867 = vmatmul.mubr.bf16.gmra.mrb[0].mxu0 %v3124
      %v7868 = vpop.f32.mrb[0].mxu0
      %v7869 = vadd.f32 0.0, %v7868
      %v7870 = vpop.f32.mrb[0].mxu0
      %v7871 = vpop.f32.mrb[0].mxu0
      %v7872 = vadd.f32 0.0, %v7871
      %v7873 = vpop.f32.mrb[0].mxu0
      %7874 = vmatprep.mubr.bf16.mxu0 %v6117
      %7875 = vmatmul.mubr.bf16.gmra.mrb[0].mxu0 %v3126
      %v7876 = vpop.f32.mrb[0].mxu0
      %v7877 = vadd.f32 0.0, %v7876
      %v7878 = vpop.f32.mrb[0].mxu0
      %v7879 = vpop.f32.mrb[0].mxu0
      %v7880 = vadd.f32 0.0, %v7879
      %v7881 = vpop.f32.mrb[0].mxu0
      %7882 = vmatprep.mubr.bf16.mxu0 %v6129
      %7883 = vmatmul.mubr.bf16.gmra.mrb[0].mxu0 %v3128
      %v7884 = vpop.f32.mrb[0].mxu0
      %v7885 = vadd.f32 0.0, %v7884
      %v7886 = vpop.f32.mrb[0].mxu0
      %v7887 = vpop.f32.mrb[0].mxu0
      %v7888 = vadd.f32 0.0, %v7887
      %v7889 = vpop.f32.mrb[0].mxu0
      %7890 = vmatprep.mubr.bf16.mxu0 %v6141
      %7891 = vmatmul.mubr.bf16.gmra.mrb[0].mxu0 %v3130
      %v7892 = vpop.f32.mrb[0].mxu0
      %v7893 = vadd.f32 0.0, %v7892
      %v7894 = vpop.f32.mrb[0].mxu0
      %v7895 = vpop.f32.mrb[0].mxu0
      %v7896 = vadd.f32 0.0, %v7895
      %v7897 = vpop.f32.mrb[0].mxu0
      %7898 = vmatprep.mubr.bf16.mxu0 %v6153
      %7899 = vmatmul.mubr.bf16.gmra.mrb[0].mxu0 %v3132
      %v7900 = vpop.f32.mrb[0].mxu0
      %v7901 = vadd.f32 0.0, %v7900
      %v7902 = vpop.f32.mrb[0].mxu0
      %v7903 = vpop.f32.mrb[0].mxu0
      %v7904 = vadd.f32 0.0, %v7903
      %v7905 = vpop.f32.mrb[0].mxu0
      %7906 = vmatprep.mubr.bf16.mxu0 %v6165
      %7907 = vmatmul.mubr.bf16.gmra.mrb[0].mxu0 %v3134
      %v7908 = vpop.f32.mrb[0].mxu0
      %v7909 = vadd.f32 0.0, %v7908
      %v7910 = vpop.f32.mrb[0].mxu0
      %v7911 = vpop.f32.mrb[0].mxu0
      %v7912 = vadd.f32 0.0, %v7911
      %v7913 = vpop.f32.mrb[0].mxu0
      %7914 = vmatprep.mubr.bf16.mxu0 %v6177
      %7915 = vmatmul.mubr.bf16.gmra.mrb[0].mxu0 %v3136
      %v7916 = vpop.f32.mrb[0].mxu0
      %v7917 = vadd.f32 0.0, %v7916
      %v7918 = vpop.f32.mrb[0].mxu0
      %v7919 = vpop.f32.mrb[0].mxu0
      %v7920 = vadd.f32 0.0, %v7919
      %v7921 = vpop.f32.mrb[0].mxu0
      %7922 = vmatprep.mubr.bf16.mxu0 %v6189
      %7923 = vmatmul.mubr.bf16.gmra.mrb[0].mxu0 %v3138
      %v7924 = vpop.f32.mrb[0].mxu0
      %v7925 = vadd.f32 0.0, %v7924
      %v7926 = vpop.f32.mrb[0].mxu0
      %v7927 = vpop.f32.mrb[0].mxu0
      %v7928 = vadd.f32 0.0, %v7927
      %v7929 = vpop.f32.mrb[0].mxu0
      %7930 = vmatprep.mubr.bf16.mxu0 %v6923
      %7931 = vmatmul.mubr.bf16.gmra.mrb[0].mxu0 %v3140
      %v7932 = vpop.f32.mrb[0].mxu0
      %v7933 = vadd.f32 0.0, %v7932
      %v7934 = vpop.f32.mrb[0].mxu0
      %v7935 = vpop.f32.mrb[0].mxu0
      %v7936 = vadd.f32 0.0, %v7935
      %v7937 = vpop.f32.mrb[0].mxu0
      %7938 = vmatprep.mubr.bf16.mxu0 %v7553
      %7939 = vmatmul.mubr.bf16.gmra.mrb[0].mxu0 %v3142
      %v7940 = vpop.f32.mrb[0].mxu0
      %v7941 = vadd.f32 0.0, %v7940
      %v7942 = vpop.f32.mrb[0].mxu0
      %v7943 = vpop.f32.mrb[0].mxu0
      %v7944 = vadd.f32 0.0, %v7943
      %v7945 = vpop.f32.mrb[0].mxu0
      %7946 = vdwg.mxu0
      %7947 = vmatprep.subr.bf16.mxu0 0
      %7948 = vmatpush1.bf16.msra.mxu0 %v7754
      %7949 = vmatprep.subr.bf16.mxu0 0
      %7950 = vmatpush1.bf16.msra.mxu0 %v7755
      %7951 = vmatprep.subr.bf16.mxu0 0
      %7952 = vmatpush1.bf16.msra.mxu0 %v7756
      %7953 = vmatprep.subr.bf16.mxu0 0
      %7954 = vmatpush1.bf16.msra.mxu0 %v7757
      %7955 = vmatprep.subr.bf16.mxu0 0
      %7956 = vmatpush1.bf16.msra.mxu0 %v7758
      %7957 = vmatprep.subr.bf16.mxu0 0
      %7958 = vmatpush1.bf16.msra.mxu0 %v7759
      %7959 = vmatprep.subr.bf16.mxu0 0
      %7960 = vmatpush1.bf16.msra.mxu0 %v7760
      %7961 = vmatprep.subr.bf16.mxu0 0
      %7962 = vmatpush1.bf16.msra.mxu0 %v7761
      %7963 = vmatprep.subr.bf16.mxu0 0
      %7964 = vmatpush1.bf16.msra.mxu0 0
      %7965 = vmatprep.subr.bf16.mxu0 0
      %7966 = vmatpush1.bf16.msra.mxu0 0
      %7967 = vmatprep.subr.bf16.mxu0 0
      %7968 = vmatpush1.bf16.msra.mxu0 0
      %7969 = vmatprep.subr.bf16.mxu0 0
      %7970 = vmatpush1.bf16.msra.mxu0 0
      %7971 = vmatprep.subr.bf16.mxu0 0
      %7972 = vmatpush1.bf16.msra.mxu0 0
      %7973 = vmatprep.subr.bf16.mxu0 0
      %7974 = vmatpush1.bf16.msra.mxu0 0
      %7975 = vmatprep.subr.bf16.mxu0 0
      %7976 = vmatpush1.bf16.msra.mxu0 0
      %7977 = vmatprep.subr.bf16.mxu0 0
      %7978 = vmatpush1.bf16.msra.mxu0 0
      %7979 = vmatprep.mubr.bf16.mxu0 0
      %7980 = vmatmul.mubr.bf16.gmra.mrb[0].mxu0 %v6246
      %v7981 = vpop.f32.mrb[0].mxu0
      %v7982 = vadd.f32 %v7821, %v7981
      %v7983 = vpop.f32.mrb[0].mxu0
      %v7984 = vpop.f32.mrb[0].mxu0
      %v7985 = vadd.f32 %v7824, %v7984
      %v7986 = vpop.f32.mrb[0].mxu0
      %7987 = vmatprep.mubr.bf16.mxu0 0
      %7988 = vmatmul.mubr.bf16.gmra.mrb[0].mxu0 %v6249
      %v7989 = vpop.f32.mrb[0].mxu0
      %v7990 = vadd.f32 %v7829, %v7989
      %v7991 = vpop.f32.mrb[0].mxu0
      %v7992 = vpop.f32.mrb[0].mxu0
      %v7993 = vadd.f32 %v7832, %v7992
      %v7994 = vpop.f32.mrb[0].mxu0
      %7995 = vmatprep.mubr.bf16.mxu0 0
      %7996 = vmatmul.mubr.bf16.gmra.mrb[0].mxu0 %v6252
      %v7997 = vpop.f32.mrb[0].mxu0
      %v7998 = vadd.f32 %v7837, %v7997
      %v7999 = vpop.f32.mrb[0].mxu0
      %v8000 = vpop.f32.mrb[0].mxu0
      %v8001 = vadd.f32 %v7840, %v8000
      %v8002 = vpop.f32.mrb[0].mxu0
      %8003 = vmatprep.mubr.bf16.mxu0 0
      %8004 = vmatmul.mubr.bf16.gmra.mrb[0].mxu0 %v6255
      %v8005 = vpop.f32.mrb[0].mxu0
      %v8006 = vadd.f32 %v7845, %v8005
      %v8007 = vpop.f32.mrb[0].mxu0
      %v8008 = vpop.f32.mrb[0].mxu0
      %v8009 = vadd.f32 %v7848, %v8008
      %v8010 = vpop.f32.mrb[0].mxu0
      %8011 = vmatprep.mubr.bf16.mxu0 0
      %8012 = vmatmul.mubr.bf16.gmra.mrb[0].mxu0 %v6258
      %v8013 = vpop.f32.mrb[0].mxu0
      %v8014 = vadd.f32 %v7853, %v8013
      %v8015 = vpop.f32.mrb[0].mxu0
      %v8016 = vpop.f32.mrb[0].mxu0
      %v8017 = vadd.f32 %v7856, %v8016
      %v8018 = vpop.f32.mrb[0].mxu0
      %8019 = vmatprep.mubr.bf16.mxu0 0
      %8020 = vmatmul.mubr.bf16.gmra.mrb[0].mxu0 %v6261
      %v8021 = vpop.f32.mrb[0].mxu0
      %v8022 = vadd.f32 %v7861, %v8021
      %v8023 = vpop.f32.mrb[0].mxu0
      %v8024 = vpop.f32.mrb[0].mxu0
      %v8025 = vadd.f32 %v7864, %v8024
      %v8026 = vpop.f32.mrb[0].mxu0
      %8027 = vmatprep.mubr.bf16.mxu0 0
      %8028 = vmatmul.mubr.bf16.gmra.mrb[0].mxu0 %v6264
      %v8029 = vpop.f32.mrb[0].mxu0
      %v8030 = vadd.f32 %v7869, %v8029
      %v8031 = vpop.f32.mrb[0].mxu0
      %v8032 = vpop.f32.mrb[0].mxu0
      %v8033 = vadd.f32 %v7872, %v8032
      %v8034 = vpop.f32.mrb[0].mxu0
      %8035 = vmatprep.mubr.bf16.mxu0 0
      %8036 = vmatmul.mubr.bf16.gmra.mrb[0].mxu0 %v6267
      %v8037 = vpop.f32.mrb[0].mxu0
      %v8038 = vadd.f32 %v7877, %v8037
      %v8039 = vpop.f32.mrb[0].mxu0
      %v8040 = vpop.f32.mrb[0].mxu0
      %v8041 = vadd.f32 %v7880, %v8040
      %v8042 = vpop.f32.mrb[0].mxu0
      %8043 = vmatprep.mubr.bf16.mxu0 0
      %8044 = vmatmul.mubr.bf16.gmra.mrb[0].mxu0 %v6270
      %v8045 = vpop.f32.mrb[0].mxu0
      %v8046 = vadd.f32 %v7885, %v8045
      %v8047 = vpop.f32.mrb[0].mxu0
      %v8048 = vpop.f32.mrb[0].mxu0
      %v8049 = vadd.f32 %v7888, %v8048
      %v8050 = vpop.f32.mrb[0].mxu0
      %8051 = vmatprep.mubr.bf16.mxu0 0
      %8052 = vmatmul.mubr.bf16.gmra.mrb[0].mxu0 %v6273
      %v8053 = vpop.f32.mrb[0].mxu0
      %v8054 = vadd.f32 %v7893, %v8053
      %v8055 = vpop.f32.mrb[0].mxu0
      %v8056 = vpop.f32.mrb[0].mxu0
      %v8057 = vadd.f32 %v7896, %v8056
      %v8058 = vpop.f32.mrb[0].mxu0
      %8059 = vmatprep.mubr.bf16.mxu0 0
      %8060 = vmatmul.mubr.bf16.gmra.mrb[0].mxu0 %v6276
      %v8061 = vpop.f32.mrb[0].mxu0
      %v8062 = vadd.f32 %v7901, %v8061
      %v8063 = vpop.f32.mrb[0].mxu0
      %v8064 = vpop.f32.mrb[0].mxu0
      %v8065 = vadd.f32 %v7904, %v8064
      %v8066 = vpop.f32.mrb[0].mxu0
      %8067 = vmatprep.mubr.bf16.mxu0 0
      %8068 = vmatmul.mubr.bf16.gmra.mrb[0].mxu0 %v6279
      %v8069 = vpop.f32.mrb[0].mxu0
      %v8070 = vadd.f32 %v7909, %v8069
      %v8071 = vpop.f32.mrb[0].mxu0
      %v8072 = vpop.f32.mrb[0].mxu0
      %v8073 = vadd.f32 %v7912, %v8072
      %v8074 = vpop.f32.mrb[0].mxu0
      %8075 = vmatprep.mubr.bf16.mxu0 0
      %8076 = vmatmul.mubr.bf16.gmra.mrb[0].mxu0 %v6282
      %v8077 = vpop.f32.mrb[0].mxu0
      %v8078 = vadd.f32 %v7917, %v8077
      %v8079 = vpop.f32.mrb[0].mxu0
      %v8080 = vpop.f32.mrb[0].mxu0
      %v8081 = vadd.f32 %v7920, %v8080
      %v8082 = vpop.f32.mrb[0].mxu0
      %8083 = vmatprep.mubr.bf16.mxu0 0
      %8084 = vmatmul.mubr.bf16.gmra.mrb[0].mxu0 %v6285
      %v8085 = vpop.f32.mrb[0].mxu0
      %v8086 = vadd.f32 %v7925, %v8085
      %v8087 = vpop.f32.mrb[0].mxu0
      %v8088 = vpop.f32.mrb[0].mxu0
      %v8089 = vadd.f32 %v7928, %v8088
      %v8090 = vpop.f32.mrb[0].mxu0
      %8091 = vmatprep.mubr.bf16.mxu0 0
      %8092 = vmatmul.mubr.bf16.gmra.mrb[0].mxu0 %v6929
      %v8093 = vpop.f32.mrb[0].mxu0
      %v8094 = vadd.f32 %v7933, %v8093
      %v8095 = vpop.f32.mrb[0].mxu0
      %v8096 = vpop.f32.mrb[0].mxu0
      %v8097 = vadd.f32 %v7936, %v8096
      %v8098 = vpop.f32.mrb[0].mxu0
      %8099 = vmatprep.mubr.bf16.mxu0 0
      %8100 = vmatmul.mubr.bf16.gmra.mrb[0].mxu0 %v7559
      %v8101 = vpop.f32.mrb[0].mxu0
      %v8102 = vadd.f32 %v7941, %v8101
      %v8103 = vpop.f32.mrb[0].mxu0
      %v8104 = vpop.f32.mrb[0].mxu0
      %v8105 = vadd.f32 %v7944, %v8104
      %v8106 = vpop.f32.mrb[0].mxu0
      %8107 = vdwg.mxu0
      %v8108 = vadd.f32 %v7561, %v7982
      %v8109 = vadd.f32 %v7562, %v7985
      %v8110 = vadd.f32 %v7563, %v7990
      %v8111 = vadd.f32 %v7564, %v7993
      %v8112 = vadd.f32 %v7565, %v7998
      %v8113 = vadd.f32 %v7566, %v8001
      %v8114 = vadd.f32 %v7567, %v8006
      %v8115 = vadd.f32 %v7568, %v8009
      %v8116 = vadd.f32 %v7569, %v8014
      %v8117 = vadd.f32 %v7570, %v8017
      %v8118 = vadd.f32 %v7571, %v8022
      %v8119 = vadd.f32 %v7572, %v8025
      %v8120 = vadd.f32 %v7573, %v8030
      %v8121 = vadd.f32 %v7574, %v8033
      %v8122 = vadd.f32 %v7575, %v8038
      %v8123 = vadd.f32 %v7576, %v8041
      %v8124 = vadd.f32 %v7577, %v8046
      %v8125 = vadd.f32 %v7578, %v8049
      %v8126 = vadd.f32 %v7579, %v8054
      %v8127 = vadd.f32 %v7580, %v8057
      %v8128 = vadd.f32 %v7581, %v8062
      %v8129 = vadd.f32 %v7582, %v8065
      %v8130 = vadd.f32 %v7583, %v8070
      %v8131 = vadd.f32 %v7584, %v8073
      %v8132 = vadd.f32 %v7585, %v8078
      %v8133 = vadd.f32 %v7586, %v8081
      %v8134 = vadd.f32 %v7587, %v8086
      %v8135 = vadd.f32 %v7588, %v8089
      %v8136 = vadd.f32 %v7589, %v8094
      %v8137 = vadd.f32 %v7590, %v8097
      %v8138 = vadd.f32 %v7591, %v8102
      %v8139 = vadd.f32 %v7592, %v8105
      %8140 = vst [vmem:[#allocation2] sm:$0xff] %v8108
      %8141 = vst [vmem:[#allocation2 + $0x8] sm:$0xff] %v8109
      %8142 = vst [vmem:[#allocation2 + $0x10] sm:$0xff] %v8110
      %8143 = vst [vmem:[#allocation2 + $0x18] sm:$0xff] %v8111
      %8144 = vst [vmem:[#allocation2 + $0x20] sm:$0xff] %v8112
      %8145 = vst [vmem:[#allocation2 + $0x28] sm:$0xff] %v8113
      %8146 = vst [vmem:[#allocation2 + $0x30] sm:$0xff] %v8114
      %8147 = vst [vmem:[#allocation2 + $0x38] sm:$0xff] %v8115
      %8148 = vst [vmem:[#allocation2 + $0x40] sm:$0xff] %v8116
      %8149 = vst [vmem:[#allocation2 + $0x48] sm:$0xff] %v8117
      %8150 = vst [vmem:[#allocation2 + $0x50] sm:$0xff] %v8118
      %8151 = vst [vmem:[#allocation2 + $0x58] sm:$0xff] %v8119
      %8152 = vst [vmem:[#allocation2 + $0x60] sm:$0xff] %v8120
      %8153 = vst [vmem:[#allocation2 + $0x68] sm:$0xff] %v8121
      %8154 = vst [vmem:[#allocation2 + $0x70] sm:$0xff] %v8122
      %8155 = vst [vmem:[#allocation2 + $0x78] sm:$0xff] %v8123
      %8156 = vst [vmem:[#allocation2 + $0x80] sm:$0xff] %v8124
      %8157 = vst [vmem:[#allocation2 + $0x88] sm:$0xff] %v8125
      %8158 = vst [vmem:[#allocation2 + $0x90] sm:$0xff] %v8126
      %8159 = vst [vmem:[#allocation2 + $0x98] sm:$0xff] %v8127
      %8160 = vst [vmem:[#allocation2 + $0xa0] sm:$0xff] %v8128
      %8161 = vst [vmem:[#allocation2 + $0xa8] sm:$0xff] %v8129
      %8162 = vst [vmem:[#allocation2 + $0xb0] sm:$0xff] %v8130
      %8163 = vst [vmem:[#allocation2 + $0xb8] sm:$0xff] %v8131
      %8164 = vst [vmem:[#allocation2 + $0xc0] sm:$0xff] %v8132
      %8165 = vst [vmem:[#allocation2 + $0xc8] sm:$0xff] %v8133
      %8166 = vst [vmem:[#allocation2 + $0xd0] sm:$0xff] %v8134
      %8167 = vst [vmem:[#allocation2 + $0xd8] sm:$0xff] %v8135
      %8168 = vst [vmem:[#allocation2 + $0xe0] sm:$0xff] %v8136
      %8169 = vst [vmem:[#allocation2 + $0xe8] sm:$0xff] %v8137
      %8170 = vst [vmem:[#allocation2 + $0xf0] sm:$0xff] %v8138
      %8171 = vst [vmem:[#allocation2 + $0xf8] sm:$0xff] %v8139
      %v8172 = vld [vmem:[#allocation2] sm:$0xff]
      %v8173 = vld [vmem:[#allocation2 + $0x8] sm:$0xff]
      %v8174 = vld [vmem:[#allocation2 + $0x10] sm:$0xff]
      %v8175 = vld [vmem:[#allocation2 + $0x18] sm:$0xff]
      %v8176 = vld [vmem:[#allocation2 + $0x20] sm:$0xff]
      %v8177 = vld [vmem:[#allocation2 + $0x28] sm:$0xff]
      %v8178 = vld [vmem:[#allocation2 + $0x30] sm:$0xff]
      %v8179 = vld [vmem:[#allocation2 + $0x38] sm:$0xff]
      %v8180 = vld [vmem:[#allocation2 + $0x40] sm:$0xff]
      %v8181 = vld [vmem:[#allocation2 + $0x48] sm:$0xff]
      %v8182 = vld [vmem:[#allocation2 + $0x50] sm:$0xff]
      %v8183 = vld [vmem:[#allocation2 + $0x58] sm:$0xff]
      %v8184 = vld [vmem:[#allocation2 + $0x60] sm:$0xff]
      %v8185 = vld [vmem:[#allocation2 + $0x68] sm:$0xff]
      %v8186 = vld [vmem:[#allocation2 + $0x70] sm:$0xff]
      %v8187 = vld [vmem:[#allocation2 + $0x78] sm:$0xff]
      %v8188 = vld [vmem:[#allocation2 + $0x80] sm:$0xff]
      %v8189 = vld [vmem:[#allocation2 + $0x88] sm:$0xff]
      %v8190 = vld [vmem:[#allocation2 + $0x90] sm:$0xff]
      %v8191 = vld [vmem:[#allocation2 + $0x98] sm:$0xff]
      %v8192 = vld [vmem:[#allocation2 + $0xa0] sm:$0xff]
      %v8193 = vld [vmem:[#allocation2 + $0xa8] sm:$0xff]
      %v8194 = vld [vmem:[#allocation2 + $0xb0] sm:$0xff]
      %v8195 = vld [vmem:[#allocation2 + $0xb8] sm:$0xff]
      %v8196 = vld [vmem:[#allocation2 + $0xc0] sm:$0xff]
      %v8197 = vld [vmem:[#allocation2 + $0xc8] sm:$0xff]
      %v8198 = vld [vmem:[#allocation2 + $0xd0] sm:$0xff]
      %v8199 = vld [vmem:[#allocation2 + $0xd8] sm:$0xff]
      %v8200 = vld [vmem:[#allocation2 + $0xe0] sm:$0xff]
      %v8201 = vld [vmem:[#allocation2 + $0xe8] sm:$0xff]
      %v8202 = vld [vmem:[#allocation2 + $0xf0] sm:$0xff]
      %v8203 = vld [vmem:[#allocation2 + $0xf8] sm:$0xff]
      %v8204 = vld [vmem:[%s12] sm:$0x1]
      %v8206 = vlaneseq
      %v8207 = vshrl.u32 %v8206, 7
      %v8208 = vsub.s32 0, %v8207
      %v8209 = vrot.slane %v8204, %v8208
      %v8211 = vmul.f32 %v8172, %v8209
      %v8212 = vmul.f32 %v8173, %v8209
      %v8213 = vmul.f32 %v8174, %v8209
      %v8214 = vmul.f32 %v8175, %v8209
      %v8215 = vmul.f32 %v8176, %v8209
      %v8216 = vmul.f32 %v8177, %v8209
      %v8217 = vmul.f32 %v8178, %v8209
      %v8218 = vmul.f32 %v8179, %v8209
      %v8219 = vmul.f32 %v8180, %v8209
      %v8220 = vmul.f32 %v8181, %v8209
      %v8221 = vmul.f32 %v8182, %v8209
      %v8222 = vmul.f32 %v8183, %v8209
      %v8223 = vmul.f32 %v8184, %v8209
      %v8224 = vmul.f32 %v8185, %v8209
      %v8225 = vmul.f32 %v8186, %v8209
      %v8226 = vmul.f32 %v8187, %v8209
      %v8227 = vmul.f32 %v8188, %v8209
      %v8228 = vmul.f32 %v8189, %v8209
      %v8229 = vmul.f32 %v8190, %v8209
      %v8230 = vmul.f32 %v8191, %v8209
      %v8231 = vmul.f32 %v8192, %v8209
      %v8232 = vmul.f32 %v8193, %v8209
      %v8233 = vmul.f32 %v8194, %v8209
      %v8234 = vmul.f32 %v8195, %v8209
      %v8235 = vmul.f32 %v8196, %v8209
      %v8236 = vmul.f32 %v8197, %v8209
      %v8237 = vmul.f32 %v8198, %v8209
      %v8238 = vmul.f32 %v8199, %v8209
      %v8239 = vmul.f32 %v8200, %v8209
      %v8240 = vmul.f32 %v8201, %v8209
      %v8241 = vmul.f32 %v8202, %v8209
      %v8242 = vmul.f32 %v8203, %v8209
      %v8243 = vld [vmem:[%s13] sm:$0x1]
      %v8245 = vlaneseq
      %v8246 = vshrl.u32 %v8245, 7
      %v8247 = vsub.s32 0, %v8246
      %v8248 = vrot.slane %v8243, %v8247
      %v8250 = vadd.f32 %v8211, %v8248
      %v8251 = vadd.f32 %v8212, %v8248
      %v8252 = vadd.f32 %v8213, %v8248
      %v8253 = vadd.f32 %v8214, %v8248
      %v8254 = vadd.f32 %v8215, %v8248
      %v8255 = vadd.f32 %v8216, %v8248
      %v8256 = vadd.f32 %v8217, %v8248
      %v8257 = vadd.f32 %v8218, %v8248
      %v8258 = vadd.f32 %v8219, %v8248
      %v8259 = vadd.f32 %v8220, %v8248
      %v8260 = vadd.f32 %v8221, %v8248
      %v8261 = vadd.f32 %v8222, %v8248
      %v8262 = vadd.f32 %v8223, %v8248
      %v8263 = vadd.f32 %v8224, %v8248
      %v8264 = vadd.f32 %v8225, %v8248
      %v8265 = vadd.f32 %v8226, %v8248
      %v8266 = vadd.f32 %v8227, %v8248
      %v8267 = vadd.f32 %v8228, %v8248
      %v8268 = vadd.f32 %v8229, %v8248
      %v8269 = vadd.f32 %v8230, %v8248
      %v8270 = vadd.f32 %v8231, %v8248
      %v8271 = vadd.f32 %v8232, %v8248
      %v8272 = vadd.f32 %v8233, %v8248
      %v8273 = vadd.f32 %v8234, %v8248
      %v8274 = vadd.f32 %v8235, %v8248
      %v8275 = vadd.f32 %v8236, %v8248
      %v8276 = vadd.f32 %v8237, %v8248
      %v8277 = vadd.f32 %v8238, %v8248
      %v8278 = vadd.f32 %v8239, %v8248
      %v8279 = vadd.f32 %v8240, %v8248
      %v8280 = vadd.f32 %v8241, %v8248
      %v8281 = vadd.f32 %v8242, %v8248
      %v8282 = vxor.u32 %v8250, 2147483648
      %v8283 = vxor.u32 %v8251, 2147483648
      %v8284 = vxor.u32 %v8252, 2147483648
      %v8285 = vxor.u32 %v8253, 2147483648
      %v8286 = vxor.u32 %v8254, 2147483648
      %v8287 = vxor.u32 %v8255, 2147483648
      %v8288 = vxor.u32 %v8256, 2147483648
      %v8289 = vxor.u32 %v8257, 2147483648
      %v8290 = vxor.u32 %v8258, 2147483648
      %v8291 = vxor.u32 %v8259, 2147483648
      %v8292 = vxor.u32 %v8260, 2147483648
      %v8293 = vxor.u32 %v8261, 2147483648
      %v8294 = vxor.u32 %v8262, 2147483648
      %v8295 = vxor.u32 %v8263, 2147483648
      %v8296 = vxor.u32 %v8264, 2147483648
      %v8297 = vxor.u32 %v8265, 2147483648
      %v8298 = vxor.u32 %v8266, 2147483648
      %v8299 = vxor.u32 %v8267, 2147483648
      %v8300 = vxor.u32 %v8268, 2147483648
      %v8301 = vxor.u32 %v8269, 2147483648
      %v8302 = vxor.u32 %v8270, 2147483648
      %v8303 = vxor.u32 %v8271, 2147483648
      %v8304 = vxor.u32 %v8272, 2147483648
      %v8305 = vxor.u32 %v8273, 2147483648
      %v8306 = vxor.u32 %v8274, 2147483648
      %v8307 = vxor.u32 %v8275, 2147483648
      %v8308 = vxor.u32 %v8276, 2147483648
      %v8309 = vxor.u32 %v8277, 2147483648
      %v8310 = vxor.u32 %v8278, 2147483648
      %v8311 = vxor.u32 %v8279, 2147483648
      %v8312 = vxor.u32 %v8280, 2147483648
      %v8313 = vxor.u32 %v8281, 2147483648
      %v8314 = vmul.f32 %v8282, 1.442695
      %v8315 = vpow.pop %v8314
      %v8316 = vmul.f32 %v8283, 1.442695
      %v8317 = vpow.pop %v8316
      %v8318 = vmul.f32 %v8284, 1.442695
      %v8319 = vpow.pop %v8318
      %v8320 = vmul.f32 %v8285, 1.442695
      %v8321 = vpow.pop %v8320
      %v8322 = vmul.f32 %v8286, 1.442695
      %v8323 = vpow.pop %v8322
      %v8324 = vmul.f32 %v8287, 1.442695
      %v8325 = vpow.pop %v8324
      %v8326 = vmul.f32 %v8288, 1.442695
      %v8327 = vpow.pop %v8326
      %v8328 = vmul.f32 %v8289, 1.442695
      %v8329 = vpow.pop %v8328
      %v8330 = vmul.f32 %v8290, 1.442695
      %v8331 = vpow.pop %v8330
      %v8332 = vmul.f32 %v8291, 1.442695
      %v8333 = vpow.pop %v8332
      %v8334 = vmul.f32 %v8292, 1.442695
      %v8335 = vpow.pop %v8334
      %v8336 = vmul.f32 %v8293, 1.442695
      %v8337 = vpow.pop %v8336
      %v8338 = vmul.f32 %v8294, 1.442695
      %v8339 = vpow.pop %v8338
      %v8340 = vmul.f32 %v8295, 1.442695
      %v8341 = vpow.pop %v8340
      %v8342 = vmul.f32 %v8296, 1.442695
      %v8343 = vpow.pop %v8342
      %v8344 = vmul.f32 %v8297, 1.442695
      %v8345 = vpow.pop %v8344
      %v8346 = vmul.f32 %v8298, 1.442695
      %v8347 = vpow.pop %v8346
      %v8348 = vmul.f32 %v8299, 1.442695
      %v8349 = vpow.pop %v8348
      %v8350 = vmul.f32 %v8300, 1.442695
      %v8351 = vpow.pop %v8350
      %v8352 = vmul.f32 %v8301, 1.442695
      %v8353 = vpow.pop %v8352
      %v8354 = vmul.f32 %v8302, 1.442695
      %v8355 = vpow.pop %v8354
      %v8356 = vmul.f32 %v8303, 1.442695
      %v8357 = vpow.pop %v8356
      %v8358 = vmul.f32 %v8304, 1.442695
      %v8359 = vpow.pop %v8358
      %v8360 = vmul.f32 %v8305, 1.442695
      %v8361 = vpow.pop %v8360
      %v8362 = vmul.f32 %v8306, 1.442695
      %v8363 = vpow.pop %v8362
      %v8364 = vmul.f32 %v8307, 1.442695
      %v8365 = vpow.pop %v8364
      %v8366 = vmul.f32 %v8308, 1.442695
      %v8367 = vpow.pop %v8366
      %v8368 = vmul.f32 %v8309, 1.442695
      %v8369 = vpow.pop %v8368
      %v8370 = vmul.f32 %v8310, 1.442695
      %v8371 = vpow.pop %v8370
      %v8372 = vmul.f32 %v8311, 1.442695
      %v8373 = vpow.pop %v8372
      %v8374 = vmul.f32 %v8312, 1.442695
      %v8375 = vpow.pop %v8374
      %v8376 = vmul.f32 %v8313, 1.442695
      %v8377 = vpow.pop %v8376
      %v8378 = vadd.f32 %v8315, 1.0
      %v8379 = vadd.f32 %v8317, 1.0
      %v8380 = vadd.f32 %v8319, 1.0
      %v8381 = vadd.f32 %v8321, 1.0
      %v8382 = vadd.f32 %v8323, 1.0
      %v8383 = vadd.f32 %v8325, 1.0
      %v8384 = vadd.f32 %v8327, 1.0
      %v8385 = vadd.f32 %v8329, 1.0
      %v8386 = vadd.f32 %v8331, 1.0
      %v8387 = vadd.f32 %v8333, 1.0
      %v8388 = vadd.f32 %v8335, 1.0
      %v8389 = vadd.f32 %v8337, 1.0
      %v8390 = vadd.f32 %v8339, 1.0
      %v8391 = vadd.f32 %v8341, 1.0
      %v8392 = vadd.f32 %v8343, 1.0
      %v8393 = vadd.f32 %v8345, 1.0
      %v8394 = vadd.f32 %v8347, 1.0
      %v8395 = vadd.f32 %v8349, 1.0
      %v8396 = vadd.f32 %v8351, 1.0
      %v8397 = vadd.f32 %v8353, 1.0
      %v8398 = vadd.f32 %v8355, 1.0
      %v8399 = vadd.f32 %v8357, 1.0
      %v8400 = vadd.f32 %v8359, 1.0
      %v8401 = vadd.f32 %v8361, 1.0
      %v8402 = vadd.f32 %v8363, 1.0
      %v8403 = vadd.f32 %v8365, 1.0
      %v8404 = vadd.f32 %v8367, 1.0
      %v8405 = vadd.f32 %v8369, 1.0
      %v8406 = vadd.f32 %v8371, 1.0
      %v8407 = vadd.f32 %v8373, 1.0
      %v8408 = vadd.f32 %v8375, 1.0
      %v8409 = vadd.f32 %v8377, 1.0
      %v8410 = vrcp.pop %v8378
      %v8411 = vmul.f32 1.0, %v8410
      %v8412 = vrcp.pop %v8379
      %v8413 = vmul.f32 1.0, %v8412
      %v8414 = vrcp.pop %v8380
      %v8415 = vmul.f32 1.0, %v8414
      %v8416 = vrcp.pop %v8381
      %v8417 = vmul.f32 1.0, %v8416
      %v8418 = vrcp.pop %v8382
      %v8419 = vmul.f32 1.0, %v8418
      %v8420 = vrcp.pop %v8383
      %v8421 = vmul.f32 1.0, %v8420
      %v8422 = vrcp.pop %v8384
      %v8423 = vmul.f32 1.0, %v8422
      %v8424 = vrcp.pop %v8385
      %v8425 = vmul.f32 1.0, %v8424
      %v8426 = vrcp.pop %v8386
      %v8427 = vmul.f32 1.0, %v8426
      %v8428 = vrcp.pop %v8387
      %v8429 = vmul.f32 1.0, %v8428
      %v8430 = vrcp.pop %v8388
      %v8431 = vmul.f32 1.0, %v8430
      %v8432 = vrcp.pop %v8389
      %v8433 = vmul.f32 1.0, %v8432
      %v8434 = vrcp.pop %v8390
      %v8435 = vmul.f32 1.0, %v8434
      %v8436 = vrcp.pop %v8391
      %v8437 = vmul.f32 1.0, %v8436
      %v8438 = vrcp.pop %v8392
      %v8439 = vmul.f32 1.0, %v8438
      %v8440 = vrcp.pop %v8393
      %v8441 = vmul.f32 1.0, %v8440
      %v8442 = vrcp.pop %v8394
      %v8443 = vmul.f32 1.0, %v8442
      %v8444 = vrcp.pop %v8395
      %v8445 = vmul.f32 1.0, %v8444
      %v8446 = vrcp.pop %v8396
      %v8447 = vmul.f32 1.0, %v8446
      %v8448 = vrcp.pop %v8397
      %v8449 = vmul.f32 1.0, %v8448
      %v8450 = vrcp.pop %v8398
      %v8451 = vmul.f32 1.0, %v8450
      %v8452 = vrcp.pop %v8399
      %v8453 = vmul.f32 1.0, %v8452
      %v8454 = vrcp.pop %v8400
      %v8455 = vmul.f32 1.0, %v8454
      %v8456 = vrcp.pop %v8401
      %v8457 = vmul.f32 1.0, %v8456
      %v8458 = vrcp.pop %v8402
      %v8459 = vmul.f32 1.0, %v8458
      %v8460 = vrcp.pop %v8403
      %v8461 = vmul.f32 1.0, %v8460
      %v8462 = vrcp.pop %v8404
      %v8463 = vmul.f32 1.0, %v8462
      %v8464 = vrcp.pop %v8405
      %v8465 = vmul.f32 1.0, %v8464
      %v8466 = vrcp.pop %v8406
      %v8467 = vmul.f32 1.0, %v8466
      %v8468 = vrcp.pop %v8407
      %v8469 = vmul.f32 1.0, %v8468
      %v8470 = vrcp.pop %v8408
      %v8471 = vmul.f32 1.0, %v8470
      %v8472 = vrcp.pop %v8409
      %v8473 = vmul.f32 1.0, %v8472
      %v8474 = vmul.f32 %v8250, %v8411
      %v8475 = vmul.f32 %v8251, %v8413
      %v8476 = vmul.f32 %v8252, %v8415
      %v8477 = vmul.f32 %v8253, %v8417
      %v8478 = vmul.f32 %v8254, %v8419
      %v8479 = vmul.f32 %v8255, %v8421
      %v8480 = vmul.f32 %v8256, %v8423
      %v8481 = vmul.f32 %v8257, %v8425
      %v8482 = vmul.f32 %v8258, %v8427
      %v8483 = vmul.f32 %v8259, %v8429
      %v8484 = vmul.f32 %v8260, %v8431
      %v8485 = vmul.f32 %v8261, %v8433
      %v8486 = vmul.f32 %v8262, %v8435
      %v8487 = vmul.f32 %v8263, %v8437
      %v8488 = vmul.f32 %v8264, %v8439
      %v8489 = vmul.f32 %v8265, %v8441
      %v8490 = vmul.f32 %v8266, %v8443
      %v8491 = vmul.f32 %v8267, %v8445
      %v8492 = vmul.f32 %v8268, %v8447
      %v8493 = vmul.f32 %v8269, %v8449
      %v8494 = vmul.f32 %v8270, %v8451
      %v8495 = vmul.f32 %v8271, %v8453
      %v8496 = vmul.f32 %v8272, %v8455
      %v8497 = vmul.f32 %v8273, %v8457
      %v8498 = vmul.f32 %v8274, %v8459
      %v8499 = vmul.f32 %v8275, %v8461
      %v8500 = vmul.f32 %v8276, %v8463
      %v8501 = vmul.f32 %v8277, %v8465
      %v8502 = vmul.f32 %v8278, %v8467
      %v8503 = vmul.f32 %v8279, %v8469
      %v8504 = vmul.f32 %v8280, %v8471
      %v8505 = vmul.f32 %v8281, %v8473
      %v8506 = vpack.c.bf16 %v8475, %v8474
      %v8507 = vpack.c.bf16 %v8477, %v8476
      %v8508 = vpack.c.bf16 %v8479, %v8478
      %v8509 = vpack.c.bf16 %v8481, %v8480
      %v8510 = vpack.c.bf16 %v8483, %v8482
      %v8511 = vpack.c.bf16 %v8485, %v8484
      %v8512 = vpack.c.bf16 %v8487, %v8486
      %v8513 = vpack.c.bf16 %v8489, %v8488
      %v8514 = vpack.c.bf16 %v8491, %v8490
      %v8515 = vpack.c.bf16 %v8493, %v8492
      %v8516 = vpack.c.bf16 %v8495, %v8494
      %v8517 = vpack.c.bf16 %v8497, %v8496
      %v8518 = vpack.c.bf16 %v8499, %v8498
      %v8519 = vpack.c.bf16 %v8501, %v8500
      %v8520 = vpack.c.bf16 %v8503, %v8502
      %v8521 = vpack.c.bf16 %v8505, %v8504
      %v8522 = vld [vmem:[%s14] sm:$0xf]
      %v8523 = vld [vmem:[%s14 + $0x4] sm:$0xf]
      %v8524 = vld [vmem:[%s14 + $0x8] sm:$0xf]
      %v8525 = vld [vmem:[%s14 + $0xc] sm:$0xf]
      %v8526 = vld [vmem:[%s14 + $0x10] sm:$0xf]
      %v8527 = vld [vmem:[%s14 + $0x14] sm:$0xf]
      %v8528 = vld [vmem:[%s14 + $0x18] sm:$0xf]
      %v8529 = vld [vmem:[%s14 + $0x1c] sm:$0xf]
      %v8530 = vld [vmem:[%s14 + $0x20] sm:$0xf]
      %v8531 = vld [vmem:[%s14 + $0x24] sm:$0xf]
      %v8532 = vld [vmem:[%s14 + $0x28] sm:$0xf]
      %v8533 = vld [vmem:[%s14 + $0x2c] sm:$0xf]
      %v8534 = vld [vmem:[%s14 + $0x30] sm:$0xf]
      %v8535 = vld [vmem:[%s14 + $0x34] sm:$0xf]
      %v8536 = vld [vmem:[%s14 + $0x38] sm:$0xf]
      %v8537 = vld [vmem:[%s14 + $0x3c] sm:$0xf]
      %v8554 = vunpack.c.l.b16 %v8522
      %v8555 = vunpack.c.l.b16 %v8523
      %v8556 = vunpack.c.l.b16 %v8524
      %v8557 = vunpack.c.l.b16 %v8525
      %v8558 = vunpack.c.l.b16 %v8526
      %v8559 = vunpack.c.l.b16 %v8527
      %v8560 = vunpack.c.l.b16 %v8528
      %v8561 = vunpack.c.l.b16 %v8529
      %v8562 = vunpack.c.l.b16 %v8530
      %v8563 = vunpack.c.l.b16 %v8531
      %v8564 = vunpack.c.l.b16 %v8532
      %v8565 = vunpack.c.l.b16 %v8533
      %v8566 = vunpack.c.l.b16 %v8534
      %v8567 = vunpack.c.l.b16 %v8535
      %v8568 = vunpack.c.l.b16 %v8536
      %v8569 = vunpack.c.l.b16 %v8537
      %v8570 = vpack.c.b16 %v8555, %v8554
      %v8571 = vpack.c.b16 %v8557, %v8556
      %v8572 = vpack.c.b16 %v8559, %v8558
      %v8573 = vpack.c.b16 %v8561, %v8560
      %v8574 = vpack.c.b16 %v8563, %v8562
      %v8575 = vpack.c.b16 %v8565, %v8564
      %v8576 = vpack.c.b16 %v8567, %v8566
      %v8577 = vpack.c.b16 %v8569, %v8568
      %8586 = vmatprep.subr.bf16.mxu0 0
      %8587 = vmatpush1.bf16.msra.mxu0 %v8570
      %8588 = vmatprep.subr.bf16.mxu0 0
      %8589 = vmatpush1.bf16.msra.mxu0 %v8571
      %8590 = vmatprep.subr.bf16.mxu0 0
      %8591 = vmatpush1.bf16.msra.mxu0 %v8572
      %8592 = vmatprep.subr.bf16.mxu0 0
      %8593 = vmatpush1.bf16.msra.mxu0 %v8573
      %8594 = vmatprep.subr.bf16.mxu0 0
      %8595 = vmatpush1.bf16.msra.mxu0 %v8574
      %8596 = vmatprep.subr.bf16.mxu0 0
      %8597 = vmatpush1.bf16.msra.mxu0 %v8575
      %8598 = vmatprep.subr.bf16.mxu0 0
      %8599 = vmatpush1.bf16.msra.mxu0 %v8576
      %8600 = vmatprep.subr.bf16.mxu0 0
      %8601 = vmatpush1.bf16.msra.mxu0 %v8577
      %8602 = vmatprep.subr.bf16.mxu0 0
      %8603 = vmatpush1.bf16.msra.mxu0 0
      %8604 = vmatprep.subr.bf16.mxu0 0
      %8605 = vmatpush1.bf16.msra.mxu0 0
      %8606 = vmatprep.subr.bf16.mxu0 0
      %8607 = vmatpush1.bf16.msra.mxu0 0
      %8608 = vmatprep.subr.bf16.mxu0 0
      %8609 = vmatpush1.bf16.msra.mxu0 0
      %8610 = vmatprep.subr.bf16.mxu0 0
      %8611 = vmatpush1.bf16.msra.mxu0 0
      %8612 = vmatprep.subr.bf16.mxu0 0
      %8613 = vmatpush1.bf16.msra.mxu0 0
      %8614 = vmatprep.subr.bf16.mxu0 0
      %8615 = vmatpush1.bf16.msra.mxu0 0
      %8616 = vmatprep.subr.bf16.mxu0 0
      %8617 = vmatpush1.bf16.msra.mxu0 0
      %8618 = vmatprep.mubr.bf16.mxu0 0
      %8619 = vmatmul.mubr.bf16.gmra.mrb[0].mxu0 %v8506
      %v8620 = vpop.f32.mrb[0].mxu0
      %v8621 = vadd.f32 0.0, %v8620
      %v8622 = vpop.f32.mrb[0].mxu0
      %v8623 = vpop.f32.mrb[0].mxu0
      %v8624 = vadd.f32 0.0, %v8623
      %v8625 = vpop.f32.mrb[0].mxu0
      %8626 = vmatprep.mubr.bf16.mxu0 0
      %8627 = vmatmul.mubr.bf16.gmra.mrb[0].mxu0 %v8507
      %v8628 = vpop.f32.mrb[0].mxu0
      %v8629 = vadd.f32 0.0, %v8628
      %v8630 = vpop.f32.mrb[0].mxu0
      %v8631 = vpop.f32.mrb[0].mxu0
      %v8632 = vadd.f32 0.0, %v8631
      %v8633 = vpop.f32.mrb[0].mxu0
      %8634 = vmatprep.mubr.bf16.mxu0 0
      %8635 = vmatmul.mubr.bf16.gmra.mrb[0].mxu0 %v8508
      %v8636 = vpop.f32.mrb[0].mxu0
      %v8637 = vadd.f32 0.0, %v8636
      %v8638 = vpop.f32.mrb[0].mxu0
      %v8639 = vpop.f32.mrb[0].mxu0
      %v8640 = vadd.f32 0.0, %v8639
      %v8641 = vpop.f32.mrb[0].mxu0
      %8642 = vmatprep.mubr.bf16.mxu0 0
      %8643 = vmatmul.mubr.bf16.gmra.mrb[0].mxu0 %v8509
      %v8644 = vpop.f32.mrb[0].mxu0
      %v8645 = vadd.f32 0.0, %v8644
      %v8646 = vpop.f32.mrb[0].mxu0
      %v8647 = vpop.f32.mrb[0].mxu0
      %v8648 = vadd.f32 0.0, %v8647
      %v8649 = vpop.f32.mrb[0].mxu0
      %8650 = vmatprep.mubr.bf16.mxu0 0
      %8651 = vmatmul.mubr.bf16.gmra.mrb[0].mxu0 %v8510
      %v8652 = vpop.f32.mrb[0].mxu0
      %v8653 = vadd.f32 0.0, %v8652
      %v8654 = vpop.f32.mrb[0].mxu0
      %v8655 = vpop.f32.mrb[0].mxu0
      %v8656 = vadd.f32 0.0, %v8655
      %v8657 = vpop.f32.mrb[0].mxu0
      %8658 = vmatprep.mubr.bf16.mxu0 0
      %8659 = vmatmul.mubr.bf16.gmra.mrb[0].mxu0 %v8511
      %v8660 = vpop.f32.mrb[0].mxu0
      %v8661 = vadd.f32 0.0, %v8660
      %v8662 = vpop.f32.mrb[0].mxu0
      %v8663 = vpop.f32.mrb[0].mxu0
      %v8664 = vadd.f32 0.0, %v8663
      %v8665 = vpop.f32.mrb[0].mxu0
      %8666 = vmatprep.mubr.bf16.mxu0 0
      %8667 = vmatmul.mubr.bf16.gmra.mrb[0].mxu0 %v8512
      %v8668 = vpop.f32.mrb[0].mxu0
      %v8669 = vadd.f32 0.0, %v8668
      %v8670 = vpop.f32.mrb[0].mxu0
      %v8671 = vpop.f32.mrb[0].mxu0
      %v8672 = vadd.f32 0.0, %v8671
      %v8673 = vpop.f32.mrb[0].mxu0
      %8674 = vmatprep.mubr.bf16.mxu0 0
      %8675 = vmatmul.mubr.bf16.gmra.mrb[0].mxu0 %v8513
      %v8676 = vpop.f32.mrb[0].mxu0
      %v8677 = vadd.f32 0.0, %v8676
      %v8678 = vpop.f32.mrb[0].mxu0
      %v8679 = vpop.f32.mrb[0].mxu0
      %v8680 = vadd.f32 0.0, %v8679
      %v8681 = vpop.f32.mrb[0].mxu0
      %8682 = vmatprep.mubr.bf16.mxu0 0
      %8683 = vmatmul.mubr.bf16.gmra.mrb[0].mxu0 %v8514
      %v8684 = vpop.f32.mrb[0].mxu0
      %v8685 = vadd.f32 0.0, %v8684
      %v8686 = vpop.f32.mrb[0].mxu0
      %v8687 = vpop.f32.mrb[0].mxu0
      %v8688 = vadd.f32 0.0, %v8687
      %v8689 = vpop.f32.mrb[0].mxu0
      %8690 = vmatprep.mubr.bf16.mxu0 0
      %8691 = vmatmul.mubr.bf16.gmra.mrb[0].mxu0 %v8515
      %v8692 = vpop.f32.mrb[0].mxu0
      %v8693 = vadd.f32 0.0, %v8692
      %v8694 = vpop.f32.mrb[0].mxu0
      %v8695 = vpop.f32.mrb[0].mxu0
      %v8696 = vadd.f32 0.0, %v8695
      %v8697 = vpop.f32.mrb[0].mxu0
      %8698 = vmatprep.mubr.bf16.mxu0 0
      %8699 = vmatmul.mubr.bf16.gmra.mrb[0].mxu0 %v8516
      %v8700 = vpop.f32.mrb[0].mxu0
      %v8701 = vadd.f32 0.0, %v8700
      %v8702 = vpop.f32.mrb[0].mxu0
      %v8703 = vpop.f32.mrb[0].mxu0
      %v8704 = vadd.f32 0.0, %v8703
      %v8705 = vpop.f32.mrb[0].mxu0
      %8706 = vmatprep.mubr.bf16.mxu0 0
      %8707 = vmatmul.mubr.bf16.gmra.mrb[0].mxu0 %v8517
      %v8708 = vpop.f32.mrb[0].mxu0
      %v8709 = vadd.f32 0.0, %v8708
      %v8710 = vpop.f32.mrb[0].mxu0
      %v8711 = vpop.f32.mrb[0].mxu0
      %v8712 = vadd.f32 0.0, %v8711
      %v8713 = vpop.f32.mrb[0].mxu0
      %8714 = vmatprep.mubr.bf16.mxu0 0
      %8715 = vmatmul.mubr.bf16.gmra.mrb[0].mxu0 %v8518
      %v8716 = vpop.f32.mrb[0].mxu0
      %v8717 = vadd.f32 0.0, %v8716
      %v8718 = vpop.f32.mrb[0].mxu0
      %v8719 = vpop.f32.mrb[0].mxu0
      %v8720 = vadd.f32 0.0, %v8719
      %v8721 = vpop.f32.mrb[0].mxu0
      %8722 = vmatprep.mubr.bf16.mxu0 0
      %8723 = vmatmul.mubr.bf16.gmra.mrb[0].mxu0 %v8519
      %v8724 = vpop.f32.mrb[0].mxu0
      %v8725 = vadd.f32 0.0, %v8724
      %v8726 = vpop.f32.mrb[0].mxu0
      %v8727 = vpop.f32.mrb[0].mxu0
      %v8728 = vadd.f32 0.0, %v8727
      %v8729 = vpop.f32.mrb[0].mxu0
      %8730 = vmatprep.mubr.bf16.mxu0 0
      %8731 = vmatmul.mubr.bf16.gmra.mrb[0].mxu0 %v8520
      %v8732 = vpop.f32.mrb[0].mxu0
      %v8733 = vadd.f32 0.0, %v8732
      %v8734 = vpop.f32.mrb[0].mxu0
      %v8735 = vpop.f32.mrb[0].mxu0
      %v8736 = vadd.f32 0.0, %v8735
      %v8737 = vpop.f32.mrb[0].mxu0
      %8738 = vmatprep.mubr.bf16.mxu0 0
      %8739 = vmatmul.mubr.bf16.gmra.mrb[0].mxu0 %v8521
      %v8740 = vpop.f32.mrb[0].mxu0
      %v8741 = vadd.f32 0.0, %v8740
      %v8742 = vpop.f32.mrb[0].mxu0
      %v8743 = vpop.f32.mrb[0].mxu0
      %v8744 = vadd.f32 0.0, %v8743
      %v8745 = vpop.f32.mrb[0].mxu0
      %8746 = vdwg.mxu0
      %v8747 = vld [vmem:[%s15] sm:$0x1]
      %v8749 = vlaneseq
      %v8750 = vshrl.u32 %v8749, 7
      %v8751 = vsub.s32 0, %v8750
      %v8752 = vrot.slane %v8747, %v8751
      %v8754 = vmul.f32 %v8621, %v8752
      %v8755 = vmul.f32 %v8624, %v8752
      %v8756 = vmul.f32 %v8629, %v8752
      %v8757 = vmul.f32 %v8632, %v8752
      %v8758 = vmul.f32 %v8637, %v8752
      %v8759 = vmul.f32 %v8640, %v8752
      %v8760 = vmul.f32 %v8645, %v8752
      %v8761 = vmul.f32 %v8648, %v8752
      %v8762 = vmul.f32 %v8653, %v8752
      %v8763 = vmul.f32 %v8656, %v8752
      %v8764 = vmul.f32 %v8661, %v8752
      %v8765 = vmul.f32 %v8664, %v8752
      %v8766 = vmul.f32 %v8669, %v8752
      %v8767 = vmul.f32 %v8672, %v8752
      %v8768 = vmul.f32 %v8677, %v8752
      %v8769 = vmul.f32 %v8680, %v8752
      %v8770 = vmul.f32 %v8685, %v8752
      %v8771 = vmul.f32 %v8688, %v8752
      %v8772 = vmul.f32 %v8693, %v8752
      %v8773 = vmul.f32 %v8696, %v8752
      %v8774 = vmul.f32 %v8701, %v8752
      %v8775 = vmul.f32 %v8704, %v8752
      %v8776 = vmul.f32 %v8709, %v8752
      %v8777 = vmul.f32 %v8712, %v8752
      %v8778 = vmul.f32 %v8717, %v8752
      %v8779 = vmul.f32 %v8720, %v8752
      %v8780 = vmul.f32 %v8725, %v8752
      %v8781 = vmul.f32 %v8728, %v8752
      %v8782 = vmul.f32 %v8733, %v8752
      %v8783 = vmul.f32 %v8736, %v8752
      %v8784 = vmul.f32 %v8741, %v8752
      %v8785 = vmul.f32 %v8744, %v8752
      %v8786 = vld [vmem:[%s16] sm:$0x1]
      %v8788 = vlaneseq
      %v8789 = vshrl.u32 %v8788, 7
      %v8790 = vsub.s32 0, %v8789
      %v8791 = vrot.slane %v8786, %v8790
      %v8793 = vadd.f32 %v8754, %v8791
      %v8794 = vadd.f32 %v8755, %v8791
      %v8795 = vadd.f32 %v8756, %v8791
      %v8796 = vadd.f32 %v8757, %v8791
      %v8797 = vadd.f32 %v8758, %v8791
      %v8798 = vadd.f32 %v8759, %v8791
      %v8799 = vadd.f32 %v8760, %v8791
      %v8800 = vadd.f32 %v8761, %v8791
      %v8801 = vadd.f32 %v8762, %v8791
      %v8802 = vadd.f32 %v8763, %v8791
      %v8803 = vadd.f32 %v8764, %v8791
      %v8804 = vadd.f32 %v8765, %v8791
      %v8805 = vadd.f32 %v8766, %v8791
      %v8806 = vadd.f32 %v8767, %v8791
      %v8807 = vadd.f32 %v8768, %v8791
      %v8808 = vadd.f32 %v8769, %v8791
      %v8809 = vadd.f32 %v8770, %v8791
      %v8810 = vadd.f32 %v8771, %v8791
      %v8811 = vadd.f32 %v8772, %v8791
      %v8812 = vadd.f32 %v8773, %v8791
      %v8813 = vadd.f32 %v8774, %v8791
      %v8814 = vadd.f32 %v8775, %v8791
      %v8815 = vadd.f32 %v8776, %v8791
      %v8816 = vadd.f32 %v8777, %v8791
      %v8817 = vadd.f32 %v8778, %v8791
      %v8818 = vadd.f32 %v8779, %v8791
      %v8819 = vadd.f32 %v8780, %v8791
      %v8820 = vadd.f32 %v8781, %v8791
      %v8821 = vadd.f32 %v8782, %v8791
      %v8822 = vadd.f32 %v8783, %v8791
      %v8823 = vadd.f32 %v8784, %v8791
      %v8824 = vadd.f32 %v8785, %v8791
      %v8825 = vxor.u32 %v8793, 2147483648
      %v8826 = vxor.u32 %v8794, 2147483648
      %v8827 = vxor.u32 %v8795, 2147483648
      %v8828 = vxor.u32 %v8796, 2147483648
      %v8829 = vxor.u32 %v8797, 2147483648
      %v8830 = vxor.u32 %v8798, 2147483648
      %v8831 = vxor.u32 %v8799, 2147483648
      %v8832 = vxor.u32 %v8800, 2147483648
      %v8833 = vxor.u32 %v8801, 2147483648
      %v8834 = vxor.u32 %v8802, 2147483648
      %v8835 = vxor.u32 %v8803, 2147483648
      %v8836 = vxor.u32 %v8804, 2147483648
      %v8837 = vxor.u32 %v8805, 2147483648
      %v8838 = vxor.u32 %v8806, 2147483648
      %v8839 = vxor.u32 %v8807, 2147483648
      %v8840 = vxor.u32 %v8808, 2147483648
      %v8841 = vxor.u32 %v8809, 2147483648
      %v8842 = vxor.u32 %v8810, 2147483648
      %v8843 = vxor.u32 %v8811, 2147483648
      %v8844 = vxor.u32 %v8812, 2147483648
      %v8845 = vxor.u32 %v8813, 2147483648
      %v8846 = vxor.u32 %v8814, 2147483648
      %v8847 = vxor.u32 %v8815, 2147483648
      %v8848 = vxor.u32 %v8816, 2147483648
      %v8849 = vxor.u32 %v8817, 2147483648
      %v8850 = vxor.u32 %v8818, 2147483648
      %v8851 = vxor.u32 %v8819, 2147483648
      %v8852 = vxor.u32 %v8820, 2147483648
      %v8853 = vxor.u32 %v8821, 2147483648
      %v8854 = vxor.u32 %v8822, 2147483648
      %v8855 = vxor.u32 %v8823, 2147483648
      %v8856 = vxor.u32 %v8824, 2147483648
      %v8857 = vmul.f32 %v8825, 1.442695
      %v8858 = vpow.pop %v8857
      %v8859 = vmul.f32 %v8826, 1.442695
      %v8860 = vpow.pop %v8859
      %v8861 = vmul.f32 %v8827, 1.442695
      %v8862 = vpow.pop %v8861
      %v8863 = vmul.f32 %v8828, 1.442695
      %v8864 = vpow.pop %v8863
      %v8865 = vmul.f32 %v8829, 1.442695
      %v8866 = vpow.pop %v8865
      %v8867 = vmul.f32 %v8830, 1.442695
      %v8868 = vpow.pop %v8867
      %v8869 = vmul.f32 %v8831, 1.442695
      %v8870 = vpow.pop %v8869
      %v8871 = vmul.f32 %v8832, 1.442695
      %v8872 = vpow.pop %v8871
      %v8873 = vmul.f32 %v8833, 1.442695
      %v8874 = vpow.pop %v8873
      %v8875 = vmul.f32 %v8834, 1.442695
      %v8876 = vpow.pop %v8875
      %v8877 = vmul.f32 %v8835, 1.442695
      %v8878 = vpow.pop %v8877
      %v8879 = vmul.f32 %v8836, 1.442695
      %v8880 = vpow.pop %v8879
      %v8881 = vmul.f32 %v8837, 1.442695
      %v8882 = vpow.pop %v8881
      %v8883 = vmul.f32 %v8838, 1.442695
      %v8884 = vpow.pop %v8883
      %v8885 = vmul.f32 %v8839, 1.442695
      %v8886 = vpow.pop %v8885
      %v8887 = vmul.f32 %v8840, 1.442695
      %v8888 = vpow.pop %v8887
      %v8889 = vmul.f32 %v8841, 1.442695
      %v8890 = vpow.pop %v8889
      %v8891 = vmul.f32 %v8842, 1.442695
      %v8892 = vpow.pop %v8891
      %v8893 = vmul.f32 %v8843, 1.442695
      %v8894 = vpow.pop %v8893
      %v8895 = vmul.f32 %v8844, 1.442695
      %v8896 = vpow.pop %v8895
      %v8897 = vmul.f32 %v8845, 1.442695
      %v8898 = vpow.pop %v8897
      %v8899 = vmul.f32 %v8846, 1.442695
      %v8900 = vpow.pop %v8899
      %v8901 = vmul.f32 %v8847, 1.442695
      %v8902 = vpow.pop %v8901
      %v8903 = vmul.f32 %v8848, 1.442695
      %v8904 = vpow.pop %v8903
      %v8905 = vmul.f32 %v8849, 1.442695
      %v8906 = vpow.pop %v8905
      %v8907 = vmul.f32 %v8850, 1.442695
      %v8908 = vpow.pop %v8907
      %v8909 = vmul.f32 %v8851, 1.442695
      %v8910 = vpow.pop %v8909
      %v8911 = vmul.f32 %v8852, 1.442695
      %v8912 = vpow.pop %v8911
      %v8913 = vmul.f32 %v8853, 1.442695
      %v8914 = vpow.pop %v8913
      %v8915 = vmul.f32 %v8854, 1.442695
      %v8916 = vpow.pop %v8915
      %v8917 = vmul.f32 %v8855, 1.442695
      %v8918 = vpow.pop %v8917
      %v8919 = vmul.f32 %v8856, 1.442695
      %v8920 = vpow.pop %v8919
      %v8921 = vadd.f32 %v8858, 1.0
      %v8922 = vadd.f32 %v8860, 1.0
      %v8923 = vadd.f32 %v8862, 1.0
      %v8924 = vadd.f32 %v8864, 1.0
      %v8925 = vadd.f32 %v8866, 1.0
      %v8926 = vadd.f32 %v8868, 1.0
      %v8927 = vadd.f32 %v8870, 1.0
      %v8928 = vadd.f32 %v8872, 1.0
      %v8929 = vadd.f32 %v8874, 1.0
      %v8930 = vadd.f32 %v8876, 1.0
      %v8931 = vadd.f32 %v8878, 1.0
      %v8932 = vadd.f32 %v8880, 1.0
      %v8933 = vadd.f32 %v8882, 1.0
      %v8934 = vadd.f32 %v8884, 1.0
      %v8935 = vadd.f32 %v8886, 1.0
      %v8936 = vadd.f32 %v8888, 1.0
      %v8937 = vadd.f32 %v8890, 1.0
      %v8938 = vadd.f32 %v8892, 1.0
      %v8939 = vadd.f32 %v8894, 1.0
      %v8940 = vadd.f32 %v8896, 1.0
      %v8941 = vadd.f32 %v8898, 1.0
      %v8942 = vadd.f32 %v8900, 1.0
      %v8943 = vadd.f32 %v8902, 1.0
      %v8944 = vadd.f32 %v8904, 1.0
      %v8945 = vadd.f32 %v8906, 1.0
      %v8946 = vadd.f32 %v8908, 1.0
      %v8947 = vadd.f32 %v8910, 1.0
      %v8948 = vadd.f32 %v8912, 1.0
      %v8949 = vadd.f32 %v8914, 1.0
      %v8950 = vadd.f32 %v8916, 1.0
      %v8951 = vadd.f32 %v8918, 1.0
      %v8952 = vadd.f32 %v8920, 1.0
      %v8953 = vrcp.pop %v8921
      %v8954 = vmul.f32 1.0, %v8953
      %v8955 = vrcp.pop %v8922
      %v8956 = vmul.f32 1.0, %v8955
      %v8957 = vrcp.pop %v8923
      %v8958 = vmul.f32 1.0, %v8957
      %v8959 = vrcp.pop %v8924
      %v8960 = vmul.f32 1.0, %v8959
      %v8961 = vrcp.pop %v8925
      %v8962 = vmul.f32 1.0, %v8961
      %v8963 = vrcp.pop %v8926
      %v8964 = vmul.f32 1.0, %v8963
      %v8965 = vrcp.pop %v8927
      %v8966 = vmul.f32 1.0, %v8965
      %v8967 = vrcp.pop %v8928
      %v8968 = vmul.f32 1.0, %v8967
      %v8969 = vrcp.pop %v8929
      %v8970 = vmul.f32 1.0, %v8969
      %v8971 = vrcp.pop %v8930
      %v8972 = vmul.f32 1.0, %v8971
      %v8973 = vrcp.pop %v8931
      %v8974 = vmul.f32 1.0, %v8973
      %v8975 = vrcp.pop %v8932
      %v8976 = vmul.f32 1.0, %v8975
      %v8977 = vrcp.pop %v8933
      %v8978 = vmul.f32 1.0, %v8977
      %v8979 = vrcp.pop %v8934
      %v8980 = vmul.f32 1.0, %v8979
      %v8981 = vrcp.pop %v8935
      %v8982 = vmul.f32 1.0, %v8981
      %v8983 = vrcp.pop %v8936
      %v8984 = vmul.f32 1.0, %v8983
      %v8985 = vrcp.pop %v8937
      %v8986 = vmul.f32 1.0, %v8985
      %v8987 = vrcp.pop %v8938
      %v8988 = vmul.f32 1.0, %v8987
      %v8989 = vrcp.pop %v8939
      %v8990 = vmul.f32 1.0, %v8989
      %v8991 = vrcp.pop %v8940
      %v8992 = vmul.f32 1.0, %v8991
      %v8993 = vrcp.pop %v8941
      %v8994 = vmul.f32 1.0, %v8993
      %v8995 = vrcp.pop %v8942
      %v8996 = vmul.f32 1.0, %v8995
      %v8997 = vrcp.pop %v8943
      %v8998 = vmul.f32 1.0, %v8997
      %v8999 = vrcp.pop %v8944
      %v9000 = vmul.f32 1.0, %v8999
      %v9001 = vrcp.pop %v8945
      %v9002 = vmul.f32 1.0, %v9001
      %v9003 = vrcp.pop %v8946
      %v9004 = vmul.f32 1.0, %v9003
      %v9005 = vrcp.pop %v8947
      %v9006 = vmul.f32 1.0, %v9005
      %v9007 = vrcp.pop %v8948
      %v9008 = vmul.f32 1.0, %v9007
      %v9009 = vrcp.pop %v8949
      %v9010 = vmul.f32 1.0, %v9009
      %v9011 = vrcp.pop %v8950
      %v9012 = vmul.f32 1.0, %v9011
      %v9013 = vrcp.pop %v8951
      %v9014 = vmul.f32 1.0, %v9013
      %v9015 = vrcp.pop %v8952
      %v9016 = vmul.f32 1.0, %v9015
      %v9017 = vmul.f32 %v8793, %v8954
      %v9018 = vmul.f32 %v8794, %v8956
      %v9019 = vmul.f32 %v8795, %v8958
      %v9020 = vmul.f32 %v8796, %v8960
      %v9021 = vmul.f32 %v8797, %v8962
      %v9022 = vmul.f32 %v8798, %v8964
      %v9023 = vmul.f32 %v8799, %v8966
      %v9024 = vmul.f32 %v8800, %v8968
      %v9025 = vmul.f32 %v8801, %v8970
      %v9026 = vmul.f32 %v8802, %v8972
      %v9027 = vmul.f32 %v8803, %v8974
      %v9028 = vmul.f32 %v8804, %v8976
      %v9029 = vmul.f32 %v8805, %v8978
      %v9030 = vmul.f32 %v8806, %v8980
      %v9031 = vmul.f32 %v8807, %v8982
      %v9032 = vmul.f32 %v8808, %v8984
      %v9033 = vmul.f32 %v8809, %v8986
      %v9034 = vmul.f32 %v8810, %v8988
      %v9035 = vmul.f32 %v8811, %v8990
      %v9036 = vmul.f32 %v8812, %v8992
      %v9037 = vmul.f32 %v8813, %v8994
      %v9038 = vmul.f32 %v8814, %v8996
      %v9039 = vmul.f32 %v8815, %v8998
      %v9040 = vmul.f32 %v8816, %v9000
      %v9041 = vmul.f32 %v8817, %v9002
      %v9042 = vmul.f32 %v8818, %v9004
      %v9043 = vmul.f32 %v8819, %v9006
      %v9044 = vmul.f32 %v8820, %v9008
      %v9045 = vmul.f32 %v8821, %v9010
      %v9046 = vmul.f32 %v8822, %v9012
      %v9047 = vmul.f32 %v8823, %v9014
      %v9048 = vmul.f32 %v8824, %v9016
      %v9049 = vld [vmem:[%s17] sm:$0x1]
      %v9051 = vlaneseq
      %v9052 = vshrl.u32 %v9051, 7
      %v9053 = vsub.s32 0, %v9052
      %v9054 = vrot.slane %v9049, %v9053
      %v9056 = vmul.f32 %v9017, %v9054
      %v9057 = vmul.f32 %v9018, %v9054
      %v9058 = vmul.f32 %v9019, %v9054
      %v9059 = vmul.f32 %v9020, %v9054
      %v9060 = vmul.f32 %v9021, %v9054
      %v9061 = vmul.f32 %v9022, %v9054
      %v9062 = vmul.f32 %v9023, %v9054
      %v9063 = vmul.f32 %v9024, %v9054
      %v9064 = vmul.f32 %v9025, %v9054
      %v9065 = vmul.f32 %v9026, %v9054
      %v9066 = vmul.f32 %v9027, %v9054
      %v9067 = vmul.f32 %v9028, %v9054
      %v9068 = vmul.f32 %v9029, %v9054
      %v9069 = vmul.f32 %v9030, %v9054
      %v9070 = vmul.f32 %v9031, %v9054
      %v9071 = vmul.f32 %v9032, %v9054
      %v9072 = vmul.f32 %v9033, %v9054
      %v9073 = vmul.f32 %v9034, %v9054
      %v9074 = vmul.f32 %v9035, %v9054
      %v9075 = vmul.f32 %v9036, %v9054
      %v9076 = vmul.f32 %v9037, %v9054
      %v9077 = vmul.f32 %v9038, %v9054
      %v9078 = vmul.f32 %v9039, %v9054
      %v9079 = vmul.f32 %v9040, %v9054
      %v9080 = vmul.f32 %v9041, %v9054
      %v9081 = vmul.f32 %v9042, %v9054
      %v9082 = vmul.f32 %v9043, %v9054
      %v9083 = vmul.f32 %v9044, %v9054
      %v9084 = vmul.f32 %v9045, %v9054
      %v9085 = vmul.f32 %v9046, %v9054
      %v9086 = vmul.f32 %v9047, %v9054
      %v9087 = vmul.f32 %v9048, %v9054
      %9088 = vadd.xlane.f32.xlu0 %v9056
      %v9089 = vpop.xlane.xlu0 %9088
      %9090 = vadd.xlane.f32.xlu0 %v9057
      %v9091 = vpop.xlane.xlu0 %9090
      %9092 = vadd.xlane.f32.xlu0 %v9058
      %v9093 = vpop.xlane.xlu0 %9092
      %9094 = vadd.xlane.f32.xlu0 %v9059
      %v9095 = vpop.xlane.xlu0 %9094
      %9096 = vadd.xlane.f32.xlu0 %v9060
      %v9097 = vpop.xlane.xlu0 %9096
      %9098 = vadd.xlane.f32.xlu0 %v9061
      %v9099 = vpop.xlane.xlu0 %9098
      %9100 = vadd.xlane.f32.xlu0 %v9062
      %v9101 = vpop.xlane.xlu0 %9100
      %9102 = vadd.xlane.f32.xlu0 %v9063
      %v9103 = vpop.xlane.xlu0 %9102
      %9104 = vadd.xlane.f32.xlu0 %v9064
      %v9105 = vpop.xlane.xlu0 %9104
      %9106 = vadd.xlane.f32.xlu0 %v9065
      %v9107 = vpop.xlane.xlu0 %9106
      %9108 = vadd.xlane.f32.xlu0 %v9066
      %v9109 = vpop.xlane.xlu0 %9108
      %9110 = vadd.xlane.f32.xlu0 %v9067
      %v9111 = vpop.xlane.xlu0 %9110
      %9112 = vadd.xlane.f32.xlu0 %v9068
      %v9113 = vpop.xlane.xlu0 %9112
      %9114 = vadd.xlane.f32.xlu0 %v9069
      %v9115 = vpop.xlane.xlu0 %9114
      %9116 = vadd.xlane.f32.xlu0 %v9070
      %v9117 = vpop.xlane.xlu0 %9116
      %9118 = vadd.xlane.f32.xlu0 %v9071
      %v9119 = vpop.xlane.xlu0 %9118
      %9120 = vadd.xlane.f32.xlu0 %v9072
      %v9121 = vpop.xlane.xlu0 %9120
      %9122 = vadd.xlane.f32.xlu0 %v9073
      %v9123 = vpop.xlane.xlu0 %9122
      %9124 = vadd.xlane.f32.xlu0 %v9074
      %v9125 = vpop.xlane.xlu0 %9124
      %9126 = vadd.xlane.f32.xlu0 %v9075
      %v9127 = vpop.xlane.xlu0 %9126
      %9128 = vadd.xlane.f32.xlu0 %v9076
      %v9129 = vpop.xlane.xlu0 %9128
      %9130 = vadd.xlane.f32.xlu0 %v9077
      %v9131 = vpop.xlane.xlu0 %9130
      %9132 = vadd.xlane.f32.xlu0 %v9078
      %v9133 = vpop.xlane.xlu0 %9132
      %9134 = vadd.xlane.f32.xlu0 %v9079
      %v9135 = vpop.xlane.xlu0 %9134
      %9136 = vadd.xlane.f32.xlu0 %v9080
      %v9137 = vpop.xlane.xlu0 %9136
      %9138 = vadd.xlane.f32.xlu0 %v9081
      %v9139 = vpop.xlane.xlu0 %9138
      %9140 = vadd.xlane.f32.xlu0 %v9082
      %v9141 = vpop.xlane.xlu0 %9140
      %9142 = vadd.xlane.f32.xlu0 %v9083
      %v9143 = vpop.xlane.xlu0 %9142
      %9144 = vadd.xlane.f32.xlu0 %v9084
      %v9145 = vpop.xlane.xlu0 %9144
      %9146 = vadd.xlane.f32.xlu0 %v9085
      %v9147 = vpop.xlane.xlu0 %9146
      %9148 = vadd.xlane.f32.xlu0 %v9086
      %v9149 = vpop.xlane.xlu0 %9148
      %9150 = vadd.xlane.f32.xlu0 %v9087
      %v9151 = vpop.xlane.xlu0 %9150
      %v9152 = vld [vmem:[#allocation3] sm:$0x1]
      %v9154 = vlaneseq
      %v9155 = vshrl.u32 %v9154, 7
      %v9156 = vsub.s32 0, %v9155
      %v9157 = vrot.slane %v9152, %v9156
      %v9159 = vadd.f32 %v9089, %v9157
      %v9160 = vadd.f32 %v9091, %v9157
      %v9161 = vadd.f32 %v9093, %v9157
      %v9162 = vadd.f32 %v9095, %v9157
      %v9163 = vadd.f32 %v9097, %v9157
      %v9164 = vadd.f32 %v9099, %v9157
      %v9165 = vadd.f32 %v9101, %v9157
      %v9166 = vadd.f32 %v9103, %v9157
      %v9167 = vadd.f32 %v9105, %v9157
      %v9168 = vadd.f32 %v9107, %v9157
      %v9169 = vadd.f32 %v9109, %v9157
      %v9170 = vadd.f32 %v9111, %v9157
      %v9171 = vadd.f32 %v9113, %v9157
      %v9172 = vadd.f32 %v9115, %v9157
      %v9173 = vadd.f32 %v9117, %v9157
      %v9174 = vadd.f32 %v9119, %v9157
      %v9175 = vadd.f32 %v9121, %v9157
      %v9176 = vadd.f32 %v9123, %v9157
      %v9177 = vadd.f32 %v9125, %v9157
      %v9178 = vadd.f32 %v9127, %v9157
      %v9179 = vadd.f32 %v9129, %v9157
      %v9180 = vadd.f32 %v9131, %v9157
      %v9181 = vadd.f32 %v9133, %v9157
      %v9182 = vadd.f32 %v9135, %v9157
      %v9183 = vadd.f32 %v9137, %v9157
      %v9184 = vadd.f32 %v9139, %v9157
      %v9185 = vadd.f32 %v9141, %v9157
      %v9186 = vadd.f32 %v9143, %v9157
      %v9187 = vadd.f32 %v9145, %v9157
      %v9188 = vadd.f32 %v9147, %v9157
      %v9189 = vadd.f32 %v9149, %v9157
      %v9190 = vadd.f32 %v9151, %v9157
      %v9191 = vxor.u32 %v9159, 2147483648
      %v9192 = vxor.u32 %v9160, 2147483648
      %v9193 = vxor.u32 %v9161, 2147483648
      %v9194 = vxor.u32 %v9162, 2147483648
      %v9195 = vxor.u32 %v9163, 2147483648
      %v9196 = vxor.u32 %v9164, 2147483648
      %v9197 = vxor.u32 %v9165, 2147483648
      %v9198 = vxor.u32 %v9166, 2147483648
      %v9199 = vxor.u32 %v9167, 2147483648
      %v9200 = vxor.u32 %v9168, 2147483648
      %v9201 = vxor.u32 %v9169, 2147483648
      %v9202 = vxor.u32 %v9170, 2147483648
      %v9203 = vxor.u32 %v9171, 2147483648
      %v9204 = vxor.u32 %v9172, 2147483648
      %v9205 = vxor.u32 %v9173, 2147483648
      %v9206 = vxor.u32 %v9174, 2147483648
      %v9207 = vxor.u32 %v9175, 2147483648
      %v9208 = vxor.u32 %v9176, 2147483648
      %v9209 = vxor.u32 %v9177, 2147483648
      %v9210 = vxor.u32 %v9178, 2147483648
      %v9211 = vxor.u32 %v9179, 2147483648
      %v9212 = vxor.u32 %v9180, 2147483648
      %v9213 = vxor.u32 %v9181, 2147483648
      %v9214 = vxor.u32 %v9182, 2147483648
      %v9215 = vxor.u32 %v9183, 2147483648
      %v9216 = vxor.u32 %v9184, 2147483648
      %v9217 = vxor.u32 %v9185, 2147483648
      %v9218 = vxor.u32 %v9186, 2147483648
      %v9219 = vxor.u32 %v9187, 2147483648
      %v9220 = vxor.u32 %v9188, 2147483648
      %v9221 = vxor.u32 %v9189, 2147483648
      %v9222 = vxor.u32 %v9190, 2147483648
      %v9223 = vmul.f32 %v9191, 1.442695
      %v9224 = vpow.pop %v9223
      %v9225 = vmul.f32 %v9192, 1.442695
      %v9226 = vpow.pop %v9225
      %v9227 = vmul.f32 %v9193, 1.442695
      %v9228 = vpow.pop %v9227
      %v9229 = vmul.f32 %v9194, 1.442695
      %v9230 = vpow.pop %v9229
      %v9231 = vmul.f32 %v9195, 1.442695
      %v9232 = vpow.pop %v9231
      %v9233 = vmul.f32 %v9196, 1.442695
      %v9234 = vpow.pop %v9233
      %v9235 = vmul.f32 %v9197, 1.442695
      %v9236 = vpow.pop %v9235
      %v9237 = vmul.f32 %v9198, 1.442695
      %v9238 = vpow.pop %v9237
      %v9239 = vmul.f32 %v9199, 1.442695
      %v9240 = vpow.pop %v9239
      %v9241 = vmul.f32 %v9200, 1.442695
      %v9242 = vpow.pop %v9241
      %v9243 = vmul.f32 %v9201, 1.442695
      %v9244 = vpow.pop %v9243
      %v9245 = vmul.f32 %v9202, 1.442695
      %v9246 = vpow.pop %v9245
      %v9247 = vmul.f32 %v9203, 1.442695
      %v9248 = vpow.pop %v9247
      %v9249 = vmul.f32 %v9204, 1.442695
      %v9250 = vpow.pop %v9249
      %v9251 = vmul.f32 %v9205, 1.442695
      %v9252 = vpow.pop %v9251
      %v9253 = vmul.f32 %v9206, 1.442695
      %v9254 = vpow.pop %v9253
      %v9255 = vmul.f32 %v9207, 1.442695
      %v9256 = vpow.pop %v9255
      %v9257 = vmul.f32 %v9208, 1.442695
      %v9258 = vpow.pop %v9257
      %v9259 = vmul.f32 %v9209, 1.442695
      %v9260 = vpow.pop %v9259
      %v9261 = vmul.f32 %v9210, 1.442695
      %v9262 = vpow.pop %v9261
      %v9263 = vmul.f32 %v9211, 1.442695
      %v9264 = vpow.pop %v9263
      %v9265 = vmul.f32 %v9212, 1.442695
      %v9266 = vpow.pop %v9265
      %v9267 = vmul.f32 %v9213, 1.442695
      %v9268 = vpow.pop %v9267
      %v9269 = vmul.f32 %v9214, 1.442695
      %v9270 = vpow.pop %v9269
      %v9271 = vmul.f32 %v9215, 1.442695
      %v9272 = vpow.pop %v9271
      %v9273 = vmul.f32 %v9216, 1.442695
      %v9274 = vpow.pop %v9273
      %v9275 = vmul.f32 %v9217, 1.442695
      %v9276 = vpow.pop %v9275
      %v9277 = vmul.f32 %v9218, 1.442695
      %v9278 = vpow.pop %v9277
      %v9279 = vmul.f32 %v9219, 1.442695
      %v9280 = vpow.pop %v9279
      %v9281 = vmul.f32 %v9220, 1.442695
      %v9282 = vpow.pop %v9281
      %v9283 = vmul.f32 %v9221, 1.442695
      %v9284 = vpow.pop %v9283
      %v9285 = vmul.f32 %v9222, 1.442695
      %v9286 = vpow.pop %v9285
      %v9287 = vadd.f32 %v9224, 1.0
      %v9288 = vadd.f32 %v9226, 1.0
      %v9289 = vadd.f32 %v9228, 1.0
      %v9290 = vadd.f32 %v9230, 1.0
      %v9291 = vadd.f32 %v9232, 1.0
      %v9292 = vadd.f32 %v9234, 1.0
      %v9293 = vadd.f32 %v9236, 1.0
      %v9294 = vadd.f32 %v9238, 1.0
      %v9295 = vadd.f32 %v9240, 1.0
      %v9296 = vadd.f32 %v9242, 1.0
      %v9297 = vadd.f32 %v9244, 1.0
      %v9298 = vadd.f32 %v9246, 1.0
      %v9299 = vadd.f32 %v9248, 1.0
      %v9300 = vadd.f32 %v9250, 1.0
      %v9301 = vadd.f32 %v9252, 1.0
      %v9302 = vadd.f32 %v9254, 1.0
      %v9303 = vadd.f32 %v9256, 1.0
      %v9304 = vadd.f32 %v9258, 1.0
      %v9305 = vadd.f32 %v9260, 1.0
      %v9306 = vadd.f32 %v9262, 1.0
      %v9307 = vadd.f32 %v9264, 1.0
      %v9308 = vadd.f32 %v9266, 1.0
      %v9309 = vadd.f32 %v9268, 1.0
      %v9310 = vadd.f32 %v9270, 1.0
      %v9311 = vadd.f32 %v9272, 1.0
      %v9312 = vadd.f32 %v9274, 1.0
      %v9313 = vadd.f32 %v9276, 1.0
      %v9314 = vadd.f32 %v9278, 1.0
      %v9315 = vadd.f32 %v9280, 1.0
      %v9316 = vadd.f32 %v9282, 1.0
      %v9317 = vadd.f32 %v9284, 1.0
      %v9318 = vadd.f32 %v9286, 1.0
      %v9319 = vrcp.pop %v9287
      %v9320 = vmul.f32 1.0, %v9319
      %v9321 = vrcp.pop %v9288
      %v9322 = vmul.f32 1.0, %v9321
      %v9323 = vrcp.pop %v9289
      %v9324 = vmul.f32 1.0, %v9323
      %v9325 = vrcp.pop %v9290
      %v9326 = vmul.f32 1.0, %v9325
      %v9327 = vrcp.pop %v9291
      %v9328 = vmul.f32 1.0, %v9327
      %v9329 = vrcp.pop %v9292
      %v9330 = vmul.f32 1.0, %v9329
      %v9331 = vrcp.pop %v9293
      %v9332 = vmul.f32 1.0, %v9331
      %v9333 = vrcp.pop %v9294
      %v9334 = vmul.f32 1.0, %v9333
      %v9335 = vrcp.pop %v9295
      %v9336 = vmul.f32 1.0, %v9335
      %v9337 = vrcp.pop %v9296
      %v9338 = vmul.f32 1.0, %v9337
      %v9339 = vrcp.pop %v9297
      %v9340 = vmul.f32 1.0, %v9339
      %v9341 = vrcp.pop %v9298
      %v9342 = vmul.f32 1.0, %v9341
      %v9343 = vrcp.pop %v9299
      %v9344 = vmul.f32 1.0, %v9343
      %v9345 = vrcp.pop %v9300
      %v9346 = vmul.f32 1.0, %v9345
      %v9347 = vrcp.pop %v9301
      %v9348 = vmul.f32 1.0, %v9347
      %v9349 = vrcp.pop %v9302
      %v9350 = vmul.f32 1.0, %v9349
      %v9351 = vrcp.pop %v9303
      %v9352 = vmul.f32 1.0, %v9351
      %v9353 = vrcp.pop %v9304
      %v9354 = vmul.f32 1.0, %v9353
      %v9355 = vrcp.pop %v9305
      %v9356 = vmul.f32 1.0, %v9355
      %v9357 = vrcp.pop %v9306
      %v9358 = vmul.f32 1.0, %v9357
      %v9359 = vrcp.pop %v9307
      %v9360 = vmul.f32 1.0, %v9359
      %v9361 = vrcp.pop %v9308
      %v9362 = vmul.f32 1.0, %v9361
      %v9363 = vrcp.pop %v9309
      %v9364 = vmul.f32 1.0, %v9363
      %v9365 = vrcp.pop %v9310
      %v9366 = vmul.f32 1.0, %v9365
      %v9367 = vrcp.pop %v9311
      %v9368 = vmul.f32 1.0, %v9367
      %v9369 = vrcp.pop %v9312
      %v9370 = vmul.f32 1.0, %v9369
      %v9371 = vrcp.pop %v9313
      %v9372 = vmul.f32 1.0, %v9371
      %v9373 = vrcp.pop %v9314
      %v9374 = vmul.f32 1.0, %v9373
      %v9375 = vrcp.pop %v9315
      %v9376 = vmul.f32 1.0, %v9375
      %v9377 = vrcp.pop %v9316
      %v9378 = vmul.f32 1.0, %v9377
      %v9379 = vrcp.pop %v9317
      %v9380 = vmul.f32 1.0, %v9379
      %v9381 = vrcp.pop %v9318
      %v9382 = vmul.f32 1.0, %v9381
      %9384 = vset.pattern.permute.xlu0 0
      %9385 = vperm.xlu0 %9384, %v9320
      %v9386 = vpop.permute.xlu0 %9385
      %9389 = vset.pattern.permute.xlu0 0
      %9390 = vperm.xlu0 %9389, %v9322
      %v9391 = vpop.permute.xlu0 %9390
      %9394 = vset.pattern.permute.xlu0 0
      %9395 = vperm.xlu0 %9394, %v9324
      %v9396 = vpop.permute.xlu0 %9395
      %9399 = vset.pattern.permute.xlu0 0
      %9400 = vperm.xlu0 %9399, %v9326
      %v9401 = vpop.permute.xlu0 %9400
      %9404 = vset.pattern.permute.xlu0 0
      %9405 = vperm.xlu0 %9404, %v9328
      %v9406 = vpop.permute.xlu0 %9405
      %9409 = vset.pattern.permute.xlu0 0
      %9410 = vperm.xlu0 %9409, %v9330
      %v9411 = vpop.permute.xlu0 %9410
      %9414 = vset.pattern.permute.xlu0 0
      %9415 = vperm.xlu0 %9414, %v9332
      %v9416 = vpop.permute.xlu0 %9415
      %9419 = vset.pattern.permute.xlu0 0
      %9420 = vperm.xlu0 %9419, %v9334
      %v9421 = vpop.permute.xlu0 %9420
      %9424 = vset.pattern.permute.xlu0 0
      %9425 = vperm.xlu0 %9424, %v9336
      %v9426 = vpop.permute.xlu0 %9425
      %9429 = vset.pattern.permute.xlu0 0
      %9430 = vperm.xlu0 %9429, %v9338
      %v9431 = vpop.permute.xlu0 %9430
      %9434 = vset.pattern.permute.xlu0 0
      %9435 = vperm.xlu0 %9434, %v9340
      %v9436 = vpop.permute.xlu0 %9435
      %9439 = vset.pattern.permute.xlu0 0
      %9440 = vperm.xlu0 %9439, %v9342
      %v9441 = vpop.permute.xlu0 %9440
      %9444 = vset.pattern.permute.xlu0 0
      %9445 = vperm.xlu0 %9444, %v9344
      %v9446 = vpop.permute.xlu0 %9445
      %9449 = vset.pattern.permute.xlu0 0
      %9450 = vperm.xlu0 %9449, %v9346
      %v9451 = vpop.permute.xlu0 %9450
      %9454 = vset.pattern.permute.xlu0 0
      %9455 = vperm.xlu0 %9454, %v9348
      %v9456 = vpop.permute.xlu0 %9455
      %9459 = vset.pattern.permute.xlu0 0
      %9460 = vperm.xlu0 %9459, %v9350
      %v9461 = vpop.permute.xlu0 %9460
      %9464 = vset.pattern.permute.xlu0 0
      %9465 = vperm.xlu0 %9464, %v9352
      %v9466 = vpop.permute.xlu0 %9465
      %9469 = vset.pattern.permute.xlu0 0
      %9470 = vperm.xlu0 %9469, %v9354
      %v9471 = vpop.permute.xlu0 %9470
      %9474 = vset.pattern.permute.xlu0 0
      %9475 = vperm.xlu0 %9474, %v9356
      %v9476 = vpop.permute.xlu0 %9475
      %9479 = vset.pattern.permute.xlu0 0
      %9480 = vperm.xlu0 %9479, %v9358
      %v9481 = vpop.permute.xlu0 %9480
      %9484 = vset.pattern.permute.xlu0 0
      %9485 = vperm.xlu0 %9484, %v9360
      %v9486 = vpop.permute.xlu0 %9485
      %9489 = vset.pattern.permute.xlu0 0
      %9490 = vperm.xlu0 %9489, %v9362
      %v9491 = vpop.permute.xlu0 %9490
      %9494 = vset.pattern.permute.xlu0 0
      %9495 = vperm.xlu0 %9494, %v9364
      %v9496 = vpop.permute.xlu0 %9495
      %9499 = vset.pattern.permute.xlu0 0
      %9500 = vperm.xlu0 %9499, %v9366
      %v9501 = vpop.permute.xlu0 %9500
      %9504 = vset.pattern.permute.xlu0 0
      %9505 = vperm.xlu0 %9504, %v9368
      %v9506 = vpop.permute.xlu0 %9505
      %9509 = vset.pattern.permute.xlu0 0
      %9510 = vperm.xlu0 %9509, %v9370
      %v9511 = vpop.permute.xlu0 %9510
      %9514 = vset.pattern.permute.xlu0 0
      %9515 = vperm.xlu0 %9514, %v9372
      %v9516 = vpop.permute.xlu0 %9515
      %9519 = vset.pattern.permute.xlu0 0
      %9520 = vperm.xlu0 %9519, %v9374
      %v9521 = vpop.permute.xlu0 %9520
      %9524 = vset.pattern.permute.xlu0 0
      %9525 = vperm.xlu0 %9524, %v9376
      %v9526 = vpop.permute.xlu0 %9525
      %9529 = vset.pattern.permute.xlu0 0
      %9530 = vperm.xlu0 %9529, %v9378
      %v9531 = vpop.permute.xlu0 %9530
      %9534 = vset.pattern.permute.xlu0 0
      %9535 = vperm.xlu0 %9534, %v9380
      %v9536 = vpop.permute.xlu0 %9535
      %9539 = vset.pattern.permute.xlu0 0
      %9540 = vperm.xlu0 %9539, %v9382
      %v9541 = vpop.permute.xlu0 %9540
      %v9543 = vmul.f32 %v9017, %v9386
      %v9544 = vmul.f32 %v9018, %v9391
      %v9545 = vmul.f32 %v9019, %v9396
      %v9546 = vmul.f32 %v9020, %v9401
      %v9547 = vmul.f32 %v9021, %v9406
      %v9548 = vmul.f32 %v9022, %v9411
      %v9549 = vmul.f32 %v9023, %v9416
      %v9550 = vmul.f32 %v9024, %v9421
      %v9551 = vmul.f32 %v9025, %v9426
      %v9552 = vmul.f32 %v9026, %v9431
      %v9553 = vmul.f32 %v9027, %v9436
      %v9554 = vmul.f32 %v9028, %v9441
      %v9555 = vmul.f32 %v9029, %v9446
      %v9556 = vmul.f32 %v9030, %v9451
      %v9557 = vmul.f32 %v9031, %v9456
      %v9558 = vmul.f32 %v9032, %v9461
      %v9559 = vmul.f32 %v9033, %v9466
      %v9560 = vmul.f32 %v9034, %v9471
      %v9561 = vmul.f32 %v9035, %v9476
      %v9562 = vmul.f32 %v9036, %v9481
      %v9563 = vmul.f32 %v9037, %v9486
      %v9564 = vmul.f32 %v9038, %v9491
      %v9565 = vmul.f32 %v9039, %v9496
      %v9566 = vmul.f32 %v9040, %v9501
      %v9567 = vmul.f32 %v9041, %v9506
      %v9568 = vmul.f32 %v9042, %v9511
      %v9569 = vmul.f32 %v9043, %v9516
      %v9570 = vmul.f32 %v9044, %v9521
      %v9571 = vmul.f32 %v9045, %v9526
      %v9572 = vmul.f32 %v9046, %v9531
      %v9573 = vmul.f32 %v9047, %v9536
      %v9574 = vmul.f32 %v9048, %v9541
      %v9575 = vpack.c.bf16 %v9544, %v9543
      %v9576 = vpack.c.bf16 %v9546, %v9545
      %v9577 = vpack.c.bf16 %v9548, %v9547
      %v9578 = vpack.c.bf16 %v9550, %v9549
      %v9579 = vpack.c.bf16 %v9552, %v9551
      %v9580 = vpack.c.bf16 %v9554, %v9553
      %v9581 = vpack.c.bf16 %v9556, %v9555
      %v9582 = vpack.c.bf16 %v9558, %v9557
      %v9583 = vpack.c.bf16 %v9560, %v9559
      %v9584 = vpack.c.bf16 %v9562, %v9561
      %v9585 = vpack.c.bf16 %v9564, %v9563
      %v9586 = vpack.c.bf16 %v9566, %v9565
      %v9587 = vpack.c.bf16 %v9568, %v9567
      %v9588 = vpack.c.bf16 %v9570, %v9569
      %v9589 = vpack.c.bf16 %v9572, %v9571
      %v9590 = vpack.c.bf16 %v9574, %v9573
      %v9591 = vld [vmem:[%s21] sm:$0xf]
      %v9592 = vld [vmem:[%s21 + $0x4] sm:$0xf]
      %v9593 = vld [vmem:[%s21 + $0x8] sm:$0xf]
      %v9594 = vld [vmem:[%s21 + $0xc] sm:$0xf]
      %v9595 = vld [vmem:[%s21 + $0x10] sm:$0xf]
      %v9596 = vld [vmem:[%s21 + $0x14] sm:$0xf]
      %v9597 = vld [vmem:[%s21 + $0x18] sm:$0xf]
      %v9598 = vld [vmem:[%s21 + $0x1c] sm:$0xf]
      %v9599 = vld [vmem:[%s21 + $0x20] sm:$0xf]
      %v9600 = vld [vmem:[%s21 + $0x24] sm:$0xf]
      %v9601 = vld [vmem:[%s21 + $0x28] sm:$0xf]
      %v9602 = vld [vmem:[%s21 + $0x2c] sm:$0xf]
      %v9603 = vld [vmem:[%s21 + $0x30] sm:$0xf]
      %v9604 = vld [vmem:[%s21 + $0x34] sm:$0xf]
      %v9605 = vld [vmem:[%s21 + $0x38] sm:$0xf]
      %v9606 = vld [vmem:[%s21 + $0x3c] sm:$0xf]
      %v9607 = vld [vmem:[%s22] sm:$0x1]
      %v9609 = vlaneseq
      %v9610 = vshrl.u32 %v9609, 7
      %v9611 = vsub.s32 0, %v9610
      %v9612 = vrot.slane %v9607, %v9611
      %v9630 = vunpack.c.l.b16 %v9591
      %v9631 = vunpack.c.l.b16 %v9592
      %v9632 = vunpack.c.l.b16 %v9593
      %v9633 = vunpack.c.l.b16 %v9594
      %v9634 = vunpack.c.l.b16 %v9595
      %v9635 = vunpack.c.l.b16 %v9596
      %v9636 = vunpack.c.l.b16 %v9597
      %v9637 = vunpack.c.l.b16 %v9598
      %v9638 = vunpack.c.l.b16 %v9599
      %v9639 = vunpack.c.l.b16 %v9600
      %v9640 = vunpack.c.l.b16 %v9601
      %v9641 = vunpack.c.l.b16 %v9602
      %v9642 = vunpack.c.l.b16 %v9603
      %v9643 = vunpack.c.l.b16 %v9604
      %v9644 = vunpack.c.l.b16 %v9605
      %v9645 = vunpack.c.l.b16 %v9606
      %v9646 = vpack.c.b16 %v9631, %v9630
      %v9647 = vpack.c.b16 %v9633, %v9632
      %v9648 = vpack.c.b16 %v9635, %v9634
      %v9649 = vpack.c.b16 %v9637, %v9636
      %v9650 = vpack.c.b16 %v9639, %v9638
      %v9651 = vpack.c.b16 %v9641, %v9640
      %v9652 = vpack.c.b16 %v9643, %v9642
      %v9653 = vpack.c.b16 %v9645, %v9644
      %9662 = vmatprep.subr.bf16.mxu0 0
      %9663 = vmatpush1.bf16.msra.mxu0 %v9646
      %9664 = vmatprep.subr.bf16.mxu0 0
      %9665 = vmatpush1.bf16.msra.mxu0 %v9647
      %9666 = vmatprep.subr.bf16.mxu0 0
      %9667 = vmatpush1.bf16.msra.mxu0 %v9648
      %9668 = vmatprep.subr.bf16.mxu0 0
      %9669 = vmatpush1.bf16.msra.mxu0 %v9649
      %9670 = vmatprep.subr.bf16.mxu0 0
      %9671 = vmatpush1.bf16.msra.mxu0 %v9650
      %9672 = vmatprep.subr.bf16.mxu0 0
      %9673 = vmatpush1.bf16.msra.mxu0 %v9651
      %9674 = vmatprep.subr.bf16.mxu0 0
      %9675 = vmatpush1.bf16.msra.mxu0 %v9652
      %9676 = vmatprep.subr.bf16.mxu0 0
      %9677 = vmatpush1.bf16.msra.mxu0 %v9653
      %9678 = vmatprep.subr.bf16.mxu0 0
      %9679 = vmatpush1.bf16.msra.mxu0 0
      %9680 = vmatprep.subr.bf16.mxu0 0
      %9681 = vmatpush1.bf16.msra.mxu0 0
      %9682 = vmatprep.subr.bf16.mxu0 0
      %9683 = vmatpush1.bf16.msra.mxu0 0
      %9684 = vmatprep.subr.bf16.mxu0 0
      %9685 = vmatpush1.bf16.msra.mxu0 0
      %9686 = vmatprep.subr.bf16.mxu0 0
      %9687 = vmatpush1.bf16.msra.mxu0 0
      %9688 = vmatprep.subr.bf16.mxu0 0
      %9689 = vmatpush1.bf16.msra.mxu0 0
      %9690 = vmatprep.subr.bf16.mxu0 0
      %9691 = vmatpush1.bf16.msra.mxu0 0
      %9692 = vmatprep.subr.bf16.mxu0 0
      %9693 = vmatpush1.bf16.msra.mxu0 0
      %9694 = vmatprep.mubr.bf16.mxu0 0
      %9695 = vmatmul.mubr.bf16.gmra.mrb[0].mxu0 %v9575
      %v9696 = vpop.f32.mrb[0].mxu0
      %v9697 = vadd.f32 %v9612, %v9696
      %v9698 = vpop.f32.mrb[0].mxu0
      %v9699 = vpop.f32.mrb[0].mxu0
      %v9700 = vadd.f32 %v9612, %v9699
      %v9701 = vpop.f32.mrb[0].mxu0
      %9702 = vmatprep.mubr.bf16.mxu0 0
      %9703 = vmatmul.mubr.bf16.gmra.mrb[0].mxu0 %v9576
      %v9704 = vpop.f32.mrb[0].mxu0
      %v9705 = vadd.f32 %v9612, %v9704
      %v9706 = vpop.f32.mrb[0].mxu0
      %v9707 = vpop.f32.mrb[0].mxu0
      %v9708 = vadd.f32 %v9612, %v9707
      %v9709 = vpop.f32.mrb[0].mxu0
      %9710 = vmatprep.mubr.bf16.mxu0 0
      %9711 = vmatmul.mubr.bf16.gmra.mrb[0].mxu0 %v9577
      %v9712 = vpop.f32.mrb[0].mxu0
      %v9713 = vadd.f32 %v9612, %v9712
      %v9714 = vpop.f32.mrb[0].mxu0
      %v9715 = vpop.f32.mrb[0].mxu0
      %v9716 = vadd.f32 %v9612, %v9715
      %v9717 = vpop.f32.mrb[0].mxu0
      %9718 = vmatprep.mubr.bf16.mxu0 0
      %9719 = vmatmul.mubr.bf16.gmra.mrb[0].mxu0 %v9578
      %v9720 = vpop.f32.mrb[0].mxu0
      %v9721 = vadd.f32 %v9612, %v9720
      %v9722 = vpop.f32.mrb[0].mxu0
      %v9723 = vpop.f32.mrb[0].mxu0
      %v9724 = vadd.f32 %v9612, %v9723
      %v9725 = vpop.f32.mrb[0].mxu0
      %9726 = vmatprep.mubr.bf16.mxu0 0
      %9727 = vmatmul.mubr.bf16.gmra.mrb[0].mxu0 %v9579
      %v9728 = vpop.f32.mrb[0].mxu0
      %v9729 = vadd.f32 %v9612, %v9728
      %v9730 = vpop.f32.mrb[0].mxu0
      %v9731 = vpop.f32.mrb[0].mxu0
      %v9732 = vadd.f32 %v9612, %v9731
      %v9733 = vpop.f32.mrb[0].mxu0
      %9734 = vmatprep.mubr.bf16.mxu0 0
      %9735 = vmatmul.mubr.bf16.gmra.mrb[0].mxu0 %v9580
      %v9736 = vpop.f32.mrb[0].mxu0
      %v9737 = vadd.f32 %v9612, %v9736
      %v9738 = vpop.f32.mrb[0].mxu0
      %v9739 = vpop.f32.mrb[0].mxu0
      %v9740 = vadd.f32 %v9612, %v9739
      %v9741 = vpop.f32.mrb[0].mxu0
      %9742 = vmatprep.mubr.bf16.mxu0 0
      %9743 = vmatmul.mubr.bf16.gmra.mrb[0].mxu0 %v9581
      %v9744 = vpop.f32.mrb[0].mxu0
      %v9745 = vadd.f32 %v9612, %v9744
      %v9746 = vpop.f32.mrb[0].mxu0
      %v9747 = vpop.f32.mrb[0].mxu0
      %v9748 = vadd.f32 %v9612, %v9747
      %v9749 = vpop.f32.mrb[0].mxu0
      %9750 = vmatprep.mubr.bf16.mxu0 0
      %9751 = vmatmul.mubr.bf16.gmra.mrb[0].mxu0 %v9582
      %v9752 = vpop.f32.mrb[0].mxu0
      %v9753 = vadd.f32 %v9612, %v9752
      %v9754 = vpop.f32.mrb[0].mxu0
      %v9755 = vpop.f32.mrb[0].mxu0
      %v9756 = vadd.f32 %v9612, %v9755
      %v9757 = vpop.f32.mrb[0].mxu0
      %9758 = vmatprep.mubr.bf16.mxu0 0
      %9759 = vmatmul.mubr.bf16.gmra.mrb[0].mxu0 %v9583
      %v9760 = vpop.f32.mrb[0].mxu0
      %v9761 = vadd.f32 %v9612, %v9760
      %v9762 = vpop.f32.mrb[0].mxu0
      %v9763 = vpop.f32.mrb[0].mxu0
      %v9764 = vadd.f32 %v9612, %v9763
      %v9765 = vpop.f32.mrb[0].mxu0
      %9766 = vmatprep.mubr.bf16.mxu0 0
      %9767 = vmatmul.mubr.bf16.gmra.mrb[0].mxu0 %v9584
      %v9768 = vpop.f32.mrb[0].mxu0
      %v9769 = vadd.f32 %v9612, %v9768
      %v9770 = vpop.f32.mrb[0].mxu0
      %v9771 = vpop.f32.mrb[0].mxu0
      %v9772 = vadd.f32 %v9612, %v9771
      %v9773 = vpop.f32.mrb[0].mxu0
      %9774 = vmatprep.mubr.bf16.mxu0 0
      %9775 = vmatmul.mubr.bf16.gmra.mrb[0].mxu0 %v9585
      %v9776 = vpop.f32.mrb[0].mxu0
      %v9777 = vadd.f32 %v9612, %v9776
      %v9778 = vpop.f32.mrb[0].mxu0
      %v9779 = vpop.f32.mrb[0].mxu0
      %v9780 = vadd.f32 %v9612, %v9779
      %v9781 = vpop.f32.mrb[0].mxu0
      %9782 = vmatprep.mubr.bf16.mxu0 0
      %9783 = vmatmul.mubr.bf16.gmra.mrb[0].mxu0 %v9586
      %v9784 = vpop.f32.mrb[0].mxu0
      %v9785 = vadd.f32 %v9612, %v9784
      %v9786 = vpop.f32.mrb[0].mxu0
      %v9787 = vpop.f32.mrb[0].mxu0
      %v9788 = vadd.f32 %v9612, %v9787
      %v9789 = vpop.f32.mrb[0].mxu0
      %9790 = vmatprep.mubr.bf16.mxu0 0
      %9791 = vmatmul.mubr.bf16.gmra.mrb[0].mxu0 %v9587
      %v9792 = vpop.f32.mrb[0].mxu0
      %v9793 = vadd.f32 %v9612, %v9792
      %v9794 = vpop.f32.mrb[0].mxu0
      %v9795 = vpop.f32.mrb[0].mxu0
      %v9796 = vadd.f32 %v9612, %v9795
      %v9797 = vpop.f32.mrb[0].mxu0
      %9798 = vmatprep.mubr.bf16.mxu0 0
      %9799 = vmatmul.mubr.bf16.gmra.mrb[0].mxu0 %v9588
      %v9800 = vpop.f32.mrb[0].mxu0
      %v9801 = vadd.f32 %v9612, %v9800
      %v9802 = vpop.f32.mrb[0].mxu0
      %v9803 = vpop.f32.mrb[0].mxu0
      %v9804 = vadd.f32 %v9612, %v9803
      %v9805 = vpop.f32.mrb[0].mxu0
      %9806 = vmatprep.mubr.bf16.mxu0 0
      %9807 = vmatmul.mubr.bf16.gmra.mrb[0].mxu0 %v9589
      %v9808 = vpop.f32.mrb[0].mxu0
      %v9809 = vadd.f32 %v9612, %v9808
      %v9810 = vpop.f32.mrb[0].mxu0
      %v9811 = vpop.f32.mrb[0].mxu0
      %v9812 = vadd.f32 %v9612, %v9811
      %v9813 = vpop.f32.mrb[0].mxu0
      %9814 = vmatprep.mubr.bf16.mxu0 0
      %9815 = vmatmul.mubr.bf16.gmra.mrb[0].mxu0 %v9590
      %v9816 = vpop.f32.mrb[0].mxu0
      %v9817 = vadd.f32 %v9612, %v9816
      %v9818 = vpop.f32.mrb[0].mxu0
      %v9819 = vpop.f32.mrb[0].mxu0
      %v9820 = vadd.f32 %v9612, %v9819
      %v9821 = vpop.f32.mrb[0].mxu0
      %9822 = vdwg.mxu0
      %9823 = vst [vmem:[%s789] sm:$0xff] %v9697
      %9824 = vst [vmem:[%s789 + $0x8] sm:$0xff] %v9700
      %9825 = vst [vmem:[%s789 + $0x10] sm:$0xff] %v9705
      %9826 = vst [vmem:[%s789 + $0x18] sm:$0xff] %v9708
      %9827 = vst [vmem:[%s789 + $0x20] sm:$0xff] %v9713
      %9828 = vst [vmem:[%s789 + $0x28] sm:$0xff] %v9716
      %9829 = vst [vmem:[%s789 + $0x30] sm:$0xff] %v9721
      %9830 = vst [vmem:[%s789 + $0x38] sm:$0xff] %v9724
      %9831 = vst [vmem:[%s789 + $0x40] sm:$0xff] %v9729
      %9832 = vst [vmem:[%s789 + $0x48] sm:$0xff] %v9732
      %9833 = vst [vmem:[%s789 + $0x50] sm:$0xff] %v9737
      %9834 = vst [vmem:[%s789 + $0x58] sm:$0xff] %v9740
      %9835 = vst [vmem:[%s789 + $0x60] sm:$0xff] %v9745
      %9836 = vst [vmem:[%s789 + $0x68] sm:$0xff] %v9748
      %9837 = vst [vmem:[%s789 + $0x70] sm:$0xff] %v9753
      %9838 = vst [vmem:[%s789 + $0x78] sm:$0xff] %v9756
      %9839 = vst [vmem:[%s789 + $0x80] sm:$0xff] %v9761
      %9840 = vst [vmem:[%s789 + $0x88] sm:$0xff] %v9764
      %9841 = vst [vmem:[%s789 + $0x90] sm:$0xff] %v9769
      %9842 = vst [vmem:[%s789 + $0x98] sm:$0xff] %v9772
      %9843 = vst [vmem:[%s789 + $0xa0] sm:$0xff] %v9777
      %9844 = vst [vmem:[%s789 + $0xa8] sm:$0xff] %v9780
      %9845 = vst [vmem:[%s789 + $0xb0] sm:$0xff] %v9785
      %9846 = vst [vmem:[%s789 + $0xb8] sm:$0xff] %v9788
      %9847 = vst [vmem:[%s789 + $0xc0] sm:$0xff] %v9793
      %9848 = vst [vmem:[%s789 + $0xc8] sm:$0xff] %v9796
      %9849 = vst [vmem:[%s789 + $0xd0] sm:$0xff] %v9801
      %9850 = vst [vmem:[%s789 + $0xd8] sm:$0xff] %v9804
      %9851 = vst [vmem:[%s789 + $0xe0] sm:$0xff] %v9809
      %9852 = vst [vmem:[%s789 + $0xe8] sm:$0xff] %v9812
      %9853 = vst [vmem:[%s789 + $0xf0] sm:$0xff] %v9817
      %9854 = vst [vmem:[%s789 + $0xf8] sm:$0xff] %v9820
      %s9855 = smul.u32 16, %s43
      %p9856 = scmp.lt.s32.totalorder %s42, 1
      %s9857 = scalar_select %p9856, %s42, 1
      %p9858 = scmp.lt.s32.totalorder %s9855, 15
      %s9859 = scalar_select %p9858, %s9855, 15
      %s9860 = smul.addr %s9859, 2
      %s9861 = smul.addr %s9857, 32
      %s9862 = sadd.s32 %s9860, %s9861
      %s9863 = smul.addr %s9862, 8
      %s9864 = scalar_lea.vmem %s23, %s9863
      %s9865 = smul.u32 16, %s43
      %p9866 = scmp.lt.s32.totalorder %s42, 1
      %s9867 = scalar_select %p9866, %s42, 1
      %p9868 = scmp.lt.s32.totalorder %s9865, 15
      %s9869 = scalar_select %p9868, %s9865, 15
      %s9870 = smul.addr %s9869, 2
      %s9871 = smul.addr %s9867, 32
      %s9872 = sadd.s32 %s9870, %s9871
      %s9873 = smul.addr %s9872, 8
      %s9874 = scalar_lea.vmem %s24, %s9873
      // Predicated region
      $region113: #{pose_head_forward.1} parent=111 // pred_check
        %p9875 = pneg %p558
      $region114: #{pose_head_forward.1} parent=111 // pred_check_branch
        %9877 = sbr.rel (%p9875) target = $region116
      $region115: #{pose_head_forward.1} parent=111 // pred_region
        %s9878 = smul.u32 16, %s43
      $region116: #{pose_head_forward.1} parent=111 // pred_fallthru
        _
      // Predicated region
      $region117: #{pose_head_forward.1} parent=111 // pred_check
        %p9879 = pneg %p586
      $region118: #{pose_head_forward.1} parent=111 // pred_check_branch
        %9881 = sbr.rel (%p9879) target = $region120
      $region119: #{pose_head_forward.1} parent=111 // pred_region
        %s9882 = smul.u32 16, %s43
      $region120: #{pose_head_forward.1} parent=111 // pred_fallthru
        _
    $region112: #{pose_head_forward.1} parent=5 // pred_fallthru
      _
    %p9883 = scmp.le.s32.totalorder 2, %s33
    // Predicated region
    $region121: #{pose_head_forward.1} parent=5 // pred_check
      %p9884 = pneg %p9883
    $region122: #{pose_head_forward.1} parent=5 // pred_check_branch
      %9886 = sbr.rel (%p9884) target = $region124
    $region123: #{pose_head_forward.1} parent=5 // pred_region
      %s9887 = ssub.s32 %s33, 2
      // Predicated region
      $region125: #{pose_head_forward.1} parent=123 // pred_check
        %p9888 = pneg %p564
      $region126: #{pose_head_forward.1} parent=123 // pred_check_branch
        %9890 = sbr.rel (%p9888) target = $region128
      $region127: #{pose_head_forward.1} parent=123 // pred_region
        %s9891 = smul.u32 16, %s45
        %p9892 = scmp.lt.s32.totalorder %s44, 1
        %s9893 = scalar_select %p9892, %s44, 1
        %p9894 = scmp.lt.s32.totalorder %s9891, 15
        %s9895 = scalar_select %p9894, %s9891, 15
        %s9896 = smul.addr %s9895, 2
        %s9897 = smul.addr %s9893, 32
        %s9898 = sadd.s32 %s9896, %s9897
        %s9899 = smul.addr %s9898, 8
        %s9900 = scalar_lea.vmem %s23, %s9899
      $region128: #{pose_head_forward.1} parent=123 // pred_fallthru
        _
      // Predicated region
      $region129: #{pose_head_forward.1} parent=123 // pred_check
        %p9901 = pneg %p592
      $region130: #{pose_head_forward.1} parent=123 // pred_check_branch
        %9903 = sbr.rel (%p9901) target = $region132
      $region131: #{pose_head_forward.1} parent=123 // pred_region
        %s9904 = smul.u32 16, %s45
        %p9905 = scmp.lt.s32.totalorder %s44, 1
        %s9906 = scalar_select %p9905, %s44, 1
        %p9907 = scmp.lt.s32.totalorder %s9904, 15
        %s9908 = scalar_select %p9907, %s9904, 15
        %s9909 = smul.addr %s9908, 2
        %s9910 = smul.addr %s9906, 32
        %s9911 = sadd.s32 %s9909, %s9910
        %s9912 = smul.addr %s9911, 8
        %s9913 = scalar_lea.vmem %s24, %s9912
      $region132: #{pose_head_forward.1} parent=123 // pred_fallthru
        _
    $region124: #{pose_head_forward.1} parent=5 // pred_fallthru
      _
  $region6: #{pose_head_forward.1} parent=0 // loop_footer
    %s37 = sadd.s32 1, %s33
  $region7: #{pose_head_forward.1} parent=0 // loop_footer_branch
    %32 = sbr.rel target = $region3
  $region8: #{pose_head_forward.1} parent=0 // loop_exit
    _

</llo_original>
